<compile_context>
chip_gen: v5e
topology: v5e:2x2
jax: 0.10.0
libtpu: 0.0.40
codegen_flags: <defaults>
</compile_context>

<pallas_src>
import functools
import math

import jax
import jax.numpy as jnp
from jax import lax
from jax.experimental import pallas as pl
from jax.experimental.pallas import tpu as pltpu

MXU_DTYPE = jnp.bfloat16       # matmul operand dtype; accumulation stays f32
WEIGHT_DTYPE = jnp.bfloat16    # weight storage dtype in HBM
LN_EPS = 1e-6
NEG_INF = -1e9
VMEM_LIMIT = 32 * 1024 * 1024  # explicit scoped-VMEM budget (safe on v5e..v7x)


def _cparams(dims):
    return pltpu.CompilerParams(dimension_semantics=dims,
                                vmem_limit_bytes=VMEM_LIMIT)


def _pick_tile(full, max_tile, quantum, min_blocks=1):
    """Largest tile <= max_tile that divides `full`, is a multiple of
    `quantum`, and yields >= min_blocks grid blocks; falls back to `full`."""
    t = (min(max_tile, full) // quantum) * quantum
    while t >= quantum:
        if full % t == 0 and full // t >= min_blocks:
            return t
        t -= quantum
    return full


def _layer_norm(s, gamma, beta, eps):
    # SublayerConnectionv2-style LayerNorm (torch.std -> unbiased, eps on std).
    d_feat = s.shape[-1]
    mean = jnp.mean(s, axis=-1, keepdims=True)
    d = s - mean
    var = jnp.sum(d * d, axis=-1, keepdims=True) / (d_feat - 1)
    return gamma * d / (jnp.sqrt(var) + eps) + beta


# ----------------------------------------------------------------------------
# trans_obj: Linear(2048->D)+ReLU, Linear(D->D)+ReLU, fused, K-tiled.
# ----------------------------------------------------------------------------
def _trans_obj_kernel(x_ref, w1_ref, b1_ref, w2_ref, b2_ref, o_ref, acc_ref):
    @pl.when(pl.program_id(1) == 0)
    def _():
        acc_ref[...] = jnp.zeros_like(acc_ref)

    acc_ref[...] += jnp.dot(x_ref[...].astype(MXU_DTYPE), w1_ref[...],
                            preferred_element_type=jnp.float32)

    @pl.when(pl.program_id(1) == pl.num_programs(1) - 1)
    def _():
        h = jnp.maximum(acc_ref[...] + b1_ref[...], 0.0)
        y = jnp.dot(h.astype(MXU_DTYPE), w2_ref[...],
                    preferred_element_type=jnp.float32) + b2_ref[...]
        o_ref[...] = jnp.maximum(y, 0.0).astype(o_ref.dtype)


def trans_obj(obj_feats, p, *, max_tm=256, max_tk=512):
    B, N, K = obj_feats.shape
    D = p["w2"].shape[1]
    x2 = obj_feats.reshape(-1, K)
    M = x2.shape[0]
    tm = _pick_tile(M, max_tm, 8, min_blocks=2)
    tk = _pick_tile(K, max_tk, 128)
    out = pl.pallas_call(
        _trans_obj_kernel,
        out_shape=jax.ShapeDtypeStruct((M, D), obj_feats.dtype),
        grid=(M // tm, K // tk),
        in_specs=[
            pl.BlockSpec((tm, tk), lambda i, k: (i, k)),
            pl.BlockSpec((tk, D), lambda i, k: (k, 0)),
            pl.BlockSpec((1, D), lambda i, k: (0, 0)),
            pl.BlockSpec((D, D), lambda i, k: (0, 0)),
            pl.BlockSpec((1, D), lambda i, k: (0, 0)),
        ],
        out_specs=pl.BlockSpec((tm, D), lambda i, k: (i, 0)),
        scratch_shapes=[pltpu.VMEM((tm, D), jnp.float32)],
        compiler_params=_cparams(("parallel", "arbitrary")),
    )(x2, p["w1"], p["b1"], p["w2"], p["b2"])
    return out.reshape(B, N, D)


# ----------------------------------------------------------------------------
# Fused attention sublayers (one kernel per batch, all heads inside).
# ----------------------------------------------------------------------------
def _attend_heads(qkv_q, qkv_k, values, mask, n_heads, scale):
    """Per-head softmax attention; q/k come from a packed projection,
    `values` is a [N, D] array (projected V or the raw input)."""
    D = values.shape[-1]
    dk = D // n_heads
    ctx_heads = []
    for h in range(n_heads):
        q_h = qkv_q[:, h * dk:(h + 1) * dk]
        k_h = qkv_k[:, h * dk:(h + 1) * dk]
        v_h = values[:, h * dk:(h + 1) * dk]
        s = lax.dot_general(q_h.astype(MXU_DTYPE), k_h.astype(MXU_DTYPE),
                            (((1,), (1,)), ((), ())),
                            preferred_element_type=jnp.float32) * scale
        s = jnp.where(mask == 0.0, NEG_INF, s)          # bcast over query rows
        s = s - jnp.max(s, axis=-1, keepdims=True)
        p = jnp.exp(s)
        p = p * pl.reciprocal(jnp.sum(p, axis=-1, keepdims=True), approx=True)
        ctx_heads.append(jnp.dot(p.astype(MXU_DTYPE), v_h.astype(MXU_DTYPE),
                                 preferred_element_type=jnp.float32))
    return jnp.concatenate(ctx_heads, axis=-1)          # [N, D]


def _mha_x_kernel(x_ref, wqkv_ref, bqkv_ref, m_ref, wo_ref, bo_ref,
                  g_ref, bb_ref, o_ref, *, n_heads, scale, eps):
    x = x_ref[0]                                        # [N, D] f32
    D = x.shape[-1]
    qkv = jnp.dot(x.astype(MXU_DTYPE), wqkv_ref[...],
                  preferred_element_type=jnp.float32) + bqkv_ref[...]
    mask = m_ref[0]                                     # [1, N]
    ctx = _attend_heads(qkv[:, :D], qkv[:, D:2 * D], qkv[:, 2 * D:],
                        mask, n_heads, scale)
    y = jnp.dot(ctx.astype(MXU_DTYPE), wo_ref[...],
                preferred_element_type=jnp.float32) + bo_ref[...]
    s_out = x + y
    o_ref[0] = _layer_norm(s_out, g_ref[...], bb_ref[...], eps).astype(o_ref.dtype)


def _mha_o_kernel(x_ref, wqk_ref, bqk_ref, m_ref, g_ref, bb_ref, o_ref,
                  *, n_heads, scale, eps):
    # MultiHeadedAttention(v=0, output=0): no V projection, no output proj.
    o_in = x_ref[0]                                     # [N, D] f32
    D = o_in.shape[-1]
    qk = jnp.dot(o_in.astype(MXU_DTYPE), wqk_ref[...],
                 preferred_element_type=jnp.float32) + bqk_ref[...]
    mask = m_ref[0]
    ctx = _attend_heads(qk[:, :D], qk[:, D:], o_in, mask, n_heads, scale)
    s_out = o_in + ctx
    o_ref[0] = _layer_norm(s_out, g_ref[...], bb_ref[...], eps).astype(o_ref.dtype)


def mhatt_x_sublayer(x, mask, p, ln_g, ln_b, n_heads, *, eps=LN_EPS):
    B, N, D = x.shape
    scale = 1.0 / math.sqrt(D // n_heads)
    return pl.pallas_call(
        functools.partial(_mha_x_kernel, n_heads=n_heads, scale=scale, eps=eps),
        out_shape=jax.ShapeDtypeStruct((B, N, D), x.dtype),
        grid=(B,),
        in_specs=[
            pl.BlockSpec((1, N, D), lambda b: (b, 0, 0)),
            pl.BlockSpec((D, 3 * D), lambda b: (0, 0)),
            pl.BlockSpec((1, 3 * D), lambda b: (0, 0)),
            pl.BlockSpec((1, 1, N), lambda b: (b, 0, 0)),
            pl.BlockSpec((D, D), lambda b: (0, 0)),
            pl.BlockSpec((1, D), lambda b: (0, 0)),
            pl.BlockSpec((1, D), lambda b: (0, 0)),
            pl.BlockSpec((1, D), lambda b: (0, 0)),
        ],
        out_specs=pl.BlockSpec((1, N, D), lambda b: (b, 0, 0)),
        compiler_params=_cparams(("parallel",)),
    )(x, p["wqkv"], p["bqkv"], mask, p["wo"], p["bo"], ln_g, ln_b)


def mhatt_o_sublayer(o, obj_mask, p, ln_g, ln_b, n_heads, *, eps=LN_EPS):
    B, N, D = o.shape
    scale = 1.0 / math.sqrt(D // n_heads)
    return pl.pallas_call(
        functools.partial(_mha_o_kernel, n_heads=n_heads, scale=scale, eps=eps),
        out_shape=jax.ShapeDtypeStruct((B, N, D), o.dtype),
        grid=(B,),
        in_specs=[
            pl.BlockSpec((1, N, D), lambda b: (b, 0, 0)),
            pl.BlockSpec((D, 2 * D), lambda b: (0, 0)),
            pl.BlockSpec((1, 2 * D), lambda b: (0, 0)),
            pl.BlockSpec((1, 1, N), lambda b: (b, 0, 0)),
            pl.BlockSpec((1, D), lambda b: (0, 0)),
            pl.BlockSpec((1, D), lambda b: (0, 0)),
        ],
        out_specs=pl.BlockSpec((1, N, D), lambda b: (b, 0, 0)),
        compiler_params=_cparams(("parallel",)),
    )(o, p["wqk"], p["bqk"], obj_mask, ln_g, ln_b)


# ----------------------------------------------------------------------------
# Fused gate sublayer: gate projections + both gated reductions + both LNs.
#   sigmoid(cat([a,b]) @ W + c) == sigmoid(a @ W[:D] + b @ W[D:] + c)
# ----------------------------------------------------------------------------
def _gate_kernel(newx_ref, newo_ref, wx_ref, bx_ref, wo_ref, bo_ref, m_ref,
                 xg_g_ref, xg_b_ref, og_g_ref, og_b_ref,
                 ox_ref, oo_ref, *, eps):
    newx = newx_ref[0]                                  # [XN, D] f32
    newo = newo_ref[0]                                  # [ON, D] f32
    mat = m_ref[0]                                      # [XN, ON] f32 (0/1)
    D = newx.shape[-1]

    gx = jnp.dot(newx.astype(MXU_DTYPE), wx_ref[...],
                 preferred_element_type=jnp.float32) + bx_ref[...]   # [XN, 2D]
    go = jnp.dot(newo.astype(MXU_DTYPE), wo_ref[...],
                 preferred_element_type=jnp.float32) + bo_ref[...]   # [ON, 2D]
    gx_x2o, gx_o2x = gx[:, :D], gx[:, D:]
    go_x2o, go_o2x = go[:, :D], go[:, D:]

    m3 = mat[:, :, None]                                # [XN, ON, 1]
    # TODO(synk): at production sizes tile XN (f32 gate temporaries are
    # O(XN*ON*D)); at the shipped sizes they comfortably fit VMEM everywhere.
    # x2o[i] = sum_j sigmoid(gx_x2o[i] + go_x2o[j]) * M[i,j] * newo[j]
    gate_x = jax.nn.sigmoid(gx_x2o[:, None, :] + go_x2o[None, :, :])  # [XN,ON,D]
    x2o = jnp.sum(gate_x * m3 * newo[None, :, :], axis=1)             # [XN, D]
    # o2x[j] = sum_i sigmoid(gx_o2x[i] + go_o2x[j]) * M[i,j] * newx[i]
    gate_o = jax.nn.sigmoid(gx_o2x[:, None, :] + go_o2x[None, :, :])  # [XN,ON,D]
    o2x = jnp.sum(gate_o * m3 * newx[:, None, :], axis=0)             # [ON, D]

    ox_ref[0] = _layer_norm(newx + x2o, xg_g_ref[...], xg_b_ref[...],
                            eps).astype(ox_ref.dtype)
    oo_ref[0] = _layer_norm(newo + o2x, og_g_ref[...], og_b_ref[...],
                            eps).astype(oo_ref.dtype)


def gate_sublayer(newx, newo, matrix, lp, *, eps=LN_EPS):
    B, XN, D = newx.shape
    ON = newo.shape[1]
    xg_g, xg_b = lp["xgate"]
    og_g, og_b = lp["ogate"]
    return pl.pallas_call(
        functools.partial(_gate_kernel, eps=eps),
        out_shape=(jax.ShapeDtypeStruct((B, XN, D), newx.dtype),
                   jax.ShapeDtypeStruct((B, ON, D), newo.dtype)),
        grid=(B,),
        in_specs=[
            pl.BlockSpec((1, XN, D), lambda b: (b, 0, 0)),
            pl.BlockSpec((1, ON, D), lambda b: (b, 0, 0)),
            pl.BlockSpec((D, 2 * D), lambda b: (0, 0)),
            pl.BlockSpec((1, 2 * D), lambda b: (0, 0)),
            pl.BlockSpec((D, 2 * D), lambda b: (0, 0)),
            pl.BlockSpec((1, 2 * D), lambda b: (0, 0)),
            pl.BlockSpec((1, XN, ON), lambda b: (b, 0, 0)),
            pl.BlockSpec((1, D), lambda b: (0, 0)),
            pl.BlockSpec((1, D), lambda b: (0, 0)),
            pl.BlockSpec((1, D), lambda b: (0, 0)),
            pl.BlockSpec((1, D), lambda b: (0, 0)),
        ],
        out_specs=(pl.BlockSpec((1, XN, D), lambda b: (b, 0, 0)),
                   pl.BlockSpec((1, ON, D), lambda b: (b, 0, 0))),
        compiler_params=_cparams(("parallel",)),
    )(newx, newo, lp["gate_wx"], lp["gate_bx"], lp["gate_wo"], lp["gate_bo"],
      matrix, xg_g, xg_b, og_g, og_b)


# ----------------------------------------------------------------------------
# Fused FFN sublayer: LayerNorm(x + W2(relu(W1 x + b1)) + b2)
# ----------------------------------------------------------------------------
def _ffn_ln_kernel(x_ref, w1_ref, b1_ref, w2_ref, b2_ref, g_ref, bb_ref, o_ref,
                   *, eps):
    x = x_ref[...]
    h = jnp.dot(x.astype(MXU_DTYPE), w1_ref[...],
                preferred_element_type=jnp.float32) + b1_ref[...]
    h = jnp.maximum(h, 0.0)
    y = jnp.dot(h.astype(MXU_DTYPE), w2_ref[...],
                preferred_element_type=jnp.float32) + b2_ref[...]
    s = x.astype(jnp.float32) + y
    o_ref[...] = _layer_norm(s, g_ref[...], bb_ref[...], eps).astype(o_ref.dtype)


def ffn_ln(x, p, gamma, beta, *, max_tm=256, eps=LN_EPS):
    lead = x.shape[:-1]
    D = x.shape[-1]
    H = p["w1"].shape[1]
    x2 = x.reshape(-1, D)
    M = x2.shape[0]
    tm = _pick_tile(M, max_tm, 8, min_blocks=2)
    out = pl.pallas_call(
        functools.partial(_ffn_ln_kernel, eps=eps),
        out_shape=jax.ShapeDtypeStruct((M, D), x.dtype),
        grid=(M // tm,),
        in_specs=[
            pl.BlockSpec((tm, D), lambda i: (i, 0)),
            pl.BlockSpec((D, H), lambda i: (0, 0)),
            pl.BlockSpec((1, H), lambda i: (0, 0)),
            pl.BlockSpec((H, D), lambda i: (0, 0)),
            pl.BlockSpec((1, D), lambda i: (0, 0)),
            pl.BlockSpec((1, D), lambda i: (0, 0)),
            pl.BlockSpec((1, D), lambda i: (0, 0)),
        ],
        out_specs=pl.BlockSpec((tm, D), lambda i: (i, 0)),
        compiler_params=_cparams(("parallel",)),
    )(x2, p["w1"], p["b1"], p["w2"], p["b2"], gamma, beta)
    return out.reshape(*lead, D)


# ----------------------------------------------------------------------------
# Full forward
# ----------------------------------------------------------------------------
def gat_encoder_forward(params, x, mask, obj_feats, obj_mask, matrix,
                        n_heads, n_layers):
    o = trans_obj(obj_feats, params["trans_obj"])
    for i in range(n_layers):
        lp = params["layers"][i]
        newx = mhatt_x_sublayer(x, mask, lp["mhatt_x"],
                                *lp["res4mes_x"], n_heads)
        newo = mhatt_o_sublayer(o, obj_mask, lp["mhatt_o"],
                                *lp["res4mes_o"], n_heads)
        x_gated, o_gated = gate_sublayer(newx, newo, matrix, lp)
        x = ffn_ln(x_gated, lp["ffn_x"], *lp["res4ffn_x"])
        o = ffn_ln(o_gated, lp["ffn_o"], *lp["res4ffn_o"])
    return x, o


# ----------------------------------------------------------------------------
# Deterministic parameter initialization (weights pre-packed, bf16 storage)
# ----------------------------------------------------------------------------
def init_params(key, d_model, d_hidden, n_heads, n_layers, objcnndim):
    kit = iter(jax.random.split(key, 1024))

    def lin(kin, kout):
        w = jax.random.normal(next(kit), (kin, kout), jnp.float32) * (kin ** -0.5)
        b = jax.random.normal(next(kit), (kout,), jnp.float32) * 0.01
        return w, b

    def pack_w(*ws):
        return jnp.concatenate(ws, axis=1).astype(WEIGHT_DTYPE)

    def pack_b(*bs):
        return jnp.concatenate(bs).reshape(1, -1).astype(jnp.float32)

    def ln_params():
        return (jnp.ones((1, d_model), jnp.float32),
                jnp.zeros((1, d_model), jnp.float32))

    params = {}
    w1, b1 = lin(objcnndim, d_model)
    w2, b2 = lin(d_model, d_model)
    params["trans_obj"] = dict(w1=w1.astype(WEIGHT_DTYPE), b1=b1.reshape(1, -1),
                               w2=w2.astype(WEIGHT_DTYPE), b2=b2.reshape(1, -1))

    layers = []
    for _ in range(n_layers):
        lp = {}
        wq, bq = lin(d_model, d_model)
        wk, bk = lin(d_model, d_model)
        wv, bv = lin(d_model, d_model)
        wo, bo = lin(d_model, d_model)
        lp["mhatt_x"] = dict(wqkv=pack_w(wq, wk, wv), bqkv=pack_b(bq, bk, bv),
                             wo=wo.astype(WEIGHT_DTYPE), bo=bo.reshape(1, -1))
        wq, bq = lin(d_model, d_model)
        wk, bk = lin(d_model, d_model)
        lp["mhatt_o"] = dict(wqk=pack_w(wq, wk), bqk=pack_b(bq, bk))
        lp["res4mes_x"], lp["res4mes_o"] = ln_params(), ln_params()
        lp["res4ffn_x"], lp["res4ffn_o"] = ln_params(), ln_params()
        lp["xgate"], lp["ogate"] = ln_params(), ln_params()
        w1, b1 = lin(d_model, d_hidden)
        w2, b2 = lin(d_hidden, d_model)
        lp["ffn_x"] = dict(w1=w1.astype(WEIGHT_DTYPE), b1=b1.reshape(1, -1),
                           w2=w2.astype(WEIGHT_DTYPE), b2=b2.reshape(1, -1))
        w1, b1 = lin(d_model, d_hidden)
        w2, b2 = lin(d_hidden, d_model)
        lp["ffn_o"] = dict(w1=w1.astype(WEIGHT_DTYPE), b1=b1.reshape(1, -1),
                           w2=w2.astype(WEIGHT_DTYPE), b2=b2.reshape(1, -1))
        # Pre-packed gate weights (split of the concat-linear):
        #   gx = newx @ [x2o_w[:D] | o2x_w[:D]] + [x2o_b | 0]
        #   go = newo @ [x2o_w[D:] | o2x_w[D:]] + [0 | o2x_b]
        x2o_w, x2o_b = lin(2 * d_model, d_model)
        o2x_w, o2x_b = lin(2 * d_model, d_model)
        lp["gate_wx"] = pack_w(x2o_w[:d_model], o2x_w[:d_model])
        lp["gate_bx"] = pack_b(x2o_b, jnp.zeros_like(o2x_b))
        lp["gate_wo"] = pack_w(x2o_w[d_model:], o2x_w[d_model:])
        lp["gate_bo"] = pack_b(jnp.zeros_like(x2o_b), o2x_b)
        layers.append(lp)
    params["layers"] = layers
    return params


# ----------------------------------------------------------------------------
if __name__ == "__main__":
    B, XN, OBJN = 2, 8, 4
    d_model, d_hidden, n_heads, n_layers = 32, 64, 4, 2
    objcnndim = 2048  # hardcoded in the PyTorch module

    key = jax.random.PRNGKey(0)
    k1, k2, k3, k4 = jax.random.split(key, 4)

    x = jax.random.normal(k1, (B, XN, d_model), jnp.float32)
    obj_feats = jax.random.normal(k2, (B, OBJN, objcnndim), jnp.float32)
    mask = jnp.ones((B, 1, XN), jnp.float32).at[1, 0, 6:].set(0.0)
    obj_mask = jnp.ones((B, 1, OBJN), jnp.float32).at[1, 0, 3:].set(0.0)
    matrix = (jax.random.uniform(k3, (B, XN, OBJN)) > 0.5).astype(jnp.float32)

    params = init_params(k4, d_model, d_hidden, n_heads, n_layers, objcnndim)

    fwd = jax.jit(functools.partial(gat_encoder_forward,
                                    n_heads=n_heads, n_layers=n_layers))
    x_out, o_out = fwd(params, x, mask, obj_feats, obj_mask, matrix)
    jax.block_until_ready((x_out, o_out))

    assert x_out.shape == (B, XN, d_model)
    assert o_out.shape == (B, OBJN, d_model)
    assert bool(jnp.all(jnp.isfinite(x_out))) and bool(jnp.all(jnp.isfinite(o_out)))
    print("KERNEL_OK")
</pallas_src>

<mosaic_0001>
module attributes {stable_mosaic.version = 11 : i64} {
  func.func @_trans_obj_kernel(%arg0: i32, %arg1: i32, %arg2: memref<8x512xf32, #tpu.memory_space<vmem>>, %arg3: memref<512x32xbf16, #tpu.memory_space<vmem>>, %arg4: memref<1x32xf32, #tpu.memory_space<vmem>>, %arg5: memref<32x32xbf16, #tpu.memory_space<vmem>>, %arg6: memref<1x32xf32, #tpu.memory_space<vmem>>, %arg7: memref<8x32xf32, #tpu.memory_space<vmem>>, %arg8: memref<8x32xf32, #tpu.memory_space<vmem>>) attributes {dimension_semantics = [#tpu.dimension_semantics<parallel>, #tpu.dimension_semantics<arbitrary>], iteration_bounds = array<i64: 1, 4>, scalar_prefetch = 0 : i64, scratch_operands = 1 : i64, tpu.core_type = #tpu.core_type<tc>, window_params = [{transform_indices = @transform_0, window_bounds = array<i64: 8, 512>}, {transform_indices = @transform_1, window_bounds = array<i64: 512, 32>}, {pipeline_mode = #tpu.pipeline_mode<synchronous>, transform_indices = @transform_2, window_bounds = array<i64: 1, 32>}, {pipeline_mode = #tpu.pipeline_mode<synchronous>, transform_indices = @transform_3, window_bounds = array<i64: 32, 32>}, {pipeline_mode = #tpu.pipeline_mode<synchronous>, transform_indices = @transform_4, window_bounds = array<i64: 1, 32>}, {transform_indices = @transform_5, window_bounds = array<i64: 8, 32>}]} {
    %c0_i32 = arith.constant 0 : i32
    %0 = arith.cmpi eq, %arg1, %c0_i32 : i32
    %1 = arith.extui %0 : i1 to i32
    %c0_i32_0 = arith.constant 0 : i32
    %2 = arith.cmpi ne, %1, %c0_i32_0 : i32
    scf.if %2 {
      %cst_9 = arith.constant 0.000000e+00 : f32
      %13 = vector.broadcast %cst_9 : f32 to vector<8x32xf32>
      %c0_10 = arith.constant 0 : index
      %c0_11 = arith.constant 0 : index
      %14 = vector.load %arg8[%c0_10, %c0_11] : memref<8x32xf32, #tpu.memory_space<vmem>>, vector<8x32xf32>
      tpu.vector_store %arg8[%c0_10, %c0_11], %13 {strides = array<i32>} : memref<8x32xf32, #tpu.memory_space<vmem>>, vector<8x32xf32>,
    } else {
    }
    %c0 = arith.constant 0 : index
    %c0_1 = arith.constant 0 : index
    %3 = vector.load %arg8[%c0, %c0_1] : memref<8x32xf32, #tpu.memory_space<vmem>>, vector<8x32xf32>
    %c0_2 = arith.constant 0 : index
    %c0_3 = arith.constant 0 : index
    %4 = vector.load %arg2[%c0_2, %c0_3] : memref<8x512xf32, #tpu.memory_space<vmem>>, vector<8x512xf32>
    %5 = arith.truncf %4 : vector<8x512xf32> to vector<8x512xbf16>
    %c0_4 = arith.constant 0 : index
    %c0_5 = arith.constant 0 : index
    %6 = vector.load %arg3[%c0_4, %c0_5] : memref<512x32xbf16, #tpu.memory_space<vmem>>, vector<512x32xbf16>
    %cst = arith.constant dense<0.000000e+00> : vector<8x32xf32>
    %7 = tpu.matmul %5, %6, %cst {dimension_numbers = #tpu.dot_dimension_numbers<[1], [0], [0], [1], [0, 0, 1, 1], [], []>} : vector<8x512xbf16>, vector<512x32xbf16>, vector<8x32xf32> -> vector<8x32xf32>
    %8 = arith.addf %3, %7 : vector<8x32xf32>
    %c0_6 = arith.constant 0 : index
    %c0_7 = arith.constant 0 : index
    %9 = vector.load %arg8[%c0_6, %c0_7] : memref<8x32xf32, #tpu.memory_space<vmem>>, vector<8x32xf32>
    tpu.vector_store %arg8[%c0_6, %c0_7], %8 {strides = array<i32>} : memref<8x32xf32, #tpu.memory_space<vmem>>, vector<8x32xf32>,
    %c3_i32 = arith.constant 3 : i32
    %10 = arith.cmpi eq, %arg1, %c3_i32 : i32
    %11 = arith.extui %10 : i1 to i32
    %c0_i32_8 = arith.constant 0 : i32
    %12 = arith.cmpi ne, %11, %c0_i32_8 : i32
    scf.if %12 {
      %c0_9 = arith.constant 0 : index
      %c0_10 = arith.constant 0 : index
      %13 = vector.load %arg8[%c0_9, %c0_10] : memref<8x32xf32, #tpu.memory_space<vmem>>, vector<8x32xf32>
      %c0_11 = arith.constant 0 : index
      %c0_12 = arith.constant 0 : index
      %14 = vector.load %arg4[%c0_11, %c0_12] : memref<1x32xf32, #tpu.memory_space<vmem>>, vector<1x32xf32>
      %15 = vector.broadcast %14 : vector<1x32xf32> to vector<8x32xf32>
      %16 = arith.addf %13, %15 : vector<8x32xf32>
      %cst_13 = arith.constant 0.000000e+00 : f32
      %17 = vector.broadcast %cst_13 : f32 to vector<8x32xf32>
      %18 = arith.maximumf %16, %17 : vector<8x32xf32>
      %19 = arith.truncf %18 : vector<8x32xf32> to vector<8x32xbf16>
      %c0_14 = arith.constant 0 : index
      %c0_15 = arith.constant 0 : index
      %20 = vector.load %arg5[%c0_14, %c0_15] : memref<32x32xbf16, #tpu.memory_space<vmem>>, vector<32x32xbf16>
      %cst_16 = arith.constant dense<0.000000e+00> : vector<8x32xf32>
      %21 = tpu.matmul %19, %20, %cst_16 {dimension_numbers = #tpu.dot_dimension_numbers<[1], [0], [0], [1], [0, 0, 1, 1], [], []>} : vector<8x32xbf16>, vector<32x32xbf16>, vector<8x32xf32> -> vector<8x32xf32>
      %c0_17 = arith.constant 0 : index
      %c0_18 = arith.constant 0 : index
      %22 = vector.load %arg6[%c0_17, %c0_18] : memref<1x32xf32, #tpu.memory_space<vmem>>, vector<1x32xf32>
      %23 = vector.broadcast %22 : vector<1x32xf32> to vector<8x32xf32>
      %24 = arith.addf %21, %23 : vector<8x32xf32>
      %cst_19 = arith.constant 0.000000e+00 : f32
      %25 = vector.broadcast %cst_19 : f32 to vector<8x32xf32>
      %26 = arith.maximumf %24, %25 : vector<8x32xf32>
      %c0_20 = arith.constant 0 : index
      %c0_21 = arith.constant 0 : index
      %27 = vector.load %arg7[%c0_20, %c0_21] : memref<8x32xf32, #tpu.memory_space<vmem>>, vector<8x32xf32>
      tpu.vector_store %arg7[%c0_20, %c0_21], %26 {strides = array<i32>} : memref<8x32xf32, #tpu.memory_space<vmem>>, vector<8x32xf32>,
    } else {
    }
    return
  }
  func.func @transform_0(%arg0: i32, %arg1: i32) -> (i32, i32) {
    %c0_i32 = arith.constant 0 : i32
    return %arg0, %arg1 : i32, i32
  }
  func.func @transform_1(%arg0: i32, %arg1: i32) -> (i32, i32) {
    %c0_i32 = arith.constant 0 : i32
    %c0_i32_0 = arith.constant 0 : i32
    return %arg1, %c0_i32 : i32, i32
  }
  func.func @transform_2(%arg0: i32, %arg1: i32) -> (i32, i32) {
    %c0_i32 = arith.constant 0 : i32
    %c0_i32_0 = arith.constant 0 : i32
    %c0_i32_1 = arith.constant 0 : i32
    return %c0_i32, %c0_i32_0 : i32, i32
  }
  func.func @transform_3(%arg0: i32, %arg1: i32) -> (i32, i32) {
    %c0_i32 = arith.constant 0 : i32
    %c0_i32_0 = arith.constant 0 : i32
    %c0_i32_1 = arith.constant 0 : i32
    return %c0_i32, %c0_i32_0 : i32, i32
  }
  func.func @transform_4(%arg0: i32, %arg1: i32) -> (i32, i32) {
    %c0_i32 = arith.constant 0 : i32
    %c0_i32_0 = arith.constant 0 : i32
    %c0_i32_1 = arith.constant 0 : i32
    return %c0_i32, %c0_i32_0 : i32, i32
  }
  func.func @transform_5(%arg0: i32, %arg1: i32) -> (i32, i32) {
    %c0_i32 = arith.constant 0 : i32
    %c0_i32_0 = arith.constant 0 : i32
    return %arg0, %c0_i32 : i32, i32
  }
}

module attributes {stable_mosaic.version = 11 : i64} {
  func.func @_mha_o_kernel(%arg0: i32, %arg1: memref<1x4x32xf32, #tpu.memory_space<vmem>>, %arg2: memref<32x64xbf16, #tpu.memory_space<vmem>>, %arg3: memref<1x64xf32, #tpu.memory_space<vmem>>, %arg4: memref<1x1x4xf32, #tpu.memory_space<vmem>>, %arg5: memref<1x32xf32, #tpu.memory_space<vmem>>, %arg6: memref<1x32xf32, #tpu.memory_space<vmem>>, %arg7: memref<1x4x32xf32, #tpu.memory_space<vmem>>) attributes {dimension_semantics = [#tpu.dimension_semantics<parallel>], iteration_bounds = array<i64: 2>, scalar_prefetch = 0 : i64, scratch_operands = 0 : i64, tpu.core_type = #tpu.core_type<tc>, window_params = [{transform_indices = @transform_0, window_bounds = array<i64: 1, 4, 32>}, {pipeline_mode = #tpu.pipeline_mode<synchronous>, transform_indices = @transform_1, window_bounds = array<i64: 32, 64>}, {pipeline_mode = #tpu.pipeline_mode<synchronous>, transform_indices = @transform_2, window_bounds = array<i64: 1, 64>}, {transform_indices = @transform_3, window_bounds = array<i64: 1, 1, 4>}, {pipeline_mode = #tpu.pipeline_mode<synchronous>, transform_indices = @transform_4, window_bounds = array<i64: 1, 32>}, {pipeline_mode = #tpu.pipeline_mode<synchronous>, transform_indices = @transform_5, window_bounds = array<i64: 1, 32>}, {transform_indices = @transform_6, window_bounds = array<i64: 1, 4, 32>}]} {
    %c0 = arith.constant 0 : index
    %c0_0 = arith.constant 0 : index
    %c0_1 = arith.constant 0 : index
    %0 = vector.load %arg1[%c0, %c0_0, %c0_1] : memref<1x4x32xf32, #tpu.memory_space<vmem>>, vector<1x4x32xf32>
    %1 = vector.shape_cast %0 : vector<1x4x32xf32> to vector<4x32xf32>
    %2 = arith.truncf %1 : vector<4x32xf32> to vector<4x32xbf16>
    %c0_2 = arith.constant 0 : index
    %c0_3 = arith.constant 0 : index
    %3 = vector.load %arg2[%c0_2, %c0_3] : memref<32x64xbf16, #tpu.memory_space<vmem>>, vector<32x64xbf16>
    %cst = arith.constant dense<0.000000e+00> : vector<4x64xf32>
    %4 = tpu.matmul %2, %3, %cst {dimension_numbers = #tpu.dot_dimension_numbers<[1], [0], [0], [1], [0, 0, 1, 1], [], []>} : vector<4x32xbf16>, vector<32x64xbf16>, vector<4x64xf32> -> vector<4x64xf32>
    %c0_4 = arith.constant 0 : index
    %c0_5 = arith.constant 0 : index
    %5 = vector.load %arg3[%c0_4, %c0_5] : memref<1x64xf32, #tpu.memory_space<vmem>>, vector<1x64xf32>
    %6 = vector.broadcast %5 : vector<1x64xf32> to vector<4x64xf32>
    %7 = arith.addf %4, %6 : vector<4x64xf32>
    %c0_6 = arith.constant 0 : index
    %c0_7 = arith.constant 0 : index
    %c0_8 = arith.constant 0 : index
    %8 = vector.load %arg4[%c0_6, %c0_7, %c0_8] : memref<1x1x4xf32, #tpu.memory_space<vmem>>, vector<1x1x4xf32>
    %9 = vector.shape_cast %8 : vector<1x1x4xf32> to vector<1x4xf32>
    %10 = vector.extract_strided_slice %7 {offsets = [0, 0], sizes = [4, 32], strides = [1, 1]} : vector<4x64xf32> to vector<4x32xf32>
    %11 = vector.extract_strided_slice %7 {offsets = [0, 32], sizes = [4, 32], strides = [1, 1]} : vector<4x64xf32> to vector<4x32xf32>
    %12 = vector.extract_strided_slice %10 {offsets = [0, 0], sizes = [4, 8], strides = [1, 1]} : vector<4x32xf32> to vector<4x8xf32>
    %13 = vector.extract_strided_slice %11 {offsets = [0, 0], sizes = [4, 8], strides = [1, 1]} : vector<4x32xf32> to vector<4x8xf32>
    %14 = vector.extract_strided_slice %1 {offsets = [0, 0], sizes = [4, 8], strides = [1, 1]} : vector<4x32xf32> to vector<4x8xf32>
    %15 = arith.truncf %12 : vector<4x8xf32> to vector<4x8xbf16>
    %16 = arith.truncf %13 : vector<4x8xf32> to vector<4x8xbf16>
    %cst_9 = arith.constant dense<0.000000e+00> : vector<4x4xf32>
    %17 = tpu.matmul %15, %16, %cst_9 {dimension_numbers = #tpu.dot_dimension_numbers<[1], [1], [0], [0], [0, 0, 1, 0], [], []>} : vector<4x8xbf16>, vector<4x8xbf16>, vector<4x4xf32> -> vector<4x4xf32>
    %cst_10 = arith.constant 0.353553385 : f32
    %18 = vector.broadcast %cst_10 : f32 to vector<4x4xf32>
    %19 = arith.mulf %17, %18 : vector<4x4xf32>
    %cst_11 = arith.constant 0.000000e+00 : f32
    %20 = vector.broadcast %cst_11 : f32 to vector<1x4xf32>
    %21 = arith.cmpf oeq, %9, %20 : vector<1x4xf32>
    %cst_12 = arith.constant -1.000000e+09 : f32
    %22 = vector.shape_cast %21 : vector<1x4xi1> to vector<1x4xi1>
    %23 = vector.broadcast %22 : vector<1x4xi1> to vector<4x4xi1>
    %24 = vector.broadcast %cst_12 : f32 to vector<4x4xf32>
    %25 = arith.select %23, %24, %19 : vector<4x4xi1>, vector<4x4xf32>
    %cst_13 = arith.constant dense<0xFF800000> : vector<4xf32>
    %26 = vector.multi_reduction <maximumf>, %25, %cst_13 [1] : vector<4x4xf32> to vector<4xf32>
    %27 = vector.shape_cast %26 : vector<4xf32> to vector<4x1xf32>
    %28 = vector.broadcast %27 : vector<4x1xf32> to vector<4x4xf32>
    %29 = arith.subf %25, %28 : vector<4x4xf32>
    %30 = math.exp %29 : vector<4x4xf32>
    %cst_14 = arith.constant dense<0.000000e+00> : vector<4xf32>
    %31 = vector.multi_reduction <add>, %30, %cst_14 [1] : vector<4x4xf32> to vector<4xf32>
    %32 = vector.shape_cast %31 : vector<4xf32> to vector<4x1xf32>
    %33 = tpu.reciprocal %32 {approx = true} : vector<4x1xf32> -> vector<4x1xf32>
    %34 = vector.broadcast %33 : vector<4x1xf32> to vector<4x4xf32>
    %35 = arith.mulf %30, %34 : vector<4x4xf32>
    %36 = arith.truncf %35 : vector<4x4xf32> to vector<4x4xbf16>
    %37 = arith.truncf %14 : vector<4x8xf32> to vector<4x8xbf16>
    %cst_15 = arith.constant dense<0.000000e+00> : vector<4x8xf32>
    %38 = tpu.matmul %36, %37, %cst_15 {dimension_numbers = #tpu.dot_dimension_numbers<[1], [0], [0], [1], [0, 0, 1, 1], [], []>} : vector<4x4xbf16>, vector<4x8xbf16>, vector<4x8xf32> -> vector<4x8xf32>
    %39 = vector.extract_strided_slice %10 {offsets = [0, 8], sizes = [4, 8], strides = [1, 1]} : vector<4x32xf32> to vector<4x8xf32>
    %40 = vector.extract_strided_slice %11 {offsets = [0, 8], sizes = [4, 8], strides = [1, 1]} : vector<4x32xf32> to vector<4x8xf32>
    %41 = vector.extract_strided_slice %1 {offsets = [0, 8], sizes = [4, 8], strides = [1, 1]} : vector<4x32xf32> to vector<4x8xf32>
    %42 = arith.truncf %39 : vector<4x8xf32> to vector<4x8xbf16>
    %43 = arith.truncf %40 : vector<4x8xf32> to vector<4x8xbf16>
    %cst_16 = arith.constant dense<0.000000e+00> : vector<4x4xf32>
    %44 = tpu.matmul %42, %43, %cst_16 {dimension_numbers = #tpu.dot_dimension_numbers<[1], [1], [0], [0], [0, 0, 1, 0], [], []>} : vector<4x8xbf16>, vector<4x8xbf16>, vector<4x4xf32> -> vector<4x4xf32>
    %cst_17 = arith.constant 0.353553385 : f32
    %45 = vector.broadcast %cst_17 : f32 to vector<4x4xf32>
    %46 = arith.mulf %44, %45 : vector<4x4xf32>
    %cst_18 = arith.constant 0.000000e+00 : f32
    %47 = vector.broadcast %cst_18 : f32 to vector<1x4xf32>
    %48 = arith.cmpf oeq, %9, %47 : vector<1x4xf32>
    %cst_19 = arith.constant -1.000000e+09 : f32
    %49 = vector.shape_cast %48 : vector<1x4xi1> to vector<1x4xi1>
    %50 = vector.broadcast %49 : vector<1x4xi1> to vector<4x4xi1>
    %51 = vector.broadcast %cst_19 : f32 to vector<4x4xf32>
    %52 = arith.select %50, %51, %46 : vector<4x4xi1>, vector<4x4xf32>
    %cst_20 = arith.constant dense<0xFF800000> : vector<4xf32>
    %53 = vector.multi_reduction <maximumf>, %52, %cst_20 [1] : vector<4x4xf32> to vector<4xf32>
    %54 = vector.shape_cast %53 : vector<4xf32> to vector<4x1xf32>
    %55 = vector.broadcast %54 : vector<4x1xf32> to vector<4x4xf32>
    %56 = arith.subf %52, %55 : vector<4x4xf32>
    %57 = math.exp %56 : vector<4x4xf32>
    %cst_21 = arith.constant dense<0.000000e+00> : vector<4xf32>
    %58 = vector.multi_reduction <add>, %57, %cst_21 [1] : vector<4x4xf32> to vector<4xf32>
    %59 = vector.shape_cast %58 : vector<4xf32> to vector<4x1xf32>
    %60 = tpu.reciprocal %59 {approx = true} : vector<4x1xf32> -> vector<4x1xf32>
    %61 = vector.broadcast %60 : vector<4x1xf32> to vector<4x4xf32>
    %62 = arith.mulf %57, %61 : vector<4x4xf32>
    %63 = arith.truncf %62 : vector<4x4xf32> to vector<4x4xbf16>
    %64 = arith.truncf %41 : vector<4x8xf32> to vector<4x8xbf16>
    %cst_22 = arith.constant dense<0.000000e+00> : vector<4x8xf32>
    %65 = tpu.matmul %63, %64, %cst_22 {dimension_numbers = #tpu.dot_dimension_numbers<[1], [0], [0], [1], [0, 0, 1, 1], [], []>} : vector<4x4xbf16>, vector<4x8xbf16>, vector<4x8xf32> -> vector<4x8xf32>
    %66 = vector.extract_strided_slice %10 {offsets = [0, 16], sizes = [4, 8], strides = [1, 1]} : vector<4x32xf32> to vector<4x8xf32>
    %67 = vector.extract_strided_slice %11 {offsets = [0, 16], sizes = [4, 8], strides = [1, 1]} : vector<4x32xf32> to vector<4x8xf32>
    %68 = vector.extract_strided_slice %1 {offsets = [0, 16], sizes = [4, 8], strides = [1, 1]} : vector<4x32xf32> to vector<4x8xf32>
    %69 = arith.truncf %66 : vector<4x8xf32> to vector<4x8xbf16>
    %70 = arith.truncf %67 : vector<4x8xf32> to vector<4x8xbf16>
    %cst_23 = arith.constant dense<0.000000e+00> : vector<4x4xf32>
    %71 = tpu.matmul %69, %70, %cst_23 {dimension_numbers = #tpu.dot_dimension_numbers<[1], [1], [0], [0], [0, 0, 1, 0], [], []>} : vector<4x8xbf16>, vector<4x8xbf16>, vector<4x4xf32> -> vector<4x4xf32>
    %cst_24 = arith.constant 0.353553385 : f32
    %72 = vector.broadcast %cst_24 : f32 to vector<4x4xf32>
    %73 = arith.mulf %71, %72 : vector<4x4xf32>
    %cst_25 = arith.constant 0.000000e+00 : f32
    %74 = vector.broadcast %cst_25 : f32 to vector<1x4xf32>
    %75 = arith.cmpf oeq, %9, %74 : vector<1x4xf32>
    %cst_26 = arith.constant -1.000000e+09 : f32
    %76 = vector.shape_cast %75 : vector<1x4xi1> to vector<1x4xi1>
    %77 = vector.broadcast %76 : vector<1x4xi1> to vector<4x4xi1>
    %78 = vector.broadcast %cst_26 : f32 to vector<4x4xf32>
    %79 = arith.select %77, %78, %73 : vector<4x4xi1>, vector<4x4xf32>
    %cst_27 = arith.constant dense<0xFF800000> : vector<4xf32>
    %80 = vector.multi_reduction <maximumf>, %79, %cst_27 [1] : vector<4x4xf32> to vector<4xf32>
    %81 = vector.shape_cast %80 : vector<4xf32> to vector<4x1xf32>
    %82 = vector.broadcast %81 : vector<4x1xf32> to vector<4x4xf32>
    %83 = arith.subf %79, %82 : vector<4x4xf32>
    %84 = math.exp %83 : vector<4x4xf32>
    %cst_28 = arith.constant dense<0.000000e+00> : vector<4xf32>
    %85 = vector.multi_reduction <add>, %84, %cst_28 [1] : vector<4x4xf32> to vector<4xf32>
    %86 = vector.shape_cast %85 : vector<4xf32> to vector<4x1xf32>
    %87 = tpu.reciprocal %86 {approx = true} : vector<4x1xf32> -> vector<4x1xf32>
    %88 = vector.broadcast %87 : vector<4x1xf32> to vector<4x4xf32>
    %89 = arith.mulf %84, %88 : vector<4x4xf32>
    %90 = arith.truncf %89 : vector<4x4xf32> to vector<4x4xbf16>
    %91 = arith.truncf %68 : vector<4x8xf32> to vector<4x8xbf16>
    %cst_29 = arith.constant dense<0.000000e+00> : vector<4x8xf32>
    %92 = tpu.matmul %90, %91, %cst_29 {dimension_numbers = #tpu.dot_dimension_numbers<[1], [0], [0], [1], [0, 0, 1, 1], [], []>} : vector<4x4xbf16>, vector<4x8xbf16>, vector<4x8xf32> -> vector<4x8xf32>
    %93 = vector.extract_strided_slice %10 {offsets = [0, 24], sizes = [4, 8], strides = [1, 1]} : vector<4x32xf32> to vector<4x8xf32>
    %94 = vector.extract_strided_slice %11 {offsets = [0, 24], sizes = [4, 8], strides = [1, 1]} : vector<4x32xf32> to vector<4x8xf32>
    %95 = vector.extract_strided_slice %1 {offsets = [0, 24], sizes = [4, 8], strides = [1, 1]} : vector<4x32xf32> to vector<4x8xf32>
    %96 = arith.truncf %93 : vector<4x8xf32> to vector<4x8xbf16>
    %97 = arith.truncf %94 : vector<4x8xf32> to vector<4x8xbf16>
    %cst_30 = arith.constant dense<0.000000e+00> : vector<4x4xf32>
    %98 = tpu.matmul %96, %97, %cst_30 {dimension_numbers = #tpu.dot_dimension_numbers<[1], [1], [0], [0], [0, 0, 1, 0], [], []>} : vector<4x8xbf16>, vector<4x8xbf16>, vector<4x4xf32> -> vector<4x4xf32>
    %cst_31 = arith.constant 0.353553385 : f32
    %99 = vector.broadcast %cst_31 : f32 to vector<4x4xf32>
    %100 = arith.mulf %98, %99 : vector<4x4xf32>
    %cst_32 = arith.constant 0.000000e+00 : f32
    %101 = vector.broadcast %cst_32 : f32 to vector<1x4xf32>
    %102 = arith.cmpf oeq, %9, %101 : vector<1x4xf32>
    %cst_33 = arith.constant -1.000000e+09 : f32
    %103 = vector.shape_cast %102 : vector<1x4xi1> to vector<1x4xi1>
    %104 = vector.broadcast %103 : vector<1x4xi1> to vector<4x4xi1>
    %105 = vector.broadcast %cst_33 : f32 to vector<4x4xf32>
    %106 = arith.select %104, %105, %100 : vector<4x4xi1>, vector<4x4xf32>
    %cst_34 = arith.constant dense<0xFF800000> : vector<4xf32>
    %107 = vector.multi_reduction <maximumf>, %106, %cst_34 [1] : vector<4x4xf32> to vector<4xf32>
    %108 = vector.shape_cast %107 : vector<4xf32> to vector<4x1xf32>
    %109 = vector.broadcast %108 : vector<4x1xf32> to vector<4x4xf32>
    %110 = arith.subf %106, %109 : vector<4x4xf32>
    %111 = math.exp %110 : vector<4x4xf32>
    %cst_35 = arith.constant dense<0.000000e+00> : vector<4xf32>
    %112 = vector.multi_reduction <add>, %111, %cst_35 [1] : vector<4x4xf32> to vector<4xf32>
    %113 = vector.shape_cast %112 : vector<4xf32> to vector<4x1xf32>
    %114 = tpu.reciprocal %113 {approx = true} : vector<4x1xf32> -> vector<4x1xf32>
    %115 = vector.broadcast %114 : vector<4x1xf32> to vector<4x4xf32>
    %116 = arith.mulf %111, %115 : vector<4x4xf32>
    %117 = arith.truncf %116 : vector<4x4xf32> to vector<4x4xbf16>
    %118 = arith.truncf %95 : vector<4x8xf32> to vector<4x8xbf16>
    %cst_36 = arith.constant dense<0.000000e+00> : vector<4x8xf32>
    %119 = tpu.matmul %117, %118, %cst_36 {dimension_numbers = #tpu.dot_dimension_numbers<[1], [0], [0], [1], [0, 0, 1, 1], [], []>} : vector<4x4xbf16>, vector<4x8xbf16>, vector<4x8xf32> -> vector<4x8xf32>
    %120 = tpu.concatenate %38, %65, %92, %119 in 1 : vector<4x8xf32>, vector<4x8xf32>, vector<4x8xf32>, vector<4x8xf32> -> vector<4x32xf32>
    %121 = arith.addf %1, %120 : vector<4x32xf32>
    %c0_37 = arith.constant 0 : index
    %c0_38 = arith.constant 0 : index
    %122 = vector.load %arg5[%c0_37, %c0_38] : memref<1x32xf32, #tpu.memory_space<vmem>>, vector<1x32xf32>
    %c0_39 = arith.constant 0 : index
    %c0_40 = arith.constant 0 : index
    %123 = vector.load %arg6[%c0_39, %c0_40] : memref<1x32xf32, #tpu.memory_space<vmem>>, vector<1x32xf32>
    %cst_41 = arith.constant dense<0.000000e+00> : vector<4xf32>
    %124 = vector.multi_reduction <add>, %121, %cst_41 [1] : vector<4x32xf32> to vector<4xf32>
    %125 = vector.shape_cast %124 : vector<4xf32> to vector<4x1xf32>
    %cst_42 = arith.constant 3.200000e+01 : f32
    %126 = vector.broadcast %cst_42 : f32 to vector<4x1xf32>
    %127 = arith.divf %125, %126 : vector<4x1xf32>
    %128 = vector.broadcast %127 : vector<4x1xf32> to vector<4x32xf32>
    %129 = arith.subf %121, %128 : vector<4x32xf32>
    %130 = arith.mulf %129, %129 : vector<4x32xf32>
    %cst_43 = arith.constant dense<0.000000e+00> : vector<4xf32>
    %131 = vector.multi_reduction <add>, %130, %cst_43 [1] : vector<4x32xf32> to vector<4xf32>
    %132 = vector.shape_cast %131 : vector<4xf32> to vector<4x1xf32>
    %cst_44 = arith.constant 3.100000e+01 : f32
    %133 = vector.broadcast %cst_44 : f32 to vector<4x1xf32>
    %134 = arith.divf %132, %133 : vector<4x1xf32>
    %135 = vector.broadcast %122 : vector<1x32xf32> to vector<4x32xf32>
    %136 = arith.mulf %135, %129 : vector<4x32xf32>
    %137 = math.sqrt %134 : vector<4x1xf32>
    %cst_45 = arith.constant 9.99999997E-7 : f32
    %138 = vector.broadcast %cst_45 : f32 to vector<4x1xf32>
    %139 = arith.addf %137, %138 : vector<4x1xf32>
    %140 = vector.broadcast %139 : vector<4x1xf32> to vector<4x32xf32>
    %141 = arith.divf %136, %140 : vector<4x32xf32>
    %142 = vector.broadcast %123 : vector<1x32xf32> to vector<4x32xf32>
    %143 = arith.addf %141, %142 : vector<4x32xf32>
    %c0_46 = arith.constant 0 : index
    %c0_47 = arith.constant 0 : index
    %c0_48 = arith.constant 0 : index
    %144 = vector.load %arg7[%c0_46, %c0_47, %c0_48] : memref<1x4x32xf32, #tpu.memory_space<vmem>>, vector<1x4x32xf32>
    %145 = vector.shape_cast %144 : vector<1x4x32xf32> to vector<4x32xf32>
    %146 = vector.shape_cast %143 : vector<4x32xf32> to vector<1x4x32xf32>
    tpu.vector_store %arg7[%c0_46, %c0_47, %c0_48], %146 {strides = array<i32>} : memref<1x4x32xf32, #tpu.memory_space<vmem>>, vector<1x4x32xf32>,
    return
  }
  func.func @transform_0(%arg0: i32) -> (i32, i32, i32) {
    %c0_i32 = arith.constant 0 : i32
    %c0_i32_0 = arith.constant 0 : i32
    %c0_i32_1 = arith.constant 0 : i32
    return %arg0, %c0_i32, %c0_i32_0 : i32, i32, i32
  }
  func.func @transform_1(%arg0: i32) -> (i32, i32) {
    %c0_i32 = arith.constant 0 : i32
    %c0_i32_0 = arith.constant 0 : i32
    %c0_i32_1 = arith.constant 0 : i32
    return %c0_i32, %c0_i32_0 : i32, i32
  }
  func.func @transform_2(%arg0: i32) -> (i32, i32) {
    %c0_i32 = arith.constant 0 : i32
    %c0_i32_0 = arith.constant 0 : i32
    %c0_i32_1 = arith.constant 0 : i32
    return %c0_i32, %c0_i32_0 : i32, i32
  }
  func.func @transform_3(%arg0: i32) -> (i32, i32, i32) {
    %c0_i32 = arith.constant 0 : i32
    %c0_i32_0 = arith.constant 0 : i32
    %c0_i32_1 = arith.constant 0 : i32
    return %arg0, %c0_i32, %c0_i32_0 : i32, i32, i32
  }
  func.func @transform_4(%arg0: i32) -> (i32, i32) {
    %c0_i32 = arith.constant 0 : i32
    %c0_i32_0 = arith.constant 0 : i32
    %c0_i32_1 = arith.constant 0 : i32
    return %c0_i32, %c0_i32_0 : i32, i32
  }
  func.func @transform_5(%arg0: i32) -> (i32, i32) {
    %c0_i32 = arith.constant 0 : i32
    %c0_i32_0 = arith.constant 0 : i32
    %c0_i32_1 = arith.constant 0 : i32
    return %c0_i32, %c0_i32_0 : i32, i32
  }
  func.func @transform_6(%arg0: i32) -> (i32, i32, i32) {
    %c0_i32 = arith.constant 0 : i32
    %c0_i32_0 = arith.constant 0 : i32
    %c0_i32_1 = arith.constant 0 : i32
    return %arg0, %c0_i32, %c0_i32_0 : i32, i32, i32
  }
}

module attributes {stable_mosaic.version = 11 : i64} {
  func.func @_mha_x_kernel(%arg0: i32, %arg1: memref<1x8x32xf32, #tpu.memory_space<vmem>>, %arg2: memref<32x96xbf16, #tpu.memory_space<vmem>>, %arg3: memref<1x96xf32, #tpu.memory_space<vmem>>, %arg4: memref<1x1x8xf32, #tpu.memory_space<vmem>>, %arg5: memref<32x32xbf16, #tpu.memory_space<vmem>>, %arg6: memref<1x32xf32, #tpu.memory_space<vmem>>, %arg7: memref<1x32xf32, #tpu.memory_space<vmem>>, %arg8: memref<1x32xf32, #tpu.memory_space<vmem>>, %arg9: memref<1x8x32xf32, #tpu.memory_space<vmem>>) attributes {dimension_semantics = [#tpu.dimension_semantics<parallel>], iteration_bounds = array<i64: 2>, scalar_prefetch = 0 : i64, scratch_operands = 0 : i64, tpu.core_type = #tpu.core_type<tc>, window_params = [{transform_indices = @transform_0, window_bounds = array<i64: 1, 8, 32>}, {pipeline_mode = #tpu.pipeline_mode<synchronous>, transform_indices = @transform_1, window_bounds = array<i64: 32, 96>}, {pipeline_mode = #tpu.pipeline_mode<synchronous>, transform_indices = @transform_2, window_bounds = array<i64: 1, 96>}, {transform_indices = @transform_3, window_bounds = array<i64: 1, 1, 8>}, {pipeline_mode = #tpu.pipeline_mode<synchronous>, transform_indices = @transform_4, window_bounds = array<i64: 32, 32>}, {pipeline_mode = #tpu.pipeline_mode<synchronous>, transform_indices = @transform_5, window_bounds = array<i64: 1, 32>}, {pipeline_mode = #tpu.pipeline_mode<synchronous>, transform_indices = @transform_6, window_bounds = array<i64: 1, 32>}, {pipeline_mode = #tpu.pipeline_mode<synchronous>, transform_indices = @transform_7, window_bounds = array<i64: 1, 32>}, {transform_indices = @transform_8, window_bounds = array<i64: 1, 8, 32>}]} {
    %c0 = arith.constant 0 : index
    %c0_0 = arith.constant 0 : index
    %c0_1 = arith.constant 0 : index
    %0 = vector.load %arg1[%c0, %c0_0, %c0_1] : memref<1x8x32xf32, #tpu.memory_space<vmem>>, vector<1x8x32xf32>
    %1 = vector.shape_cast %0 : vector<1x8x32xf32> to vector<8x32xf32>
    %2 = arith.truncf %1 : vector<8x32xf32> to vector<8x32xbf16>
    %c0_2 = arith.constant 0 : index
    %c0_3 = arith.constant 0 : index
    %3 = vector.load %arg2[%c0_2, %c0_3] : memref<32x96xbf16, #tpu.memory_space<vmem>>, vector<32x96xbf16>
    %cst = arith.constant dense<0.000000e+00> : vector<8x96xf32>
    %4 = tpu.matmul %2, %3, %cst {dimension_numbers = #tpu.dot_dimension_numbers<[1], [0], [0], [1], [0, 0, 1, 1], [], []>} : vector<8x32xbf16>, vector<32x96xbf16>, vector<8x96xf32> -> vector<8x96xf32>
    %c0_4 = arith.constant 0 : index
    %c0_5 = arith.constant 0 : index
    %5 = vector.load %arg3[%c0_4, %c0_5] : memref<1x96xf32, #tpu.memory_space<vmem>>, vector<1x96xf32>
    %6 = vector.broadcast %5 : vector<1x96xf32> to vector<8x96xf32>
    %7 = arith.addf %4, %6 : vector<8x96xf32>
    %c0_6 = arith.constant 0 : index
    %c0_7 = arith.constant 0 : index
    %c0_8 = arith.constant 0 : index
    %8 = vector.load %arg4[%c0_6, %c0_7, %c0_8] : memref<1x1x8xf32, #tpu.memory_space<vmem>>, vector<1x1x8xf32>
    %9 = vector.shape_cast %8 : vector<1x1x8xf32> to vector<1x8xf32>
    %10 = vector.extract_strided_slice %7 {offsets = [0, 0], sizes = [8, 32], strides = [1, 1]} : vector<8x96xf32> to vector<8x32xf32>
    %11 = vector.extract_strided_slice %7 {offsets = [0, 32], sizes = [8, 32], strides = [1, 1]} : vector<8x96xf32> to vector<8x32xf32>
    %12 = vector.extract_strided_slice %7 {offsets = [0, 64], sizes = [8, 32], strides = [1, 1]} : vector<8x96xf32> to vector<8x32xf32>
    %13 = vector.extract_strided_slice %10 {offsets = [0, 0], sizes = [8, 8], strides = [1, 1]} : vector<8x32xf32> to vector<8x8xf32>
    %14 = vector.extract_strided_slice %11 {offsets = [0, 0], sizes = [8, 8], strides = [1, 1]} : vector<8x32xf32> to vector<8x8xf32>
    %15 = vector.extract_strided_slice %12 {offsets = [0, 0], sizes = [8, 8], strides = [1, 1]} : vector<8x32xf32> to vector<8x8xf32>
    %16 = arith.truncf %13 : vector<8x8xf32> to vector<8x8xbf16>
    %17 = arith.truncf %14 : vector<8x8xf32> to vector<8x8xbf16>
    %cst_9 = arith.constant dense<0.000000e+00> : vector<8x8xf32>
    %18 = tpu.matmul %16, %17, %cst_9 {dimension_numbers = #tpu.dot_dimension_numbers<[1], [1], [0], [0], [0, 0, 1, 0], [], []>} : vector<8x8xbf16>, vector<8x8xbf16>, vector<8x8xf32> -> vector<8x8xf32>
    %cst_10 = arith.constant 0.353553385 : f32
    %19 = vector.broadcast %cst_10 : f32 to vector<8x8xf32>
    %20 = arith.mulf %18, %19 : vector<8x8xf32>
    %cst_11 = arith.constant 0.000000e+00 : f32
    %21 = vector.broadcast %cst_11 : f32 to vector<1x8xf32>
    %22 = arith.cmpf oeq, %9, %21 : vector<1x8xf32>
    %cst_12 = arith.constant -1.000000e+09 : f32
    %23 = vector.shape_cast %22 : vector<1x8xi1> to vector<1x8xi1>
    %24 = vector.broadcast %23 : vector<1x8xi1> to vector<8x8xi1>
    %25 = vector.broadcast %cst_12 : f32 to vector<8x8xf32>
    %26 = arith.select %24, %25, %20 : vector<8x8xi1>, vector<8x8xf32>
    %cst_13 = arith.constant dense<0xFF800000> : vector<8xf32>
    %27 = vector.multi_reduction <maximumf>, %26, %cst_13 [1] : vector<8x8xf32> to vector<8xf32>
    %28 = vector.shape_cast %27 : vector<8xf32> to vector<8x1xf32>
    %29 = vector.broadcast %28 : vector<8x1xf32> to vector<8x8xf32>
    %30 = arith.subf %26, %29 : vector<8x8xf32>
    %31 = math.exp %30 : vector<8x8xf32>
    %cst_14 = arith.constant dense<0.000000e+00> : vector<8xf32>
    %32 = vector.multi_reduction <add>, %31, %cst_14 [1] : vector<8x8xf32> to vector<8xf32>
    %33 = vector.shape_cast %32 : vector<8xf32> to vector<8x1xf32>
    %34 = tpu.reciprocal %33 {approx = true} : vector<8x1xf32> -> vector<8x1xf32>
    %35 = vector.broadcast %34 : vector<8x1xf32> to vector<8x8xf32>
    %36 = arith.mulf %31, %35 : vector<8x8xf32>
    %37 = arith.truncf %36 : vector<8x8xf32> to vector<8x8xbf16>
    %38 = arith.truncf %15 : vector<8x8xf32> to vector<8x8xbf16>
    %cst_15 = arith.constant dense<0.000000e+00> : vector<8x8xf32>
    %39 = tpu.matmul %37, %38, %cst_15 {dimension_numbers = #tpu.dot_dimension_numbers<[1], [0], [0], [1], [0, 0, 1, 1], [], []>} : vector<8x8xbf16>, vector<8x8xbf16>, vector<8x8xf32> -> vector<8x8xf32>
    %40 = vector.extract_strided_slice %10 {offsets = [0, 8], sizes = [8, 8], strides = [1, 1]} : vector<8x32xf32> to vector<8x8xf32>
    %41 = vector.extract_strided_slice %11 {offsets = [0, 8], sizes = [8, 8], strides = [1, 1]} : vector<8x32xf32> to vector<8x8xf32>
    %42 = vector.extract_strided_slice %12 {offsets = [0, 8], sizes = [8, 8], strides = [1, 1]} : vector<8x32xf32> to vector<8x8xf32>
    %43 = arith.truncf %40 : vector<8x8xf32> to vector<8x8xbf16>
    %44 = arith.truncf %41 : vector<8x8xf32> to vector<8x8xbf16>
    %cst_16 = arith.constant dense<0.000000e+00> : vector<8x8xf32>
    %45 = tpu.matmul %43, %44, %cst_16 {dimension_numbers = #tpu.dot_dimension_numbers<[1], [1], [0], [0], [0, 0, 1, 0], [], []>} : vector<8x8xbf16>, vector<8x8xbf16>, vector<8x8xf32> -> vector<8x8xf32>
    %cst_17 = arith.constant 0.353553385 : f32
    %46 = vector.broadcast %cst_17 : f32 to vector<8x8xf32>
    %47 = arith.mulf %45, %46 : vector<8x8xf32>
    %cst_18 = arith.constant 0.000000e+00 : f32
    %48 = vector.broadcast %cst_18 : f32 to vector<1x8xf32>
    %49 = arith.cmpf oeq, %9, %48 : vector<1x8xf32>
    %cst_19 = arith.constant -1.000000e+09 : f32
    %50 = vector.shape_cast %49 : vector<1x8xi1> to vector<1x8xi1>
    %51 = vector.broadcast %50 : vector<1x8xi1> to vector<8x8xi1>
    %52 = vector.broadcast %cst_19 : f32 to vector<8x8xf32>
    %53 = arith.select %51, %52, %47 : vector<8x8xi1>, vector<8x8xf32>
    %cst_20 = arith.constant dense<0xFF800000> : vector<8xf32>
    %54 = vector.multi_reduction <maximumf>, %53, %cst_20 [1] : vector<8x8xf32> to vector<8xf32>
    %55 = vector.shape_cast %54 : vector<8xf32> to vector<8x1xf32>
    %56 = vector.broadcast %55 : vector<8x1xf32> to vector<8x8xf32>
    %57 = arith.subf %53, %56 : vector<8x8xf32>
    %58 = math.exp %57 : vector<8x8xf32>
    %cst_21 = arith.constant dense<0.000000e+00> : vector<8xf32>
    %59 = vector.multi_reduction <add>, %58, %cst_21 [1] : vector<8x8xf32> to vector<8xf32>
    %60 = vector.shape_cast %59 : vector<8xf32> to vector<8x1xf32>
    %61 = tpu.reciprocal %60 {approx = true} : vector<8x1xf32> -> vector<8x1xf32>
    %62 = vector.broadcast %61 : vector<8x1xf32> to vector<8x8xf32>
    %63 = arith.mulf %58, %62 : vector<8x8xf32>
    %64 = arith.truncf %63 : vector<8x8xf32> to vector<8x8xbf16>
    %65 = arith.truncf %42 : vector<8x8xf32> to vector<8x8xbf16>
    %cst_22 = arith.constant dense<0.000000e+00> : vector<8x8xf32>
    %66 = tpu.matmul %64, %65, %cst_22 {dimension_numbers = #tpu.dot_dimension_numbers<[1], [0], [0], [1], [0, 0, 1, 1], [], []>} : vector<8x8xbf16>, vector<8x8xbf16>, vector<8x8xf32> -> vector<8x8xf32>
    %67 = vector.extract_strided_slice %10 {offsets = [0, 16], sizes = [8, 8], strides = [1, 1]} : vector<8x32xf32> to vector<8x8xf32>
    %68 = vector.extract_strided_slice %11 {offsets = [0, 16], sizes = [8, 8], strides = [1, 1]} : vector<8x32xf32> to vector<8x8xf32>
    %69 = vector.extract_strided_slice %12 {offsets = [0, 16], sizes = [8, 8], strides = [1, 1]} : vector<8x32xf32> to vector<8x8xf32>
    %70 = arith.truncf %67 : vector<8x8xf32> to vector<8x8xbf16>
    %71 = arith.truncf %68 : vector<8x8xf32> to vector<8x8xbf16>
    %cst_23 = arith.constant dense<0.000000e+00> : vector<8x8xf32>
    %72 = tpu.matmul %70, %71, %cst_23 {dimension_numbers = #tpu.dot_dimension_numbers<[1], [1], [0], [0], [0, 0, 1, 0], [], []>} : vector<8x8xbf16>, vector<8x8xbf16>, vector<8x8xf32> -> vector<8x8xf32>
    %cst_24 = arith.constant 0.353553385 : f32
    %73 = vector.broadcast %cst_24 : f32 to vector<8x8xf32>
    %74 = arith.mulf %72, %73 : vector<8x8xf32>
    %cst_25 = arith.constant 0.000000e+00 : f32
    %75 = vector.broadcast %cst_25 : f32 to vector<1x8xf32>
    %76 = arith.cmpf oeq, %9, %75 : vector<1x8xf32>
    %cst_26 = arith.constant -1.000000e+09 : f32
    %77 = vector.shape_cast %76 : vector<1x8xi1> to vector<1x8xi1>
    %78 = vector.broadcast %77 : vector<1x8xi1> to vector<8x8xi1>
    %79 = vector.broadcast %cst_26 : f32 to vector<8x8xf32>
    %80 = arith.select %78, %79, %74 : vector<8x8xi1>, vector<8x8xf32>
    %cst_27 = arith.constant dense<0xFF800000> : vector<8xf32>
    %81 = vector.multi_reduction <maximumf>, %80, %cst_27 [1] : vector<8x8xf32> to vector<8xf32>
    %82 = vector.shape_cast %81 : vector<8xf32> to vector<8x1xf32>
    %83 = vector.broadcast %82 : vector<8x1xf32> to vector<8x8xf32>
    %84 = arith.subf %80, %83 : vector<8x8xf32>
    %85 = math.exp %84 : vector<8x8xf32>
    %cst_28 = arith.constant dense<0.000000e+00> : vector<8xf32>
    %86 = vector.multi_reduction <add>, %85, %cst_28 [1] : vector<8x8xf32> to vector<8xf32>
    %87 = vector.shape_cast %86 : vector<8xf32> to vector<8x1xf32>
    %88 = tpu.reciprocal %87 {approx = true} : vector<8x1xf32> -> vector<8x1xf32>
    %89 = vector.broadcast %88 : vector<8x1xf32> to vector<8x8xf32>
    %90 = arith.mulf %85, %89 : vector<8x8xf32>
    %91 = arith.truncf %90 : vector<8x8xf32> to vector<8x8xbf16>
    %92 = arith.truncf %69 : vector<8x8xf32> to vector<8x8xbf16>
    %cst_29 = arith.constant dense<0.000000e+00> : vector<8x8xf32>
    %93 = tpu.matmul %91, %92, %cst_29 {dimension_numbers = #tpu.dot_dimension_numbers<[1], [0], [0], [1], [0, 0, 1, 1], [], []>} : vector<8x8xbf16>, vector<8x8xbf16>, vector<8x8xf32> -> vector<8x8xf32>
    %94 = vector.extract_strided_slice %10 {offsets = [0, 24], sizes = [8, 8], strides = [1, 1]} : vector<8x32xf32> to vector<8x8xf32>
    %95 = vector.extract_strided_slice %11 {offsets = [0, 24], sizes = [8, 8], strides = [1, 1]} : vector<8x32xf32> to vector<8x8xf32>
    %96 = vector.extract_strided_slice %12 {offsets = [0, 24], sizes = [8, 8], strides = [1, 1]} : vector<8x32xf32> to vector<8x8xf32>
    %97 = arith.truncf %94 : vector<8x8xf32> to vector<8x8xbf16>
    %98 = arith.truncf %95 : vector<8x8xf32> to vector<8x8xbf16>
    %cst_30 = arith.constant dense<0.000000e+00> : vector<8x8xf32>
    %99 = tpu.matmul %97, %98, %cst_30 {dimension_numbers = #tpu.dot_dimension_numbers<[1], [1], [0], [0], [0, 0, 1, 0], [], []>} : vector<8x8xbf16>, vector<8x8xbf16>, vector<8x8xf32> -> vector<8x8xf32>
    %cst_31 = arith.constant 0.353553385 : f32
    %100 = vector.broadcast %cst_31 : f32 to vector<8x8xf32>
    %101 = arith.mulf %99, %100 : vector<8x8xf32>
    %cst_32 = arith.constant 0.000000e+00 : f32
    %102 = vector.broadcast %cst_32 : f32 to vector<1x8xf32>
    %103 = arith.cmpf oeq, %9, %102 : vector<1x8xf32>
    %cst_33 = arith.constant -1.000000e+09 : f32
    %104 = vector.shape_cast %103 : vector<1x8xi1> to vector<1x8xi1>
    %105 = vector.broadcast %104 : vector<1x8xi1> to vector<8x8xi1>
    %106 = vector.broadcast %cst_33 : f32 to vector<8x8xf32>
    %107 = arith.select %105, %106, %101 : vector<8x8xi1>, vector<8x8xf32>
    %cst_34 = arith.constant dense<0xFF800000> : vector<8xf32>
    %108 = vector.multi_reduction <maximumf>, %107, %cst_34 [1] : vector<8x8xf32> to vector<8xf32>
    %109 = vector.shape_cast %108 : vector<8xf32> to vector<8x1xf32>
    %110 = vector.broadcast %109 : vector<8x1xf32> to vector<8x8xf32>
    %111 = arith.subf %107, %110 : vector<8x8xf32>
    %112 = math.exp %111 : vector<8x8xf32>
    %cst_35 = arith.constant dense<0.000000e+00> : vector<8xf32>
    %113 = vector.multi_reduction <add>, %112, %cst_35 [1] : vector<8x8xf32> to vector<8xf32>
    %114 = vector.shape_cast %113 : vector<8xf32> to vector<8x1xf32>
    %115 = tpu.reciprocal %114 {approx = true} : vector<8x1xf32> -> vector<8x1xf32>
    %116 = vector.broadcast %115 : vector<8x1xf32> to vector<8x8xf32>
    %117 = arith.mulf %112, %116 : vector<8x8xf32>
    %118 = arith.truncf %117 : vector<8x8xf32> to vector<8x8xbf16>
    %119 = arith.truncf %96 : vector<8x8xf32> to vector<8x8xbf16>
    %cst_36 = arith.constant dense<0.000000e+00> : vector<8x8xf32>
    %120 = tpu.matmul %118, %119, %cst_36 {dimension_numbers = #tpu.dot_dimension_numbers<[1], [0], [0], [1], [0, 0, 1, 1], [], []>} : vector<8x8xbf16>, vector<8x8xbf16>, vector<8x8xf32> -> vector<8x8xf32>
    %121 = tpu.concatenate %39, %66, %93, %120 in 1 : vector<8x8xf32>, vector<8x8xf32>, vector<8x8xf32>, vector<8x8xf32> -> vector<8x32xf32>
    %122 = arith.truncf %121 : vector<8x32xf32> to vector<8x32xbf16>
    %c0_37 = arith.constant 0 : index
    %c0_38 = arith.constant 0 : index
    %123 = vector.load %arg5[%c0_37, %c0_38] : memref<32x32xbf16, #tpu.memory_space<vmem>>, vector<32x32xbf16>
    %cst_39 = arith.constant dense<0.000000e+00> : vector<8x32xf32>
    %124 = tpu.matmul %122, %123, %cst_39 {dimension_numbers = #tpu.dot_dimension_numbers<[1], [0], [0], [1], [0, 0, 1, 1], [], []>} : vector<8x32xbf16>, vector<32x32xbf16>, vector<8x32xf32> -> vector<8x32xf32>
    %c0_40 = arith.constant 0 : index
    %c0_41 = arith.constant 0 : index
    %125 = vector.load %arg6[%c0_40, %c0_41] : memref<1x32xf32, #tpu.memory_space<vmem>>, vector<1x32xf32>
    %126 = vector.broadcast %125 : vector<1x32xf32> to vector<8x32xf32>
    %127 = arith.addf %124, %126 : vector<8x32xf32>
    %128 = arith.addf %1, %127 : vector<8x32xf32>
    %c0_42 = arith.constant 0 : index
    %c0_43 = arith.constant 0 : index
    %129 = vector.load %arg7[%c0_42, %c0_43] : memref<1x32xf32, #tpu.memory_space<vmem>>, vector<1x32xf32>
    %c0_44 = arith.constant 0 : index
    %c0_45 = arith.constant 0 : index
    %130 = vector.load %arg8[%c0_44, %c0_45] : memref<1x32xf32, #tpu.memory_space<vmem>>, vector<1x32xf32>
    %cst_46 = arith.constant dense<0.000000e+00> : vector<8xf32>
    %131 = vector.multi_reduction <add>, %128, %cst_46 [1] : vector<8x32xf32> to vector<8xf32>
    %132 = vector.shape_cast %131 : vector<8xf32> to vector<8x1xf32>
    %cst_47 = arith.constant 3.200000e+01 : f32
    %133 = vector.broadcast %cst_47 : f32 to vector<8x1xf32>
    %134 = arith.divf %132, %133 : vector<8x1xf32>
    %135 = vector.broadcast %134 : vector<8x1xf32> to vector<8x32xf32>
    %136 = arith.subf %128, %135 : vector<8x32xf32>
    %137 = arith.mulf %136, %136 : vector<8x32xf32>
    %cst_48 = arith.constant dense<0.000000e+00> : vector<8xf32>
    %138 = vector.multi_reduction <add>, %137, %cst_48 [1] : vector<8x32xf32> to vector<8xf32>
    %139 = vector.shape_cast %138 : vector<8xf32> to vector<8x1xf32>
    %cst_49 = arith.constant 3.100000e+01 : f32
    %140 = vector.broadcast %cst_49 : f32 to vector<8x1xf32>
    %141 = arith.divf %139, %140 : vector<8x1xf32>
    %142 = vector.broadcast %129 : vector<1x32xf32> to vector<8x32xf32>
    %143 = arith.mulf %142, %136 : vector<8x32xf32>
    %144 = math.sqrt %141 : vector<8x1xf32>
    %cst_50 = arith.constant 9.99999997E-7 : f32
    %145 = vector.broadcast %cst_50 : f32 to vector<8x1xf32>
    %146 = arith.addf %144, %145 : vector<8x1xf32>
    %147 = vector.broadcast %146 : vector<8x1xf32> to vector<8x32xf32>
    %148 = arith.divf %143, %147 : vector<8x32xf32>
    %149 = vector.broadcast %130 : vector<1x32xf32> to vector<8x32xf32>
    %150 = arith.addf %148, %149 : vector<8x32xf32>
    %c0_51 = arith.constant 0 : index
    %c0_52 = arith.constant 0 : index
    %c0_53 = arith.constant 0 : index
    %151 = vector.load %arg9[%c0_51, %c0_52, %c0_53] : memref<1x8x32xf32, #tpu.memory_space<vmem>>, vector<1x8x32xf32>
    %152 = vector.shape_cast %151 : vector<1x8x32xf32> to vector<8x32xf32>
    %153 = vector.shape_cast %150 : vector<8x32xf32> to vector<1x8x32xf32>
    tpu.vector_store %arg9[%c0_51, %c0_52, %c0_53], %153 {strides = array<i32>} : memref<1x8x32xf32, #tpu.memory_space<vmem>>, vector<1x8x32xf32>,
    return
  }
  func.func @transform_0(%arg0: i32) -> (i32, i32, i32) {
    %c0_i32 = arith.constant 0 : i32
    %c0_i32_0 = arith.constant 0 : i32
    %c0_i32_1 = arith.constant 0 : i32
    return %arg0, %c0_i32, %c0_i32_0 : i32, i32, i32
  }
  func.func @transform_1(%arg0: i32) -> (i32, i32) {
    %c0_i32 = arith.constant 0 : i32
    %c0_i32_0 = arith.constant 0 : i32
    %c0_i32_1 = arith.constant 0 : i32
    return %c0_i32, %c0_i32_0 : i32, i32
  }
  func.func @transform_2(%arg0: i32) -> (i32, i32) {
    %c0_i32 = arith.constant 0 : i32
    %c0_i32_0 = arith.constant 0 : i32
    %c0_i32_1 = arith.constant 0 : i32
    return %c0_i32, %c0_i32_0 : i32, i32
  }
  func.func @transform_3(%arg0: i32) -> (i32, i32, i32) {
    %c0_i32 = arith.constant 0 : i32
    %c0_i32_0 = arith.constant 0 : i32
    %c0_i32_1 = arith.constant 0 : i32
    return %arg0, %c0_i32, %c0_i32_0 : i32, i32, i32
  }
  func.func @transform_4(%arg0: i32) -> (i32, i32) {
    %c0_i32 = arith.constant 0 : i32
    %c0_i32_0 = arith.constant 0 : i32
    %c0_i32_1 = arith.constant 0 : i32
    return %c0_i32, %c0_i32_0 : i32, i32
  }
  func.func @transform_5(%arg0: i32) -> (i32, i32) {
    %c0_i32 = arith.constant 0 : i32
    %c0_i32_0 = arith.constant 0 : i32
    %c0_i32_1 = arith.constant 0 : i32
    return %c0_i32, %c0_i32_0 : i32, i32
  }
  func.func @transform_6(%arg0: i32) -> (i32, i32) {
    %c0_i32 = arith.constant 0 : i32
    %c0_i32_0 = arith.constant 0 : i32
    %c0_i32_1 = arith.constant 0 : i32
    return %c0_i32, %c0_i32_0 : i32, i32
  }
  func.func @transform_7(%arg0: i32) -> (i32, i32) {
    %c0_i32 = arith.constant 0 : i32
    %c0_i32_0 = arith.constant 0 : i32
    %c0_i32_1 = arith.constant 0 : i32
    return %c0_i32, %c0_i32_0 : i32, i32
  }
  func.func @transform_8(%arg0: i32) -> (i32, i32, i32) {
    %c0_i32 = arith.constant 0 : i32
    %c0_i32_0 = arith.constant 0 : i32
    %c0_i32_1 = arith.constant 0 : i32
    return %arg0, %c0_i32, %c0_i32_0 : i32, i32, i32
  }
}

module attributes {stable_mosaic.version = 11 : i64} {
  func.func @_gate_kernel(%arg0: i32, %arg1: memref<1x8x32xf32, #tpu.memory_space<vmem>>, %arg2: memref<1x4x32xf32, #tpu.memory_space<vmem>>, %arg3: memref<32x64xbf16, #tpu.memory_space<vmem>>, %arg4: memref<1x64xf32, #tpu.memory_space<vmem>>, %arg5: memref<32x64xbf16, #tpu.memory_space<vmem>>, %arg6: memref<1x64xf32, #tpu.memory_space<vmem>>, %arg7: memref<1x8x4xf32, #tpu.memory_space<vmem>>, %arg8: memref<1x32xf32, #tpu.memory_space<vmem>>, %arg9: memref<1x32xf32, #tpu.memory_space<vmem>>, %arg10: memref<1x32xf32, #tpu.memory_space<vmem>>, %arg11: memref<1x32xf32, #tpu.memory_space<vmem>>, %arg12: memref<1x8x32xf32, #tpu.memory_space<vmem>>, %arg13: memref<1x4x32xf32, #tpu.memory_space<vmem>>) attributes {dimension_semantics = [#tpu.dimension_semantics<parallel>], iteration_bounds = array<i64: 2>, scalar_prefetch = 0 : i64, scratch_operands = 0 : i64, tpu.core_type = #tpu.core_type<tc>, window_params = [{transform_indices = @transform_0, window_bounds = array<i64: 1, 8, 32>}, {transform_indices = @transform_1, window_bounds = array<i64: 1, 4, 32>}, {pipeline_mode = #tpu.pipeline_mode<synchronous>, transform_indices = @transform_2, window_bounds = array<i64: 32, 64>}, {pipeline_mode = #tpu.pipeline_mode<synchronous>, transform_indices = @transform_3, window_bounds = array<i64: 1, 64>}, {pipeline_mode = #tpu.pipeline_mode<synchronous>, transform_indices = @transform_4, window_bounds = array<i64: 32, 64>}, {pipeline_mode = #tpu.pipeline_mode<synchronous>, transform_indices = @transform_5, window_bounds = array<i64: 1, 64>}, {transform_indices = @transform_6, window_bounds = array<i64: 1, 8, 4>}, {pipeline_mode = #tpu.pipeline_mode<synchronous>, transform_indices = @transform_7, window_bounds = array<i64: 1, 32>}, {pipeline_mode = #tpu.pipeline_mode<synchronous>, transform_indices = @transform_8, window_bounds = array<i64: 1, 32>}, {pipeline_mode = #tpu.pipeline_mode<synchronous>, transform_indices = @transform_9, window_bounds = array<i64: 1, 32>}, {pipeline_mode = #tpu.pipeline_mode<synchronous>, transform_indices = @transform_10, window_bounds = array<i64: 1, 32>}, {transform_indices = @transform_11, window_bounds = array<i64: 1, 8, 32>}, {transform_indices = @transform_12, window_bounds = array<i64: 1, 4, 32>}]} {
    %c0 = arith.constant 0 : index
    %c0_0 = arith.constant 0 : index
    %c0_1 = arith.constant 0 : index
    %0 = vector.load %arg1[%c0, %c0_0, %c0_1] : memref<1x8x32xf32, #tpu.memory_space<vmem>>, vector<1x8x32xf32>
    %1 = vector.shape_cast %0 : vector<1x8x32xf32> to vector<8x32xf32>
    %c0_2 = arith.constant 0 : index
    %c0_3 = arith.constant 0 : index
    %c0_4 = arith.constant 0 : index
    %2 = vector.load %arg2[%c0_2, %c0_3, %c0_4] : memref<1x4x32xf32, #tpu.memory_space<vmem>>, vector<1x4x32xf32>
    %3 = vector.shape_cast %2 : vector<1x4x32xf32> to vector<4x32xf32>
    %c0_5 = arith.constant 0 : index
    %c0_6 = arith.constant 0 : index
    %c0_7 = arith.constant 0 : index
    %4 = vector.load %arg7[%c0_5, %c0_6, %c0_7] : memref<1x8x4xf32, #tpu.memory_space<vmem>>, vector<1x8x4xf32>
    %5 = vector.shape_cast %4 : vector<1x8x4xf32> to vector<8x4xf32>
    %6 = arith.truncf %1 : vector<8x32xf32> to vector<8x32xbf16>
    %c0_8 = arith.constant 0 : index
    %c0_9 = arith.constant 0 : index
    %7 = vector.load %arg3[%c0_8, %c0_9] : memref<32x64xbf16, #tpu.memory_space<vmem>>, vector<32x64xbf16>
    %cst = arith.constant dense<0.000000e+00> : vector<8x64xf32>
    %8 = tpu.matmul %6, %7, %cst {dimension_numbers = #tpu.dot_dimension_numbers<[1], [0], [0], [1], [0, 0, 1, 1], [], []>} : vector<8x32xbf16>, vector<32x64xbf16>, vector<8x64xf32> -> vector<8x64xf32>
    %c0_10 = arith.constant 0 : index
    %c0_11 = arith.constant 0 : index
    %9 = vector.load %arg4[%c0_10, %c0_11] : memref<1x64xf32, #tpu.memory_space<vmem>>, vector<1x64xf32>
    %10 = vector.broadcast %9 : vector<1x64xf32> to vector<8x64xf32>
    %11 = arith.addf %8, %10 : vector<8x64xf32>
    %12 = arith.truncf %3 : vector<4x32xf32> to vector<4x32xbf16>
    %c0_12 = arith.constant 0 : index
    %c0_13 = arith.constant 0 : index
    %13 = vector.load %arg5[%c0_12, %c0_13] : memref<32x64xbf16, #tpu.memory_space<vmem>>, vector<32x64xbf16>
    %cst_14 = arith.constant dense<0.000000e+00> : vector<4x64xf32>
    %14 = tpu.matmul %12, %13, %cst_14 {dimension_numbers = #tpu.dot_dimension_numbers<[1], [0], [0], [1], [0, 0, 1, 1], [], []>} : vector<4x32xbf16>, vector<32x64xbf16>, vector<4x64xf32> -> vector<4x64xf32>
    %c0_15 = arith.constant 0 : index
    %c0_16 = arith.constant 0 : index
    %15 = vector.load %arg6[%c0_15, %c0_16] : memref<1x64xf32, #tpu.memory_space<vmem>>, vector<1x64xf32>
    %16 = vector.broadcast %15 : vector<1x64xf32> to vector<4x64xf32>
    %17 = arith.addf %14, %16 : vector<4x64xf32>
    %18 = vector.extract_strided_slice %11 {offsets = [0, 0], sizes = [8, 32], strides = [1, 1]} : vector<8x64xf32> to vector<8x32xf32>
    %19 = vector.extract_strided_slice %11 {offsets = [0, 32], sizes = [8, 32], strides = [1, 1]} : vector<8x64xf32> to vector<8x32xf32>
    %20 = vector.extract_strided_slice %17 {offsets = [0, 0], sizes = [4, 32], strides = [1, 1]} : vector<4x64xf32> to vector<4x32xf32>
    %21 = vector.extract_strided_slice %17 {offsets = [0, 32], sizes = [4, 32], strides = [1, 1]} : vector<4x64xf32> to vector<4x32xf32>
    %22 = vector.shape_cast %5 : vector<8x4xf32> to vector<8x4x1xf32>
    %23 = vector.shape_cast %18 : vector<8x32xf32> to vector<8x1x32xf32>
    %24 = vector.shape_cast %20 : vector<4x32xf32> to vector<1x4x32xf32>
    %25 = vector.broadcast %23 : vector<8x1x32xf32> to vector<8x4x32xf32>
    %26 = vector.broadcast %24 : vector<1x4x32xf32> to vector<8x4x32xf32>
    %27 = arith.addf %25, %26 : vector<8x4x32xf32>
    %28 = arith.negf %27 : vector<8x4x32xf32>
    %29 = math.exp %28 : vector<8x4x32xf32>
    %cst_17 = arith.constant 1.000000e+00 : f32
    %30 = vector.broadcast %cst_17 : f32 to vector<8x4x32xf32>
    %31 = arith.addf %30, %29 : vector<8x4x32xf32>
    %32 = arith.divf %30, %31 : vector<8x4x32xf32>
    %33 = vector.broadcast %22 : vector<8x4x1xf32> to vector<8x4x32xf32>
    %34 = arith.mulf %32, %33 : vector<8x4x32xf32>
    %35 = vector.shape_cast %3 : vector<4x32xf32> to vector<1x4x32xf32>
    %36 = vector.broadcast %35 : vector<1x4x32xf32> to vector<8x4x32xf32>
    %37 = arith.mulf %34, %36 : vector<8x4x32xf32>
    %cst_18 = arith.constant dense<0.000000e+00> : vector<8x32xf32>
    %38 = vector.multi_reduction <add>, %37, %cst_18 [1] : vector<8x4x32xf32> to vector<8x32xf32>
    %39 = vector.shape_cast %19 : vector<8x32xf32> to vector<8x1x32xf32>
    %40 = vector.shape_cast %21 : vector<4x32xf32> to vector<1x4x32xf32>
    %41 = vector.broadcast %39 : vector<8x1x32xf32> to vector<8x4x32xf32>
    %42 = vector.broadcast %40 : vector<1x4x32xf32> to vector<8x4x32xf32>
    %43 = arith.addf %41, %42 : vector<8x4x32xf32>
    %44 = arith.negf %43 : vector<8x4x32xf32>
    %45 = math.exp %44 : vector<8x4x32xf32>
    %cst_19 = arith.constant 1.000000e+00 : f32
    %46 = vector.broadcast %cst_19 : f32 to vector<8x4x32xf32>
    %47 = arith.addf %46, %45 : vector<8x4x32xf32>
    %48 = arith.divf %46, %47 : vector<8x4x32xf32>
    %49 = vector.broadcast %22 : vector<8x4x1xf32> to vector<8x4x32xf32>
    %50 = arith.mulf %48, %49 : vector<8x4x32xf32>
    %51 = vector.shape_cast %1 : vector<8x32xf32> to vector<8x1x32xf32>
    %52 = vector.broadcast %51 : vector<8x1x32xf32> to vector<8x4x32xf32>
    %53 = arith.mulf %50, %52 : vector<8x4x32xf32>
    %cst_20 = arith.constant dense<0.000000e+00> : vector<4x32xf32>
    %54 = vector.multi_reduction <add>, %53, %cst_20 [0] : vector<8x4x32xf32> to vector<4x32xf32>
    %55 = arith.addf %1, %38 : vector<8x32xf32>
    %c0_21 = arith.constant 0 : index
    %c0_22 = arith.constant 0 : index
    %56 = vector.load %arg8[%c0_21, %c0_22] : memref<1x32xf32, #tpu.memory_space<vmem>>, vector<1x32xf32>
    %c0_23 = arith.constant 0 : index
    %c0_24 = arith.constant 0 : index
    %57 = vector.load %arg9[%c0_23, %c0_24] : memref<1x32xf32, #tpu.memory_space<vmem>>, vector<1x32xf32>
    %cst_25 = arith.constant dense<0.000000e+00> : vector<8xf32>
    %58 = vector.multi_reduction <add>, %55, %cst_25 [1] : vector<8x32xf32> to vector<8xf32>
    %59 = vector.shape_cast %58 : vector<8xf32> to vector<8x1xf32>
    %cst_26 = arith.constant 3.200000e+01 : f32
    %60 = vector.broadcast %cst_26 : f32 to vector<8x1xf32>
    %61 = arith.divf %59, %60 : vector<8x1xf32>
    %62 = vector.broadcast %61 : vector<8x1xf32> to vector<8x32xf32>
    %63 = arith.subf %55, %62 : vector<8x32xf32>
    %64 = arith.mulf %63, %63 : vector<8x32xf32>
    %cst_27 = arith.constant dense<0.000000e+00> : vector<8xf32>
    %65 = vector.multi_reduction <add>, %64, %cst_27 [1] : vector<8x32xf32> to vector<8xf32>
    %66 = vector.shape_cast %65 : vector<8xf32> to vector<8x1xf32>
    %cst_28 = arith.constant 3.100000e+01 : f32
    %67 = vector.broadcast %cst_28 : f32 to vector<8x1xf32>
    %68 = arith.divf %66, %67 : vector<8x1xf32>
    %69 = vector.broadcast %56 : vector<1x32xf32> to vector<8x32xf32>
    %70 = arith.mulf %69, %63 : vector<8x32xf32>
    %71 = math.sqrt %68 : vector<8x1xf32>
    %cst_29 = arith.constant 9.99999997E-7 : f32
    %72 = vector.broadcast %cst_29 : f32 to vector<8x1xf32>
    %73 = arith.addf %71, %72 : vector<8x1xf32>
    %74 = vector.broadcast %73 : vector<8x1xf32> to vector<8x32xf32>
    %75 = arith.divf %70, %74 : vector<8x32xf32>
    %76 = vector.broadcast %57 : vector<1x32xf32> to vector<8x32xf32>
    %77 = arith.addf %75, %76 : vector<8x32xf32>
    %c0_30 = arith.constant 0 : index
    %c0_31 = arith.constant 0 : index
    %c0_32 = arith.constant 0 : index
    %78 = vector.load %arg12[%c0_30, %c0_31, %c0_32] : memref<1x8x32xf32, #tpu.memory_space<vmem>>, vector<1x8x32xf32>
    %79 = vector.shape_cast %78 : vector<1x8x32xf32> to vector<8x32xf32>
    %80 = vector.shape_cast %77 : vector<8x32xf32> to vector<1x8x32xf32>
    tpu.vector_store %arg12[%c0_30, %c0_31, %c0_32], %80 {strides = array<i32>} : memref<1x8x32xf32, #tpu.memory_space<vmem>>, vector<1x8x32xf32>,
    %81 = arith.addf %3, %54 : vector<4x32xf32>
    %c0_33 = arith.constant 0 : index
    %c0_34 = arith.constant 0 : index
    %82 = vector.load %arg10[%c0_33, %c0_34] : memref<1x32xf32, #tpu.memory_space<vmem>>, vector<1x32xf32>
    %c0_35 = arith.constant 0 : index
    %c0_36 = arith.constant 0 : index
    %83 = vector.load %arg11[%c0_35, %c0_36] : memref<1x32xf32, #tpu.memory_space<vmem>>, vector<1x32xf32>
    %cst_37 = arith.constant dense<0.000000e+00> : vector<4xf32>
    %84 = vector.multi_reduction <add>, %81, %cst_37 [1] : vector<4x32xf32> to vector<4xf32>
    %85 = vector.shape_cast %84 : vector<4xf32> to vector<4x1xf32>
    %cst_38 = arith.constant 3.200000e+01 : f32
    %86 = vector.broadcast %cst_38 : f32 to vector<4x1xf32>
    %87 = arith.divf %85, %86 : vector<4x1xf32>
    %88 = vector.broadcast %87 : vector<4x1xf32> to vector<4x32xf32>
    %89 = arith.subf %81, %88 : vector<4x32xf32>
    %90 = arith.mulf %89, %89 : vector<4x32xf32>
    %cst_39 = arith.constant dense<0.000000e+00> : vector<4xf32>
    %91 = vector.multi_reduction <add>, %90, %cst_39 [1] : vector<4x32xf32> to vector<4xf32>
    %92 = vector.shape_cast %91 : vector<4xf32> to vector<4x1xf32>
    %cst_40 = arith.constant 3.100000e+01 : f32
    %93 = vector.broadcast %cst_40 : f32 to vector<4x1xf32>
    %94 = arith.divf %92, %93 : vector<4x1xf32>
    %95 = vector.broadcast %82 : vector<1x32xf32> to vector<4x32xf32>
    %96 = arith.mulf %95, %89 : vector<4x32xf32>
    %97 = math.sqrt %94 : vector<4x1xf32>
    %cst_41 = arith.constant 9.99999997E-7 : f32
    %98 = vector.broadcast %cst_41 : f32 to vector<4x1xf32>
    %99 = arith.addf %97, %98 : vector<4x1xf32>
    %100 = vector.broadcast %99 : vector<4x1xf32> to vector<4x32xf32>
    %101 = arith.divf %96, %100 : vector<4x32xf32>
    %102 = vector.broadcast %83 : vector<1x32xf32> to vector<4x32xf32>
    %103 = arith.addf %101, %102 : vector<4x32xf32>
    %c0_42 = arith.constant 0 : index
    %c0_43 = arith.constant 0 : index
    %c0_44 = arith.constant 0 : index
    %104 = vector.load %arg13[%c0_42, %c0_43, %c0_44] : memref<1x4x32xf32, #tpu.memory_space<vmem>>, vector<1x4x32xf32>
    %105 = vector.shape_cast %104 : vector<1x4x32xf32> to vector<4x32xf32>
    %106 = vector.shape_cast %103 : vector<4x32xf32> to vector<1x4x32xf32>
    tpu.vector_store %arg13[%c0_42, %c0_43, %c0_44], %106 {strides = array<i32>} : memref<1x4x32xf32, #tpu.memory_space<vmem>>, vector<1x4x32xf32>,
    return
  }
  func.func @transform_0(%arg0: i32) -> (i32, i32, i32) {
    %c0_i32 = arith.constant 0 : i32
    %c0_i32_0 = arith.constant 0 : i32
    %c0_i32_1 = arith.constant 0 : i32
    return %arg0, %c0_i32, %c0_i32_0 : i32, i32, i32
  }
  func.func @transform_1(%arg0: i32) -> (i32, i32, i32) {
    %c0_i32 = arith.constant 0 : i32
    %c0_i32_0 = arith.constant 0 : i32
    %c0_i32_1 = arith.constant 0 : i32
    return %arg0, %c0_i32, %c0_i32_0 : i32, i32, i32
  }
  func.func @transform_2(%arg0: i32) -> (i32, i32) {
    %c0_i32 = arith.constant 0 : i32
    %c0_i32_0 = arith.constant 0 : i32
    %c0_i32_1 = arith.constant 0 : i32
    return %c0_i32, %c0_i32_0 : i32, i32
  }
  func.func @transform_3(%arg0: i32) -> (i32, i32) {
    %c0_i32 = arith.constant 0 : i32
    %c0_i32_0 = arith.constant 0 : i32
    %c0_i32_1 = arith.constant 0 : i32
    return %c0_i32, %c0_i32_0 : i32, i32
  }
  func.func @transform_4(%arg0: i32) -> (i32, i32) {
    %c0_i32 = arith.constant 0 : i32
    %c0_i32_0 = arith.constant 0 : i32
    %c0_i32_1 = arith.constant 0 : i32
    return %c0_i32, %c0_i32_0 : i32, i32
  }
  func.func @transform_5(%arg0: i32) -> (i32, i32) {
    %c0_i32 = arith.constant 0 : i32
    %c0_i32_0 = arith.constant 0 : i32
    %c0_i32_1 = arith.constant 0 : i32
    return %c0_i32, %c0_i32_0 : i32, i32
  }
  func.func @transform_6(%arg0: i32) -> (i32, i32, i32) {
    %c0_i32 = arith.constant 0 : i32
    %c0_i32_0 = arith.constant 0 : i32
    %c0_i32_1 = arith.constant 0 : i32
    return %arg0, %c0_i32, %c0_i32_0 : i32, i32, i32
  }
  func.func @transform_7(%arg0: i32) -> (i32, i32) {
    %c0_i32 = arith.constant 0 : i32
    %c0_i32_0 = arith.constant 0 : i32
    %c0_i32_1 = arith.constant 0 : i32
    return %c0_i32, %c0_i32_0 : i32, i32
  }
  func.func @transform_8(%arg0: i32) -> (i32, i32) {
    %c0_i32 = arith.constant 0 : i32
    %c0_i32_0 = arith.constant 0 : i32
    %c0_i32_1 = arith.constant 0 : i32
    return %c0_i32, %c0_i32_0 : i32, i32
  }
  func.func @transform_9(%arg0: i32) -> (i32, i32) {
    %c0_i32 = arith.constant 0 : i32
    %c0_i32_0 = arith.constant 0 : i32
    %c0_i32_1 = arith.constant 0 : i32
    return %c0_i32, %c0_i32_0 : i32, i32
  }
  func.func @transform_10(%arg0: i32) -> (i32, i32) {
    %c0_i32 = arith.constant 0 : i32
    %c0_i32_0 = arith.constant 0 : i32
    %c0_i32_1 = arith.constant 0 : i32
    return %c0_i32, %c0_i32_0 : i32, i32
  }
  func.func @transform_11(%arg0: i32) -> (i32, i32, i32) {
    %c0_i32 = arith.constant 0 : i32
    %c0_i32_0 = arith.constant 0 : i32
    %c0_i32_1 = arith.constant 0 : i32
    return %arg0, %c0_i32, %c0_i32_0 : i32, i32, i32
  }
  func.func @transform_12(%arg0: i32) -> (i32, i32, i32) {
    %c0_i32 = arith.constant 0 : i32
    %c0_i32_0 = arith.constant 0 : i32
    %c0_i32_1 = arith.constant 0 : i32
    return %arg0, %c0_i32, %c0_i32_0 : i32, i32, i32
  }
}

module attributes {stable_mosaic.version = 11 : i64} {
  func.func @_ffn_ln_kernel(%arg0: i32, %arg1: memref<8x32xf32, #tpu.memory_space<vmem>>, %arg2: memref<32x64xbf16, #tpu.memory_space<vmem>>, %arg3: memref<1x64xf32, #tpu.memory_space<vmem>>, %arg4: memref<64x32xbf16, #tpu.memory_space<vmem>>, %arg5: memref<1x32xf32, #tpu.memory_space<vmem>>, %arg6: memref<1x32xf32, #tpu.memory_space<vmem>>, %arg7: memref<1x32xf32, #tpu.memory_space<vmem>>, %arg8: memref<8x32xf32, #tpu.memory_space<vmem>>) attributes {dimension_semantics = [#tpu.dimension_semantics<parallel>], iteration_bounds = array<i64: 1>, scalar_prefetch = 0 : i64, scratch_operands = 0 : i64, tpu.core_type = #tpu.core_type<tc>, window_params = [{transform_indices = @transform_0, window_bounds = array<i64: 8, 32>}, {pipeline_mode = #tpu.pipeline_mode<synchronous>, transform_indices = @transform_1, window_bounds = array<i64: 32, 64>}, {pipeline_mode = #tpu.pipeline_mode<synchronous>, transform_indices = @transform_2, window_bounds = array<i64: 1, 64>}, {pipeline_mode = #tpu.pipeline_mode<synchronous>, transform_indices = @transform_3, window_bounds = array<i64: 64, 32>}, {pipeline_mode = #tpu.pipeline_mode<synchronous>, transform_indices = @transform_4, window_bounds = array<i64: 1, 32>}, {pipeline_mode = #tpu.pipeline_mode<synchronous>, transform_indices = @transform_5, window_bounds = array<i64: 1, 32>}, {pipeline_mode = #tpu.pipeline_mode<synchronous>, transform_indices = @transform_6, window_bounds = array<i64: 1, 32>}, {transform_indices = @transform_7, window_bounds = array<i64: 8, 32>}]} {
    %c0 = arith.constant 0 : index
    %c0_0 = arith.constant 0 : index
    %0 = vector.load %arg1[%c0, %c0_0] : memref<8x32xf32, #tpu.memory_space<vmem>>, vector<8x32xf32>
    %1 = arith.truncf %0 : vector<8x32xf32> to vector<8x32xbf16>
    %c0_1 = arith.constant 0 : index
    %c0_2 = arith.constant 0 : index
    %2 = vector.load %arg2[%c0_1, %c0_2] : memref<32x64xbf16, #tpu.memory_space<vmem>>, vector<32x64xbf16>
    %cst = arith.constant dense<0.000000e+00> : vector<8x64xf32>
    %3 = tpu.matmul %1, %2, %cst {dimension_numbers = #tpu.dot_dimension_numbers<[1], [0], [0], [1], [0, 0, 1, 1], [], []>} : vector<8x32xbf16>, vector<32x64xbf16>, vector<8x64xf32> -> vector<8x64xf32>
    %c0_3 = arith.constant 0 : index
    %c0_4 = arith.constant 0 : index
    %4 = vector.load %arg3[%c0_3, %c0_4] : memref<1x64xf32, #tpu.memory_space<vmem>>, vector<1x64xf32>
    %5 = vector.broadcast %4 : vector<1x64xf32> to vector<8x64xf32>
    %6 = arith.addf %3, %5 : vector<8x64xf32>
    %cst_5 = arith.constant 0.000000e+00 : f32
    %7 = vector.broadcast %cst_5 : f32 to vector<8x64xf32>
    %8 = arith.maximumf %6, %7 : vector<8x64xf32>
    %9 = arith.truncf %8 : vector<8x64xf32> to vector<8x64xbf16>
    %c0_6 = arith.constant 0 : index
    %c0_7 = arith.constant 0 : index
    %10 = vector.load %arg4[%c0_6, %c0_7] : memref<64x32xbf16, #tpu.memory_space<vmem>>, vector<64x32xbf16>
    %cst_8 = arith.constant dense<0.000000e+00> : vector<8x32xf32>
    %11 = tpu.matmul %9, %10, %cst_8 {dimension_numbers = #tpu.dot_dimension_numbers<[1], [0], [0], [1], [0, 0, 1, 1], [], []>} : vector<8x64xbf16>, vector<64x32xbf16>, vector<8x32xf32> -> vector<8x32xf32>
    %c0_9 = arith.constant 0 : index
    %c0_10 = arith.constant 0 : index
    %12 = vector.load %arg5[%c0_9, %c0_10] : memref<1x32xf32, #tpu.memory_space<vmem>>, vector<1x32xf32>
    %13 = vector.broadcast %12 : vector<1x32xf32> to vector<8x32xf32>
    %14 = arith.addf %11, %13 : vector<8x32xf32>
    %15 = arith.addf %0, %14 : vector<8x32xf32>
    %c0_11 = arith.constant 0 : index
    %c0_12 = arith.constant 0 : index
    %16 = vector.load %arg6[%c0_11, %c0_12] : memref<1x32xf32, #tpu.memory_space<vmem>>, vector<1x32xf32>
    %c0_13 = arith.constant 0 : index
    %c0_14 = arith.constant 0 : index
    %17 = vector.load %arg7[%c0_13, %c0_14] : memref<1x32xf32, #tpu.memory_space<vmem>>, vector<1x32xf32>
    %cst_15 = arith.constant dense<0.000000e+00> : vector<8xf32>
    %18 = vector.multi_reduction <add>, %15, %cst_15 [1] : vector<8x32xf32> to vector<8xf32>
    %19 = vector.shape_cast %18 : vector<8xf32> to vector<8x1xf32>
    %cst_16 = arith.constant 3.200000e+01 : f32
    %20 = vector.broadcast %cst_16 : f32 to vector<8x1xf32>
    %21 = arith.divf %19, %20 : vector<8x1xf32>
    %22 = vector.broadcast %21 : vector<8x1xf32> to vector<8x32xf32>
    %23 = arith.subf %15, %22 : vector<8x32xf32>
    %24 = arith.mulf %23, %23 : vector<8x32xf32>
    %cst_17 = arith.constant dense<0.000000e+00> : vector<8xf32>
    %25 = vector.multi_reduction <add>, %24, %cst_17 [1] : vector<8x32xf32> to vector<8xf32>
    %26 = vector.shape_cast %25 : vector<8xf32> to vector<8x1xf32>
    %cst_18 = arith.constant 3.100000e+01 : f32
    %27 = vector.broadcast %cst_18 : f32 to vector<8x1xf32>
    %28 = arith.divf %26, %27 : vector<8x1xf32>
    %29 = vector.broadcast %16 : vector<1x32xf32> to vector<8x32xf32>
    %30 = arith.mulf %29, %23 : vector<8x32xf32>
    %31 = math.sqrt %28 : vector<8x1xf32>
    %cst_19 = arith.constant 9.99999997E-7 : f32
    %32 = vector.broadcast %cst_19 : f32 to vector<8x1xf32>
    %33 = arith.addf %31, %32 : vector<8x1xf32>
    %34 = vector.broadcast %33 : vector<8x1xf32> to vector<8x32xf32>
    %35 = arith.divf %30, %34 : vector<8x32xf32>
    %36 = vector.broadcast %17 : vector<1x32xf32> to vector<8x32xf32>
    %37 = arith.addf %35, %36 : vector<8x32xf32>
    %c0_20 = arith.constant 0 : index
    %c0_21 = arith.constant 0 : index
    %38 = vector.load %arg8[%c0_20, %c0_21] : memref<8x32xf32, #tpu.memory_space<vmem>>, vector<8x32xf32>
    tpu.vector_store %arg8[%c0_20, %c0_21], %37 {strides = array<i32>} : memref<8x32xf32, #tpu.memory_space<vmem>>, vector<8x32xf32>,
    return
  }
  func.func @transform_0(%arg0: i32) -> (i32, i32) {
    %c0_i32 = arith.constant 0 : i32
    %c0_i32_0 = arith.constant 0 : i32
    return %arg0, %c0_i32 : i32, i32
  }
  func.func @transform_1(%arg0: i32) -> (i32, i32) {
    %c0_i32 = arith.constant 0 : i32
    %c0_i32_0 = arith.constant 0 : i32
    %c0_i32_1 = arith.constant 0 : i32
    return %c0_i32, %c0_i32_0 : i32, i32
  }
  func.func @transform_2(%arg0: i32) -> (i32, i32) {
    %c0_i32 = arith.constant 0 : i32
    %c0_i32_0 = arith.constant 0 : i32
    %c0_i32_1 = arith.constant 0 : i32
    return %c0_i32, %c0_i32_0 : i32, i32
  }
  func.func @transform_3(%arg0: i32) -> (i32, i32) {
    %c0_i32 = arith.constant 0 : i32
    %c0_i32_0 = arith.constant 0 : i32
    %c0_i32_1 = arith.constant 0 : i32
    return %c0_i32, %c0_i32_0 : i32, i32
  }
  func.func @transform_4(%arg0: i32) -> (i32, i32) {
    %c0_i32 = arith.constant 0 : i32
    %c0_i32_0 = arith.constant 0 : i32
    %c0_i32_1 = arith.constant 0 : i32
    return %c0_i32, %c0_i32_0 : i32, i32
  }
  func.func @transform_5(%arg0: i32) -> (i32, i32) {
    %c0_i32 = arith.constant 0 : i32
    %c0_i32_0 = arith.constant 0 : i32
    %c0_i32_1 = arith.constant 0 : i32
    return %c0_i32, %c0_i32_0 : i32, i32
  }
  func.func @transform_6(%arg0: i32) -> (i32, i32) {
    %c0_i32 = arith.constant 0 : i32
    %c0_i32_0 = arith.constant 0 : i32
    %c0_i32_1 = arith.constant 0 : i32
    return %c0_i32, %c0_i32_0 : i32, i32
  }
  func.func @transform_7(%arg0: i32) -> (i32, i32) {
    %c0_i32 = arith.constant 0 : i32
    %c0_i32_0 = arith.constant 0 : i32
    return %arg0, %c0_i32 : i32, i32
  }
}

module attributes {stable_mosaic.version = 11 : i64} {
  func.func @_ffn_ln_kernel(%arg0: i32, %arg1: memref<8x32xf32, #tpu.memory_space<vmem>>, %arg2: memref<32x64xbf16, #tpu.memory_space<vmem>>, %arg3: memref<1x64xf32, #tpu.memory_space<vmem>>, %arg4: memref<64x32xbf16, #tpu.memory_space<vmem>>, %arg5: memref<1x32xf32, #tpu.memory_space<vmem>>, %arg6: memref<1x32xf32, #tpu.memory_space<vmem>>, %arg7: memref<1x32xf32, #tpu.memory_space<vmem>>, %arg8: memref<8x32xf32, #tpu.memory_space<vmem>>) attributes {dimension_semantics = [#tpu.dimension_semantics<parallel>], iteration_bounds = array<i64: 2>, scalar_prefetch = 0 : i64, scratch_operands = 0 : i64, tpu.core_type = #tpu.core_type<tc>, window_params = [{transform_indices = @transform_0, window_bounds = array<i64: 8, 32>}, {pipeline_mode = #tpu.pipeline_mode<synchronous>, transform_indices = @transform_1, window_bounds = array<i64: 32, 64>}, {pipeline_mode = #tpu.pipeline_mode<synchronous>, transform_indices = @transform_2, window_bounds = array<i64: 1, 64>}, {pipeline_mode = #tpu.pipeline_mode<synchronous>, transform_indices = @transform_3, window_bounds = array<i64: 64, 32>}, {pipeline_mode = #tpu.pipeline_mode<synchronous>, transform_indices = @transform_4, window_bounds = array<i64: 1, 32>}, {pipeline_mode = #tpu.pipeline_mode<synchronous>, transform_indices = @transform_5, window_bounds = array<i64: 1, 32>}, {pipeline_mode = #tpu.pipeline_mode<synchronous>, transform_indices = @transform_6, window_bounds = array<i64: 1, 32>}, {transform_indices = @transform_7, window_bounds = array<i64: 8, 32>}]} {
    %c0 = arith.constant 0 : index
    %c0_0 = arith.constant 0 : index
    %0 = vector.load %arg1[%c0, %c0_0] : memref<8x32xf32, #tpu.memory_space<vmem>>, vector<8x32xf32>
    %1 = arith.truncf %0 : vector<8x32xf32> to vector<8x32xbf16>
    %c0_1 = arith.constant 0 : index
    %c0_2 = arith.constant 0 : index
    %2 = vector.load %arg2[%c0_1, %c0_2] : memref<32x64xbf16, #tpu.memory_space<vmem>>, vector<32x64xbf16>
    %cst = arith.constant dense<0.000000e+00> : vector<8x64xf32>
    %3 = tpu.matmul %1, %2, %cst {dimension_numbers = #tpu.dot_dimension_numbers<[1], [0], [0], [1], [0, 0, 1, 1], [], []>} : vector<8x32xbf16>, vector<32x64xbf16>, vector<8x64xf32> -> vector<8x64xf32>
    %c0_3 = arith.constant 0 : index
    %c0_4 = arith.constant 0 : index
    %4 = vector.load %arg3[%c0_3, %c0_4] : memref<1x64xf32, #tpu.memory_space<vmem>>, vector<1x64xf32>
    %5 = vector.broadcast %4 : vector<1x64xf32> to vector<8x64xf32>
    %6 = arith.addf %3, %5 : vector<8x64xf32>
    %cst_5 = arith.constant 0.000000e+00 : f32
    %7 = vector.broadcast %cst_5 : f32 to vector<8x64xf32>
    %8 = arith.maximumf %6, %7 : vector<8x64xf32>
    %9 = arith.truncf %8 : vector<8x64xf32> to vector<8x64xbf16>
    %c0_6 = arith.constant 0 : index
    %c0_7 = arith.constant 0 : index
    %10 = vector.load %arg4[%c0_6, %c0_7] : memref<64x32xbf16, #tpu.memory_space<vmem>>, vector<64x32xbf16>
    %cst_8 = arith.constant dense<0.000000e+00> : vector<8x32xf32>
    %11 = tpu.matmul %9, %10, %cst_8 {dimension_numbers = #tpu.dot_dimension_numbers<[1], [0], [0], [1], [0, 0, 1, 1], [], []>} : vector<8x64xbf16>, vector<64x32xbf16>, vector<8x32xf32> -> vector<8x32xf32>
    %c0_9 = arith.constant 0 : index
    %c0_10 = arith.constant 0 : index
    %12 = vector.load %arg5[%c0_9, %c0_10] : memref<1x32xf32, #tpu.memory_space<vmem>>, vector<1x32xf32>
    %13 = vector.broadcast %12 : vector<1x32xf32> to vector<8x32xf32>
    %14 = arith.addf %11, %13 : vector<8x32xf32>
    %15 = arith.addf %0, %14 : vector<8x32xf32>
    %c0_11 = arith.constant 0 : index
    %c0_12 = arith.constant 0 : index
    %16 = vector.load %arg6[%c0_11, %c0_12] : memref<1x32xf32, #tpu.memory_space<vmem>>, vector<1x32xf32>
    %c0_13 = arith.constant 0 : index
    %c0_14 = arith.constant 0 : index
    %17 = vector.load %arg7[%c0_13, %c0_14] : memref<1x32xf32, #tpu.memory_space<vmem>>, vector<1x32xf32>
    %cst_15 = arith.constant dense<0.000000e+00> : vector<8xf32>
    %18 = vector.multi_reduction <add>, %15, %cst_15 [1] : vector<8x32xf32> to vector<8xf32>
    %19 = vector.shape_cast %18 : vector<8xf32> to vector<8x1xf32>
    %cst_16 = arith.constant 3.200000e+01 : f32
    %20 = vector.broadcast %cst_16 : f32 to vector<8x1xf32>
    %21 = arith.divf %19, %20 : vector<8x1xf32>
    %22 = vector.broadcast %21 : vector<8x1xf32> to vector<8x32xf32>
    %23 = arith.subf %15, %22 : vector<8x32xf32>
    %24 = arith.mulf %23, %23 : vector<8x32xf32>
    %cst_17 = arith.constant dense<0.000000e+00> : vector<8xf32>
    %25 = vector.multi_reduction <add>, %24, %cst_17 [1] : vector<8x32xf32> to vector<8xf32>
    %26 = vector.shape_cast %25 : vector<8xf32> to vector<8x1xf32>
    %cst_18 = arith.constant 3.100000e+01 : f32
    %27 = vector.broadcast %cst_18 : f32 to vector<8x1xf32>
    %28 = arith.divf %26, %27 : vector<8x1xf32>
    %29 = vector.broadcast %16 : vector<1x32xf32> to vector<8x32xf32>
    %30 = arith.mulf %29, %23 : vector<8x32xf32>
    %31 = math.sqrt %28 : vector<8x1xf32>
    %cst_19 = arith.constant 9.99999997E-7 : f32
    %32 = vector.broadcast %cst_19 : f32 to vector<8x1xf32>
    %33 = arith.addf %31, %32 : vector<8x1xf32>
    %34 = vector.broadcast %33 : vector<8x1xf32> to vector<8x32xf32>
    %35 = arith.divf %30, %34 : vector<8x32xf32>
    %36 = vector.broadcast %17 : vector<1x32xf32> to vector<8x32xf32>
    %37 = arith.addf %35, %36 : vector<8x32xf32>
    %c0_20 = arith.constant 0 : index
    %c0_21 = arith.constant 0 : index
    %38 = vector.load %arg8[%c0_20, %c0_21] : memref<8x32xf32, #tpu.memory_space<vmem>>, vector<8x32xf32>
    tpu.vector_store %arg8[%c0_20, %c0_21], %37 {strides = array<i32>} : memref<8x32xf32, #tpu.memory_space<vmem>>, vector<8x32xf32>,
    return
  }
  func.func @transform_0(%arg0: i32) -> (i32, i32) {
    %c0_i32 = arith.constant 0 : i32
    %c0_i32_0 = arith.constant 0 : i32
    return %arg0, %c0_i32 : i32, i32
  }
  func.func @transform_1(%arg0: i32) -> (i32, i32) {
    %c0_i32 = arith.constant 0 : i32
    %c0_i32_0 = arith.constant 0 : i32
    %c0_i32_1 = arith.constant 0 : i32
    return %c0_i32, %c0_i32_0 : i32, i32
  }
  func.func @transform_2(%arg0: i32) -> (i32, i32) {
    %c0_i32 = arith.constant 0 : i32
    %c0_i32_0 = arith.constant 0 : i32
    %c0_i32_1 = arith.constant 0 : i32
    return %c0_i32, %c0_i32_0 : i32, i32
  }
  func.func @transform_3(%arg0: i32) -> (i32, i32) {
    %c0_i32 = arith.constant 0 : i32
    %c0_i32_0 = arith.constant 0 : i32
    %c0_i32_1 = arith.constant 0 : i32
    return %c0_i32, %c0_i32_0 : i32, i32
  }
  func.func @transform_4(%arg0: i32) -> (i32, i32) {
    %c0_i32 = arith.constant 0 : i32
    %c0_i32_0 = arith.constant 0 : i32
    %c0_i32_1 = arith.constant 0 : i32
    return %c0_i32, %c0_i32_0 : i32, i32
  }
  func.func @transform_5(%arg0: i32) -> (i32, i32) {
    %c0_i32 = arith.constant 0 : i32
    %c0_i32_0 = arith.constant 0 : i32
    %c0_i32_1 = arith.constant 0 : i32
    return %c0_i32, %c0_i32_0 : i32, i32
  }
  func.func @transform_6(%arg0: i32) -> (i32, i32) {
    %c0_i32 = arith.constant 0 : i32
    %c0_i32_0 = arith.constant 0 : i32
    %c0_i32_1 = arith.constant 0 : i32
    return %c0_i32, %c0_i32_0 : i32, i32
  }
  func.func @transform_7(%arg0: i32) -> (i32, i32) {
    %c0_i32 = arith.constant 0 : i32
    %c0_i32_0 = arith.constant 0 : i32
    return %arg0, %c0_i32 : i32, i32
  }
}

module attributes {stable_mosaic.version = 11 : i64} {
  func.func @_mha_o_kernel(%arg0: i32, %arg1: memref<1x4x32xf32, #tpu.memory_space<vmem>>, %arg2: memref<32x64xbf16, #tpu.memory_space<vmem>>, %arg3: memref<1x64xf32, #tpu.memory_space<vmem>>, %arg4: memref<1x1x4xf32, #tpu.memory_space<vmem>>, %arg5: memref<1x32xf32, #tpu.memory_space<vmem>>, %arg6: memref<1x32xf32, #tpu.memory_space<vmem>>, %arg7: memref<1x4x32xf32, #tpu.memory_space<vmem>>) attributes {dimension_semantics = [#tpu.dimension_semantics<parallel>], iteration_bounds = array<i64: 2>, scalar_prefetch = 0 : i64, scratch_operands = 0 : i64, tpu.core_type = #tpu.core_type<tc>, window_params = [{transform_indices = @transform_0, window_bounds = array<i64: 1, 4, 32>}, {pipeline_mode = #tpu.pipeline_mode<synchronous>, transform_indices = @transform_1, window_bounds = array<i64: 32, 64>}, {pipeline_mode = #tpu.pipeline_mode<synchronous>, transform_indices = @transform_2, window_bounds = array<i64: 1, 64>}, {transform_indices = @transform_3, window_bounds = array<i64: 1, 1, 4>}, {pipeline_mode = #tpu.pipeline_mode<synchronous>, transform_indices = @transform_4, window_bounds = array<i64: 1, 32>}, {pipeline_mode = #tpu.pipeline_mode<synchronous>, transform_indices = @transform_5, window_bounds = array<i64: 1, 32>}, {transform_indices = @transform_6, window_bounds = array<i64: 1, 4, 32>}]} {
    %c0 = arith.constant 0 : index
    %c0_0 = arith.constant 0 : index
    %c0_1 = arith.constant 0 : index
    %0 = vector.load %arg1[%c0, %c0_0, %c0_1] : memref<1x4x32xf32, #tpu.memory_space<vmem>>, vector<1x4x32xf32>
    %1 = vector.shape_cast %0 : vector<1x4x32xf32> to vector<4x32xf32>
    %2 = arith.truncf %1 : vector<4x32xf32> to vector<4x32xbf16>
    %c0_2 = arith.constant 0 : index
    %c0_3 = arith.constant 0 : index
    %3 = vector.load %arg2[%c0_2, %c0_3] : memref<32x64xbf16, #tpu.memory_space<vmem>>, vector<32x64xbf16>
    %cst = arith.constant dense<0.000000e+00> : vector<4x64xf32>
    %4 = tpu.matmul %2, %3, %cst {dimension_numbers = #tpu.dot_dimension_numbers<[1], [0], [0], [1], [0, 0, 1, 1], [], []>} : vector<4x32xbf16>, vector<32x64xbf16>, vector<4x64xf32> -> vector<4x64xf32>
    %c0_4 = arith.constant 0 : index
    %c0_5 = arith.constant 0 : index
    %5 = vector.load %arg3[%c0_4, %c0_5] : memref<1x64xf32, #tpu.memory_space<vmem>>, vector<1x64xf32>
    %6 = vector.broadcast %5 : vector<1x64xf32> to vector<4x64xf32>
    %7 = arith.addf %4, %6 : vector<4x64xf32>
    %c0_6 = arith.constant 0 : index
    %c0_7 = arith.constant 0 : index
    %c0_8 = arith.constant 0 : index
    %8 = vector.load %arg4[%c0_6, %c0_7, %c0_8] : memref<1x1x4xf32, #tpu.memory_space<vmem>>, vector<1x1x4xf32>
    %9 = vector.shape_cast %8 : vector<1x1x4xf32> to vector<1x4xf32>
    %10 = vector.extract_strided_slice %7 {offsets = [0, 0], sizes = [4, 32], strides = [1, 1]} : vector<4x64xf32> to vector<4x32xf32>
    %11 = vector.extract_strided_slice %7 {offsets = [0, 32], sizes = [4, 32], strides = [1, 1]} : vector<4x64xf32> to vector<4x32xf32>
    %12 = vector.extract_strided_slice %10 {offsets = [0, 0], sizes = [4, 8], strides = [1, 1]} : vector<4x32xf32> to vector<4x8xf32>
    %13 = vector.extract_strided_slice %11 {offsets = [0, 0], sizes = [4, 8], strides = [1, 1]} : vector<4x32xf32> to vector<4x8xf32>
    %14 = vector.extract_strided_slice %1 {offsets = [0, 0], sizes = [4, 8], strides = [1, 1]} : vector<4x32xf32> to vector<4x8xf32>
    %15 = arith.truncf %12 : vector<4x8xf32> to vector<4x8xbf16>
    %16 = arith.truncf %13 : vector<4x8xf32> to vector<4x8xbf16>
    %cst_9 = arith.constant dense<0.000000e+00> : vector<4x4xf32>
    %17 = tpu.matmul %15, %16, %cst_9 {dimension_numbers = #tpu.dot_dimension_numbers<[1], [1], [0], [0], [0, 0, 1, 0], [], []>} : vector<4x8xbf16>, vector<4x8xbf16>, vector<4x4xf32> -> vector<4x4xf32>
    %cst_10 = arith.constant 0.353553385 : f32
    %18 = vector.broadcast %cst_10 : f32 to vector<4x4xf32>
    %19 = arith.mulf %17, %18 : vector<4x4xf32>
    %cst_11 = arith.constant 0.000000e+00 : f32
    %20 = vector.broadcast %cst_11 : f32 to vector<1x4xf32>
    %21 = arith.cmpf oeq, %9, %20 : vector<1x4xf32>
    %cst_12 = arith.constant -1.000000e+09 : f32
    %22 = vector.shape_cast %21 : vector<1x4xi1> to vector<1x4xi1>
    %23 = vector.broadcast %22 : vector<1x4xi1> to vector<4x4xi1>
    %24 = vector.broadcast %cst_12 : f32 to vector<4x4xf32>
    %25 = arith.select %23, %24, %19 : vector<4x4xi1>, vector<4x4xf32>
    %cst_13 = arith.constant dense<0xFF800000> : vector<4xf32>
    %26 = vector.multi_reduction <maximumf>, %25, %cst_13 [1] : vector<4x4xf32> to vector<4xf32>
    %27 = vector.shape_cast %26 : vector<4xf32> to vector<4x1xf32>
    %28 = vector.broadcast %27 : vector<4x1xf32> to vector<4x4xf32>
    %29 = arith.subf %25, %28 : vector<4x4xf32>
    %30 = math.exp %29 : vector<4x4xf32>
    %cst_14 = arith.constant dense<0.000000e+00> : vector<4xf32>
    %31 = vector.multi_reduction <add>, %30, %cst_14 [1] : vector<4x4xf32> to vector<4xf32>
    %32 = vector.shape_cast %31 : vector<4xf32> to vector<4x1xf32>
    %33 = tpu.reciprocal %32 {approx = true} : vector<4x1xf32> -> vector<4x1xf32>
    %34 = vector.broadcast %33 : vector<4x1xf32> to vector<4x4xf32>
    %35 = arith.mulf %30, %34 : vector<4x4xf32>
    %36 = arith.truncf %35 : vector<4x4xf32> to vector<4x4xbf16>
    %37 = arith.truncf %14 : vector<4x8xf32> to vector<4x8xbf16>
    %cst_15 = arith.constant dense<0.000000e+00> : vector<4x8xf32>
    %38 = tpu.matmul %36, %37, %cst_15 {dimension_numbers = #tpu.dot_dimension_numbers<[1], [0], [0], [1], [0, 0, 1, 1], [], []>} : vector<4x4xbf16>, vector<4x8xbf16>, vector<4x8xf32> -> vector<4x8xf32>
    %39 = vector.extract_strided_slice %10 {offsets = [0, 8], sizes = [4, 8], strides = [1, 1]} : vector<4x32xf32> to vector<4x8xf32>
    %40 = vector.extract_strided_slice %11 {offsets = [0, 8], sizes = [4, 8], strides = [1, 1]} : vector<4x32xf32> to vector<4x8xf32>
    %41 = vector.extract_strided_slice %1 {offsets = [0, 8], sizes = [4, 8], strides = [1, 1]} : vector<4x32xf32> to vector<4x8xf32>
    %42 = arith.truncf %39 : vector<4x8xf32> to vector<4x8xbf16>
    %43 = arith.truncf %40 : vector<4x8xf32> to vector<4x8xbf16>
    %cst_16 = arith.constant dense<0.000000e+00> : vector<4x4xf32>
    %44 = tpu.matmul %42, %43, %cst_16 {dimension_numbers = #tpu.dot_dimension_numbers<[1], [1], [0], [0], [0, 0, 1, 0], [], []>} : vector<4x8xbf16>, vector<4x8xbf16>, vector<4x4xf32> -> vector<4x4xf32>
    %cst_17 = arith.constant 0.353553385 : f32
    %45 = vector.broadcast %cst_17 : f32 to vector<4x4xf32>
    %46 = arith.mulf %44, %45 : vector<4x4xf32>
    %cst_18 = arith.constant 0.000000e+00 : f32
    %47 = vector.broadcast %cst_18 : f32 to vector<1x4xf32>
    %48 = arith.cmpf oeq, %9, %47 : vector<1x4xf32>
    %cst_19 = arith.constant -1.000000e+09 : f32
    %49 = vector.shape_cast %48 : vector<1x4xi1> to vector<1x4xi1>
    %50 = vector.broadcast %49 : vector<1x4xi1> to vector<4x4xi1>
    %51 = vector.broadcast %cst_19 : f32 to vector<4x4xf32>
    %52 = arith.select %50, %51, %46 : vector<4x4xi1>, vector<4x4xf32>
    %cst_20 = arith.constant dense<0xFF800000> : vector<4xf32>
    %53 = vector.multi_reduction <maximumf>, %52, %cst_20 [1] : vector<4x4xf32> to vector<4xf32>
    %54 = vector.shape_cast %53 : vector<4xf32> to vector<4x1xf32>
    %55 = vector.broadcast %54 : vector<4x1xf32> to vector<4x4xf32>
    %56 = arith.subf %52, %55 : vector<4x4xf32>
    %57 = math.exp %56 : vector<4x4xf32>
    %cst_21 = arith.constant dense<0.000000e+00> : vector<4xf32>
    %58 = vector.multi_reduction <add>, %57, %cst_21 [1] : vector<4x4xf32> to vector<4xf32>
    %59 = vector.shape_cast %58 : vector<4xf32> to vector<4x1xf32>
    %60 = tpu.reciprocal %59 {approx = true} : vector<4x1xf32> -> vector<4x1xf32>
    %61 = vector.broadcast %60 : vector<4x1xf32> to vector<4x4xf32>
    %62 = arith.mulf %57, %61 : vector<4x4xf32>
    %63 = arith.truncf %62 : vector<4x4xf32> to vector<4x4xbf16>
    %64 = arith.truncf %41 : vector<4x8xf32> to vector<4x8xbf16>
    %cst_22 = arith.constant dense<0.000000e+00> : vector<4x8xf32>
    %65 = tpu.matmul %63, %64, %cst_22 {dimension_numbers = #tpu.dot_dimension_numbers<[1], [0], [0], [1], [0, 0, 1, 1], [], []>} : vector<4x4xbf16>, vector<4x8xbf16>, vector<4x8xf32> -> vector<4x8xf32>
    %66 = vector.extract_strided_slice %10 {offsets = [0, 16], sizes = [4, 8], strides = [1, 1]} : vector<4x32xf32> to vector<4x8xf32>
    %67 = vector.extract_strided_slice %11 {offsets = [0, 16], sizes = [4, 8], strides = [1, 1]} : vector<4x32xf32> to vector<4x8xf32>
    %68 = vector.extract_strided_slice %1 {offsets = [0, 16], sizes = [4, 8], strides = [1, 1]} : vector<4x32xf32> to vector<4x8xf32>
    %69 = arith.truncf %66 : vector<4x8xf32> to vector<4x8xbf16>
    %70 = arith.truncf %67 : vector<4x8xf32> to vector<4x8xbf16>
    %cst_23 = arith.constant dense<0.000000e+00> : vector<4x4xf32>
    %71 = tpu.matmul %69, %70, %cst_23 {dimension_numbers = #tpu.dot_dimension_numbers<[1], [1], [0], [0], [0, 0, 1, 0], [], []>} : vector<4x8xbf16>, vector<4x8xbf16>, vector<4x4xf32> -> vector<4x4xf32>
    %cst_24 = arith.constant 0.353553385 : f32
    %72 = vector.broadcast %cst_24 : f32 to vector<4x4xf32>
    %73 = arith.mulf %71, %72 : vector<4x4xf32>
    %cst_25 = arith.constant 0.000000e+00 : f32
    %74 = vector.broadcast %cst_25 : f32 to vector<1x4xf32>
    %75 = arith.cmpf oeq, %9, %74 : vector<1x4xf32>
    %cst_26 = arith.constant -1.000000e+09 : f32
    %76 = vector.shape_cast %75 : vector<1x4xi1> to vector<1x4xi1>
    %77 = vector.broadcast %76 : vector<1x4xi1> to vector<4x4xi1>
    %78 = vector.broadcast %cst_26 : f32 to vector<4x4xf32>
    %79 = arith.select %77, %78, %73 : vector<4x4xi1>, vector<4x4xf32>
    %cst_27 = arith.constant dense<0xFF800000> : vector<4xf32>
    %80 = vector.multi_reduction <maximumf>, %79, %cst_27 [1] : vector<4x4xf32> to vector<4xf32>
    %81 = vector.shape_cast %80 : vector<4xf32> to vector<4x1xf32>
    %82 = vector.broadcast %81 : vector<4x1xf32> to vector<4x4xf32>
    %83 = arith.subf %79, %82 : vector<4x4xf32>
    %84 = math.exp %83 : vector<4x4xf32>
    %cst_28 = arith.constant dense<0.000000e+00> : vector<4xf32>
    %85 = vector.multi_reduction <add>, %84, %cst_28 [1] : vector<4x4xf32> to vector<4xf32>
    %86 = vector.shape_cast %85 : vector<4xf32> to vector<4x1xf32>
    %87 = tpu.reciprocal %86 {approx = true} : vector<4x1xf32> -> vector<4x1xf32>
    %88 = vector.broadcast %87 : vector<4x1xf32> to vector<4x4xf32>
    %89 = arith.mulf %84, %88 : vector<4x4xf32>
    %90 = arith.truncf %89 : vector<4x4xf32> to vector<4x4xbf16>
    %91 = arith.truncf %68 : vector<4x8xf32> to vector<4x8xbf16>
    %cst_29 = arith.constant dense<0.000000e+00> : vector<4x8xf32>
    %92 = tpu.matmul %90, %91, %cst_29 {dimension_numbers = #tpu.dot_dimension_numbers<[1], [0], [0], [1], [0, 0, 1, 1], [], []>} : vector<4x4xbf16>, vector<4x8xbf16>, vector<4x8xf32> -> vector<4x8xf32>
    %93 = vector.extract_strided_slice %10 {offsets = [0, 24], sizes = [4, 8], strides = [1, 1]} : vector<4x32xf32> to vector<4x8xf32>
    %94 = vector.extract_strided_slice %11 {offsets = [0, 24], sizes = [4, 8], strides = [1, 1]} : vector<4x32xf32> to vector<4x8xf32>
    %95 = vector.extract_strided_slice %1 {offsets = [0, 24], sizes = [4, 8], strides = [1, 1]} : vector<4x32xf32> to vector<4x8xf32>
    %96 = arith.truncf %93 : vector<4x8xf32> to vector<4x8xbf16>
    %97 = arith.truncf %94 : vector<4x8xf32> to vector<4x8xbf16>
    %cst_30 = arith.constant dense<0.000000e+00> : vector<4x4xf32>
    %98 = tpu.matmul %96, %97, %cst_30 {dimension_numbers = #tpu.dot_dimension_numbers<[1], [1], [0], [0], [0, 0, 1, 0], [], []>} : vector<4x8xbf16>, vector<4x8xbf16>, vector<4x4xf32> -> vector<4x4xf32>
    %cst_31 = arith.constant 0.353553385 : f32
    %99 = vector.broadcast %cst_31 : f32 to vector<4x4xf32>
    %100 = arith.mulf %98, %99 : vector<4x4xf32>
    %cst_32 = arith.constant 0.000000e+00 : f32
    %101 = vector.broadcast %cst_32 : f32 to vector<1x4xf32>
    %102 = arith.cmpf oeq, %9, %101 : vector<1x4xf32>
    %cst_33 = arith.constant -1.000000e+09 : f32
    %103 = vector.shape_cast %102 : vector<1x4xi1> to vector<1x4xi1>
    %104 = vector.broadcast %103 : vector<1x4xi1> to vector<4x4xi1>
    %105 = vector.broadcast %cst_33 : f32 to vector<4x4xf32>
    %106 = arith.select %104, %105, %100 : vector<4x4xi1>, vector<4x4xf32>
    %cst_34 = arith.constant dense<0xFF800000> : vector<4xf32>
    %107 = vector.multi_reduction <maximumf>, %106, %cst_34 [1] : vector<4x4xf32> to vector<4xf32>
    %108 = vector.shape_cast %107 : vector<4xf32> to vector<4x1xf32>
    %109 = vector.broadcast %108 : vector<4x1xf32> to vector<4x4xf32>
    %110 = arith.subf %106, %109 : vector<4x4xf32>
    %111 = math.exp %110 : vector<4x4xf32>
    %cst_35 = arith.constant dense<0.000000e+00> : vector<4xf32>
    %112 = vector.multi_reduction <add>, %111, %cst_35 [1] : vector<4x4xf32> to vector<4xf32>
    %113 = vector.shape_cast %112 : vector<4xf32> to vector<4x1xf32>
    %114 = tpu.reciprocal %113 {approx = true} : vector<4x1xf32> -> vector<4x1xf32>
    %115 = vector.broadcast %114 : vector<4x1xf32> to vector<4x4xf32>
    %116 = arith.mulf %111, %115 : vector<4x4xf32>
    %117 = arith.truncf %116 : vector<4x4xf32> to vector<4x4xbf16>
    %118 = arith.truncf %95 : vector<4x8xf32> to vector<4x8xbf16>
    %cst_36 = arith.constant dense<0.000000e+00> : vector<4x8xf32>
    %119 = tpu.matmul %117, %118, %cst_36 {dimension_numbers = #tpu.dot_dimension_numbers<[1], [0], [0], [1], [0, 0, 1, 1], [], []>} : vector<4x4xbf16>, vector<4x8xbf16>, vector<4x8xf32> -> vector<4x8xf32>
    %120 = tpu.concatenate %38, %65, %92, %119 in 1 : vector<4x8xf32>, vector<4x8xf32>, vector<4x8xf32>, vector<4x8xf32> -> vector<4x32xf32>
    %121 = arith.addf %1, %120 : vector<4x32xf32>
    %c0_37 = arith.constant 0 : index
    %c0_38 = arith.constant 0 : index
    %122 = vector.load %arg5[%c0_37, %c0_38] : memref<1x32xf32, #tpu.memory_space<vmem>>, vector<1x32xf32>
    %c0_39 = arith.constant 0 : index
    %c0_40 = arith.constant 0 : index
    %123 = vector.load %arg6[%c0_39, %c0_40] : memref<1x32xf32, #tpu.memory_space<vmem>>, vector<1x32xf32>
    %cst_41 = arith.constant dense<0.000000e+00> : vector<4xf32>
    %124 = vector.multi_reduction <add>, %121, %cst_41 [1] : vector<4x32xf32> to vector<4xf32>
    %125 = vector.shape_cast %124 : vector<4xf32> to vector<4x1xf32>
    %cst_42 = arith.constant 3.200000e+01 : f32
    %126 = vector.broadcast %cst_42 : f32 to vector<4x1xf32>
    %127 = arith.divf %125, %126 : vector<4x1xf32>
    %128 = vector.broadcast %127 : vector<4x1xf32> to vector<4x32xf32>
    %129 = arith.subf %121, %128 : vector<4x32xf32>
    %130 = arith.mulf %129, %129 : vector<4x32xf32>
    %cst_43 = arith.constant dense<0.000000e+00> : vector<4xf32>
    %131 = vector.multi_reduction <add>, %130, %cst_43 [1] : vector<4x32xf32> to vector<4xf32>
    %132 = vector.shape_cast %131 : vector<4xf32> to vector<4x1xf32>
    %cst_44 = arith.constant 3.100000e+01 : f32
    %133 = vector.broadcast %cst_44 : f32 to vector<4x1xf32>
    %134 = arith.divf %132, %133 : vector<4x1xf32>
    %135 = vector.broadcast %122 : vector<1x32xf32> to vector<4x32xf32>
    %136 = arith.mulf %135, %129 : vector<4x32xf32>
    %137 = math.sqrt %134 : vector<4x1xf32>
    %cst_45 = arith.constant 9.99999997E-7 : f32
    %138 = vector.broadcast %cst_45 : f32 to vector<4x1xf32>
    %139 = arith.addf %137, %138 : vector<4x1xf32>
    %140 = vector.broadcast %139 : vector<4x1xf32> to vector<4x32xf32>
    %141 = arith.divf %136, %140 : vector<4x32xf32>
    %142 = vector.broadcast %123 : vector<1x32xf32> to vector<4x32xf32>
    %143 = arith.addf %141, %142 : vector<4x32xf32>
    %c0_46 = arith.constant 0 : index
    %c0_47 = arith.constant 0 : index
    %c0_48 = arith.constant 0 : index
    %144 = vector.load %arg7[%c0_46, %c0_47, %c0_48] : memref<1x4x32xf32, #tpu.memory_space<vmem>>, vector<1x4x32xf32>
    %145 = vector.shape_cast %144 : vector<1x4x32xf32> to vector<4x32xf32>
    %146 = vector.shape_cast %143 : vector<4x32xf32> to vector<1x4x32xf32>
    tpu.vector_store %arg7[%c0_46, %c0_47, %c0_48], %146 {strides = array<i32>} : memref<1x4x32xf32, #tpu.memory_space<vmem>>, vector<1x4x32xf32>,
    return
  }
  func.func @transform_0(%arg0: i32) -> (i32, i32, i32) {
    %c0_i32 = arith.constant 0 : i32
    %c0_i32_0 = arith.constant 0 : i32
    %c0_i32_1 = arith.constant 0 : i32
    return %arg0, %c0_i32, %c0_i32_0 : i32, i32, i32
  }
  func.func @transform_1(%arg0: i32) -> (i32, i32) {
    %c0_i32 = arith.constant 0 : i32
    %c0_i32_0 = arith.constant 0 : i32
    %c0_i32_1 = arith.constant 0 : i32
    return %c0_i32, %c0_i32_0 : i32, i32
  }
  func.func @transform_2(%arg0: i32) -> (i32, i32) {
    %c0_i32 = arith.constant 0 : i32
    %c0_i32_0 = arith.constant 0 : i32
    %c0_i32_1 = arith.constant 0 : i32
    return %c0_i32, %c0_i32_0 : i32, i32
  }
  func.func @transform_3(%arg0: i32) -> (i32, i32, i32) {
    %c0_i32 = arith.constant 0 : i32
    %c0_i32_0 = arith.constant 0 : i32
    %c0_i32_1 = arith.constant 0 : i32
    return %arg0, %c0_i32, %c0_i32_0 : i32, i32, i32
  }
  func.func @transform_4(%arg0: i32) -> (i32, i32) {
    %c0_i32 = arith.constant 0 : i32
    %c0_i32_0 = arith.constant 0 : i32
    %c0_i32_1 = arith.constant 0 : i32
    return %c0_i32, %c0_i32_0 : i32, i32
  }
  func.func @transform_5(%arg0: i32) -> (i32, i32) {
    %c0_i32 = arith.constant 0 : i32
    %c0_i32_0 = arith.constant 0 : i32
    %c0_i32_1 = arith.constant 0 : i32
    return %c0_i32, %c0_i32_0 : i32, i32
  }
  func.func @transform_6(%arg0: i32) -> (i32, i32, i32) {
    %c0_i32 = arith.constant 0 : i32
    %c0_i32_0 = arith.constant 0 : i32
    %c0_i32_1 = arith.constant 0 : i32
    return %arg0, %c0_i32, %c0_i32_0 : i32, i32, i32
  }
}

module attributes {stable_mosaic.version = 11 : i64} {
  func.func @_ffn_ln_kernel(%arg0: i32, %arg1: memref<8x32xf32, #tpu.memory_space<vmem>>, %arg2: memref<32x64xbf16, #tpu.memory_space<vmem>>, %arg3: memref<1x64xf32, #tpu.memory_space<vmem>>, %arg4: memref<64x32xbf16, #tpu.memory_space<vmem>>, %arg5: memref<1x32xf32, #tpu.memory_space<vmem>>, %arg6: memref<1x32xf32, #tpu.memory_space<vmem>>, %arg7: memref<1x32xf32, #tpu.memory_space<vmem>>, %arg8: memref<8x32xf32, #tpu.memory_space<vmem>>) attributes {dimension_semantics = [#tpu.dimension_semantics<parallel>], iteration_bounds = array<i64: 2>, scalar_prefetch = 0 : i64, scratch_operands = 0 : i64, tpu.core_type = #tpu.core_type<tc>, window_params = [{transform_indices = @transform_0, window_bounds = array<i64: 8, 32>}, {pipeline_mode = #tpu.pipeline_mode<synchronous>, transform_indices = @transform_1, window_bounds = array<i64: 32, 64>}, {pipeline_mode = #tpu.pipeline_mode<synchronous>, transform_indices = @transform_2, window_bounds = array<i64: 1, 64>}, {pipeline_mode = #tpu.pipeline_mode<synchronous>, transform_indices = @transform_3, window_bounds = array<i64: 64, 32>}, {pipeline_mode = #tpu.pipeline_mode<synchronous>, transform_indices = @transform_4, window_bounds = array<i64: 1, 32>}, {pipeline_mode = #tpu.pipeline_mode<synchronous>, transform_indices = @transform_5, window_bounds = array<i64: 1, 32>}, {pipeline_mode = #tpu.pipeline_mode<synchronous>, transform_indices = @transform_6, window_bounds = array<i64: 1, 32>}, {transform_indices = @transform_7, window_bounds = array<i64: 8, 32>}]} {
    %c0 = arith.constant 0 : index
    %c0_0 = arith.constant 0 : index
    %0 = vector.load %arg1[%c0, %c0_0] : memref<8x32xf32, #tpu.memory_space<vmem>>, vector<8x32xf32>
    %1 = arith.truncf %0 : vector<8x32xf32> to vector<8x32xbf16>
    %c0_1 = arith.constant 0 : index
    %c0_2 = arith.constant 0 : index
    %2 = vector.load %arg2[%c0_1, %c0_2] : memref<32x64xbf16, #tpu.memory_space<vmem>>, vector<32x64xbf16>
    %cst = arith.constant dense<0.000000e+00> : vector<8x64xf32>
    %3 = tpu.matmul %1, %2, %cst {dimension_numbers = #tpu.dot_dimension_numbers<[1], [0], [0], [1], [0, 0, 1, 1], [], []>} : vector<8x32xbf16>, vector<32x64xbf16>, vector<8x64xf32> -> vector<8x64xf32>
    %c0_3 = arith.constant 0 : index
    %c0_4 = arith.constant 0 : index
    %4 = vector.load %arg3[%c0_3, %c0_4] : memref<1x64xf32, #tpu.memory_space<vmem>>, vector<1x64xf32>
    %5 = vector.broadcast %4 : vector<1x64xf32> to vector<8x64xf32>
    %6 = arith.addf %3, %5 : vector<8x64xf32>
    %cst_5 = arith.constant 0.000000e+00 : f32
    %7 = vector.broadcast %cst_5 : f32 to vector<8x64xf32>
    %8 = arith.maximumf %6, %7 : vector<8x64xf32>
    %9 = arith.truncf %8 : vector<8x64xf32> to vector<8x64xbf16>
    %c0_6 = arith.constant 0 : index
    %c0_7 = arith.constant 0 : index
    %10 = vector.load %arg4[%c0_6, %c0_7] : memref<64x32xbf16, #tpu.memory_space<vmem>>, vector<64x32xbf16>
    %cst_8 = arith.constant dense<0.000000e+00> : vector<8x32xf32>
    %11 = tpu.matmul %9, %10, %cst_8 {dimension_numbers = #tpu.dot_dimension_numbers<[1], [0], [0], [1], [0, 0, 1, 1], [], []>} : vector<8x64xbf16>, vector<64x32xbf16>, vector<8x32xf32> -> vector<8x32xf32>
    %c0_9 = arith.constant 0 : index
    %c0_10 = arith.constant 0 : index
    %12 = vector.load %arg5[%c0_9, %c0_10] : memref<1x32xf32, #tpu.memory_space<vmem>>, vector<1x32xf32>
    %13 = vector.broadcast %12 : vector<1x32xf32> to vector<8x32xf32>
    %14 = arith.addf %11, %13 : vector<8x32xf32>
    %15 = arith.addf %0, %14 : vector<8x32xf32>
    %c0_11 = arith.constant 0 : index
    %c0_12 = arith.constant 0 : index
    %16 = vector.load %arg6[%c0_11, %c0_12] : memref<1x32xf32, #tpu.memory_space<vmem>>, vector<1x32xf32>
    %c0_13 = arith.constant 0 : index
    %c0_14 = arith.constant 0 : index
    %17 = vector.load %arg7[%c0_13, %c0_14] : memref<1x32xf32, #tpu.memory_space<vmem>>, vector<1x32xf32>
    %cst_15 = arith.constant dense<0.000000e+00> : vector<8xf32>
    %18 = vector.multi_reduction <add>, %15, %cst_15 [1] : vector<8x32xf32> to vector<8xf32>
    %19 = vector.shape_cast %18 : vector<8xf32> to vector<8x1xf32>
    %cst_16 = arith.constant 3.200000e+01 : f32
    %20 = vector.broadcast %cst_16 : f32 to vector<8x1xf32>
    %21 = arith.divf %19, %20 : vector<8x1xf32>
    %22 = vector.broadcast %21 : vector<8x1xf32> to vector<8x32xf32>
    %23 = arith.subf %15, %22 : vector<8x32xf32>
    %24 = arith.mulf %23, %23 : vector<8x32xf32>
    %cst_17 = arith.constant dense<0.000000e+00> : vector<8xf32>
    %25 = vector.multi_reduction <add>, %24, %cst_17 [1] : vector<8x32xf32> to vector<8xf32>
    %26 = vector.shape_cast %25 : vector<8xf32> to vector<8x1xf32>
    %cst_18 = arith.constant 3.100000e+01 : f32
    %27 = vector.broadcast %cst_18 : f32 to vector<8x1xf32>
    %28 = arith.divf %26, %27 : vector<8x1xf32>
    %29 = vector.broadcast %16 : vector<1x32xf32> to vector<8x32xf32>
    %30 = arith.mulf %29, %23 : vector<8x32xf32>
    %31 = math.sqrt %28 : vector<8x1xf32>
    %cst_19 = arith.constant 9.99999997E-7 : f32
    %32 = vector.broadcast %cst_19 : f32 to vector<8x1xf32>
    %33 = arith.addf %31, %32 : vector<8x1xf32>
    %34 = vector.broadcast %33 : vector<8x1xf32> to vector<8x32xf32>
    %35 = arith.divf %30, %34 : vector<8x32xf32>
    %36 = vector.broadcast %17 : vector<1x32xf32> to vector<8x32xf32>
    %37 = arith.addf %35, %36 : vector<8x32xf32>
    %c0_20 = arith.constant 0 : index
    %c0_21 = arith.constant 0 : index
    %38 = vector.load %arg8[%c0_20, %c0_21] : memref<8x32xf32, #tpu.memory_space<vmem>>, vector<8x32xf32>
    tpu.vector_store %arg8[%c0_20, %c0_21], %37 {strides = array<i32>} : memref<8x32xf32, #tpu.memory_space<vmem>>, vector<8x32xf32>,
    return
  }
  func.func @transform_0(%arg0: i32) -> (i32, i32) {
    %c0_i32 = arith.constant 0 : i32
    %c0_i32_0 = arith.constant 0 : i32
    return %arg0, %c0_i32 : i32, i32
  }
  func.func @transform_1(%arg0: i32) -> (i32, i32) {
    %c0_i32 = arith.constant 0 : i32
    %c0_i32_0 = arith.constant 0 : i32
    %c0_i32_1 = arith.constant 0 : i32
    return %c0_i32, %c0_i32_0 : i32, i32
  }
  func.func @transform_2(%arg0: i32) -> (i32, i32) {
    %c0_i32 = arith.constant 0 : i32
    %c0_i32_0 = arith.constant 0 : i32
    %c0_i32_1 = arith.constant 0 : i32
    return %c0_i32, %c0_i32_0 : i32, i32
  }
  func.func @transform_3(%arg0: i32) -> (i32, i32) {
    %c0_i32 = arith.constant 0 : i32
    %c0_i32_0 = arith.constant 0 : i32
    %c0_i32_1 = arith.constant 0 : i32
    return %c0_i32, %c0_i32_0 : i32, i32
  }
  func.func @transform_4(%arg0: i32) -> (i32, i32) {
    %c0_i32 = arith.constant 0 : i32
    %c0_i32_0 = arith.constant 0 : i32
    %c0_i32_1 = arith.constant 0 : i32
    return %c0_i32, %c0_i32_0 : i32, i32
  }
  func.func @transform_5(%arg0: i32) -> (i32, i32) {
    %c0_i32 = arith.constant 0 : i32
    %c0_i32_0 = arith.constant 0 : i32
    %c0_i32_1 = arith.constant 0 : i32
    return %c0_i32, %c0_i32_0 : i32, i32
  }
  func.func @transform_6(%arg0: i32) -> (i32, i32) {
    %c0_i32 = arith.constant 0 : i32
    %c0_i32_0 = arith.constant 0 : i32
    %c0_i32_1 = arith.constant 0 : i32
    return %c0_i32, %c0_i32_0 : i32, i32
  }
  func.func @transform_7(%arg0: i32) -> (i32, i32) {
    %c0_i32 = arith.constant 0 : i32
    %c0_i32_0 = arith.constant 0 : i32
    return %arg0, %c0_i32 : i32, i32
  }
}

module attributes {stable_mosaic.version = 11 : i64} {
  func.func @_gate_kernel(%arg0: i32, %arg1: memref<1x8x32xf32, #tpu.memory_space<vmem>>, %arg2: memref<1x4x32xf32, #tpu.memory_space<vmem>>, %arg3: memref<32x64xbf16, #tpu.memory_space<vmem>>, %arg4: memref<1x64xf32, #tpu.memory_space<vmem>>, %arg5: memref<32x64xbf16, #tpu.memory_space<vmem>>, %arg6: memref<1x64xf32, #tpu.memory_space<vmem>>, %arg7: memref<1x8x4xf32, #tpu.memory_space<vmem>>, %arg8: memref<1x32xf32, #tpu.memory_space<vmem>>, %arg9: memref<1x32xf32, #tpu.memory_space<vmem>>, %arg10: memref<1x32xf32, #tpu.memory_space<vmem>>, %arg11: memref<1x32xf32, #tpu.memory_space<vmem>>, %arg12: memref<1x8x32xf32, #tpu.memory_space<vmem>>, %arg13: memref<1x4x32xf32, #tpu.memory_space<vmem>>) attributes {dimension_semantics = [#tpu.dimension_semantics<parallel>], iteration_bounds = array<i64: 2>, scalar_prefetch = 0 : i64, scratch_operands = 0 : i64, tpu.core_type = #tpu.core_type<tc>, window_params = [{transform_indices = @transform_0, window_bounds = array<i64: 1, 8, 32>}, {transform_indices = @transform_1, window_bounds = array<i64: 1, 4, 32>}, {pipeline_mode = #tpu.pipeline_mode<synchronous>, transform_indices = @transform_2, window_bounds = array<i64: 32, 64>}, {pipeline_mode = #tpu.pipeline_mode<synchronous>, transform_indices = @transform_3, window_bounds = array<i64: 1, 64>}, {pipeline_mode = #tpu.pipeline_mode<synchronous>, transform_indices = @transform_4, window_bounds = array<i64: 32, 64>}, {pipeline_mode = #tpu.pipeline_mode<synchronous>, transform_indices = @transform_5, window_bounds = array<i64: 1, 64>}, {transform_indices = @transform_6, window_bounds = array<i64: 1, 8, 4>}, {pipeline_mode = #tpu.pipeline_mode<synchronous>, transform_indices = @transform_7, window_bounds = array<i64: 1, 32>}, {pipeline_mode = #tpu.pipeline_mode<synchronous>, transform_indices = @transform_8, window_bounds = array<i64: 1, 32>}, {pipeline_mode = #tpu.pipeline_mode<synchronous>, transform_indices = @transform_9, window_bounds = array<i64: 1, 32>}, {pipeline_mode = #tpu.pipeline_mode<synchronous>, transform_indices = @transform_10, window_bounds = array<i64: 1, 32>}, {transform_indices = @transform_11, window_bounds = array<i64: 1, 8, 32>}, {transform_indices = @transform_12, window_bounds = array<i64: 1, 4, 32>}]} {
    %c0 = arith.constant 0 : index
    %c0_0 = arith.constant 0 : index
    %c0_1 = arith.constant 0 : index
    %0 = vector.load %arg1[%c0, %c0_0, %c0_1] : memref<1x8x32xf32, #tpu.memory_space<vmem>>, vector<1x8x32xf32>
    %1 = vector.shape_cast %0 : vector<1x8x32xf32> to vector<8x32xf32>
    %c0_2 = arith.constant 0 : index
    %c0_3 = arith.constant 0 : index
    %c0_4 = arith.constant 0 : index
    %2 = vector.load %arg2[%c0_2, %c0_3, %c0_4] : memref<1x4x32xf32, #tpu.memory_space<vmem>>, vector<1x4x32xf32>
    %3 = vector.shape_cast %2 : vector<1x4x32xf32> to vector<4x32xf32>
    %c0_5 = arith.constant 0 : index
    %c0_6 = arith.constant 0 : index
    %c0_7 = arith.constant 0 : index
    %4 = vector.load %arg7[%c0_5, %c0_6, %c0_7] : memref<1x8x4xf32, #tpu.memory_space<vmem>>, vector<1x8x4xf32>
    %5 = vector.shape_cast %4 : vector<1x8x4xf32> to vector<8x4xf32>
    %6 = arith.truncf %1 : vector<8x32xf32> to vector<8x32xbf16>
    %c0_8 = arith.constant 0 : index
    %c0_9 = arith.constant 0 : index
    %7 = vector.load %arg3[%c0_8, %c0_9] : memref<32x64xbf16, #tpu.memory_space<vmem>>, vector<32x64xbf16>
    %cst = arith.constant dense<0.000000e+00> : vector<8x64xf32>
    %8 = tpu.matmul %6, %7, %cst {dimension_numbers = #tpu.dot_dimension_numbers<[1], [0], [0], [1], [0, 0, 1, 1], [], []>} : vector<8x32xbf16>, vector<32x64xbf16>, vector<8x64xf32> -> vector<8x64xf32>
    %c0_10 = arith.constant 0 : index
    %c0_11 = arith.constant 0 : index
    %9 = vector.load %arg4[%c0_10, %c0_11] : memref<1x64xf32, #tpu.memory_space<vmem>>, vector<1x64xf32>
    %10 = vector.broadcast %9 : vector<1x64xf32> to vector<8x64xf32>
    %11 = arith.addf %8, %10 : vector<8x64xf32>
    %12 = arith.truncf %3 : vector<4x32xf32> to vector<4x32xbf16>
    %c0_12 = arith.constant 0 : index
    %c0_13 = arith.constant 0 : index
    %13 = vector.load %arg5[%c0_12, %c0_13] : memref<32x64xbf16, #tpu.memory_space<vmem>>, vector<32x64xbf16>
    %cst_14 = arith.constant dense<0.000000e+00> : vector<4x64xf32>
    %14 = tpu.matmul %12, %13, %cst_14 {dimension_numbers = #tpu.dot_dimension_numbers<[1], [0], [0], [1], [0, 0, 1, 1], [], []>} : vector<4x32xbf16>, vector<32x64xbf16>, vector<4x64xf32> -> vector<4x64xf32>
    %c0_15 = arith.constant 0 : index
    %c0_16 = arith.constant 0 : index
    %15 = vector.load %arg6[%c0_15, %c0_16] : memref<1x64xf32, #tpu.memory_space<vmem>>, vector<1x64xf32>
    %16 = vector.broadcast %15 : vector<1x64xf32> to vector<4x64xf32>
    %17 = arith.addf %14, %16 : vector<4x64xf32>
    %18 = vector.extract_strided_slice %11 {offsets = [0, 0], sizes = [8, 32], strides = [1, 1]} : vector<8x64xf32> to vector<8x32xf32>
    %19 = vector.extract_strided_slice %11 {offsets = [0, 32], sizes = [8, 32], strides = [1, 1]} : vector<8x64xf32> to vector<8x32xf32>
    %20 = vector.extract_strided_slice %17 {offsets = [0, 0], sizes = [4, 32], strides = [1, 1]} : vector<4x64xf32> to vector<4x32xf32>
    %21 = vector.extract_strided_slice %17 {offsets = [0, 32], sizes = [4, 32], strides = [1, 1]} : vector<4x64xf32> to vector<4x32xf32>
    %22 = vector.shape_cast %5 : vector<8x4xf32> to vector<8x4x1xf32>
    %23 = vector.shape_cast %18 : vector<8x32xf32> to vector<8x1x32xf32>
    %24 = vector.shape_cast %20 : vector<4x32xf32> to vector<1x4x32xf32>
    %25 = vector.broadcast %23 : vector<8x1x32xf32> to vector<8x4x32xf32>
    %26 = vector.broadcast %24 : vector<1x4x32xf32> to vector<8x4x32xf32>
    %27 = arith.addf %25, %26 : vector<8x4x32xf32>
    %28 = arith.negf %27 : vector<8x4x32xf32>
    %29 = math.exp %28 : vector<8x4x32xf32>
    %cst_17 = arith.constant 1.000000e+00 : f32
    %30 = vector.broadcast %cst_17 : f32 to vector<8x4x32xf32>
    %31 = arith.addf %30, %29 : vector<8x4x32xf32>
    %32 = arith.divf %30, %31 : vector<8x4x32xf32>
    %33 = vector.broadcast %22 : vector<8x4x1xf32> to vector<8x4x32xf32>
    %34 = arith.mulf %32, %33 : vector<8x4x32xf32>
    %35 = vector.shape_cast %3 : vector<4x32xf32> to vector<1x4x32xf32>
    %36 = vector.broadcast %35 : vector<1x4x32xf32> to vector<8x4x32xf32>
    %37 = arith.mulf %34, %36 : vector<8x4x32xf32>
    %cst_18 = arith.constant dense<0.000000e+00> : vector<8x32xf32>
    %38 = vector.multi_reduction <add>, %37, %cst_18 [1] : vector<8x4x32xf32> to vector<8x32xf32>
    %39 = vector.shape_cast %19 : vector<8x32xf32> to vector<8x1x32xf32>
    %40 = vector.shape_cast %21 : vector<4x32xf32> to vector<1x4x32xf32>
    %41 = vector.broadcast %39 : vector<8x1x32xf32> to vector<8x4x32xf32>
    %42 = vector.broadcast %40 : vector<1x4x32xf32> to vector<8x4x32xf32>
    %43 = arith.addf %41, %42 : vector<8x4x32xf32>
    %44 = arith.negf %43 : vector<8x4x32xf32>
    %45 = math.exp %44 : vector<8x4x32xf32>
    %cst_19 = arith.constant 1.000000e+00 : f32
    %46 = vector.broadcast %cst_19 : f32 to vector<8x4x32xf32>
    %47 = arith.addf %46, %45 : vector<8x4x32xf32>
    %48 = arith.divf %46, %47 : vector<8x4x32xf32>
    %49 = vector.broadcast %22 : vector<8x4x1xf32> to vector<8x4x32xf32>
    %50 = arith.mulf %48, %49 : vector<8x4x32xf32>
    %51 = vector.shape_cast %1 : vector<8x32xf32> to vector<8x1x32xf32>
    %52 = vector.broadcast %51 : vector<8x1x32xf32> to vector<8x4x32xf32>
    %53 = arith.mulf %50, %52 : vector<8x4x32xf32>
    %cst_20 = arith.constant dense<0.000000e+00> : vector<4x32xf32>
    %54 = vector.multi_reduction <add>, %53, %cst_20 [0] : vector<8x4x32xf32> to vector<4x32xf32>
    %55 = arith.addf %1, %38 : vector<8x32xf32>
    %c0_21 = arith.constant 0 : index
    %c0_22 = arith.constant 0 : index
    %56 = vector.load %arg8[%c0_21, %c0_22] : memref<1x32xf32, #tpu.memory_space<vmem>>, vector<1x32xf32>
    %c0_23 = arith.constant 0 : index
    %c0_24 = arith.constant 0 : index
    %57 = vector.load %arg9[%c0_23, %c0_24] : memref<1x32xf32, #tpu.memory_space<vmem>>, vector<1x32xf32>
    %cst_25 = arith.constant dense<0.000000e+00> : vector<8xf32>
    %58 = vector.multi_reduction <add>, %55, %cst_25 [1] : vector<8x32xf32> to vector<8xf32>
    %59 = vector.shape_cast %58 : vector<8xf32> to vector<8x1xf32>
    %cst_26 = arith.constant 3.200000e+01 : f32
    %60 = vector.broadcast %cst_26 : f32 to vector<8x1xf32>
    %61 = arith.divf %59, %60 : vector<8x1xf32>
    %62 = vector.broadcast %61 : vector<8x1xf32> to vector<8x32xf32>
    %63 = arith.subf %55, %62 : vector<8x32xf32>
    %64 = arith.mulf %63, %63 : vector<8x32xf32>
    %cst_27 = arith.constant dense<0.000000e+00> : vector<8xf32>
    %65 = vector.multi_reduction <add>, %64, %cst_27 [1] : vector<8x32xf32> to vector<8xf32>
    %66 = vector.shape_cast %65 : vector<8xf32> to vector<8x1xf32>
    %cst_28 = arith.constant 3.100000e+01 : f32
    %67 = vector.broadcast %cst_28 : f32 to vector<8x1xf32>
    %68 = arith.divf %66, %67 : vector<8x1xf32>
    %69 = vector.broadcast %56 : vector<1x32xf32> to vector<8x32xf32>
    %70 = arith.mulf %69, %63 : vector<8x32xf32>
    %71 = math.sqrt %68 : vector<8x1xf32>
    %cst_29 = arith.constant 9.99999997E-7 : f32
    %72 = vector.broadcast %cst_29 : f32 to vector<8x1xf32>
    %73 = arith.addf %71, %72 : vector<8x1xf32>
    %74 = vector.broadcast %73 : vector<8x1xf32> to vector<8x32xf32>
    %75 = arith.divf %70, %74 : vector<8x32xf32>
    %76 = vector.broadcast %57 : vector<1x32xf32> to vector<8x32xf32>
    %77 = arith.addf %75, %76 : vector<8x32xf32>
    %c0_30 = arith.constant 0 : index
    %c0_31 = arith.constant 0 : index
    %c0_32 = arith.constant 0 : index
    %78 = vector.load %arg12[%c0_30, %c0_31, %c0_32] : memref<1x8x32xf32, #tpu.memory_space<vmem>>, vector<1x8x32xf32>
    %79 = vector.shape_cast %78 : vector<1x8x32xf32> to vector<8x32xf32>
    %80 = vector.shape_cast %77 : vector<8x32xf32> to vector<1x8x32xf32>
    tpu.vector_store %arg12[%c0_30, %c0_31, %c0_32], %80 {strides = array<i32>} : memref<1x8x32xf32, #tpu.memory_space<vmem>>, vector<1x8x32xf32>,
    %81 = arith.addf %3, %54 : vector<4x32xf32>
    %c0_33 = arith.constant 0 : index
    %c0_34 = arith.constant 0 : index
    %82 = vector.load %arg10[%c0_33, %c0_34] : memref<1x32xf32, #tpu.memory_space<vmem>>, vector<1x32xf32>
    %c0_35 = arith.constant 0 : index
    %c0_36 = arith.constant 0 : index
    %83 = vector.load %arg11[%c0_35, %c0_36] : memref<1x32xf32, #tpu.memory_space<vmem>>, vector<1x32xf32>
    %cst_37 = arith.constant dense<0.000000e+00> : vector<4xf32>
    %84 = vector.multi_reduction <add>, %81, %cst_37 [1] : vector<4x32xf32> to vector<4xf32>
    %85 = vector.shape_cast %84 : vector<4xf32> to vector<4x1xf32>
    %cst_38 = arith.constant 3.200000e+01 : f32
    %86 = vector.broadcast %cst_38 : f32 to vector<4x1xf32>
    %87 = arith.divf %85, %86 : vector<4x1xf32>
    %88 = vector.broadcast %87 : vector<4x1xf32> to vector<4x32xf32>
    %89 = arith.subf %81, %88 : vector<4x32xf32>
    %90 = arith.mulf %89, %89 : vector<4x32xf32>
    %cst_39 = arith.constant dense<0.000000e+00> : vector<4xf32>
    %91 = vector.multi_reduction <add>, %90, %cst_39 [1] : vector<4x32xf32> to vector<4xf32>
    %92 = vector.shape_cast %91 : vector<4xf32> to vector<4x1xf32>
    %cst_40 = arith.constant 3.100000e+01 : f32
    %93 = vector.broadcast %cst_40 : f32 to vector<4x1xf32>
    %94 = arith.divf %92, %93 : vector<4x1xf32>
    %95 = vector.broadcast %82 : vector<1x32xf32> to vector<4x32xf32>
    %96 = arith.mulf %95, %89 : vector<4x32xf32>
    %97 = math.sqrt %94 : vector<4x1xf32>
    %cst_41 = arith.constant 9.99999997E-7 : f32
    %98 = vector.broadcast %cst_41 : f32 to vector<4x1xf32>
    %99 = arith.addf %97, %98 : vector<4x1xf32>
    %100 = vector.broadcast %99 : vector<4x1xf32> to vector<4x32xf32>
    %101 = arith.divf %96, %100 : vector<4x32xf32>
    %102 = vector.broadcast %83 : vector<1x32xf32> to vector<4x32xf32>
    %103 = arith.addf %101, %102 : vector<4x32xf32>
    %c0_42 = arith.constant 0 : index
    %c0_43 = arith.constant 0 : index
    %c0_44 = arith.constant 0 : index
    %104 = vector.load %arg13[%c0_42, %c0_43, %c0_44] : memref<1x4x32xf32, #tpu.memory_space<vmem>>, vector<1x4x32xf32>
    %105 = vector.shape_cast %104 : vector<1x4x32xf32> to vector<4x32xf32>
    %106 = vector.shape_cast %103 : vector<4x32xf32> to vector<1x4x32xf32>
    tpu.vector_store %arg13[%c0_42, %c0_43, %c0_44], %106 {strides = array<i32>} : memref<1x4x32xf32, #tpu.memory_space<vmem>>, vector<1x4x32xf32>,
    return
  }
  func.func @transform_0(%arg0: i32) -> (i32, i32, i32) {
    %c0_i32 = arith.constant 0 : i32
    %c0_i32_0 = arith.constant 0 : i32
    %c0_i32_1 = arith.constant 0 : i32
    return %arg0, %c0_i32, %c0_i32_0 : i32, i32, i32
  }
  func.func @transform_1(%arg0: i32) -> (i32, i32, i32) {
    %c0_i32 = arith.constant 0 : i32
    %c0_i32_0 = arith.constant 0 : i32
    %c0_i32_1 = arith.constant 0 : i32
    return %arg0, %c0_i32, %c0_i32_0 : i32, i32, i32
  }
  func.func @transform_2(%arg0: i32) -> (i32, i32) {
    %c0_i32 = arith.constant 0 : i32
    %c0_i32_0 = arith.constant 0 : i32
    %c0_i32_1 = arith.constant 0 : i32
    return %c0_i32, %c0_i32_0 : i32, i32
  }
  func.func @transform_3(%arg0: i32) -> (i32, i32) {
    %c0_i32 = arith.constant 0 : i32
    %c0_i32_0 = arith.constant 0 : i32
    %c0_i32_1 = arith.constant 0 : i32
    return %c0_i32, %c0_i32_0 : i32, i32
  }
  func.func @transform_4(%arg0: i32) -> (i32, i32) {
    %c0_i32 = arith.constant 0 : i32
    %c0_i32_0 = arith.constant 0 : i32
    %c0_i32_1 = arith.constant 0 : i32
    return %c0_i32, %c0_i32_0 : i32, i32
  }
  func.func @transform_5(%arg0: i32) -> (i32, i32) {
    %c0_i32 = arith.constant 0 : i32
    %c0_i32_0 = arith.constant 0 : i32
    %c0_i32_1 = arith.constant 0 : i32
    return %c0_i32, %c0_i32_0 : i32, i32
  }
  func.func @transform_6(%arg0: i32) -> (i32, i32, i32) {
    %c0_i32 = arith.constant 0 : i32
    %c0_i32_0 = arith.constant 0 : i32
    %c0_i32_1 = arith.constant 0 : i32
    return %arg0, %c0_i32, %c0_i32_0 : i32, i32, i32
  }
  func.func @transform_7(%arg0: i32) -> (i32, i32) {
    %c0_i32 = arith.constant 0 : i32
    %c0_i32_0 = arith.constant 0 : i32
    %c0_i32_1 = arith.constant 0 : i32
    return %c0_i32, %c0_i32_0 : i32, i32
  }
  func.func @transform_8(%arg0: i32) -> (i32, i32) {
    %c0_i32 = arith.constant 0 : i32
    %c0_i32_0 = arith.constant 0 : i32
    %c0_i32_1 = arith.constant 0 : i32
    return %c0_i32, %c0_i32_0 : i32, i32
  }
  func.func @transform_9(%arg0: i32) -> (i32, i32) {
    %c0_i32 = arith.constant 0 : i32
    %c0_i32_0 = arith.constant 0 : i32
    %c0_i32_1 = arith.constant 0 : i32
    return %c0_i32, %c0_i32_0 : i32, i32
  }
  func.func @transform_10(%arg0: i32) -> (i32, i32) {
    %c0_i32 = arith.constant 0 : i32
    %c0_i32_0 = arith.constant 0 : i32
    %c0_i32_1 = arith.constant 0 : i32
    return %c0_i32, %c0_i32_0 : i32, i32
  }
  func.func @transform_11(%arg0: i32) -> (i32, i32, i32) {
    %c0_i32 = arith.constant 0 : i32
    %c0_i32_0 = arith.constant 0 : i32
    %c0_i32_1 = arith.constant 0 : i32
    return %arg0, %c0_i32, %c0_i32_0 : i32, i32, i32
  }
  func.func @transform_12(%arg0: i32) -> (i32, i32, i32) {
    %c0_i32 = arith.constant 0 : i32
    %c0_i32_0 = arith.constant 0 : i32
    %c0_i32_1 = arith.constant 0 : i32
    return %arg0, %c0_i32, %c0_i32_0 : i32, i32, i32
  }
}

module attributes {stable_mosaic.version = 11 : i64} {
  func.func @_ffn_ln_kernel(%arg0: i32, %arg1: memref<8x32xf32, #tpu.memory_space<vmem>>, %arg2: memref<32x64xbf16, #tpu.memory_space<vmem>>, %arg3: memref<1x64xf32, #tpu.memory_space<vmem>>, %arg4: memref<64x32xbf16, #tpu.memory_space<vmem>>, %arg5: memref<1x32xf32, #tpu.memory_space<vmem>>, %arg6: memref<1x32xf32, #tpu.memory_space<vmem>>, %arg7: memref<1x32xf32, #tpu.memory_space<vmem>>, %arg8: memref<8x32xf32, #tpu.memory_space<vmem>>) attributes {dimension_semantics = [#tpu.dimension_semantics<parallel>], iteration_bounds = array<i64: 1>, scalar_prefetch = 0 : i64, scratch_operands = 0 : i64, tpu.core_type = #tpu.core_type<tc>, window_params = [{transform_indices = @transform_0, window_bounds = array<i64: 8, 32>}, {pipeline_mode = #tpu.pipeline_mode<synchronous>, transform_indices = @transform_1, window_bounds = array<i64: 32, 64>}, {pipeline_mode = #tpu.pipeline_mode<synchronous>, transform_indices = @transform_2, window_bounds = array<i64: 1, 64>}, {pipeline_mode = #tpu.pipeline_mode<synchronous>, transform_indices = @transform_3, window_bounds = array<i64: 64, 32>}, {pipeline_mode = #tpu.pipeline_mode<synchronous>, transform_indices = @transform_4, window_bounds = array<i64: 1, 32>}, {pipeline_mode = #tpu.pipeline_mode<synchronous>, transform_indices = @transform_5, window_bounds = array<i64: 1, 32>}, {pipeline_mode = #tpu.pipeline_mode<synchronous>, transform_indices = @transform_6, window_bounds = array<i64: 1, 32>}, {transform_indices = @transform_7, window_bounds = array<i64: 8, 32>}]} {
    %c0 = arith.constant 0 : index
    %c0_0 = arith.constant 0 : index
    %0 = vector.load %arg1[%c0, %c0_0] : memref<8x32xf32, #tpu.memory_space<vmem>>, vector<8x32xf32>
    %1 = arith.truncf %0 : vector<8x32xf32> to vector<8x32xbf16>
    %c0_1 = arith.constant 0 : index
    %c0_2 = arith.constant 0 : index
    %2 = vector.load %arg2[%c0_1, %c0_2] : memref<32x64xbf16, #tpu.memory_space<vmem>>, vector<32x64xbf16>
    %cst = arith.constant dense<0.000000e+00> : vector<8x64xf32>
    %3 = tpu.matmul %1, %2, %cst {dimension_numbers = #tpu.dot_dimension_numbers<[1], [0], [0], [1], [0, 0, 1, 1], [], []>} : vector<8x32xbf16>, vector<32x64xbf16>, vector<8x64xf32> -> vector<8x64xf32>
    %c0_3 = arith.constant 0 : index
    %c0_4 = arith.constant 0 : index
    %4 = vector.load %arg3[%c0_3, %c0_4] : memref<1x64xf32, #tpu.memory_space<vmem>>, vector<1x64xf32>
    %5 = vector.broadcast %4 : vector<1x64xf32> to vector<8x64xf32>
    %6 = arith.addf %3, %5 : vector<8x64xf32>
    %cst_5 = arith.constant 0.000000e+00 : f32
    %7 = vector.broadcast %cst_5 : f32 to vector<8x64xf32>
    %8 = arith.maximumf %6, %7 : vector<8x64xf32>
    %9 = arith.truncf %8 : vector<8x64xf32> to vector<8x64xbf16>
    %c0_6 = arith.constant 0 : index
    %c0_7 = arith.constant 0 : index
    %10 = vector.load %arg4[%c0_6, %c0_7] : memref<64x32xbf16, #tpu.memory_space<vmem>>, vector<64x32xbf16>
    %cst_8 = arith.constant dense<0.000000e+00> : vector<8x32xf32>
    %11 = tpu.matmul %9, %10, %cst_8 {dimension_numbers = #tpu.dot_dimension_numbers<[1], [0], [0], [1], [0, 0, 1, 1], [], []>} : vector<8x64xbf16>, vector<64x32xbf16>, vector<8x32xf32> -> vector<8x32xf32>
    %c0_9 = arith.constant 0 : index
    %c0_10 = arith.constant 0 : index
    %12 = vector.load %arg5[%c0_9, %c0_10] : memref<1x32xf32, #tpu.memory_space<vmem>>, vector<1x32xf32>
    %13 = vector.broadcast %12 : vector<1x32xf32> to vector<8x32xf32>
    %14 = arith.addf %11, %13 : vector<8x32xf32>
    %15 = arith.addf %0, %14 : vector<8x32xf32>
    %c0_11 = arith.constant 0 : index
    %c0_12 = arith.constant 0 : index
    %16 = vector.load %arg6[%c0_11, %c0_12] : memref<1x32xf32, #tpu.memory_space<vmem>>, vector<1x32xf32>
    %c0_13 = arith.constant 0 : index
    %c0_14 = arith.constant 0 : index
    %17 = vector.load %arg7[%c0_13, %c0_14] : memref<1x32xf32, #tpu.memory_space<vmem>>, vector<1x32xf32>
    %cst_15 = arith.constant dense<0.000000e+00> : vector<8xf32>
    %18 = vector.multi_reduction <add>, %15, %cst_15 [1] : vector<8x32xf32> to vector<8xf32>
    %19 = vector.shape_cast %18 : vector<8xf32> to vector<8x1xf32>
    %cst_16 = arith.constant 3.200000e+01 : f32
    %20 = vector.broadcast %cst_16 : f32 to vector<8x1xf32>
    %21 = arith.divf %19, %20 : vector<8x1xf32>
    %22 = vector.broadcast %21 : vector<8x1xf32> to vector<8x32xf32>
    %23 = arith.subf %15, %22 : vector<8x32xf32>
    %24 = arith.mulf %23, %23 : vector<8x32xf32>
    %cst_17 = arith.constant dense<0.000000e+00> : vector<8xf32>
    %25 = vector.multi_reduction <add>, %24, %cst_17 [1] : vector<8x32xf32> to vector<8xf32>
    %26 = vector.shape_cast %25 : vector<8xf32> to vector<8x1xf32>
    %cst_18 = arith.constant 3.100000e+01 : f32
    %27 = vector.broadcast %cst_18 : f32 to vector<8x1xf32>
    %28 = arith.divf %26, %27 : vector<8x1xf32>
    %29 = vector.broadcast %16 : vector<1x32xf32> to vector<8x32xf32>
    %30 = arith.mulf %29, %23 : vector<8x32xf32>
    %31 = math.sqrt %28 : vector<8x1xf32>
    %cst_19 = arith.constant 9.99999997E-7 : f32
    %32 = vector.broadcast %cst_19 : f32 to vector<8x1xf32>
    %33 = arith.addf %31, %32 : vector<8x1xf32>
    %34 = vector.broadcast %33 : vector<8x1xf32> to vector<8x32xf32>
    %35 = arith.divf %30, %34 : vector<8x32xf32>
    %36 = vector.broadcast %17 : vector<1x32xf32> to vector<8x32xf32>
    %37 = arith.addf %35, %36 : vector<8x32xf32>
    %c0_20 = arith.constant 0 : index
    %c0_21 = arith.constant 0 : index
    %38 = vector.load %arg8[%c0_20, %c0_21] : memref<8x32xf32, #tpu.memory_space<vmem>>, vector<8x32xf32>
    tpu.vector_store %arg8[%c0_20, %c0_21], %37 {strides = array<i32>} : memref<8x32xf32, #tpu.memory_space<vmem>>, vector<8x32xf32>,
    return
  }
  func.func @transform_0(%arg0: i32) -> (i32, i32) {
    %c0_i32 = arith.constant 0 : i32
    %c0_i32_0 = arith.constant 0 : i32
    return %arg0, %c0_i32 : i32, i32
  }
  func.func @transform_1(%arg0: i32) -> (i32, i32) {
    %c0_i32 = arith.constant 0 : i32
    %c0_i32_0 = arith.constant 0 : i32
    %c0_i32_1 = arith.constant 0 : i32
    return %c0_i32, %c0_i32_0 : i32, i32
  }
  func.func @transform_2(%arg0: i32) -> (i32, i32) {
    %c0_i32 = arith.constant 0 : i32
    %c0_i32_0 = arith.constant 0 : i32
    %c0_i32_1 = arith.constant 0 : i32
    return %c0_i32, %c0_i32_0 : i32, i32
  }
  func.func @transform_3(%arg0: i32) -> (i32, i32) {
    %c0_i32 = arith.constant 0 : i32
    %c0_i32_0 = arith.constant 0 : i32
    %c0_i32_1 = arith.constant 0 : i32
    return %c0_i32, %c0_i32_0 : i32, i32
  }
  func.func @transform_4(%arg0: i32) -> (i32, i32) {
    %c0_i32 = arith.constant 0 : i32
    %c0_i32_0 = arith.constant 0 : i32
    %c0_i32_1 = arith.constant 0 : i32
    return %c0_i32, %c0_i32_0 : i32, i32
  }
  func.func @transform_5(%arg0: i32) -> (i32, i32) {
    %c0_i32 = arith.constant 0 : i32
    %c0_i32_0 = arith.constant 0 : i32
    %c0_i32_1 = arith.constant 0 : i32
    return %c0_i32, %c0_i32_0 : i32, i32
  }
  func.func @transform_6(%arg0: i32) -> (i32, i32) {
    %c0_i32 = arith.constant 0 : i32
    %c0_i32_0 = arith.constant 0 : i32
    %c0_i32_1 = arith.constant 0 : i32
    return %c0_i32, %c0_i32_0 : i32, i32
  }
  func.func @transform_7(%arg0: i32) -> (i32, i32) {
    %c0_i32 = arith.constant 0 : i32
    %c0_i32_0 = arith.constant 0 : i32
    return %arg0, %c0_i32 : i32, i32
  }
}

</mosaic_0001>

<llo_original>
// kernel: gat_encoder_forward.11
$region0: #{gat_encoder_forward.11}
  #allocation0 [shape = 'u32[]', space=smem, size = 0x4, offset = 0x4, fixed_abs, tag = 'smem constant byte address 0x4 - core index']
  #allocation1 [shape = 'u32[72,128]{1,0:T(1,128)}', space=vmem, size = 0x9000, scoped, tag = 'internal scratch']
  #allocation2 [shape = 'f32[8,32]{1,0:T(8,128)}', space=vmem, size = 0x1000, scoped, tag = 'scratch operand']
  %s0 = inlined_call_operand.vmem [shape: f32[8,2048], index: 0, kind: input, shape index: {}]
  %s1 = inlined_call_operand.vmem [shape: bf16[2048,32], index: 1, kind: input, shape index: {}]
  %s2 = inlined_call_operand.vmem [shape: f32[1,32], index: 2, kind: input, shape index: {}]
  %s3 = inlined_call_operand.vmem [shape: bf16[32,32], index: 3, kind: input, shape index: {}]
  %s4 = inlined_call_operand.vmem [shape: f32[1,32], index: 4, kind: input, shape index: {}]
  %s5 = inlined_call_operand.vmem [shape: f32[8,32], index: 5, kind: output, shape index: {}]
  %s6 = sld [smem:[#allocation0]]
  $region61: #{gat_encoder_forward.11} parent=0
    _
  %s8 = ssub.s32 1, %s6
  %s9 = scalar_select 0, %s8, %s6
  loop: start=0, step=1, limit=6
  $region2: #{gat_encoder_forward.11} parent=0 // loop_pre_header
    _
  $region3: #{gat_encoder_forward.11} parent=0 // loop_header
    %s11 = sphi 0, %s15
    %p12 = scmp.ge.s32.totalorder %s11, 6
    %s18 = sphi 0, %s30
    %s19 = sphi 0, %s26
    %s20 = sphi 0, %s18
    %s21 = sphi 0, %s19
    %s22 = sphi 0, %s20
    %s23 = sphi 0, %s21
    %s35 = sphi 0, %s37
    %s38 = sphi 0, %s35
    %s39 = sphi 0, %s38
    %s55 = sphi 0, %s39
    %s61 = sphi 0, %s63
    %s64 = sphi 0, %s61
    %s65 = sphi 0, %s64
    %s81 = sphi 0, %s65
    %s85 = sphi 0, %s85
    %s87 = sphi 0, %s85
    %s88 = sphi 0, %s87
    %s102 = sphi 0, %s88
    %s106 = sphi 0, %s106
    %s108 = sphi 0, %s106
    %s109 = sphi 0, %s108
    %s123 = sphi 0, %s109
    %s127 = sphi 0, %s127
    %s129 = sphi 0, %s127
    %s130 = sphi 0, %s129
    %s144 = sphi 0, %s130
    %s150 = sphi 0, %s152
    %s153 = sphi 0, %s150
    %s154 = sphi 0, %s153
    %s170 = sphi 0, %s154
  $region4: #{gat_encoder_forward.11} parent=0 // loop_header_branch
    %14 = sbr.rel (%p12) target = $region8
  $region5: #{gat_encoder_forward.11} parent=0 // loop_body
    %s16 = ssub.s32 %s11, 1
    %s17 = ssub.s32 %s11, 2
    %s24 = sadd.s32 1, %s19
    %p25 = scmp.ge.s32.totalorder %s24, 4
    %s26 = scalar_select %p25, 0, %s24
    %s27 = sadd.s32 1, %s18
    %s28 = scalar_select %p25, %s27, %s18
    %p29 = scmp.ge.s32.totalorder %s28, 1
    %s30 = scalar_select %p29, 0, %s28
    %s31 = ssub.s32 %s18, %s30
    %s32 = ssub.s32 %s19, %s26
    %s33 = sor.u32 %s31, %s32
    %p34 = scmp.eq.s32.totalorder %s33, 0
    %s36 = sadd.s32 %s35, 1
    %s37 = scalar_select %p34, %s35, %s36
    %p40 = pneg %p34
    %p41 = scmp.eq.s32.totalorder %s11, 3
    %p42 = por %p40, %p41
    %p43 = scmp.ne.s32.totalorder %s35, %s38
    %p44 = scmp.eq.s32.totalorder %s11, 0
    %p45 = por %p43, %p44
    %p46 = scmp.ne.s32.totalorder %s35, %s38
    %p47 = scmp.eq.s32.totalorder %s16, 3
    %p48 = por %p46, %p47
    %p49 = scmp.ne.s32.totalorder %s38, %s39
    %p50 = scmp.eq.s32.totalorder %s16, 0
    %p51 = por %p49, %p50
    %p52 = scmp.ne.s32.totalorder %s38, %s39
    %p53 = scmp.eq.s32.totalorder %s17, 3
    %p54 = por %p52, %p53
    %p56 = scmp.ne.s32.totalorder %s39, %s55
    %p57 = scmp.eq.s32.totalorder %s17, 0
    %p58 = por %p56, %p57
    %s59 = ssub.s32 %s19, %s26
    %p60 = scmp.eq.s32.totalorder %s59, 0
    %s62 = sadd.s32 %s61, 1
    %s63 = scalar_select %p60, %s61, %s62
    %p66 = pneg %p60
    %p67 = scmp.eq.s32.totalorder %s11, 3
    %p68 = por %p66, %p67
    %p69 = scmp.ne.s32.totalorder %s61, %s64
    %p70 = scmp.eq.s32.totalorder %s11, 0
    %p71 = por %p69, %p70
    %p72 = scmp.ne.s32.totalorder %s61, %s64
    %p73 = scmp.eq.s32.totalorder %s16, 3
    %p74 = por %p72, %p73
    %p75 = scmp.ne.s32.totalorder %s64, %s65
    %p76 = scmp.eq.s32.totalorder %s16, 0
    %p77 = por %p75, %p76
    %p78 = scmp.ne.s32.totalorder %s64, %s65
    %p79 = scmp.eq.s32.totalorder %s17, 3
    %p80 = por %p78, %p79
    %p82 = scmp.ne.s32.totalorder %s65, %s81
    %p83 = scmp.eq.s32.totalorder %s17, 0
    %p84 = por %p82, %p83
    %s86 = sadd.s32 %s85, 1
    %p89 = scmp.eq.s32.totalorder %s11, 3
    %p90 = scmp.ne.s32.totalorder %s85, %s87
    %p91 = scmp.eq.s32.totalorder %s11, 0
    %p92 = por %p90, %p91
    %p93 = scmp.ne.s32.totalorder %s85, %s87
    %p94 = scmp.eq.s32.totalorder %s16, 3
    %p95 = por %p93, %p94
    %p96 = scmp.ne.s32.totalorder %s87, %s88
    %p97 = scmp.eq.s32.totalorder %s16, 0
    %p98 = por %p96, %p97
    %p99 = scmp.ne.s32.totalorder %s87, %s88
    %p100 = scmp.eq.s32.totalorder %s17, 3
    %p101 = por %p99, %p100
    %p103 = scmp.ne.s32.totalorder %s88, %s102
    %p104 = scmp.eq.s32.totalorder %s17, 0
    %p105 = por %p103, %p104
    %s107 = sadd.s32 %s106, 1
    %p110 = scmp.eq.s32.totalorder %s11, 3
    %p111 = scmp.ne.s32.totalorder %s106, %s108
    %p112 = scmp.eq.s32.totalorder %s11, 0
    %p113 = por %p111, %p112
    %p114 = scmp.ne.s32.totalorder %s106, %s108
    %p115 = scmp.eq.s32.totalorder %s16, 3
    %p116 = por %p114, %p115
    %p117 = scmp.ne.s32.totalorder %s108, %s109
    %p118 = scmp.eq.s32.totalorder %s16, 0
    %p119 = por %p117, %p118
    %p120 = scmp.ne.s32.totalorder %s108, %s109
    %p121 = scmp.eq.s32.totalorder %s17, 3
    %p122 = por %p120, %p121
    %p124 = scmp.ne.s32.totalorder %s109, %s123
    %p125 = scmp.eq.s32.totalorder %s17, 0
    %p126 = por %p124, %p125
    %s128 = sadd.s32 %s127, 1
    %p131 = scmp.eq.s32.totalorder %s11, 3
    %p132 = scmp.ne.s32.totalorder %s127, %s129
    %p133 = scmp.eq.s32.totalorder %s11, 0
    %p134 = por %p132, %p133
    %p135 = scmp.ne.s32.totalorder %s127, %s129
    %p136 = scmp.eq.s32.totalorder %s16, 3
    %p137 = por %p135, %p136
    %p138 = scmp.ne.s32.totalorder %s129, %s130
    %p139 = scmp.eq.s32.totalorder %s16, 0
    %p140 = por %p138, %p139
    %p141 = scmp.ne.s32.totalorder %s129, %s130
    %p142 = scmp.eq.s32.totalorder %s17, 3
    %p143 = por %p141, %p142
    %p145 = scmp.ne.s32.totalorder %s130, %s144
    %p146 = scmp.eq.s32.totalorder %s17, 0
    %p147 = por %p145, %p146
    %s148 = ssub.s32 %s18, %s30
    %p149 = scmp.eq.s32.totalorder %s148, 0
    %s151 = sadd.s32 %s150, 1
    %s152 = scalar_select %p149, %s150, %s151
    %p155 = pneg %p149
    %p156 = scmp.eq.s32.totalorder %s11, 3
    %p157 = por %p155, %p156
    %p158 = scmp.ne.s32.totalorder %s150, %s153
    %p159 = scmp.eq.s32.totalorder %s11, 0
    %p160 = por %p158, %p159
    %p161 = scmp.ne.s32.totalorder %s150, %s153
    %p162 = scmp.eq.s32.totalorder %s16, 3
    %p163 = por %p161, %p162
    %p164 = scmp.ne.s32.totalorder %s153, %s154
    %p165 = scmp.eq.s32.totalorder %s16, 0
    %p166 = por %p164, %p165
    %p167 = scmp.ne.s32.totalorder %s153, %s154
    %p168 = scmp.eq.s32.totalorder %s17, 3
    %p169 = por %p167, %p168
    %p171 = scmp.ne.s32.totalorder %s154, %s170
    %p172 = scmp.eq.s32.totalorder %s17, 0
    %p173 = por %p171, %p172
    %p174 = scmp.le.s32.totalorder 1, %s11
    %p175 = scmp.lt.s32.totalorder %s11, 5
    %p176 = pnand %p174, %p175
    %p177 = pneg %p176
    // Predicated region
    $region9: #{gat_encoder_forward.11} parent=5 // pred_check
      _
    $region10: #{gat_encoder_forward.11} parent=5 // pred_check_branch
      %179 = sbr.rel (%p176) target = $region12
    $region11: #{gat_encoder_forward.11} parent=5 // pred_region
      %s180 = ssub.s32 %s11, 1
      // Predicated region
      $region13: #{gat_encoder_forward.11} parent=11 // pred_check
        %p181 = pneg %p98
      $region14: #{gat_encoder_forward.11} parent=11 // pred_check_branch
        %183 = sbr.rel (%p181) target = $region16
      $region15: #{gat_encoder_forward.11} parent=11 // pred_region
        _
      $region16: #{gat_encoder_forward.11} parent=11 // pred_fallthru
        _
      // Predicated region
      $region17: #{gat_encoder_forward.11} parent=11 // pred_check
        %p184 = pneg %p119
      $region18: #{gat_encoder_forward.11} parent=11 // pred_check_branch
        %186 = sbr.rel (%p184) target = $region20
      $region19: #{gat_encoder_forward.11} parent=11 // pred_region
        _
      $region20: #{gat_encoder_forward.11} parent=11 // pred_fallthru
        _
      // Predicated region
      $region21: #{gat_encoder_forward.11} parent=11 // pred_check
        %p187 = pneg %p140
      $region22: #{gat_encoder_forward.11} parent=11 // pred_check_branch
        %189 = sbr.rel (%p187) target = $region24
      $region23: #{gat_encoder_forward.11} parent=11 // pred_region
        _
      $region24: #{gat_encoder_forward.11} parent=11 // pred_fallthru
        _
    $region12: #{gat_encoder_forward.11} parent=5 // pred_fallthru
      _
    %p190 = scmp.lt.s32.totalorder %s11, 4
    // Predicated region
    $region25: #{gat_encoder_forward.11} parent=5 // pred_check
      %p191 = pneg %p190
    $region26: #{gat_encoder_forward.11} parent=5 // pred_check_branch
      %193 = sbr.rel (%p191) target = $region28
    $region27: #{gat_encoder_forward.11} parent=5 // pred_region
      // Predicated region
      $region29: #{gat_encoder_forward.11} parent=27 // pred_check
        %p194 = pneg %p45
      $region30: #{gat_encoder_forward.11} parent=27 // pred_check_branch
        %196 = sbr.rel (%p194) target = $region32
      $region31: #{gat_encoder_forward.11} parent=27 // pred_region
        %s197 = smul.u32 4, %s19
        %p198 = scmp.lt.s32.totalorder %s18, 0
        %s199 = scalar_select %p198, %s18, 0
        %p200 = scmp.lt.s32.totalorder %s197, 15
        %s201 = scalar_select %p200, %s197, 15
        %s202 = smul.addr %s199, 16
        %s203 = sadd.s32 %s201, %s202
        %s204 = smul.addr %s203, 8
        %s205 = scalar_lea.vmem %s0, %s204
        %s206 = smul.u32 4, %s19
      $region32: #{gat_encoder_forward.11} parent=27 // pred_fallthru
        _
      // Predicated region
      $region33: #{gat_encoder_forward.11} parent=27 // pred_check
        %p207 = pneg %p71
      $region34: #{gat_encoder_forward.11} parent=27 // pred_check_branch
        %209 = sbr.rel (%p207) target = $region36
      $region35: #{gat_encoder_forward.11} parent=27 // pred_region
        %s210 = smul.u32 64, %s19
        %p211 = scmp.lt.s32.totalorder %s210, 255
        %s212 = scalar_select %p211, %s210, 255
        %s213 = smul.addr %s212, 4
        %s214 = scalar_lea.vmem %s1, %s213
        %s215 = smul.u32 64, %s19
      $region36: #{gat_encoder_forward.11} parent=27 // pred_fallthru
        _
    $region28: #{gat_encoder_forward.11} parent=5 // pred_fallthru
      _
    %p216 = scmp.le.s32.totalorder 1, %s11
    %p217 = scmp.lt.s32.totalorder %s11, 5
    %p218 = pnand %p216, %p217
    %p219 = pneg %p218
    // Predicated region
    $region37: #{gat_encoder_forward.11} parent=5 // pred_check
      _
    $region38: #{gat_encoder_forward.11} parent=5 // pred_check_branch
      %221 = sbr.rel (%p218) target = $region40
    $region39: #{gat_encoder_forward.11} parent=5 // pred_region
      %s222 = ssub.s32 %s11, 1
      %s223 = smul.u32 4, %s21
      %p224 = scmp.lt.s32.totalorder %s20, 0
      %s225 = scalar_select %p224, %s20, 0
      %p226 = scmp.lt.s32.totalorder %s223, 15
      %s227 = scalar_select %p226, %s223, 15
      %s228 = smul.addr %s225, 16
      %s229 = sadd.s32 %s227, %s228
      %s230 = smul.addr %s229, 8
      %s231 = scalar_lea.vmem %s0, %s230
      %p232 = pneg %p51
      %p233 = pneg %p48
      %s234 = smul.u32 64, %s21
      %p235 = scmp.lt.s32.totalorder %s234, 255
      %s236 = scalar_select %p235, %s234, 255
      %s237 = smul.addr %s236, 4
      %s238 = scalar_lea.vmem %s1, %s237
      %p239 = pneg %p77
      %p240 = pneg %p74
      %p241 = pneg %p98
      %p242 = pneg %p95
      %p243 = pneg %p119
      %p244 = pneg %p116
      %p245 = pneg %p140
      %p246 = pneg %p137
      %p247 = pneg %p166
      %p248 = pneg %p163
      %p249 = scmp.lt.s32.totalorder %s20, 0
      %s250 = scalar_select %p249, %s20, 0
      %s251 = smul.addr %s250, 8
      %s252 = scalar_lea.vmem %s5, %s251
      %s253 = smul.u32 4, %s21
      %p254 = scmp.lt.s32.totalorder %s20, 0
      %s255 = scalar_select %p254, %s20, 0
      %p256 = scmp.lt.s32.totalorder %s253, 15
      %s257 = scalar_select %p256, %s253, 15
      %s258 = smul.addr %s255, 16
      %s259 = sadd.s32 %s257, %s258
      %s260 = smul.addr %s259, 8
      %s261 = scalar_lea.vmem %s0, %s260
      %s262 = smul.u32 4, %s21
      %s263 = smul.u32 64, %s21
      %p264 = scmp.lt.s32.totalorder %s263, 255
      %s265 = scalar_select %p264, %s263, 255
      %s266 = smul.addr %s265, 4
      %s267 = scalar_lea.vmem %s1, %s266
      %s268 = smul.u32 64, %s21
      %p269 = scmp.lt.s32.totalorder %s20, 0
      %s270 = scalar_select %p269, %s20, 0
      %s271 = smul.addr %s270, 8
      %s272 = scalar_lea.vmem %s5, %s271
      %p274 = scmp.eq.s32.totalorder %s21, 0
      // Predicated region
      $region41: #{gat_encoder_forward.11} parent=39 // pred_check
        %p275 = pneg %p274
      $region42: #{gat_encoder_forward.11} parent=39 // pred_check_branch
        %277 = sbr.rel (%p275) target = $region44
      $region43: #{gat_encoder_forward.11} parent=39 // pred_region
        %vm278 = vcmask 261120
        %279 = vst.msk [vmem:[#allocation2] sm:$0xff] %vm278, 0.0
      $region44: #{gat_encoder_forward.11} parent=39 // pred_fallthru
        _
      %v280 = vld [vmem:[#allocation2] sm:$0xff]
      %v281 = vld [vmem:[%s261] sm:$0xff]
      %v282 = vld [vmem:[%s261 + $0x8] sm:$0xff]
      %v283 = vld [vmem:[%s261 + $0x10] sm:$0xff]
      %v284 = vld [vmem:[%s261 + $0x18] sm:$0xff]
      %v285 = vpack.c.bf16 %v281, %v281
      %v286 = vpack.c.bf16 %v282, %v282
      %v287 = vpack.c.bf16 %v283, %v283
      %v288 = vpack.c.bf16 %v284, %v284
      %v289 = vld [vmem:[%s267] sm:$0xf]
      %v290 = vld [vmem:[%s267 + $0x4] sm:$0xf]
      %v291 = vld [vmem:[%s267 + $0x8] sm:$0xf]
      %v292 = vld [vmem:[%s267 + $0xc] sm:$0xf]
      %v293 = vld [vmem:[%s267 + $0x10] sm:$0xf]
      %v294 = vld [vmem:[%s267 + $0x14] sm:$0xf]
      %v295 = vld [vmem:[%s267 + $0x18] sm:$0xf]
      %v296 = vld [vmem:[%s267 + $0x1c] sm:$0xf]
      %v297 = vld [vmem:[%s267 + $0x20] sm:$0xf]
      %v298 = vld [vmem:[%s267 + $0x24] sm:$0xf]
      %v299 = vld [vmem:[%s267 + $0x28] sm:$0xf]
      %v300 = vld [vmem:[%s267 + $0x2c] sm:$0xf]
      %v301 = vld [vmem:[%s267 + $0x30] sm:$0xf]
      %v302 = vld [vmem:[%s267 + $0x34] sm:$0xf]
      %v303 = vld [vmem:[%s267 + $0x38] sm:$0xf]
      %v304 = vld [vmem:[%s267 + $0x3c] sm:$0xf]
      %v305 = vld [vmem:[%s267 + $0x40] sm:$0xf]
      %v306 = vld [vmem:[%s267 + $0x44] sm:$0xf]
      %v307 = vld [vmem:[%s267 + $0x48] sm:$0xf]
      %v308 = vld [vmem:[%s267 + $0x4c] sm:$0xf]
      %v309 = vld [vmem:[%s267 + $0x50] sm:$0xf]
      %v310 = vld [vmem:[%s267 + $0x54] sm:$0xf]
      %v311 = vld [vmem:[%s267 + $0x58] sm:$0xf]
      %v312 = vld [vmem:[%s267 + $0x5c] sm:$0xf]
      %v313 = vld [vmem:[%s267 + $0x60] sm:$0xf]
      %v314 = vld [vmem:[%s267 + $0x64] sm:$0xf]
      %v315 = vld [vmem:[%s267 + $0x68] sm:$0xf]
      %v316 = vld [vmem:[%s267 + $0x6c] sm:$0xf]
      %v317 = vld [vmem:[%s267 + $0x70] sm:$0xf]
      %v318 = vld [vmem:[%s267 + $0x74] sm:$0xf]
      %v319 = vld [vmem:[%s267 + $0x78] sm:$0xf]
      %v320 = vld [vmem:[%s267 + $0x7c] sm:$0xf]
      %v321 = vld [vmem:[%s267 + $0x80] sm:$0xf]
      %v322 = vld [vmem:[%s267 + $0x84] sm:$0xf]
      %v323 = vld [vmem:[%s267 + $0x88] sm:$0xf]
      %v324 = vld [vmem:[%s267 + $0x8c] sm:$0xf]
      %v325 = vld [vmem:[%s267 + $0x90] sm:$0xf]
      %v326 = vld [vmem:[%s267 + $0x94] sm:$0xf]
      %v327 = vld [vmem:[%s267 + $0x98] sm:$0xf]
      %v328 = vld [vmem:[%s267 + $0x9c] sm:$0xf]
      %v329 = vld [vmem:[%s267 + $0xa0] sm:$0xf]
      %v330 = vld [vmem:[%s267 + $0xa4] sm:$0xf]
      %v331 = vld [vmem:[%s267 + $0xa8] sm:$0xf]
      %v332 = vld [vmem:[%s267 + $0xac] sm:$0xf]
      %v333 = vld [vmem:[%s267 + $0xb0] sm:$0xf]
      %v334 = vld [vmem:[%s267 + $0xb4] sm:$0xf]
      %v335 = vld [vmem:[%s267 + $0xb8] sm:$0xf]
      %v336 = vld [vmem:[%s267 + $0xbc] sm:$0xf]
      %v337 = vld [vmem:[%s267 + $0xc0] sm:$0xf]
      %v338 = vld [vmem:[%s267 + $0xc4] sm:$0xf]
      %v339 = vld [vmem:[%s267 + $0xc8] sm:$0xf]
      %v340 = vld [vmem:[%s267 + $0xcc] sm:$0xf]
      %v341 = vld [vmem:[%s267 + $0xd0] sm:$0xf]
      %v342 = vld [vmem:[%s267 + $0xd4] sm:$0xf]
      %v343 = vld [vmem:[%s267 + $0xd8] sm:$0xf]
      %v344 = vld [vmem:[%s267 + $0xdc] sm:$0xf]
      %v345 = vld [vmem:[%s267 + $0xe0] sm:$0xf]
      %v346 = vld [vmem:[%s267 + $0xe4] sm:$0xf]
      %v347 = vld [vmem:[%s267 + $0xe8] sm:$0xf]
      %v348 = vld [vmem:[%s267 + $0xec] sm:$0xf]
      %v349 = vld [vmem:[%s267 + $0xf0] sm:$0xf]
      %v350 = vld [vmem:[%s267 + $0xf4] sm:$0xf]
      %v351 = vld [vmem:[%s267 + $0xf8] sm:$0xf]
      %v352 = vld [vmem:[%s267 + $0xfc] sm:$0xf]
      %v417 = vunpack.c.l.b16 %v289
      %v418 = vunpack.c.l.b16 %v290
      %v419 = vunpack.c.l.b16 %v291
      %v420 = vunpack.c.l.b16 %v292
      %v421 = vunpack.c.l.b16 %v293
      %v422 = vunpack.c.l.b16 %v294
      %v423 = vunpack.c.l.b16 %v295
      %v424 = vunpack.c.l.b16 %v296
      %v425 = vunpack.c.l.b16 %v297
      %v426 = vunpack.c.l.b16 %v298
      %v427 = vunpack.c.l.b16 %v299
      %v428 = vunpack.c.l.b16 %v300
      %v429 = vunpack.c.l.b16 %v301
      %v430 = vunpack.c.l.b16 %v302
      %v431 = vunpack.c.l.b16 %v303
      %v432 = vunpack.c.l.b16 %v304
      %v433 = vunpack.c.l.b16 %v305
      %v434 = vunpack.c.l.b16 %v306
      %v435 = vunpack.c.l.b16 %v307
      %v436 = vunpack.c.l.b16 %v308
      %v437 = vunpack.c.l.b16 %v309
      %v438 = vunpack.c.l.b16 %v310
      %v439 = vunpack.c.l.b16 %v311
      %v440 = vunpack.c.l.b16 %v312
      %v441 = vunpack.c.l.b16 %v313
      %v442 = vunpack.c.l.b16 %v314
      %v443 = vunpack.c.l.b16 %v315
      %v444 = vunpack.c.l.b16 %v316
      %v445 = vunpack.c.l.b16 %v317
      %v446 = vunpack.c.l.b16 %v318
      %v447 = vunpack.c.l.b16 %v319
      %v448 = vunpack.c.l.b16 %v320
      %v449 = vunpack.c.l.b16 %v321
      %v450 = vunpack.c.l.b16 %v322
      %v451 = vunpack.c.l.b16 %v323
      %v452 = vunpack.c.l.b16 %v324
      %v453 = vunpack.c.l.b16 %v325
      %v454 = vunpack.c.l.b16 %v326
      %v455 = vunpack.c.l.b16 %v327
      %v456 = vunpack.c.l.b16 %v328
      %v457 = vunpack.c.l.b16 %v329
      %v458 = vunpack.c.l.b16 %v330
      %v459 = vunpack.c.l.b16 %v331
      %v460 = vunpack.c.l.b16 %v332
      %v461 = vunpack.c.l.b16 %v333
      %v462 = vunpack.c.l.b16 %v334
      %v463 = vunpack.c.l.b16 %v335
      %v464 = vunpack.c.l.b16 %v336
      %v465 = vunpack.c.l.b16 %v337
      %v466 = vunpack.c.l.b16 %v338
      %v467 = vunpack.c.l.b16 %v339
      %v468 = vunpack.c.l.b16 %v340
      %v469 = vunpack.c.l.b16 %v341
      %v470 = vunpack.c.l.b16 %v342
      %v471 = vunpack.c.l.b16 %v343
      %v472 = vunpack.c.l.b16 %v344
      %v473 = vunpack.c.l.b16 %v345
      %v474 = vunpack.c.l.b16 %v346
      %v475 = vunpack.c.l.b16 %v347
      %v476 = vunpack.c.l.b16 %v348
      %v477 = vunpack.c.l.b16 %v349
      %v478 = vunpack.c.l.b16 %v350
      %v479 = vunpack.c.l.b16 %v351
      %v480 = vunpack.c.l.b16 %v352
      %v481 = vpack.c.b16 %v418, %v417
      %v482 = vpack.c.b16 %v420, %v419
      %v483 = vpack.c.b16 %v422, %v421
      %v484 = vpack.c.b16 %v424, %v423
      %v485 = vpack.c.b16 %v426, %v425
      %v486 = vpack.c.b16 %v428, %v427
      %v487 = vpack.c.b16 %v430, %v429
      %v488 = vpack.c.b16 %v432, %v431
      %v489 = vpack.c.b16 %v434, %v433
      %v490 = vpack.c.b16 %v436, %v435
      %v491 = vpack.c.b16 %v438, %v437
      %v492 = vpack.c.b16 %v440, %v439
      %v493 = vpack.c.b16 %v442, %v441
      %v494 = vpack.c.b16 %v444, %v443
      %v495 = vpack.c.b16 %v446, %v445
      %v496 = vpack.c.b16 %v448, %v447
      %v497 = vpack.c.b16 %v450, %v449
      %v498 = vpack.c.b16 %v452, %v451
      %v499 = vpack.c.b16 %v454, %v453
      %v500 = vpack.c.b16 %v456, %v455
      %v501 = vpack.c.b16 %v458, %v457
      %v502 = vpack.c.b16 %v460, %v459
      %v503 = vpack.c.b16 %v462, %v461
      %v504 = vpack.c.b16 %v464, %v463
      %v505 = vpack.c.b16 %v466, %v465
      %v506 = vpack.c.b16 %v468, %v467
      %v507 = vpack.c.b16 %v470, %v469
      %v508 = vpack.c.b16 %v472, %v471
      %v509 = vpack.c.b16 %v474, %v473
      %v510 = vpack.c.b16 %v476, %v475
      %v511 = vpack.c.b16 %v478, %v477
      %v512 = vpack.c.b16 %v480, %v479
      %545 = vmatpush.bf16.msra.mxu0 %v488
      %546 = vmatpush.bf16.msra.mxu0 %v487
      %547 = vmatpush.bf16.msra.mxu0 %v486
      %548 = vmatpush.bf16.msra.mxu0 %v485
      %549 = vmatpush.bf16.msra.mxu0 %v484
      %550 = vmatpush.bf16.msra.mxu0 %v483
      %551 = vmatpush.bf16.msra.mxu0 %v482
      %552 = vmatpush.bf16.msra.mxu0 %v481
      %553 = vmatmul.bf16.gmra.mxu0 %v285
      %v554 = vpop.f32.mrf.mxu0
      %v555 = vadd.f32 0.0, %v554
      %v556 = vpop.f32.mrf.mxu0
      %557 = vdwg.mxu0
      %558 = vmatpush.bf16.msra.mxu0 %v496
      %559 = vmatpush.bf16.msra.mxu0 %v495
      %560 = vmatpush.bf16.msra.mxu0 %v494
      %561 = vmatpush.bf16.msra.mxu0 %v493
      %562 = vmatpush.bf16.msra.mxu0 %v492
      %563 = vmatpush.bf16.msra.mxu0 %v491
      %564 = vmatpush.bf16.msra.mxu0 %v490
      %565 = vmatpush.bf16.msra.mxu0 %v489
      %566 = vmatmul.bf16.gmra.mxu0 %v286
      %v567 = vpop.f32.mrf.mxu0
      %v568 = vadd.f32 %v555, %v567
      %v569 = vpop.f32.mrf.mxu0
      %570 = vdwg.mxu0
      %571 = vmatpush.bf16.msra.mxu0 %v504
      %572 = vmatpush.bf16.msra.mxu0 %v503
      %573 = vmatpush.bf16.msra.mxu0 %v502
      %574 = vmatpush.bf16.msra.mxu0 %v501
      %575 = vmatpush.bf16.msra.mxu0 %v500
      %576 = vmatpush.bf16.msra.mxu0 %v499
      %577 = vmatpush.bf16.msra.mxu0 %v498
      %578 = vmatpush.bf16.msra.mxu0 %v497
      %579 = vmatmul.bf16.gmra.mxu0 %v287
      %v580 = vpop.f32.mrf.mxu0
      %v581 = vadd.f32 %v568, %v580
      %v582 = vpop.f32.mrf.mxu0
      %583 = vdwg.mxu0
      %584 = vmatpush.bf16.msra.mxu0 %v512
      %585 = vmatpush.bf16.msra.mxu0 %v511
      %586 = vmatpush.bf16.msra.mxu0 %v510
      %587 = vmatpush.bf16.msra.mxu0 %v509
      %588 = vmatpush.bf16.msra.mxu0 %v508
      %589 = vmatpush.bf16.msra.mxu0 %v507
      %590 = vmatpush.bf16.msra.mxu0 %v506
      %591 = vmatpush.bf16.msra.mxu0 %v505
      %592 = vmatmul.bf16.gmra.mxu0 %v288
      %v593 = vpop.f32.mrf.mxu0
      %v594 = vadd.f32 %v581, %v593
      %v595 = vpop.f32.mrf.mxu0
      %596 = vdwg.mxu0
      %v597 = vadd.f32 %v280, %v594
      %vm598 = vcmask 261120
      %599 = vst.msk [vmem:[#allocation2] sm:$0xff] %vm598, %v597
      %p600 = scmp.eq.s32.totalorder %s21, 3
      // Predicated region
      $region45: #{gat_encoder_forward.11} parent=39 // pred_check
        %p601 = pneg %p600
      $region46: #{gat_encoder_forward.11} parent=39 // pred_check_branch
        %603 = sbr.rel (%p601) target = $region48
      $region47: #{gat_encoder_forward.11} parent=39 // pred_region
        %v604 = vld [vmem:[#allocation2] sm:$0xff]
        %v605 = vld [vmem:[%s2] sm:$0x1]
        %v607 = vperm.slane %v605, 0
        %v609 = vadd.f32 %v604, %v607
        %v610 = vmax.f32 %v609, 0.0
        %v611 = vpack.c.bf16 %v610, %v610
        %v612 = vld [vmem:[%s3] sm:$0xf]
        %v613 = vld [vmem:[%s3 + $0x4] sm:$0xf]
        %v614 = vld [vmem:[%s3 + $0x8] sm:$0xf]
        %v615 = vld [vmem:[%s3 + $0xc] sm:$0xf]
        %v616 = vld [vmem:[%s4] sm:$0x1]
        %v618 = vperm.slane %v616, 0
        %v624 = vunpack.c.l.b16 %v612
        %v625 = vunpack.c.l.b16 %v613
        %v626 = vunpack.c.l.b16 %v614
        %v627 = vunpack.c.l.b16 %v615
        %v628 = vpack.c.b16 %v625, %v624
        %v629 = vpack.c.b16 %v627, %v626
        %v633 = vsel %vm598, %v611, 0
        %635 = vmatpush.bf16.msra.mxu0 0
        %636 = vmatpush.bf16.msra.mxu0 0
        %637 = vmatpush.bf16.msra.mxu0 0
        %638 = vmatpush.bf16.msra.mxu0 0
        %639 = vmatpush.bf16.msra.mxu0 0
        %640 = vmatpush.bf16.msra.mxu0 0
        %641 = vmatpush.bf16.msra.mxu0 %v629
        %642 = vmatpush.bf16.msra.mxu0 %v628
        %643 = vmatmul.bf16.gmra.mxu0 %v633
        %v644 = vpop.f32.mrf.mxu0
        %v645 = vadd.f32 %v618, %v644
        %v646 = vpop.f32.mrf.mxu0
        %647 = vdwg.mxu0
        %v648 = vmax.f32 %v645, 0.0
        %649 = vst.msk [vmem:[%s272] sm:$0xff] %vm598, %v648
      $region48: #{gat_encoder_forward.11} parent=39 // pred_fallthru
        _
      %p650 = scmp.lt.s32.totalorder %s20, 0
      %s651 = scalar_select %p650, %s20, 0
      %s652 = smul.addr %s651, 8
      %s653 = scalar_lea.vmem %s5, %s652
      // Predicated region
      $region49: #{gat_encoder_forward.11} parent=39 // pred_check
        %p654 = pneg %p163
      $region50: #{gat_encoder_forward.11} parent=39 // pred_check_branch
        %656 = sbr.rel (%p654) target = $region52
      $region51: #{gat_encoder_forward.11} parent=39 // pred_region
        _
      $region52: #{gat_encoder_forward.11} parent=39 // pred_fallthru
        _
      // Predicated region
      $region53: #{gat_encoder_forward.11} parent=39 // pred_check
        %p657 = pneg %p163
      $region54: #{gat_encoder_forward.11} parent=39 // pred_check_branch
        %659 = sbr.rel (%p657) target = $region56
      $region55: #{gat_encoder_forward.11} parent=39 // pred_region
        %p660 = scmp.lt.s32.totalorder %s20, 0
        %s661 = scalar_select %p660, %s20, 0
        %s662 = smul.addr %s661, 8
        %s663 = scalar_lea.vmem %s5, %s662
      $region56: #{gat_encoder_forward.11} parent=39 // pred_fallthru
        _
    $region40: #{gat_encoder_forward.11} parent=5 // pred_fallthru
      _
    %p664 = scmp.le.s32.totalorder 2, %s11
    // Predicated region
    $region57: #{gat_encoder_forward.11} parent=5 // pred_check
      %p665 = pneg %p664
    $region58: #{gat_encoder_forward.11} parent=5 // pred_check_branch
      %667 = sbr.rel (%p665) target = $region60
    $region59: #{gat_encoder_forward.11} parent=5 // pred_region
      %s668 = ssub.s32 %s11, 2
    $region60: #{gat_encoder_forward.11} parent=5 // pred_fallthru
      _
  $region6: #{gat_encoder_forward.11} parent=0 // loop_footer
    %s15 = sadd.s32 1, %s11
  $region7: #{gat_encoder_forward.11} parent=0 // loop_footer_branch
    %10 = sbr.rel target = $region3
  $region8: #{gat_encoder_forward.11} parent=0 // loop_exit
    _

// kernel: gat_encoder_forward.13
$region0: #{gat_encoder_forward.13}
  #allocation0 [shape = 'u32[]', space=smem, size = 0x4, offset = 0x4, fixed_abs, tag = 'smem constant byte address 0x4 - core index']
  #allocation1 [shape = 'u32[72,128]{1,0:T(1,128)}', space=vmem, size = 0x9000, scoped, tag = 'internal scratch']
  %s0 = inlined_call_operand.vmem [shape: f32[2,4,32], index: 0, kind: input, shape index: {}]
  %s1 = inlined_call_operand.vmem [shape: bf16[32,64], index: 1, kind: input, shape index: {}]
  %s2 = inlined_call_operand.vmem [shape: f32[1,64], index: 2, kind: input, shape index: {}]
  %s3 = inlined_call_operand.vmem [shape: f32[2,1,4], index: 3, kind: input, shape index: {}]
  %s4 = inlined_call_operand.vmem [shape: f32[1,32], index: 4, kind: input, shape index: {}]
  %s5 = inlined_call_operand.vmem [shape: f32[1,32], index: 5, kind: input, shape index: {}]
  %s6 = inlined_call_operand.vmem [shape: f32[2,4,32], index: 6, kind: output, shape index: {}]
  %s7 = sld [smem:[#allocation0]]
  $region57: #{gat_encoder_forward.13} parent=0
    _
  %s9 = ssub.s32 1, %s7
  %s10 = scalar_select 0, %s9, %s7
  loop: start=0, step=1, limit=4
  $region2: #{gat_encoder_forward.13} parent=0 // loop_pre_header
    _
  $region3: #{gat_encoder_forward.13} parent=0 // loop_header
    %s12 = sphi 0, %s16
    %p13 = scmp.ge.s32.totalorder %s12, 4
    %s22 = sphi 0, %s24
    %s25 = sphi 0, %s22
    %s26 = sphi 0, %s25
    %s42 = sphi 0, %s26
    %s46 = sphi 0, %s46
    %s48 = sphi 0, %s46
    %s49 = sphi 0, %s48
    %s63 = sphi 0, %s49
    %s67 = sphi 0, %s67
    %s69 = sphi 0, %s67
    %s70 = sphi 0, %s69
    %s84 = sphi 0, %s70
    %s90 = sphi 0, %s92
    %s93 = sphi 0, %s90
    %s94 = sphi 0, %s93
    %s110 = sphi 0, %s94
    %s114 = sphi 0, %s114
    %s116 = sphi 0, %s114
    %s117 = sphi 0, %s116
    %s131 = sphi 0, %s117
    %s135 = sphi 0, %s135
    %s137 = sphi 0, %s135
    %s138 = sphi 0, %s137
    %s152 = sphi 0, %s138
    %s158 = sphi 0, %s160
    %s161 = sphi 0, %s158
    %s162 = sphi 0, %s161
    %s178 = sphi 0, %s162
  $region4: #{gat_encoder_forward.13} parent=0 // loop_header_branch
    %15 = sbr.rel (%p13) target = $region8
  $region5: #{gat_encoder_forward.13} parent=0 // loop_body
    %s17 = ssub.s32 %s12, 1
    %s18 = ssub.s32 %s12, 2
    %s19 = sadd.s32 %s12, 1
    %s20 = ssub.s32 %s12, %s19
    %p21 = scmp.eq.s32.totalorder %s20, 0
    %s23 = sadd.s32 %s22, 1
    %s24 = scalar_select %p21, %s22, %s23
    %p27 = pneg %p21
    %p28 = scmp.eq.s32.totalorder %s12, 1
    %p29 = por %p27, %p28
    %p30 = scmp.ne.s32.totalorder %s22, %s25
    %p31 = scmp.eq.s32.totalorder %s12, 0
    %p32 = por %p30, %p31
    %p33 = scmp.ne.s32.totalorder %s22, %s25
    %p34 = scmp.eq.s32.totalorder %s17, 1
    %p35 = por %p33, %p34
    %p36 = scmp.ne.s32.totalorder %s25, %s26
    %p37 = scmp.eq.s32.totalorder %s17, 0
    %p38 = por %p36, %p37
    %p39 = scmp.ne.s32.totalorder %s25, %s26
    %p40 = scmp.eq.s32.totalorder %s18, 1
    %p41 = por %p39, %p40
    %p43 = scmp.ne.s32.totalorder %s26, %s42
    %p44 = scmp.eq.s32.totalorder %s18, 0
    %p45 = por %p43, %p44
    %s47 = sadd.s32 %s46, 1
    %p50 = scmp.eq.s32.totalorder %s12, 1
    %p51 = scmp.ne.s32.totalorder %s46, %s48
    %p52 = scmp.eq.s32.totalorder %s12, 0
    %p53 = por %p51, %p52
    %p54 = scmp.ne.s32.totalorder %s46, %s48
    %p55 = scmp.eq.s32.totalorder %s17, 1
    %p56 = por %p54, %p55
    %p57 = scmp.ne.s32.totalorder %s48, %s49
    %p58 = scmp.eq.s32.totalorder %s17, 0
    %p59 = por %p57, %p58
    %p60 = scmp.ne.s32.totalorder %s48, %s49
    %p61 = scmp.eq.s32.totalorder %s18, 1
    %p62 = por %p60, %p61
    %p64 = scmp.ne.s32.totalorder %s49, %s63
    %p65 = scmp.eq.s32.totalorder %s18, 0
    %p66 = por %p64, %p65
    %s68 = sadd.s32 %s67, 1
    %p71 = scmp.eq.s32.totalorder %s12, 1
    %p72 = scmp.ne.s32.totalorder %s67, %s69
    %p73 = scmp.eq.s32.totalorder %s12, 0
    %p74 = por %p72, %p73
    %p75 = scmp.ne.s32.totalorder %s67, %s69
    %p76 = scmp.eq.s32.totalorder %s17, 1
    %p77 = por %p75, %p76
    %p78 = scmp.ne.s32.totalorder %s69, %s70
    %p79 = scmp.eq.s32.totalorder %s17, 0
    %p80 = por %p78, %p79
    %p81 = scmp.ne.s32.totalorder %s69, %s70
    %p82 = scmp.eq.s32.totalorder %s18, 1
    %p83 = por %p81, %p82
    %p85 = scmp.ne.s32.totalorder %s70, %s84
    %p86 = scmp.eq.s32.totalorder %s18, 0
    %p87 = por %p85, %p86
    %s88 = ssub.s32 %s12, %s19
    %p89 = scmp.eq.s32.totalorder %s88, 0
    %s91 = sadd.s32 %s90, 1
    %s92 = scalar_select %p89, %s90, %s91
    %p95 = pneg %p89
    %p96 = scmp.eq.s32.totalorder %s12, 1
    %p97 = por %p95, %p96
    %p98 = scmp.ne.s32.totalorder %s90, %s93
    %p99 = scmp.eq.s32.totalorder %s12, 0
    %p100 = por %p98, %p99
    %p101 = scmp.ne.s32.totalorder %s90, %s93
    %p102 = scmp.eq.s32.totalorder %s17, 1
    %p103 = por %p101, %p102
    %p104 = scmp.ne.s32.totalorder %s93, %s94
    %p105 = scmp.eq.s32.totalorder %s17, 0
    %p106 = por %p104, %p105
    %p107 = scmp.ne.s32.totalorder %s93, %s94
    %p108 = scmp.eq.s32.totalorder %s18, 1
    %p109 = por %p107, %p108
    %p111 = scmp.ne.s32.totalorder %s94, %s110
    %p112 = scmp.eq.s32.totalorder %s18, 0
    %p113 = por %p111, %p112
    %s115 = sadd.s32 %s114, 1
    %p118 = scmp.eq.s32.totalorder %s12, 1
    %p119 = scmp.ne.s32.totalorder %s114, %s116
    %p120 = scmp.eq.s32.totalorder %s12, 0
    %p121 = por %p119, %p120
    %p122 = scmp.ne.s32.totalorder %s114, %s116
    %p123 = scmp.eq.s32.totalorder %s17, 1
    %p124 = por %p122, %p123
    %p125 = scmp.ne.s32.totalorder %s116, %s117
    %p126 = scmp.eq.s32.totalorder %s17, 0
    %p127 = por %p125, %p126
    %p128 = scmp.ne.s32.totalorder %s116, %s117
    %p129 = scmp.eq.s32.totalorder %s18, 1
    %p130 = por %p128, %p129
    %p132 = scmp.ne.s32.totalorder %s117, %s131
    %p133 = scmp.eq.s32.totalorder %s18, 0
    %p134 = por %p132, %p133
    %s136 = sadd.s32 %s135, 1
    %p139 = scmp.eq.s32.totalorder %s12, 1
    %p140 = scmp.ne.s32.totalorder %s135, %s137
    %p141 = scmp.eq.s32.totalorder %s12, 0
    %p142 = por %p140, %p141
    %p143 = scmp.ne.s32.totalorder %s135, %s137
    %p144 = scmp.eq.s32.totalorder %s17, 1
    %p145 = por %p143, %p144
    %p146 = scmp.ne.s32.totalorder %s137, %s138
    %p147 = scmp.eq.s32.totalorder %s17, 0
    %p148 = por %p146, %p147
    %p149 = scmp.ne.s32.totalorder %s137, %s138
    %p150 = scmp.eq.s32.totalorder %s18, 1
    %p151 = por %p149, %p150
    %p153 = scmp.ne.s32.totalorder %s138, %s152
    %p154 = scmp.eq.s32.totalorder %s18, 0
    %p155 = por %p153, %p154
    %s156 = ssub.s32 %s12, %s19
    %p157 = scmp.eq.s32.totalorder %s156, 0
    %s159 = sadd.s32 %s158, 1
    %s160 = scalar_select %p157, %s158, %s159
    %p163 = pneg %p157
    %p164 = scmp.eq.s32.totalorder %s12, 1
    %p165 = por %p163, %p164
    %p166 = scmp.ne.s32.totalorder %s158, %s161
    %p167 = scmp.eq.s32.totalorder %s12, 0
    %p168 = por %p166, %p167
    %p169 = scmp.ne.s32.totalorder %s158, %s161
    %p170 = scmp.eq.s32.totalorder %s17, 1
    %p171 = por %p169, %p170
    %p172 = scmp.ne.s32.totalorder %s161, %s162
    %p173 = scmp.eq.s32.totalorder %s17, 0
    %p174 = por %p172, %p173
    %p175 = scmp.ne.s32.totalorder %s161, %s162
    %p176 = scmp.eq.s32.totalorder %s18, 1
    %p177 = por %p175, %p176
    %p179 = scmp.ne.s32.totalorder %s162, %s178
    %p180 = scmp.eq.s32.totalorder %s18, 0
    %p181 = por %p179, %p180
    %p182 = scmp.le.s32.totalorder 1, %s12
    %p183 = scmp.lt.s32.totalorder %s12, 3
    %p184 = pnand %p182, %p183
    %p185 = pneg %p184
    // Predicated region
    $region9: #{gat_encoder_forward.13} parent=5 // pred_check
      _
    $region10: #{gat_encoder_forward.13} parent=5 // pred_check_branch
      %187 = sbr.rel (%p184) target = $region12
    $region11: #{gat_encoder_forward.13} parent=5 // pred_region
      %s188 = ssub.s32 %s12, 1
      // Predicated region
      $region13: #{gat_encoder_forward.13} parent=11 // pred_check
        %p189 = pneg %p59
      $region14: #{gat_encoder_forward.13} parent=11 // pred_check_branch
        %191 = sbr.rel (%p189) target = $region16
      $region15: #{gat_encoder_forward.13} parent=11 // pred_region
        _
      $region16: #{gat_encoder_forward.13} parent=11 // pred_fallthru
        _
      // Predicated region
      $region17: #{gat_encoder_forward.13} parent=11 // pred_check
        %p192 = pneg %p80
      $region18: #{gat_encoder_forward.13} parent=11 // pred_check_branch
        %194 = sbr.rel (%p192) target = $region20
      $region19: #{gat_encoder_forward.13} parent=11 // pred_region
        _
      $region20: #{gat_encoder_forward.13} parent=11 // pred_fallthru
        _
      // Predicated region
      $region21: #{gat_encoder_forward.13} parent=11 // pred_check
        %p195 = pneg %p127
      $region22: #{gat_encoder_forward.13} parent=11 // pred_check_branch
        %197 = sbr.rel (%p195) target = $region24
      $region23: #{gat_encoder_forward.13} parent=11 // pred_region
        _
      $region24: #{gat_encoder_forward.13} parent=11 // pred_fallthru
        _
      // Predicated region
      $region25: #{gat_encoder_forward.13} parent=11 // pred_check
        %p198 = pneg %p148
      $region26: #{gat_encoder_forward.13} parent=11 // pred_check_branch
        %200 = sbr.rel (%p198) target = $region28
      $region27: #{gat_encoder_forward.13} parent=11 // pred_region
        _
      $region28: #{gat_encoder_forward.13} parent=11 // pred_fallthru
        _
    $region12: #{gat_encoder_forward.13} parent=5 // pred_fallthru
      _
    %p201 = scmp.lt.s32.totalorder %s12, 2
    // Predicated region
    $region29: #{gat_encoder_forward.13} parent=5 // pred_check
      %p202 = pneg %p201
    $region30: #{gat_encoder_forward.13} parent=5 // pred_check_branch
      %204 = sbr.rel (%p202) target = $region32
    $region31: #{gat_encoder_forward.13} parent=5 // pred_region
      // Predicated region
      $region33: #{gat_encoder_forward.13} parent=31 // pred_check
        %p205 = pneg %p32
      $region34: #{gat_encoder_forward.13} parent=31 // pred_check_branch
        %207 = sbr.rel (%p205) target = $region36
      $region35: #{gat_encoder_forward.13} parent=31 // pred_region
        %p208 = scmp.lt.s32.totalorder %s12, 1
        %s209 = scalar_select %p208, %s12, 1
        %s210 = smul.addr %s209, 4
        %s211 = scalar_lea.vmem %s0, %s210
      $region36: #{gat_encoder_forward.13} parent=31 // pred_fallthru
        _
      // Predicated region
      $region37: #{gat_encoder_forward.13} parent=31 // pred_check
        %p212 = pneg %p100
      $region38: #{gat_encoder_forward.13} parent=31 // pred_check_branch
        %214 = sbr.rel (%p212) target = $region40
      $region39: #{gat_encoder_forward.13} parent=31 // pred_region
        %p215 = scmp.lt.s32.totalorder %s12, 1
        %s216 = scalar_select %p215, %s12, 1
        %s217 = scalar_lea.vmem %s3, %s216
      $region40: #{gat_encoder_forward.13} parent=31 // pred_fallthru
        _
    $region32: #{gat_encoder_forward.13} parent=5 // pred_fallthru
      _
    %p218 = scmp.le.s32.totalorder 1, %s12
    %p219 = scmp.lt.s32.totalorder %s12, 3
    %p220 = pnand %p218, %p219
    %p221 = pneg %p220
    // Predicated region
    $region41: #{gat_encoder_forward.13} parent=5 // pred_check
      _
    $region42: #{gat_encoder_forward.13} parent=5 // pred_check_branch
      %223 = sbr.rel (%p220) target = $region44
    $region43: #{gat_encoder_forward.13} parent=5 // pred_region
      %s224 = ssub.s32 %s12, 1
      %p225 = scmp.lt.s32.totalorder %s17, 1
      %s226 = scalar_select %p225, %s17, 1
      %s227 = smul.addr %s226, 4
      %s228 = scalar_lea.vmem %s0, %s227
      %p229 = pneg %p38
      %p230 = pneg %p35
      %p231 = pneg %p59
      %p232 = pneg %p56
      %p233 = pneg %p80
      %p234 = pneg %p77
      %p235 = scmp.lt.s32.totalorder %s17, 1
      %s236 = scalar_select %p235, %s17, 1
      %s237 = scalar_lea.vmem %s3, %s236
      %p238 = pneg %p106
      %p239 = pneg %p103
      %p240 = pneg %p127
      %p241 = pneg %p124
      %p242 = pneg %p148
      %p243 = pneg %p145
      %p244 = pneg %p174
      %p245 = pneg %p171
      %p246 = scmp.lt.s32.totalorder %s17, 1
      %s247 = scalar_select %p246, %s17, 1
      %s248 = smul.addr %s247, 4
      %s249 = scalar_lea.vmem %s6, %s248
      %p250 = scmp.lt.s32.totalorder %s17, 1
      %s251 = scalar_select %p250, %s17, 1
      %s252 = smul.addr %s251, 4
      %s253 = scalar_lea.vmem %s0, %s252
      %p254 = scmp.lt.s32.totalorder %s17, 1
      %s255 = scalar_select %p254, %s17, 1
      %s256 = scalar_lea.vmem %s3, %s255
      %p257 = scmp.lt.s32.totalorder %s17, 1
      %s258 = scalar_select %p257, %s17, 1
      %s259 = smul.addr %s258, 4
      %s260 = scalar_lea.vmem %s6, %s259
      %v262 = vld [vmem:[%s253] sm:$0xf]
      %v263 = vpack.c.bf16 %v262, %v262
      %v264 = vld [vmem:[%s1] sm:$0xf]
      %v265 = vld [vmem:[%s1 + $0x4] sm:$0xf]
      %v266 = vld [vmem:[%s1 + $0x8] sm:$0xf]
      %v267 = vld [vmem:[%s1 + $0xc] sm:$0xf]
      %v268 = vld [vmem:[%s2] sm:$0x1]
      %v270 = vperm.slane %v268, 0
      %v276 = vunpack.c.l.b16 %v264
      %v277 = vunpack.c.l.b16 %v265
      %v278 = vunpack.c.l.b16 %v266
      %v279 = vunpack.c.l.b16 %v267
      %v280 = vpack.c.b16 %v277, %v276
      %v281 = vpack.c.b16 %v279, %v278
      %vm284 = vcmask 261120
      %v286 = vsel %vm284, %v263, 0
      %288 = vmatpush.bf16.msra.mxu0 0
      %289 = vmatpush.bf16.msra.mxu0 0
      %290 = vmatpush.bf16.msra.mxu0 0
      %291 = vmatpush.bf16.msra.mxu0 0
      %292 = vmatpush.bf16.msra.mxu0 0
      %293 = vmatpush.bf16.msra.mxu0 0
      %294 = vmatpush.bf16.msra.mxu0 %v281
      %295 = vmatpush.bf16.msra.mxu0 %v280
      %296 = vmatmul.bf16.gmra.mxu0 %v286
      %v297 = vpop.f32.mrf.mxu0
      %v298 = vadd.f32 %v270, %v297
      %v299 = vpop.f32.mrf.mxu0
      %300 = vdwg.mxu0
      %v301 = vld [vmem:[%s256] sm:$0x1]
      %v302 = vpack.c.bf16 %v298, %v298
      %304 = vrot.lane.b32.xlu0 %v302, 96
      %v305 = vpop.permute.xlu0 %304
      %vm306 = vcmask 64512
      %v308 = vsel %vm306, %v302, 0
      %v311 = vsel %vm306, %v305, 0
      %313 = vmatpush.bf16.xpose.msra.mxu0 0
      %314 = vmatpush.bf16.xpose.msra.mxu0 0
      %315 = vmatpush.bf16.xpose.msra.mxu0 0
      %316 = vmatpush.bf16.xpose.msra.mxu0 0
      %317 = vmatpush.bf16.xpose.msra.mxu0 0
      %318 = vmatpush.bf16.xpose.msra.mxu0 0
      %319 = vmatpush.bf16.xpose.msra.mxu0 0
      %320 = vmatpush.bf16.xpose.msra.mxu0 %v311
      %321 = vmatmul.bf16.gmra.mxu0 %v308
      %v322 = vpop.f32.mrf.mxu0
      %v323 = vadd.f32 0.0, %v322
      %v324 = vpop.f32.mrf.mxu0
      %325 = vdwg.mxu0
      %v326 = vmul.f32 %v323, 0.35355338
      %vm327 = vcmp.eq.f32.partialorder %v301, 0.0
      %v328 = vsel %vm327, 1, 0
      %v329 = vperm.slane %v328, 0
      %vm330 = vcmp.eq.s32.totalorder %v329, 1
      %v331 = vsel %vm330, -1e+09, %v326
      %vm332 = vcmask 27648
      %v333 = vsel %vm332, %v331, -inf
      %334 = vmax.xlane.f32.xlu0 %v333
      %v335 = vpop.xlane.xlu0 %334
      %v336 = vsub.f32 %v331, %v335
      %v337 = vmul.f32 %v336, 1.442695
      %v338 = vpow.pop %v337
      %v339 = vsel %vm332, %v338, 0.0
      %340 = vadd.xlane.f32.xlu0 %v339
      %v341 = vpop.xlane.xlu0 %340
      %v342 = vrcp.pop %v341
      %v343 = vmul.f32 %v338, %v342
      %v344 = vpack.c.bf16 %v343, %v343
      %vm345 = vcmask 31744
      %v347 = vsel %vm345, %v344, 0
      %vm349 = vcmask 1041408
      %v350 = vsel %vm349, %v263, 0
      %352 = vmatpush.bf16.msra.mxu0 0
      %353 = vmatpush.bf16.msra.mxu0 0
      %354 = vmatpush.bf16.msra.mxu0 0
      %355 = vmatpush.bf16.msra.mxu0 0
      %356 = vmatpush.bf16.msra.mxu0 0
      %357 = vmatpush.bf16.msra.mxu0 0
      %358 = vmatpush.bf16.msra.mxu0 0
      %359 = vmatpush.bf16.msra.mxu0 %v350
      %360 = vmatmul.bf16.gmra.mxu0 %v347
      %v361 = vpop.f32.mrf.mxu0
      %v362 = vadd.f32 0.0, %v361
      %v363 = vpop.f32.mrf.mxu0
      %364 = vdwg.mxu0
      %365 = vrot.lane.b32.xlu0 %v302, 120
      %v366 = vpop.permute.xlu0 %365
      %367 = vrot.lane.b32.xlu0 %v302, 88
      %v368 = vpop.permute.xlu0 %367
      %v370 = vsel %vm306, %v366, 0
      %v373 = vsel %vm306, %v368, 0
      %375 = vmatpush.bf16.xpose.msra.mxu0 0
      %376 = vmatpush.bf16.xpose.msra.mxu0 0
      %377 = vmatpush.bf16.xpose.msra.mxu0 0
      %378 = vmatpush.bf16.xpose.msra.mxu0 0
      %379 = vmatpush.bf16.xpose.msra.mxu0 0
      %380 = vmatpush.bf16.xpose.msra.mxu0 0
      %381 = vmatpush.bf16.xpose.msra.mxu0 0
      %382 = vmatpush.bf16.xpose.msra.mxu0 %v373
      %383 = vmatmul.bf16.gmra.mxu0 %v370
      %v384 = vpop.f32.mrf.mxu0
      %v385 = vadd.f32 0.0, %v384
      %v386 = vpop.f32.mrf.mxu0
      %387 = vdwg.mxu0
      %v388 = vmul.f32 %v385, 0.35355338
      %v389 = vsel %vm330, -1e+09, %v388
      %v390 = vsel %vm332, %v389, -inf
      %391 = vmax.xlane.f32.xlu0 %v390
      %v392 = vpop.xlane.xlu0 %391
      %v393 = vsub.f32 %v389, %v392
      %v394 = vmul.f32 %v393, 1.442695
      %v395 = vpow.pop %v394
      %v396 = vsel %vm332, %v395, 0.0
      %397 = vadd.xlane.f32.xlu0 %v396
      %v398 = vpop.xlane.xlu0 %397
      %v399 = vrcp.pop %v398
      %v400 = vmul.f32 %v395, %v399
      %v401 = vpack.c.bf16 %v400, %v400
      %403 = vrot.lane.b32.xlu0 %v263, 120
      %v404 = vpop.permute.xlu0 %403
      %v406 = vsel %vm345, %v401, 0
      %v409 = vsel %vm349, %v404, 0
      %411 = vmatpush.bf16.msra.mxu0 0
      %412 = vmatpush.bf16.msra.mxu0 0
      %413 = vmatpush.bf16.msra.mxu0 0
      %414 = vmatpush.bf16.msra.mxu0 0
      %415 = vmatpush.bf16.msra.mxu0 0
      %416 = vmatpush.bf16.msra.mxu0 0
      %417 = vmatpush.bf16.msra.mxu0 0
      %418 = vmatpush.bf16.msra.mxu0 %v409
      %419 = vmatmul.bf16.gmra.mxu0 %v406
      %v420 = vpop.f32.mrf.mxu0
      %v421 = vadd.f32 0.0, %v420
      %v422 = vpop.f32.mrf.mxu0
      %423 = vdwg.mxu0
      %424 = vrot.lane.b32.xlu0 %v302, 112
      %v425 = vpop.permute.xlu0 %424
      %426 = vrot.lane.b32.xlu0 %v302, 80
      %v427 = vpop.permute.xlu0 %426
      %v429 = vsel %vm306, %v425, 0
      %v432 = vsel %vm306, %v427, 0
      %434 = vmatpush.bf16.xpose.msra.mxu0 0
      %435 = vmatpush.bf16.xpose.msra.mxu0 0
      %436 = vmatpush.bf16.xpose.msra.mxu0 0
      %437 = vmatpush.bf16.xpose.msra.mxu0 0
      %438 = vmatpush.bf16.xpose.msra.mxu0 0
      %439 = vmatpush.bf16.xpose.msra.mxu0 0
      %440 = vmatpush.bf16.xpose.msra.mxu0 0
      %441 = vmatpush.bf16.xpose.msra.mxu0 %v432
      %442 = vmatmul.bf16.gmra.mxu0 %v429
      %v443 = vpop.f32.mrf.mxu0
      %v444 = vadd.f32 0.0, %v443
      %v445 = vpop.f32.mrf.mxu0
      %446 = vdwg.mxu0
      %v447 = vmul.f32 %v444, 0.35355338
      %v448 = vsel %vm330, -1e+09, %v447
      %v449 = vsel %vm332, %v448, -inf
      %450 = vmax.xlane.f32.xlu0 %v449
      %v451 = vpop.xlane.xlu0 %450
      %v452 = vsub.f32 %v448, %v451
      %v453 = vmul.f32 %v452, 1.442695
      %v454 = vpow.pop %v453
      %v455 = vsel %vm332, %v454, 0.0
      %456 = vadd.xlane.f32.xlu0 %v455
      %v457 = vpop.xlane.xlu0 %456
      %v458 = vrcp.pop %v457
      %v459 = vmul.f32 %v454, %v458
      %v460 = vpack.c.bf16 %v459, %v459
      %461 = vrot.lane.b32.xlu0 %v263, 112
      %v462 = vpop.permute.xlu0 %461
      %v464 = vsel %vm345, %v460, 0
      %v467 = vsel %vm349, %v462, 0
      %469 = vmatpush.bf16.msra.mxu0 0
      %470 = vmatpush.bf16.msra.mxu0 0
      %471 = vmatpush.bf16.msra.mxu0 0
      %472 = vmatpush.bf16.msra.mxu0 0
      %473 = vmatpush.bf16.msra.mxu0 0
      %474 = vmatpush.bf16.msra.mxu0 0
      %475 = vmatpush.bf16.msra.mxu0 0
      %476 = vmatpush.bf16.msra.mxu0 %v467
      %477 = vmatmul.bf16.gmra.mxu0 %v464
      %v478 = vpop.f32.mrf.mxu0
      %v479 = vadd.f32 0.0, %v478
      %v480 = vpop.f32.mrf.mxu0
      %481 = vdwg.mxu0
      %482 = vrot.lane.b32.xlu0 %v302, 104
      %v483 = vpop.permute.xlu0 %482
      %484 = vrot.lane.b32.xlu0 %v302, 72
      %v485 = vpop.permute.xlu0 %484
      %v487 = vsel %vm306, %v483, 0
      %v490 = vsel %vm306, %v485, 0
      %492 = vmatpush.bf16.xpose.msra.mxu0 0
      %493 = vmatpush.bf16.xpose.msra.mxu0 0
      %494 = vmatpush.bf16.xpose.msra.mxu0 0
      %495 = vmatpush.bf16.xpose.msra.mxu0 0
      %496 = vmatpush.bf16.xpose.msra.mxu0 0
      %497 = vmatpush.bf16.xpose.msra.mxu0 0
      %498 = vmatpush.bf16.xpose.msra.mxu0 0
      %499 = vmatpush.bf16.xpose.msra.mxu0 %v490
      %500 = vmatmul.bf16.gmra.mxu0 %v487
      %v501 = vpop.f32.mrf.mxu0
      %v502 = vadd.f32 0.0, %v501
      %v503 = vpop.f32.mrf.mxu0
      %504 = vdwg.mxu0
      %v505 = vmul.f32 %v502, 0.35355338
      %v506 = vsel %vm330, -1e+09, %v505
      %v507 = vsel %vm332, %v506, -inf
      %508 = vmax.xlane.f32.xlu0 %v507
      %v509 = vpop.xlane.xlu0 %508
      %v510 = vsub.f32 %v506, %v509
      %v511 = vmul.f32 %v510, 1.442695
      %v512 = vpow.pop %v511
      %v513 = vsel %vm332, %v512, 0.0
      %514 = vadd.xlane.f32.xlu0 %v513
      %v515 = vpop.xlane.xlu0 %514
      %v516 = vrcp.pop %v515
      %v517 = vmul.f32 %v512, %v516
      %v518 = vpack.c.bf16 %v517, %v517
      %519 = vrot.lane.b32.xlu0 %v263, 104
      %v520 = vpop.permute.xlu0 %519
      %v522 = vsel %vm345, %v518, 0
      %v525 = vsel %vm349, %v520, 0
      %527 = vmatpush.bf16.msra.mxu0 0
      %528 = vmatpush.bf16.msra.mxu0 0
      %529 = vmatpush.bf16.msra.mxu0 0
      %530 = vmatpush.bf16.msra.mxu0 0
      %531 = vmatpush.bf16.msra.mxu0 0
      %532 = vmatpush.bf16.msra.mxu0 0
      %533 = vmatpush.bf16.msra.mxu0 0
      %534 = vmatpush.bf16.msra.mxu0 %v525
      %535 = vmatmul.bf16.gmra.mxu0 %v522
      %v536 = vpop.f32.mrf.mxu0
      %v537 = vadd.f32 0.0, %v536
      %v538 = vpop.f32.mrf.mxu0
      %539 = vdwg.mxu0
      %541 = vrot.lane.b32.xlu0 %v421, 8
      %v542 = vpop.permute.xlu0 %541
      %545 = vrot.lane.b32.xlu0 %v479, 16
      %v546 = vpop.permute.xlu0 %545
      %549 = vrot.lane.b32.xlu0 %v537, 24
      %v550 = vpop.permute.xlu0 %549
      %v552 = vsel %vm306, %v362, %v542
      %vm553 = vcmask 130048
      %v554 = vsel %vm553, %v552, %v546
      %vm555 = vcmask 195584
      %v556 = vsel %vm555, %v554, %v550
      %v557 = vadd.f32 %v262, %v556
      %v558 = vld [vmem:[%s4] sm:$0x1]
      %v559 = vld [vmem:[%s5] sm:$0x1]
      %vm560 = vcmask 257024
      %v561 = vsel %vm560, %v557, 0.0
      %562 = vadd.xlane.f32.xlu0 %v561
      %v563 = vpop.xlane.xlu0 %562
      %v564 = vrcp.pop 32.0
      %v565 = vmul.f32 32.0, %v564
      %v566 = vsub.f32 1.0, %v565
      %v567 = vmul.f32 %v564, %v566
      %v568 = vadd.f32 %v564, %v567
      %vm569 = vweird.f32 %v564
      %v570 = vsel %vm569, %v564, %v568
      %v571 = vmul.f32 %v563, %v570
      %v572 = vsub.f32 %v557, %v571
      %v573 = vmul.f32 %v572, %v572
      %v574 = vsel %vm560, %v573, 0.0
      %575 = vadd.xlane.f32.xlu0 %v574
      %v576 = vpop.xlane.xlu0 %575
      %v577 = vrcp.pop 31.0
      %v578 = vmul.f32 31.0, %v577
      %v579 = vsub.f32 1.0, %v578
      %v580 = vmul.f32 %v577, %v579
      %v581 = vadd.f32 %v577, %v580
      %vm582 = vweird.f32 %v577
      %v583 = vsel %vm582, %v577, %v581
      %v584 = vmul.f32 %v576, %v583
      %v586 = vperm.slane %v558, 0
      %v588 = vmul.f32 %v586, %v572
      %v589 = vrsqrt.pop %v584
      %v590 = vmul.f32 %v589, %v584
      %v591 = vmul.f32 %v590, %v589
      %v592 = vmul.f32 0.5, %v591
      %v593 = vsub.f32 1.5, %v592
      %v594 = vmul.f32 %v589, %v593
      %v595 = vmul.f32 %v584, %v594
      %vm596 = vcmp.eq.f32.partialorder %v584, inf
      %v597 = vsel %vm596, %v584, %v595
      %vm598 = vcmp.eq.f32.partialorder %v584, 0.0
      %v599 = vand.u32 %v584, 2147483648
      %v600 = vsel %vm598, %v599, %v597
      %v601 = vadd.f32 %v600, 1e-06
      %v602 = vrcp.pop %v601
      %v603 = vmul.f32 %v601, %v602
      %v604 = vsub.f32 1.0, %v603
      %v605 = vmul.f32 %v602, %v604
      %v606 = vadd.f32 %v602, %v605
      %vm607 = vweird.f32 %v601
      %vm608 = vweird.f32 %v602
      %vm609 = vmor %vm607, %vm608
      %v610 = vsel %vm609, %v602, %v606
      %v611 = vand.u32 2147483647, %v601
      %vm612 = vcmp.eq.f32.partialorder %v611, 8.507059e+37
      %v613 = vand.u32 %v601, 2147483648
      %v614 = vor.u32 1.1754944e-38, %v613
      %v615 = vsel %vm612, %v614, %v610
      %v616 = vmul.f32 %v588, %v615
      %v618 = vperm.slane %v559, 0
      %v620 = vadd.f32 %v616, %v618
      %621 = vst.msk [vmem:[%s260] sm:$0xf] %vm560, %v620
      %p622 = scmp.lt.s32.totalorder %s17, 1
      %s623 = scalar_select %p622, %s17, 1
      %s624 = smul.addr %s623, 4
      %s625 = scalar_lea.vmem %s6, %s624
      // Predicated region
      $region45: #{gat_encoder_forward.13} parent=43 // pred_check
        %p626 = pneg %p171
      $region46: #{gat_encoder_forward.13} parent=43 // pred_check_branch
        %628 = sbr.rel (%p626) target = $region48
      $region47: #{gat_encoder_forward.13} parent=43 // pred_region
        _
      $region48: #{gat_encoder_forward.13} parent=43 // pred_fallthru
        _
    $region44: #{gat_encoder_forward.13} parent=5 // pred_fallthru
      _
    %p629 = scmp.le.s32.totalorder 2, %s12
    // Predicated region
    $region49: #{gat_encoder_forward.13} parent=5 // pred_check
      %p630 = pneg %p629
    $region50: #{gat_encoder_forward.13} parent=5 // pred_check_branch
      %632 = sbr.rel (%p630) target = $region52
    $region51: #{gat_encoder_forward.13} parent=5 // pred_region
      %s633 = ssub.s32 %s12, 2
      // Predicated region
      $region53: #{gat_encoder_forward.13} parent=51 // pred_check
        %p634 = pneg %p177
      $region54: #{gat_encoder_forward.13} parent=51 // pred_check_branch
        %636 = sbr.rel (%p634) target = $region56
      $region55: #{gat_encoder_forward.13} parent=51 // pred_region
        %p637 = scmp.lt.s32.totalorder %s18, 1
        %s638 = scalar_select %p637, %s18, 1
        %s639 = smul.addr %s638, 4
        %s640 = scalar_lea.vmem %s6, %s639
      $region56: #{gat_encoder_forward.13} parent=51 // pred_fallthru
        _
    $region52: #{gat_encoder_forward.13} parent=5 // pred_fallthru
      _
  $region6: #{gat_encoder_forward.13} parent=0 // loop_footer
    %s16 = sadd.s32 1, %s12
  $region7: #{gat_encoder_forward.13} parent=0 // loop_footer_branch
    %11 = sbr.rel target = $region3
  $region8: #{gat_encoder_forward.13} parent=0 // loop_exit
    _

// kernel: gat_encoder_forward.12
$region0: #{gat_encoder_forward.12}
  #allocation0 [shape = 'u32[]', space=smem, size = 0x4, offset = 0x4, fixed_abs, tag = 'smem constant byte address 0x4 - core index']
  #allocation1 [shape = 'u32[72,128]{1,0:T(1,128)}', space=vmem, size = 0x9000, scoped, tag = 'internal scratch']
  %s0 = inlined_call_operand.vmem [shape: f32[2,8,32], index: 0, kind: input, shape index: {}]
  %s1 = inlined_call_operand.vmem [shape: bf16[32,96], index: 1, kind: input, shape index: {}]
  %s2 = inlined_call_operand.vmem [shape: f32[1,96], index: 2, kind: input, shape index: {}]
  %s3 = inlined_call_operand.vmem [shape: f32[2,1,8], index: 3, kind: input, shape index: {}]
  %s4 = inlined_call_operand.vmem [shape: bf16[32,32], index: 4, kind: input, shape index: {}]
  %s5 = inlined_call_operand.vmem [shape: f32[1,32], index: 5, kind: input, shape index: {}]
  %s6 = inlined_call_operand.vmem [shape: f32[1,32], index: 6, kind: input, shape index: {}]
  %s7 = inlined_call_operand.vmem [shape: f32[1,32], index: 7, kind: input, shape index: {}]
  %s8 = inlined_call_operand.vmem [shape: f32[2,8,32], index: 8, kind: output, shape index: {}]
  %s9 = sld [smem:[#allocation0]]
  $region65: #{gat_encoder_forward.12} parent=0
    _
  %s11 = ssub.s32 1, %s9
  %s12 = scalar_select 0, %s11, %s9
  loop: start=0, step=1, limit=4
  $region2: #{gat_encoder_forward.12} parent=0 // loop_pre_header
    _
  $region3: #{gat_encoder_forward.12} parent=0 // loop_header
    %s14 = sphi 0, %s18
    %p15 = scmp.ge.s32.totalorder %s14, 4
    %s24 = sphi 0, %s26
    %s27 = sphi 0, %s24
    %s28 = sphi 0, %s27
    %s44 = sphi 0, %s28
    %s48 = sphi 0, %s48
    %s50 = sphi 0, %s48
    %s51 = sphi 0, %s50
    %s65 = sphi 0, %s51
    %s69 = sphi 0, %s69
    %s71 = sphi 0, %s69
    %s72 = sphi 0, %s71
    %s86 = sphi 0, %s72
    %s92 = sphi 0, %s94
    %s95 = sphi 0, %s92
    %s96 = sphi 0, %s95
    %s112 = sphi 0, %s96
    %s116 = sphi 0, %s116
    %s118 = sphi 0, %s116
    %s119 = sphi 0, %s118
    %s133 = sphi 0, %s119
    %s137 = sphi 0, %s137
    %s139 = sphi 0, %s137
    %s140 = sphi 0, %s139
    %s154 = sphi 0, %s140
    %s158 = sphi 0, %s158
    %s160 = sphi 0, %s158
    %s161 = sphi 0, %s160
    %s175 = sphi 0, %s161
    %s179 = sphi 0, %s179
    %s181 = sphi 0, %s179
    %s182 = sphi 0, %s181
    %s196 = sphi 0, %s182
    %s202 = sphi 0, %s204
    %s205 = sphi 0, %s202
    %s206 = sphi 0, %s205
    %s222 = sphi 0, %s206
  $region4: #{gat_encoder_forward.12} parent=0 // loop_header_branch
    %17 = sbr.rel (%p15) target = $region8
  $region5: #{gat_encoder_forward.12} parent=0 // loop_body
    %s19 = ssub.s32 %s14, 1
    %s20 = ssub.s32 %s14, 2
    %s21 = sadd.s32 %s14, 1
    %s22 = ssub.s32 %s14, %s21
    %p23 = scmp.eq.s32.totalorder %s22, 0
    %s25 = sadd.s32 %s24, 1
    %s26 = scalar_select %p23, %s24, %s25
    %p29 = pneg %p23
    %p30 = scmp.eq.s32.totalorder %s14, 1
    %p31 = por %p29, %p30
    %p32 = scmp.ne.s32.totalorder %s24, %s27
    %p33 = scmp.eq.s32.totalorder %s14, 0
    %p34 = por %p32, %p33
    %p35 = scmp.ne.s32.totalorder %s24, %s27
    %p36 = scmp.eq.s32.totalorder %s19, 1
    %p37 = por %p35, %p36
    %p38 = scmp.ne.s32.totalorder %s27, %s28
    %p39 = scmp.eq.s32.totalorder %s19, 0
    %p40 = por %p38, %p39
    %p41 = scmp.ne.s32.totalorder %s27, %s28
    %p42 = scmp.eq.s32.totalorder %s20, 1
    %p43 = por %p41, %p42
    %p45 = scmp.ne.s32.totalorder %s28, %s44
    %p46 = scmp.eq.s32.totalorder %s20, 0
    %p47 = por %p45, %p46
    %s49 = sadd.s32 %s48, 1
    %p52 = scmp.eq.s32.totalorder %s14, 1
    %p53 = scmp.ne.s32.totalorder %s48, %s50
    %p54 = scmp.eq.s32.totalorder %s14, 0
    %p55 = por %p53, %p54
    %p56 = scmp.ne.s32.totalorder %s48, %s50
    %p57 = scmp.eq.s32.totalorder %s19, 1
    %p58 = por %p56, %p57
    %p59 = scmp.ne.s32.totalorder %s50, %s51
    %p60 = scmp.eq.s32.totalorder %s19, 0
    %p61 = por %p59, %p60
    %p62 = scmp.ne.s32.totalorder %s50, %s51
    %p63 = scmp.eq.s32.totalorder %s20, 1
    %p64 = por %p62, %p63
    %p66 = scmp.ne.s32.totalorder %s51, %s65
    %p67 = scmp.eq.s32.totalorder %s20, 0
    %p68 = por %p66, %p67
    %s70 = sadd.s32 %s69, 1
    %p73 = scmp.eq.s32.totalorder %s14, 1
    %p74 = scmp.ne.s32.totalorder %s69, %s71
    %p75 = scmp.eq.s32.totalorder %s14, 0
    %p76 = por %p74, %p75
    %p77 = scmp.ne.s32.totalorder %s69, %s71
    %p78 = scmp.eq.s32.totalorder %s19, 1
    %p79 = por %p77, %p78
    %p80 = scmp.ne.s32.totalorder %s71, %s72
    %p81 = scmp.eq.s32.totalorder %s19, 0
    %p82 = por %p80, %p81
    %p83 = scmp.ne.s32.totalorder %s71, %s72
    %p84 = scmp.eq.s32.totalorder %s20, 1
    %p85 = por %p83, %p84
    %p87 = scmp.ne.s32.totalorder %s72, %s86
    %p88 = scmp.eq.s32.totalorder %s20, 0
    %p89 = por %p87, %p88
    %s90 = ssub.s32 %s14, %s21
    %p91 = scmp.eq.s32.totalorder %s90, 0
    %s93 = sadd.s32 %s92, 1
    %s94 = scalar_select %p91, %s92, %s93
    %p97 = pneg %p91
    %p98 = scmp.eq.s32.totalorder %s14, 1
    %p99 = por %p97, %p98
    %p100 = scmp.ne.s32.totalorder %s92, %s95
    %p101 = scmp.eq.s32.totalorder %s14, 0
    %p102 = por %p100, %p101
    %p103 = scmp.ne.s32.totalorder %s92, %s95
    %p104 = scmp.eq.s32.totalorder %s19, 1
    %p105 = por %p103, %p104
    %p106 = scmp.ne.s32.totalorder %s95, %s96
    %p107 = scmp.eq.s32.totalorder %s19, 0
    %p108 = por %p106, %p107
    %p109 = scmp.ne.s32.totalorder %s95, %s96
    %p110 = scmp.eq.s32.totalorder %s20, 1
    %p111 = por %p109, %p110
    %p113 = scmp.ne.s32.totalorder %s96, %s112
    %p114 = scmp.eq.s32.totalorder %s20, 0
    %p115 = por %p113, %p114
    %s117 = sadd.s32 %s116, 1
    %p120 = scmp.eq.s32.totalorder %s14, 1
    %p121 = scmp.ne.s32.totalorder %s116, %s118
    %p122 = scmp.eq.s32.totalorder %s14, 0
    %p123 = por %p121, %p122
    %p124 = scmp.ne.s32.totalorder %s116, %s118
    %p125 = scmp.eq.s32.totalorder %s19, 1
    %p126 = por %p124, %p125
    %p127 = scmp.ne.s32.totalorder %s118, %s119
    %p128 = scmp.eq.s32.totalorder %s19, 0
    %p129 = por %p127, %p128
    %p130 = scmp.ne.s32.totalorder %s118, %s119
    %p131 = scmp.eq.s32.totalorder %s20, 1
    %p132 = por %p130, %p131
    %p134 = scmp.ne.s32.totalorder %s119, %s133
    %p135 = scmp.eq.s32.totalorder %s20, 0
    %p136 = por %p134, %p135
    %s138 = sadd.s32 %s137, 1
    %p141 = scmp.eq.s32.totalorder %s14, 1
    %p142 = scmp.ne.s32.totalorder %s137, %s139
    %p143 = scmp.eq.s32.totalorder %s14, 0
    %p144 = por %p142, %p143
    %p145 = scmp.ne.s32.totalorder %s137, %s139
    %p146 = scmp.eq.s32.totalorder %s19, 1
    %p147 = por %p145, %p146
    %p148 = scmp.ne.s32.totalorder %s139, %s140
    %p149 = scmp.eq.s32.totalorder %s19, 0
    %p150 = por %p148, %p149
    %p151 = scmp.ne.s32.totalorder %s139, %s140
    %p152 = scmp.eq.s32.totalorder %s20, 1
    %p153 = por %p151, %p152
    %p155 = scmp.ne.s32.totalorder %s140, %s154
    %p156 = scmp.eq.s32.totalorder %s20, 0
    %p157 = por %p155, %p156
    %s159 = sadd.s32 %s158, 1
    %p162 = scmp.eq.s32.totalorder %s14, 1
    %p163 = scmp.ne.s32.totalorder %s158, %s160
    %p164 = scmp.eq.s32.totalorder %s14, 0
    %p165 = por %p163, %p164
    %p166 = scmp.ne.s32.totalorder %s158, %s160
    %p167 = scmp.eq.s32.totalorder %s19, 1
    %p168 = por %p166, %p167
    %p169 = scmp.ne.s32.totalorder %s160, %s161
    %p170 = scmp.eq.s32.totalorder %s19, 0
    %p171 = por %p169, %p170
    %p172 = scmp.ne.s32.totalorder %s160, %s161
    %p173 = scmp.eq.s32.totalorder %s20, 1
    %p174 = por %p172, %p173
    %p176 = scmp.ne.s32.totalorder %s161, %s175
    %p177 = scmp.eq.s32.totalorder %s20, 0
    %p178 = por %p176, %p177
    %s180 = sadd.s32 %s179, 1
    %p183 = scmp.eq.s32.totalorder %s14, 1
    %p184 = scmp.ne.s32.totalorder %s179, %s181
    %p185 = scmp.eq.s32.totalorder %s14, 0
    %p186 = por %p184, %p185
    %p187 = scmp.ne.s32.totalorder %s179, %s181
    %p188 = scmp.eq.s32.totalorder %s19, 1
    %p189 = por %p187, %p188
    %p190 = scmp.ne.s32.totalorder %s181, %s182
    %p191 = scmp.eq.s32.totalorder %s19, 0
    %p192 = por %p190, %p191
    %p193 = scmp.ne.s32.totalorder %s181, %s182
    %p194 = scmp.eq.s32.totalorder %s20, 1
    %p195 = por %p193, %p194
    %p197 = scmp.ne.s32.totalorder %s182, %s196
    %p198 = scmp.eq.s32.totalorder %s20, 0
    %p199 = por %p197, %p198
    %s200 = ssub.s32 %s14, %s21
    %p201 = scmp.eq.s32.totalorder %s200, 0
    %s203 = sadd.s32 %s202, 1
    %s204 = scalar_select %p201, %s202, %s203
    %p207 = pneg %p201
    %p208 = scmp.eq.s32.totalorder %s14, 1
    %p209 = por %p207, %p208
    %p210 = scmp.ne.s32.totalorder %s202, %s205
    %p211 = scmp.eq.s32.totalorder %s14, 0
    %p212 = por %p210, %p211
    %p213 = scmp.ne.s32.totalorder %s202, %s205
    %p214 = scmp.eq.s32.totalorder %s19, 1
    %p215 = por %p213, %p214
    %p216 = scmp.ne.s32.totalorder %s205, %s206
    %p217 = scmp.eq.s32.totalorder %s19, 0
    %p218 = por %p216, %p217
    %p219 = scmp.ne.s32.totalorder %s205, %s206
    %p220 = scmp.eq.s32.totalorder %s20, 1
    %p221 = por %p219, %p220
    %p223 = scmp.ne.s32.totalorder %s206, %s222
    %p224 = scmp.eq.s32.totalorder %s20, 0
    %p225 = por %p223, %p224
    %p226 = scmp.le.s32.totalorder 1, %s14
    %p227 = scmp.lt.s32.totalorder %s14, 3
    %p228 = pnand %p226, %p227
    %p229 = pneg %p228
    // Predicated region
    $region9: #{gat_encoder_forward.12} parent=5 // pred_check
      _
    $region10: #{gat_encoder_forward.12} parent=5 // pred_check_branch
      %231 = sbr.rel (%p228) target = $region12
    $region11: #{gat_encoder_forward.12} parent=5 // pred_region
      %s232 = ssub.s32 %s14, 1
      // Predicated region
      $region13: #{gat_encoder_forward.12} parent=11 // pred_check
        %p233 = pneg %p61
      $region14: #{gat_encoder_forward.12} parent=11 // pred_check_branch
        %235 = sbr.rel (%p233) target = $region16
      $region15: #{gat_encoder_forward.12} parent=11 // pred_region
        _
      $region16: #{gat_encoder_forward.12} parent=11 // pred_fallthru
        _
      // Predicated region
      $region17: #{gat_encoder_forward.12} parent=11 // pred_check
        %p236 = pneg %p82
      $region18: #{gat_encoder_forward.12} parent=11 // pred_check_branch
        %238 = sbr.rel (%p236) target = $region20
      $region19: #{gat_encoder_forward.12} parent=11 // pred_region
        _
      $region20: #{gat_encoder_forward.12} parent=11 // pred_fallthru
        _
      // Predicated region
      $region21: #{gat_encoder_forward.12} parent=11 // pred_check
        %p239 = pneg %p129
      $region22: #{gat_encoder_forward.12} parent=11 // pred_check_branch
        %241 = sbr.rel (%p239) target = $region24
      $region23: #{gat_encoder_forward.12} parent=11 // pred_region
        _
      $region24: #{gat_encoder_forward.12} parent=11 // pred_fallthru
        _
      // Predicated region
      $region25: #{gat_encoder_forward.12} parent=11 // pred_check
        %p242 = pneg %p150
      $region26: #{gat_encoder_forward.12} parent=11 // pred_check_branch
        %244 = sbr.rel (%p242) target = $region28
      $region27: #{gat_encoder_forward.12} parent=11 // pred_region
        _
      $region28: #{gat_encoder_forward.12} parent=11 // pred_fallthru
        _
      // Predicated region
      $region29: #{gat_encoder_forward.12} parent=11 // pred_check
        %p245 = pneg %p171
      $region30: #{gat_encoder_forward.12} parent=11 // pred_check_branch
        %247 = sbr.rel (%p245) target = $region32
      $region31: #{gat_encoder_forward.12} parent=11 // pred_region
        _
      $region32: #{gat_encoder_forward.12} parent=11 // pred_fallthru
        _
      // Predicated region
      $region33: #{gat_encoder_forward.12} parent=11 // pred_check
        %p248 = pneg %p192
      $region34: #{gat_encoder_forward.12} parent=11 // pred_check_branch
        %250 = sbr.rel (%p248) target = $region36
      $region35: #{gat_encoder_forward.12} parent=11 // pred_region
        _
      $region36: #{gat_encoder_forward.12} parent=11 // pred_fallthru
        _
    $region12: #{gat_encoder_forward.12} parent=5 // pred_fallthru
      _
    %p251 = scmp.lt.s32.totalorder %s14, 2
    // Predicated region
    $region37: #{gat_encoder_forward.12} parent=5 // pred_check
      %p252 = pneg %p251
    $region38: #{gat_encoder_forward.12} parent=5 // pred_check_branch
      %254 = sbr.rel (%p252) target = $region40
    $region39: #{gat_encoder_forward.12} parent=5 // pred_region
      // Predicated region
      $region41: #{gat_encoder_forward.12} parent=39 // pred_check
        %p255 = pneg %p34
      $region42: #{gat_encoder_forward.12} parent=39 // pred_check_branch
        %257 = sbr.rel (%p255) target = $region44
      $region43: #{gat_encoder_forward.12} parent=39 // pred_region
        %p258 = scmp.lt.s32.totalorder %s14, 1
        %s259 = scalar_select %p258, %s14, 1
        %s260 = smul.addr %s259, 8
        %s261 = scalar_lea.vmem %s0, %s260
      $region44: #{gat_encoder_forward.12} parent=39 // pred_fallthru
        _
      // Predicated region
      $region45: #{gat_encoder_forward.12} parent=39 // pred_check
        %p262 = pneg %p102
      $region46: #{gat_encoder_forward.12} parent=39 // pred_check_branch
        %264 = sbr.rel (%p262) target = $region48
      $region47: #{gat_encoder_forward.12} parent=39 // pred_region
        %p265 = scmp.lt.s32.totalorder %s14, 1
        %s266 = scalar_select %p265, %s14, 1
        %s267 = scalar_lea.vmem %s3, %s266
      $region48: #{gat_encoder_forward.12} parent=39 // pred_fallthru
        _
    $region40: #{gat_encoder_forward.12} parent=5 // pred_fallthru
      _
    %p268 = scmp.le.s32.totalorder 1, %s14
    %p269 = scmp.lt.s32.totalorder %s14, 3
    %p270 = pnand %p268, %p269
    %p271 = pneg %p270
    // Predicated region
    $region49: #{gat_encoder_forward.12} parent=5 // pred_check
      _
    $region50: #{gat_encoder_forward.12} parent=5 // pred_check_branch
      %273 = sbr.rel (%p270) target = $region52
    $region51: #{gat_encoder_forward.12} parent=5 // pred_region
      %s274 = ssub.s32 %s14, 1
      %p275 = scmp.lt.s32.totalorder %s19, 1
      %s276 = scalar_select %p275, %s19, 1
      %s277 = smul.addr %s276, 8
      %s278 = scalar_lea.vmem %s0, %s277
      %p279 = pneg %p40
      %p280 = pneg %p37
      %p281 = pneg %p61
      %p282 = pneg %p58
      %p283 = pneg %p82
      %p284 = pneg %p79
      %p285 = scmp.lt.s32.totalorder %s19, 1
      %s286 = scalar_select %p285, %s19, 1
      %s287 = scalar_lea.vmem %s3, %s286
      %p288 = pneg %p108
      %p289 = pneg %p105
      %p290 = pneg %p129
      %p291 = pneg %p126
      %p292 = pneg %p150
      %p293 = pneg %p147
      %p294 = pneg %p171
      %p295 = pneg %p168
      %p296 = pneg %p192
      %p297 = pneg %p189
      %p298 = pneg %p218
      %p299 = pneg %p215
      %p300 = scmp.lt.s32.totalorder %s19, 1
      %s301 = scalar_select %p300, %s19, 1
      %s302 = smul.addr %s301, 8
      %s303 = scalar_lea.vmem %s8, %s302
      %p304 = scmp.lt.s32.totalorder %s19, 1
      %s305 = scalar_select %p304, %s19, 1
      %s306 = smul.addr %s305, 8
      %s307 = scalar_lea.vmem %s0, %s306
      %p308 = scmp.lt.s32.totalorder %s19, 1
      %s309 = scalar_select %p308, %s19, 1
      %s310 = scalar_lea.vmem %s3, %s309
      %p311 = scmp.lt.s32.totalorder %s19, 1
      %s312 = scalar_select %p311, %s19, 1
      %s313 = smul.addr %s312, 8
      %s314 = scalar_lea.vmem %s8, %s313
      %v316 = vld [vmem:[%s307] sm:$0xff]
      %v317 = vpack.c.bf16 %v316, %v316
      %v318 = vld [vmem:[%s1] sm:$0xf]
      %v319 = vld [vmem:[%s1 + $0x4] sm:$0xf]
      %v320 = vld [vmem:[%s1 + $0x8] sm:$0xf]
      %v321 = vld [vmem:[%s1 + $0xc] sm:$0xf]
      %v322 = vld [vmem:[%s2] sm:$0x1]
      %v324 = vperm.slane %v322, 0
      %v330 = vunpack.c.l.b16 %v318
      %v331 = vunpack.c.l.b16 %v319
      %v332 = vunpack.c.l.b16 %v320
      %v333 = vunpack.c.l.b16 %v321
      %v334 = vpack.c.b16 %v331, %v330
      %v335 = vpack.c.b16 %v333, %v332
      %vm338 = vcmask 261120
      %v340 = vsel %vm338, %v317, 0
      %342 = vmatpush.bf16.msra.mxu0 0
      %343 = vmatpush.bf16.msra.mxu0 0
      %344 = vmatpush.bf16.msra.mxu0 0
      %345 = vmatpush.bf16.msra.mxu0 0
      %346 = vmatpush.bf16.msra.mxu0 0
      %347 = vmatpush.bf16.msra.mxu0 0
      %348 = vmatpush.bf16.msra.mxu0 %v335
      %349 = vmatpush.bf16.msra.mxu0 %v334
      %350 = vmatmul.bf16.gmra.mxu0 %v340
      %v351 = vpop.f32.mrf.mxu0
      %v352 = vadd.f32 %v324, %v351
      %v353 = vpop.f32.mrf.mxu0
      %354 = vdwg.mxu0
      %v355 = vld [vmem:[%s310] sm:$0x1]
      %v356 = vpack.c.bf16 %v352, %v352
      %358 = vrot.lane.b32.xlu0 %v356, 96
      %v359 = vpop.permute.xlu0 %358
      %vm360 = vcmask 64512
      %v362 = vsel %vm360, %v356, 0
      %v365 = vsel %vm360, %v359, 0
      %367 = vmatpush.bf16.xpose.msra.mxu0 0
      %368 = vmatpush.bf16.xpose.msra.mxu0 0
      %369 = vmatpush.bf16.xpose.msra.mxu0 0
      %370 = vmatpush.bf16.xpose.msra.mxu0 0
      %371 = vmatpush.bf16.xpose.msra.mxu0 0
      %372 = vmatpush.bf16.xpose.msra.mxu0 0
      %373 = vmatpush.bf16.xpose.msra.mxu0 0
      %374 = vmatpush.bf16.xpose.msra.mxu0 %v365
      %375 = vmatmul.bf16.gmra.mxu0 %v362
      %v376 = vpop.f32.mrf.mxu0
      %v377 = vadd.f32 0.0, %v376
      %v378 = vpop.f32.mrf.mxu0
      %379 = vdwg.mxu0
      %v380 = vmul.f32 %v377, 0.35355338
      %vm381 = vcmp.eq.f32.partialorder %v355, 0.0
      %v382 = vsel %vm381, 1, 0
      %v383 = vperm.slane %v382, 0
      %vm384 = vcmp.eq.s32.totalorder %v383, 1
      %v385 = vsel %vm384, -1e+09, %v380
      %v386 = vsel %vm360, %v385, -inf
      %387 = vmax.xlane.f32.xlu0 %v386
      %v388 = vpop.xlane.xlu0 %387
      %v389 = vsub.f32 %v385, %v388
      %v390 = vmul.f32 %v389, 1.442695
      %v391 = vpow.pop %v390
      %v392 = vsel %vm360, %v391, 0.0
      %393 = vadd.xlane.f32.xlu0 %v392
      %v394 = vpop.xlane.xlu0 %393
      %v395 = vrcp.pop %v394
      %v396 = vmul.f32 %v391, %v395
      %v397 = vpack.c.bf16 %v396, %v396
      %398 = vrot.lane.b32.xlu0 %v356, 64
      %v399 = vpop.permute.xlu0 %398
      %v401 = vsel %vm360, %v397, 0
      %vm403 = vcmask 1043456
      %v405 = vsel %vm403, %v399, 0
      %407 = vmatpush.bf16.msra.mxu0 0
      %408 = vmatpush.bf16.msra.mxu0 0
      %409 = vmatpush.bf16.msra.mxu0 0
      %410 = vmatpush.bf16.msra.mxu0 0
      %411 = vmatpush.bf16.msra.mxu0 0
      %412 = vmatpush.bf16.msra.mxu0 0
      %413 = vmatpush.bf16.msra.mxu0 0
      %414 = vmatpush.bf16.msra.mxu0 %v405
      %415 = vmatmul.bf16.gmra.mxu0 %v401
      %v416 = vpop.f32.mrf.mxu0
      %v417 = vadd.f32 0.0, %v416
      %v418 = vpop.f32.mrf.mxu0
      %419 = vdwg.mxu0
      %420 = vrot.lane.b32.xlu0 %v356, 120
      %v421 = vpop.permute.xlu0 %420
      %422 = vrot.lane.b32.xlu0 %v356, 88
      %v423 = vpop.permute.xlu0 %422
      %v425 = vsel %vm360, %v421, 0
      %v428 = vsel %vm360, %v423, 0
      %430 = vmatpush.bf16.xpose.msra.mxu0 0
      %431 = vmatpush.bf16.xpose.msra.mxu0 0
      %432 = vmatpush.bf16.xpose.msra.mxu0 0
      %433 = vmatpush.bf16.xpose.msra.mxu0 0
      %434 = vmatpush.bf16.xpose.msra.mxu0 0
      %435 = vmatpush.bf16.xpose.msra.mxu0 0
      %436 = vmatpush.bf16.xpose.msra.mxu0 0
      %437 = vmatpush.bf16.xpose.msra.mxu0 %v428
      %438 = vmatmul.bf16.gmra.mxu0 %v425
      %v439 = vpop.f32.mrf.mxu0
      %v440 = vadd.f32 0.0, %v439
      %v441 = vpop.f32.mrf.mxu0
      %442 = vdwg.mxu0
      %v443 = vmul.f32 %v440, 0.35355338
      %v444 = vsel %vm384, -1e+09, %v443
      %v445 = vsel %vm360, %v444, -inf
      %446 = vmax.xlane.f32.xlu0 %v445
      %v447 = vpop.xlane.xlu0 %446
      %v448 = vsub.f32 %v444, %v447
      %v449 = vmul.f32 %v448, 1.442695
      %v450 = vpow.pop %v449
      %v451 = vsel %vm360, %v450, 0.0
      %452 = vadd.xlane.f32.xlu0 %v451
      %v453 = vpop.xlane.xlu0 %452
      %v454 = vrcp.pop %v453
      %v455 = vmul.f32 %v450, %v454
      %v456 = vpack.c.bf16 %v455, %v455
      %457 = vrot.lane.b32.xlu0 %v356, 56
      %v458 = vpop.permute.xlu0 %457
      %v460 = vsel %vm360, %v456, 0
      %v463 = vsel %vm403, %v458, 0
      %465 = vmatpush.bf16.msra.mxu0 0
      %466 = vmatpush.bf16.msra.mxu0 0
      %467 = vmatpush.bf16.msra.mxu0 0
      %468 = vmatpush.bf16.msra.mxu0 0
      %469 = vmatpush.bf16.msra.mxu0 0
      %470 = vmatpush.bf16.msra.mxu0 0
      %471 = vmatpush.bf16.msra.mxu0 0
      %472 = vmatpush.bf16.msra.mxu0 %v463
      %473 = vmatmul.bf16.gmra.mxu0 %v460
      %v474 = vpop.f32.mrf.mxu0
      %v475 = vadd.f32 0.0, %v474
      %v476 = vpop.f32.mrf.mxu0
      %477 = vdwg.mxu0
      %478 = vrot.lane.b32.xlu0 %v356, 112
      %v479 = vpop.permute.xlu0 %478
      %480 = vrot.lane.b32.xlu0 %v356, 80
      %v481 = vpop.permute.xlu0 %480
      %v483 = vsel %vm360, %v479, 0
      %v486 = vsel %vm360, %v481, 0
      %488 = vmatpush.bf16.xpose.msra.mxu0 0
      %489 = vmatpush.bf16.xpose.msra.mxu0 0
      %490 = vmatpush.bf16.xpose.msra.mxu0 0
      %491 = vmatpush.bf16.xpose.msra.mxu0 0
      %492 = vmatpush.bf16.xpose.msra.mxu0 0
      %493 = vmatpush.bf16.xpose.msra.mxu0 0
      %494 = vmatpush.bf16.xpose.msra.mxu0 0
      %495 = vmatpush.bf16.xpose.msra.mxu0 %v486
      %496 = vmatmul.bf16.gmra.mxu0 %v483
      %v497 = vpop.f32.mrf.mxu0
      %v498 = vadd.f32 0.0, %v497
      %v499 = vpop.f32.mrf.mxu0
      %500 = vdwg.mxu0
      %v501 = vmul.f32 %v498, 0.35355338
      %v502 = vsel %vm384, -1e+09, %v501
      %v503 = vsel %vm360, %v502, -inf
      %504 = vmax.xlane.f32.xlu0 %v503
      %v505 = vpop.xlane.xlu0 %504
      %v506 = vsub.f32 %v502, %v505
      %v507 = vmul.f32 %v506, 1.442695
      %v508 = vpow.pop %v507
      %v509 = vsel %vm360, %v508, 0.0
      %510 = vadd.xlane.f32.xlu0 %v509
      %v511 = vpop.xlane.xlu0 %510
      %v512 = vrcp.pop %v511
      %v513 = vmul.f32 %v508, %v512
      %v514 = vpack.c.bf16 %v513, %v513
      %515 = vrot.lane.b32.xlu0 %v356, 48
      %v516 = vpop.permute.xlu0 %515
      %v518 = vsel %vm360, %v514, 0
      %v521 = vsel %vm403, %v516, 0
      %523 = vmatpush.bf16.msra.mxu0 0
      %524 = vmatpush.bf16.msra.mxu0 0
      %525 = vmatpush.bf16.msra.mxu0 0
      %526 = vmatpush.bf16.msra.mxu0 0
      %527 = vmatpush.bf16.msra.mxu0 0
      %528 = vmatpush.bf16.msra.mxu0 0
      %529 = vmatpush.bf16.msra.mxu0 0
      %530 = vmatpush.bf16.msra.mxu0 %v521
      %531 = vmatmul.bf16.gmra.mxu0 %v518
      %v532 = vpop.f32.mrf.mxu0
      %v533 = vadd.f32 0.0, %v532
      %v534 = vpop.f32.mrf.mxu0
      %535 = vdwg.mxu0
      %536 = vrot.lane.b32.xlu0 %v356, 104
      %v537 = vpop.permute.xlu0 %536
      %538 = vrot.lane.b32.xlu0 %v356, 72
      %v539 = vpop.permute.xlu0 %538
      %v541 = vsel %vm360, %v537, 0
      %v544 = vsel %vm360, %v539, 0
      %546 = vmatpush.bf16.xpose.msra.mxu0 0
      %547 = vmatpush.bf16.xpose.msra.mxu0 0
      %548 = vmatpush.bf16.xpose.msra.mxu0 0
      %549 = vmatpush.bf16.xpose.msra.mxu0 0
      %550 = vmatpush.bf16.xpose.msra.mxu0 0
      %551 = vmatpush.bf16.xpose.msra.mxu0 0
      %552 = vmatpush.bf16.xpose.msra.mxu0 0
      %553 = vmatpush.bf16.xpose.msra.mxu0 %v544
      %554 = vmatmul.bf16.gmra.mxu0 %v541
      %v555 = vpop.f32.mrf.mxu0
      %v556 = vadd.f32 0.0, %v555
      %v557 = vpop.f32.mrf.mxu0
      %558 = vdwg.mxu0
      %v559 = vmul.f32 %v556, 0.35355338
      %v560 = vsel %vm384, -1e+09, %v559
      %v561 = vsel %vm360, %v560, -inf
      %562 = vmax.xlane.f32.xlu0 %v561
      %v563 = vpop.xlane.xlu0 %562
      %v564 = vsub.f32 %v560, %v563
      %v565 = vmul.f32 %v564, 1.442695
      %v566 = vpow.pop %v565
      %v567 = vsel %vm360, %v566, 0.0
      %568 = vadd.xlane.f32.xlu0 %v567
      %v569 = vpop.xlane.xlu0 %568
      %v570 = vrcp.pop %v569
      %v571 = vmul.f32 %v566, %v570
      %v572 = vpack.c.bf16 %v571, %v571
      %573 = vrot.lane.b32.xlu0 %v356, 40
      %v574 = vpop.permute.xlu0 %573
      %v576 = vsel %vm360, %v572, 0
      %v579 = vsel %vm403, %v574, 0
      %581 = vmatpush.bf16.msra.mxu0 0
      %582 = vmatpush.bf16.msra.mxu0 0
      %583 = vmatpush.bf16.msra.mxu0 0
      %584 = vmatpush.bf16.msra.mxu0 0
      %585 = vmatpush.bf16.msra.mxu0 0
      %586 = vmatpush.bf16.msra.mxu0 0
      %587 = vmatpush.bf16.msra.mxu0 0
      %588 = vmatpush.bf16.msra.mxu0 %v579
      %589 = vmatmul.bf16.gmra.mxu0 %v576
      %v590 = vpop.f32.mrf.mxu0
      %v591 = vadd.f32 0.0, %v590
      %v592 = vpop.f32.mrf.mxu0
      %593 = vdwg.mxu0
      %595 = vrot.lane.b32.xlu0 %v475, 8
      %v596 = vpop.permute.xlu0 %595
      %599 = vrot.lane.b32.xlu0 %v533, 16
      %v600 = vpop.permute.xlu0 %599
      %603 = vrot.lane.b32.xlu0 %v591, 24
      %v604 = vpop.permute.xlu0 %603
      %v606 = vsel %vm360, %v417, %v596
      %vm607 = vcmask 130048
      %v608 = vsel %vm607, %v606, %v600
      %vm609 = vcmask 195584
      %v610 = vsel %vm609, %v608, %v604
      %v611 = vpack.c.bf16 %v610, %v610
      %v612 = vld [vmem:[%s4] sm:$0xf]
      %v613 = vld [vmem:[%s4 + $0x4] sm:$0xf]
      %v614 = vld [vmem:[%s4 + $0x8] sm:$0xf]
      %v615 = vld [vmem:[%s4 + $0xc] sm:$0xf]
      %v616 = vld [vmem:[%s5] sm:$0x1]
      %v618 = vperm.slane %v616, 0
      %v624 = vunpack.c.l.b16 %v612
      %v625 = vunpack.c.l.b16 %v613
      %v626 = vunpack.c.l.b16 %v614
      %v627 = vunpack.c.l.b16 %v615
      %v628 = vpack.c.b16 %v625, %v624
      %v629 = vpack.c.b16 %v627, %v626
      %v633 = vsel %vm338, %v611, 0
      %635 = vmatpush.bf16.msra.mxu0 0
      %636 = vmatpush.bf16.msra.mxu0 0
      %637 = vmatpush.bf16.msra.mxu0 0
      %638 = vmatpush.bf16.msra.mxu0 0
      %639 = vmatpush.bf16.msra.mxu0 0
      %640 = vmatpush.bf16.msra.mxu0 0
      %641 = vmatpush.bf16.msra.mxu0 %v629
      %642 = vmatpush.bf16.msra.mxu0 %v628
      %643 = vmatmul.bf16.gmra.mxu0 %v633
      %v644 = vpop.f32.mrf.mxu0
      %v645 = vadd.f32 %v618, %v644
      %v646 = vpop.f32.mrf.mxu0
      %647 = vdwg.mxu0
      %v648 = vadd.f32 %v316, %v645
      %v649 = vld [vmem:[%s6] sm:$0x1]
      %v650 = vld [vmem:[%s7] sm:$0x1]
      %v651 = vsel %vm338, %v648, 0.0
      %652 = vadd.xlane.f32.xlu0 %v651
      %v653 = vpop.xlane.xlu0 %652
      %v654 = vrcp.pop 32.0
      %v655 = vmul.f32 32.0, %v654
      %v656 = vsub.f32 1.0, %v655
      %v657 = vmul.f32 %v654, %v656
      %v658 = vadd.f32 %v654, %v657
      %vm659 = vweird.f32 %v654
      %v660 = vsel %vm659, %v654, %v658
      %v661 = vmul.f32 %v653, %v660
      %v662 = vsub.f32 %v648, %v661
      %v663 = vmul.f32 %v662, %v662
      %v664 = vsel %vm338, %v663, 0.0
      %665 = vadd.xlane.f32.xlu0 %v664
      %v666 = vpop.xlane.xlu0 %665
      %v667 = vrcp.pop 31.0
      %v668 = vmul.f32 31.0, %v667
      %v669 = vsub.f32 1.0, %v668
      %v670 = vmul.f32 %v667, %v669
      %v671 = vadd.f32 %v667, %v670
      %vm672 = vweird.f32 %v667
      %v673 = vsel %vm672, %v667, %v671
      %v674 = vmul.f32 %v666, %v673
      %v676 = vperm.slane %v649, 0
      %v678 = vmul.f32 %v676, %v662
      %v679 = vrsqrt.pop %v674
      %v680 = vmul.f32 %v679, %v674
      %v681 = vmul.f32 %v680, %v679
      %v682 = vmul.f32 0.5, %v681
      %v683 = vsub.f32 1.5, %v682
      %v684 = vmul.f32 %v679, %v683
      %v685 = vmul.f32 %v674, %v684
      %vm686 = vcmp.eq.f32.partialorder %v674, inf
      %v687 = vsel %vm686, %v674, %v685
      %vm688 = vcmp.eq.f32.partialorder %v674, 0.0
      %v689 = vand.u32 %v674, 2147483648
      %v690 = vsel %vm688, %v689, %v687
      %v691 = vadd.f32 %v690, 1e-06
      %v692 = vrcp.pop %v691
      %v693 = vmul.f32 %v691, %v692
      %v694 = vsub.f32 1.0, %v693
      %v695 = vmul.f32 %v692, %v694
      %v696 = vadd.f32 %v692, %v695
      %vm697 = vweird.f32 %v691
      %vm698 = vweird.f32 %v692
      %vm699 = vmor %vm697, %vm698
      %v700 = vsel %vm699, %v692, %v696
      %v701 = vand.u32 2147483647, %v691
      %vm702 = vcmp.eq.f32.partialorder %v701, 8.507059e+37
      %v703 = vand.u32 %v691, 2147483648
      %v704 = vor.u32 1.1754944e-38, %v703
      %v705 = vsel %vm702, %v704, %v700
      %v706 = vmul.f32 %v678, %v705
      %v708 = vperm.slane %v650, 0
      %v710 = vadd.f32 %v706, %v708
      %711 = vst.msk [vmem:[%s314] sm:$0xff] %vm338, %v710
      %p712 = scmp.lt.s32.totalorder %s19, 1
      %s713 = scalar_select %p712, %s19, 1
      %s714 = smul.addr %s713, 8
      %s715 = scalar_lea.vmem %s8, %s714
      // Predicated region
      $region53: #{gat_encoder_forward.12} parent=51 // pred_check
        %p716 = pneg %p215
      $region54: #{gat_encoder_forward.12} parent=51 // pred_check_branch
        %718 = sbr.rel (%p716) target = $region56
      $region55: #{gat_encoder_forward.12} parent=51 // pred_region
        _
      $region56: #{gat_encoder_forward.12} parent=51 // pred_fallthru
        _
    $region52: #{gat_encoder_forward.12} parent=5 // pred_fallthru
      _
    %p719 = scmp.le.s32.totalorder 2, %s14
    // Predicated region
    $region57: #{gat_encoder_forward.12} parent=5 // pred_check
      %p720 = pneg %p719
    $region58: #{gat_encoder_forward.12} parent=5 // pred_check_branch
      %722 = sbr.rel (%p720) target = $region60
    $region59: #{gat_encoder_forward.12} parent=5 // pred_region
      %s723 = ssub.s32 %s14, 2
      // Predicated region
      $region61: #{gat_encoder_forward.12} parent=59 // pred_check
        %p724 = pneg %p221
      $region62: #{gat_encoder_forward.12} parent=59 // pred_check_branch
        %726 = sbr.rel (%p724) target = $region64
      $region63: #{gat_encoder_forward.12} parent=59 // pred_region
        %p727 = scmp.lt.s32.totalorder %s20, 1
        %s728 = scalar_select %p727, %s20, 1
        %s729 = smul.addr %s728, 8
        %s730 = scalar_lea.vmem %s8, %s729
      $region64: #{gat_encoder_forward.12} parent=59 // pred_fallthru
        _
    $region60: #{gat_encoder_forward.12} parent=5 // pred_fallthru
      _
  $region6: #{gat_encoder_forward.12} parent=0 // loop_footer
    %s18 = sadd.s32 1, %s14
  $region7: #{gat_encoder_forward.12} parent=0 // loop_footer_branch
    %13 = sbr.rel target = $region3
  $region8: #{gat_encoder_forward.12} parent=0 // loop_exit
    _

// kernel: gat_encoder_forward.14
$region0: #{gat_encoder_forward.14}
  #allocation0 [shape = 'u32[]', space=smem, size = 0x4, offset = 0x4, fixed_abs, tag = 'smem constant byte address 0x4 - core index']
  #allocation1 [shape = 'u32[72,128]{1,0:T(1,128)}', space=vmem, size = 0x9000, scoped, tag = 'internal scratch']
  %s0 = inlined_call_operand.vmem [shape: f32[2,8,32], index: 0, kind: input, shape index: {}]
  %s1 = inlined_call_operand.vmem [shape: f32[2,4,32], index: 1, kind: input, shape index: {}]
  %s2 = inlined_call_operand.vmem [shape: bf16[32,64], index: 2, kind: input, shape index: {}]
  %s3 = inlined_call_operand.vmem [shape: f32[1,64], index: 3, kind: input, shape index: {}]
  %s4 = inlined_call_operand.vmem [shape: bf16[32,64], index: 4, kind: input, shape index: {}]
  %s5 = inlined_call_operand.vmem [shape: f32[1,64], index: 5, kind: input, shape index: {}]
  %s6 = inlined_call_operand.vmem [shape: f32[2,8,4], index: 6, kind: input, shape index: {}]
  %s7 = inlined_call_operand.vmem [shape: f32[1,32], index: 7, kind: input, shape index: {}]
  %s8 = inlined_call_operand.vmem [shape: f32[1,32], index: 8, kind: input, shape index: {}]
  %s9 = inlined_call_operand.vmem [shape: f32[1,32], index: 9, kind: input, shape index: {}]
  %s10 = inlined_call_operand.vmem [shape: f32[1,32], index: 10, kind: input, shape index: {}]
  %s11 = inlined_call_operand.vmem [shape: f32[2,8,32], index: 11, kind: output, shape index: {0}]
  %s12 = inlined_call_operand.vmem [shape: f32[2,4,32], index: 12, kind: output, shape index: {1}]
  %13 = xla_tuple %s11, %s12
  %s14 = sld [smem:[#allocation0]]
  $region85: #{gat_encoder_forward.14} parent=0
    _
  %s16 = ssub.s32 1, %s14
  %s17 = scalar_select 0, %s16, %s14
  loop: start=0, step=1, limit=4
  $region2: #{gat_encoder_forward.14} parent=0 // loop_pre_header
    _
  $region3: #{gat_encoder_forward.14} parent=0 // loop_header
    %s19 = sphi 0, %s23
    %p20 = scmp.ge.s32.totalorder %s19, 4
    %s29 = sphi 0, %s31
    %s32 = sphi 0, %s29
    %s33 = sphi 0, %s32
    %s49 = sphi 0, %s33
    %s55 = sphi 0, %s57
    %s58 = sphi 0, %s55
    %s59 = sphi 0, %s58
    %s75 = sphi 0, %s59
    %s79 = sphi 0, %s79
    %s81 = sphi 0, %s79
    %s82 = sphi 0, %s81
    %s96 = sphi 0, %s82
    %s100 = sphi 0, %s100
    %s102 = sphi 0, %s100
    %s103 = sphi 0, %s102
    %s117 = sphi 0, %s103
    %s121 = sphi 0, %s121
    %s123 = sphi 0, %s121
    %s124 = sphi 0, %s123
    %s138 = sphi 0, %s124
    %s142 = sphi 0, %s142
    %s144 = sphi 0, %s142
    %s145 = sphi 0, %s144
    %s159 = sphi 0, %s145
    %s165 = sphi 0, %s167
    %s168 = sphi 0, %s165
    %s169 = sphi 0, %s168
    %s185 = sphi 0, %s169
    %s189 = sphi 0, %s189
    %s191 = sphi 0, %s189
    %s192 = sphi 0, %s191
    %s206 = sphi 0, %s192
    %s210 = sphi 0, %s210
    %s212 = sphi 0, %s210
    %s213 = sphi 0, %s212
    %s227 = sphi 0, %s213
    %s231 = sphi 0, %s231
    %s233 = sphi 0, %s231
    %s234 = sphi 0, %s233
    %s248 = sphi 0, %s234
    %s252 = sphi 0, %s252
    %s254 = sphi 0, %s252
    %s255 = sphi 0, %s254
    %s269 = sphi 0, %s255
    %s275 = sphi 0, %s277
    %s278 = sphi 0, %s275
    %s279 = sphi 0, %s278
    %s295 = sphi 0, %s279
    %s301 = sphi 0, %s303
    %s304 = sphi 0, %s301
    %s305 = sphi 0, %s304
    %s321 = sphi 0, %s305
  $region4: #{gat_encoder_forward.14} parent=0 // loop_header_branch
    %22 = sbr.rel (%p20) target = $region8
  $region5: #{gat_encoder_forward.14} parent=0 // loop_body
    %s24 = ssub.s32 %s19, 1
    %s25 = ssub.s32 %s19, 2
    %s26 = sadd.s32 %s19, 1
    %s27 = ssub.s32 %s19, %s26
    %p28 = scmp.eq.s32.totalorder %s27, 0
    %s30 = sadd.s32 %s29, 1
    %s31 = scalar_select %p28, %s29, %s30
    %p34 = pneg %p28
    %p35 = scmp.eq.s32.totalorder %s19, 1
    %p36 = por %p34, %p35
    %p37 = scmp.ne.s32.totalorder %s29, %s32
    %p38 = scmp.eq.s32.totalorder %s19, 0
    %p39 = por %p37, %p38
    %p40 = scmp.ne.s32.totalorder %s29, %s32
    %p41 = scmp.eq.s32.totalorder %s24, 1
    %p42 = por %p40, %p41
    %p43 = scmp.ne.s32.totalorder %s32, %s33
    %p44 = scmp.eq.s32.totalorder %s24, 0
    %p45 = por %p43, %p44
    %p46 = scmp.ne.s32.totalorder %s32, %s33
    %p47 = scmp.eq.s32.totalorder %s25, 1
    %p48 = por %p46, %p47
    %p50 = scmp.ne.s32.totalorder %s33, %s49
    %p51 = scmp.eq.s32.totalorder %s25, 0
    %p52 = por %p50, %p51
    %s53 = ssub.s32 %s19, %s26
    %p54 = scmp.eq.s32.totalorder %s53, 0
    %s56 = sadd.s32 %s55, 1
    %s57 = scalar_select %p54, %s55, %s56
    %p60 = pneg %p54
    %p61 = scmp.eq.s32.totalorder %s19, 1
    %p62 = por %p60, %p61
    %p63 = scmp.ne.s32.totalorder %s55, %s58
    %p64 = scmp.eq.s32.totalorder %s19, 0
    %p65 = por %p63, %p64
    %p66 = scmp.ne.s32.totalorder %s55, %s58
    %p67 = scmp.eq.s32.totalorder %s24, 1
    %p68 = por %p66, %p67
    %p69 = scmp.ne.s32.totalorder %s58, %s59
    %p70 = scmp.eq.s32.totalorder %s24, 0
    %p71 = por %p69, %p70
    %p72 = scmp.ne.s32.totalorder %s58, %s59
    %p73 = scmp.eq.s32.totalorder %s25, 1
    %p74 = por %p72, %p73
    %p76 = scmp.ne.s32.totalorder %s59, %s75
    %p77 = scmp.eq.s32.totalorder %s25, 0
    %p78 = por %p76, %p77
    %s80 = sadd.s32 %s79, 1
    %p83 = scmp.eq.s32.totalorder %s19, 1
    %p84 = scmp.ne.s32.totalorder %s79, %s81
    %p85 = scmp.eq.s32.totalorder %s19, 0
    %p86 = por %p84, %p85
    %p87 = scmp.ne.s32.totalorder %s79, %s81
    %p88 = scmp.eq.s32.totalorder %s24, 1
    %p89 = por %p87, %p88
    %p90 = scmp.ne.s32.totalorder %s81, %s82
    %p91 = scmp.eq.s32.totalorder %s24, 0
    %p92 = por %p90, %p91
    %p93 = scmp.ne.s32.totalorder %s81, %s82
    %p94 = scmp.eq.s32.totalorder %s25, 1
    %p95 = por %p93, %p94
    %p97 = scmp.ne.s32.totalorder %s82, %s96
    %p98 = scmp.eq.s32.totalorder %s25, 0
    %p99 = por %p97, %p98
    %s101 = sadd.s32 %s100, 1
    %p104 = scmp.eq.s32.totalorder %s19, 1
    %p105 = scmp.ne.s32.totalorder %s100, %s102
    %p106 = scmp.eq.s32.totalorder %s19, 0
    %p107 = por %p105, %p106
    %p108 = scmp.ne.s32.totalorder %s100, %s102
    %p109 = scmp.eq.s32.totalorder %s24, 1
    %p110 = por %p108, %p109
    %p111 = scmp.ne.s32.totalorder %s102, %s103
    %p112 = scmp.eq.s32.totalorder %s24, 0
    %p113 = por %p111, %p112
    %p114 = scmp.ne.s32.totalorder %s102, %s103
    %p115 = scmp.eq.s32.totalorder %s25, 1
    %p116 = por %p114, %p115
    %p118 = scmp.ne.s32.totalorder %s103, %s117
    %p119 = scmp.eq.s32.totalorder %s25, 0
    %p120 = por %p118, %p119
    %s122 = sadd.s32 %s121, 1
    %p125 = scmp.eq.s32.totalorder %s19, 1
    %p126 = scmp.ne.s32.totalorder %s121, %s123
    %p127 = scmp.eq.s32.totalorder %s19, 0
    %p128 = por %p126, %p127
    %p129 = scmp.ne.s32.totalorder %s121, %s123
    %p130 = scmp.eq.s32.totalorder %s24, 1
    %p131 = por %p129, %p130
    %p132 = scmp.ne.s32.totalorder %s123, %s124
    %p133 = scmp.eq.s32.totalorder %s24, 0
    %p134 = por %p132, %p133
    %p135 = scmp.ne.s32.totalorder %s123, %s124
    %p136 = scmp.eq.s32.totalorder %s25, 1
    %p137 = por %p135, %p136
    %p139 = scmp.ne.s32.totalorder %s124, %s138
    %p140 = scmp.eq.s32.totalorder %s25, 0
    %p141 = por %p139, %p140
    %s143 = sadd.s32 %s142, 1
    %p146 = scmp.eq.s32.totalorder %s19, 1
    %p147 = scmp.ne.s32.totalorder %s142, %s144
    %p148 = scmp.eq.s32.totalorder %s19, 0
    %p149 = por %p147, %p148
    %p150 = scmp.ne.s32.totalorder %s142, %s144
    %p151 = scmp.eq.s32.totalorder %s24, 1
    %p152 = por %p150, %p151
    %p153 = scmp.ne.s32.totalorder %s144, %s145
    %p154 = scmp.eq.s32.totalorder %s24, 0
    %p155 = por %p153, %p154
    %p156 = scmp.ne.s32.totalorder %s144, %s145
    %p157 = scmp.eq.s32.totalorder %s25, 1
    %p158 = por %p156, %p157
    %p160 = scmp.ne.s32.totalorder %s145, %s159
    %p161 = scmp.eq.s32.totalorder %s25, 0
    %p162 = por %p160, %p161
    %s163 = ssub.s32 %s19, %s26
    %p164 = scmp.eq.s32.totalorder %s163, 0
    %s166 = sadd.s32 %s165, 1
    %s167 = scalar_select %p164, %s165, %s166
    %p170 = pneg %p164
    %p171 = scmp.eq.s32.totalorder %s19, 1
    %p172 = por %p170, %p171
    %p173 = scmp.ne.s32.totalorder %s165, %s168
    %p174 = scmp.eq.s32.totalorder %s19, 0
    %p175 = por %p173, %p174
    %p176 = scmp.ne.s32.totalorder %s165, %s168
    %p177 = scmp.eq.s32.totalorder %s24, 1
    %p178 = por %p176, %p177
    %p179 = scmp.ne.s32.totalorder %s168, %s169
    %p180 = scmp.eq.s32.totalorder %s24, 0
    %p181 = por %p179, %p180
    %p182 = scmp.ne.s32.totalorder %s168, %s169
    %p183 = scmp.eq.s32.totalorder %s25, 1
    %p184 = por %p182, %p183
    %p186 = scmp.ne.s32.totalorder %s169, %s185
    %p187 = scmp.eq.s32.totalorder %s25, 0
    %p188 = por %p186, %p187
    %s190 = sadd.s32 %s189, 1
    %p193 = scmp.eq.s32.totalorder %s19, 1
    %p194 = scmp.ne.s32.totalorder %s189, %s191
    %p195 = scmp.eq.s32.totalorder %s19, 0
    %p196 = por %p194, %p195
    %p197 = scmp.ne.s32.totalorder %s189, %s191
    %p198 = scmp.eq.s32.totalorder %s24, 1
    %p199 = por %p197, %p198
    %p200 = scmp.ne.s32.totalorder %s191, %s192
    %p201 = scmp.eq.s32.totalorder %s24, 0
    %p202 = por %p200, %p201
    %p203 = scmp.ne.s32.totalorder %s191, %s192
    %p204 = scmp.eq.s32.totalorder %s25, 1
    %p205 = por %p203, %p204
    %p207 = scmp.ne.s32.totalorder %s192, %s206
    %p208 = scmp.eq.s32.totalorder %s25, 0
    %p209 = por %p207, %p208
    %s211 = sadd.s32 %s210, 1
    %p214 = scmp.eq.s32.totalorder %s19, 1
    %p215 = scmp.ne.s32.totalorder %s210, %s212
    %p216 = scmp.eq.s32.totalorder %s19, 0
    %p217 = por %p215, %p216
    %p218 = scmp.ne.s32.totalorder %s210, %s212
    %p219 = scmp.eq.s32.totalorder %s24, 1
    %p220 = por %p218, %p219
    %p221 = scmp.ne.s32.totalorder %s212, %s213
    %p222 = scmp.eq.s32.totalorder %s24, 0
    %p223 = por %p221, %p222
    %p224 = scmp.ne.s32.totalorder %s212, %s213
    %p225 = scmp.eq.s32.totalorder %s25, 1
    %p226 = por %p224, %p225
    %p228 = scmp.ne.s32.totalorder %s213, %s227
    %p229 = scmp.eq.s32.totalorder %s25, 0
    %p230 = por %p228, %p229
    %s232 = sadd.s32 %s231, 1
    %p235 = scmp.eq.s32.totalorder %s19, 1
    %p236 = scmp.ne.s32.totalorder %s231, %s233
    %p237 = scmp.eq.s32.totalorder %s19, 0
    %p238 = por %p236, %p237
    %p239 = scmp.ne.s32.totalorder %s231, %s233
    %p240 = scmp.eq.s32.totalorder %s24, 1
    %p241 = por %p239, %p240
    %p242 = scmp.ne.s32.totalorder %s233, %s234
    %p243 = scmp.eq.s32.totalorder %s24, 0
    %p244 = por %p242, %p243
    %p245 = scmp.ne.s32.totalorder %s233, %s234
    %p246 = scmp.eq.s32.totalorder %s25, 1
    %p247 = por %p245, %p246
    %p249 = scmp.ne.s32.totalorder %s234, %s248
    %p250 = scmp.eq.s32.totalorder %s25, 0
    %p251 = por %p249, %p250
    %s253 = sadd.s32 %s252, 1
    %p256 = scmp.eq.s32.totalorder %s19, 1
    %p257 = scmp.ne.s32.totalorder %s252, %s254
    %p258 = scmp.eq.s32.totalorder %s19, 0
    %p259 = por %p257, %p258
    %p260 = scmp.ne.s32.totalorder %s252, %s254
    %p261 = scmp.eq.s32.totalorder %s24, 1
    %p262 = por %p260, %p261
    %p263 = scmp.ne.s32.totalorder %s254, %s255
    %p264 = scmp.eq.s32.totalorder %s24, 0
    %p265 = por %p263, %p264
    %p266 = scmp.ne.s32.totalorder %s254, %s255
    %p267 = scmp.eq.s32.totalorder %s25, 1
    %p268 = por %p266, %p267
    %p270 = scmp.ne.s32.totalorder %s255, %s269
    %p271 = scmp.eq.s32.totalorder %s25, 0
    %p272 = por %p270, %p271
    %s273 = ssub.s32 %s19, %s26
    %p274 = scmp.eq.s32.totalorder %s273, 0
    %s276 = sadd.s32 %s275, 1
    %s277 = scalar_select %p274, %s275, %s276
    %p280 = pneg %p274
    %p281 = scmp.eq.s32.totalorder %s19, 1
    %p282 = por %p280, %p281
    %p283 = scmp.ne.s32.totalorder %s275, %s278
    %p284 = scmp.eq.s32.totalorder %s19, 0
    %p285 = por %p283, %p284
    %p286 = scmp.ne.s32.totalorder %s275, %s278
    %p287 = scmp.eq.s32.totalorder %s24, 1
    %p288 = por %p286, %p287
    %p289 = scmp.ne.s32.totalorder %s278, %s279
    %p290 = scmp.eq.s32.totalorder %s24, 0
    %p291 = por %p289, %p290
    %p292 = scmp.ne.s32.totalorder %s278, %s279
    %p293 = scmp.eq.s32.totalorder %s25, 1
    %p294 = por %p292, %p293
    %p296 = scmp.ne.s32.totalorder %s279, %s295
    %p297 = scmp.eq.s32.totalorder %s25, 0
    %p298 = por %p296, %p297
    %s299 = ssub.s32 %s19, %s26
    %p300 = scmp.eq.s32.totalorder %s299, 0
    %s302 = sadd.s32 %s301, 1
    %s303 = scalar_select %p300, %s301, %s302
    %p306 = pneg %p300
    %p307 = scmp.eq.s32.totalorder %s19, 1
    %p308 = por %p306, %p307
    %p309 = scmp.ne.s32.totalorder %s301, %s304
    %p310 = scmp.eq.s32.totalorder %s19, 0
    %p311 = por %p309, %p310
    %p312 = scmp.ne.s32.totalorder %s301, %s304
    %p313 = scmp.eq.s32.totalorder %s24, 1
    %p314 = por %p312, %p313
    %p315 = scmp.ne.s32.totalorder %s304, %s305
    %p316 = scmp.eq.s32.totalorder %s24, 0
    %p317 = por %p315, %p316
    %p318 = scmp.ne.s32.totalorder %s304, %s305
    %p319 = scmp.eq.s32.totalorder %s25, 1
    %p320 = por %p318, %p319
    %p322 = scmp.ne.s32.totalorder %s305, %s321
    %p323 = scmp.eq.s32.totalorder %s25, 0
    %p324 = por %p322, %p323
    %p325 = scmp.le.s32.totalorder 1, %s19
    %p326 = scmp.lt.s32.totalorder %s19, 3
    %p327 = pnand %p325, %p326
    %p328 = pneg %p327
    // Predicated region
    $region9: #{gat_encoder_forward.14} parent=5 // pred_check
      _
    $region10: #{gat_encoder_forward.14} parent=5 // pred_check_branch
      %330 = sbr.rel (%p327) target = $region12
    $region11: #{gat_encoder_forward.14} parent=5 // pred_region
      %s331 = ssub.s32 %s19, 1
      // Predicated region
      $region13: #{gat_encoder_forward.14} parent=11 // pred_check
        %p332 = pneg %p92
      $region14: #{gat_encoder_forward.14} parent=11 // pred_check_branch
        %334 = sbr.rel (%p332) target = $region16
      $region15: #{gat_encoder_forward.14} parent=11 // pred_region
        _
      $region16: #{gat_encoder_forward.14} parent=11 // pred_fallthru
        _
      // Predicated region
      $region17: #{gat_encoder_forward.14} parent=11 // pred_check
        %p335 = pneg %p113
      $region18: #{gat_encoder_forward.14} parent=11 // pred_check_branch
        %337 = sbr.rel (%p335) target = $region20
      $region19: #{gat_encoder_forward.14} parent=11 // pred_region
        _
      $region20: #{gat_encoder_forward.14} parent=11 // pred_fallthru
        _
      // Predicated region
      $region21: #{gat_encoder_forward.14} parent=11 // pred_check
        %p338 = pneg %p134
      $region22: #{gat_encoder_forward.14} parent=11 // pred_check_branch
        %340 = sbr.rel (%p338) target = $region24
      $region23: #{gat_encoder_forward.14} parent=11 // pred_region
        _
      $region24: #{gat_encoder_forward.14} parent=11 // pred_fallthru
        _
      // Predicated region
      $region25: #{gat_encoder_forward.14} parent=11 // pred_check
        %p341 = pneg %p155
      $region26: #{gat_encoder_forward.14} parent=11 // pred_check_branch
        %343 = sbr.rel (%p341) target = $region28
      $region27: #{gat_encoder_forward.14} parent=11 // pred_region
        _
      $region28: #{gat_encoder_forward.14} parent=11 // pred_fallthru
        _
      // Predicated region
      $region29: #{gat_encoder_forward.14} parent=11 // pred_check
        %p344 = pneg %p202
      $region30: #{gat_encoder_forward.14} parent=11 // pred_check_branch
        %346 = sbr.rel (%p344) target = $region32
      $region31: #{gat_encoder_forward.14} parent=11 // pred_region
        _
      $region32: #{gat_encoder_forward.14} parent=11 // pred_fallthru
        _
      // Predicated region
      $region33: #{gat_encoder_forward.14} parent=11 // pred_check
        %p347 = pneg %p223
      $region34: #{gat_encoder_forward.14} parent=11 // pred_check_branch
        %349 = sbr.rel (%p347) target = $region36
      $region35: #{gat_encoder_forward.14} parent=11 // pred_region
        _
      $region36: #{gat_encoder_forward.14} parent=11 // pred_fallthru
        _
      // Predicated region
      $region37: #{gat_encoder_forward.14} parent=11 // pred_check
        %p350 = pneg %p244
      $region38: #{gat_encoder_forward.14} parent=11 // pred_check_branch
        %352 = sbr.rel (%p350) target = $region40
      $region39: #{gat_encoder_forward.14} parent=11 // pred_region
        _
      $region40: #{gat_encoder_forward.14} parent=11 // pred_fallthru
        _
      // Predicated region
      $region41: #{gat_encoder_forward.14} parent=11 // pred_check
        %p353 = pneg %p265
      $region42: #{gat_encoder_forward.14} parent=11 // pred_check_branch
        %355 = sbr.rel (%p353) target = $region44
      $region43: #{gat_encoder_forward.14} parent=11 // pred_region
        _
      $region44: #{gat_encoder_forward.14} parent=11 // pred_fallthru
        _
    $region12: #{gat_encoder_forward.14} parent=5 // pred_fallthru
      _
    %p356 = scmp.lt.s32.totalorder %s19, 2
    // Predicated region
    $region45: #{gat_encoder_forward.14} parent=5 // pred_check
      %p357 = pneg %p356
    $region46: #{gat_encoder_forward.14} parent=5 // pred_check_branch
      %359 = sbr.rel (%p357) target = $region48
    $region47: #{gat_encoder_forward.14} parent=5 // pred_region
      // Predicated region
      $region49: #{gat_encoder_forward.14} parent=47 // pred_check
        %p360 = pneg %p39
      $region50: #{gat_encoder_forward.14} parent=47 // pred_check_branch
        %362 = sbr.rel (%p360) target = $region52
      $region51: #{gat_encoder_forward.14} parent=47 // pred_region
        %p363 = scmp.lt.s32.totalorder %s19, 1
        %s364 = scalar_select %p363, %s19, 1
        %s365 = smul.addr %s364, 8
        %s366 = scalar_lea.vmem %s0, %s365
      $region52: #{gat_encoder_forward.14} parent=47 // pred_fallthru
        _
      // Predicated region
      $region53: #{gat_encoder_forward.14} parent=47 // pred_check
        %p367 = pneg %p65
      $region54: #{gat_encoder_forward.14} parent=47 // pred_check_branch
        %369 = sbr.rel (%p367) target = $region56
      $region55: #{gat_encoder_forward.14} parent=47 // pred_region
        %p370 = scmp.lt.s32.totalorder %s19, 1
        %s371 = scalar_select %p370, %s19, 1
        %s372 = smul.addr %s371, 4
        %s373 = scalar_lea.vmem %s1, %s372
      $region56: #{gat_encoder_forward.14} parent=47 // pred_fallthru
        _
      // Predicated region
      $region57: #{gat_encoder_forward.14} parent=47 // pred_check
        %p374 = pneg %p175
      $region58: #{gat_encoder_forward.14} parent=47 // pred_check_branch
        %376 = sbr.rel (%p374) target = $region60
      $region59: #{gat_encoder_forward.14} parent=47 // pred_region
        %p377 = scmp.lt.s32.totalorder %s19, 1
        %s378 = scalar_select %p377, %s19, 1
        %s379 = smul.addr %s378, 8
        %s380 = scalar_lea.vmem %s6, %s379
      $region60: #{gat_encoder_forward.14} parent=47 // pred_fallthru
        _
    $region48: #{gat_encoder_forward.14} parent=5 // pred_fallthru
      _
    %p381 = scmp.le.s32.totalorder 1, %s19
    %p382 = scmp.lt.s32.totalorder %s19, 3
    %p383 = pnand %p381, %p382
    %p384 = pneg %p383
    // Predicated region
    $region61: #{gat_encoder_forward.14} parent=5 // pred_check
      _
    $region62: #{gat_encoder_forward.14} parent=5 // pred_check_branch
      %386 = sbr.rel (%p383) target = $region64
    $region63: #{gat_encoder_forward.14} parent=5 // pred_region
      %s387 = ssub.s32 %s19, 1
      %p388 = scmp.lt.s32.totalorder %s24, 1
      %s389 = scalar_select %p388, %s24, 1
      %s390 = smul.addr %s389, 8
      %s391 = scalar_lea.vmem %s0, %s390
      %p392 = pneg %p45
      %p393 = pneg %p42
      %p394 = scmp.lt.s32.totalorder %s24, 1
      %s395 = scalar_select %p394, %s24, 1
      %s396 = smul.addr %s395, 4
      %s397 = scalar_lea.vmem %s1, %s396
      %p398 = pneg %p71
      %p399 = pneg %p68
      %p400 = pneg %p92
      %p401 = pneg %p89
      %p402 = pneg %p113
      %p403 = pneg %p110
      %p404 = pneg %p134
      %p405 = pneg %p131
      %p406 = pneg %p155
      %p407 = pneg %p152
      %p408 = scmp.lt.s32.totalorder %s24, 1
      %s409 = scalar_select %p408, %s24, 1
      %s410 = smul.addr %s409, 8
      %s411 = scalar_lea.vmem %s6, %s410
      %p412 = pneg %p181
      %p413 = pneg %p178
      %p414 = pneg %p202
      %p415 = pneg %p199
      %p416 = pneg %p223
      %p417 = pneg %p220
      %p418 = pneg %p244
      %p419 = pneg %p241
      %p420 = pneg %p265
      %p421 = pneg %p262
      %p422 = pneg %p291
      %p423 = pneg %p288
      %p424 = scmp.lt.s32.totalorder %s24, 1
      %s425 = scalar_select %p424, %s24, 1
      %s426 = smul.addr %s425, 8
      %s427 = scalar_lea.vmem %s11, %s426
      %p428 = pneg %p317
      %p429 = pneg %p314
      %p430 = scmp.lt.s32.totalorder %s24, 1
      %s431 = scalar_select %p430, %s24, 1
      %s432 = smul.addr %s431, 4
      %s433 = scalar_lea.vmem %s12, %s432
      %p434 = scmp.lt.s32.totalorder %s24, 1
      %s435 = scalar_select %p434, %s24, 1
      %s436 = smul.addr %s435, 8
      %s437 = scalar_lea.vmem %s0, %s436
      %p438 = scmp.lt.s32.totalorder %s24, 1
      %s439 = scalar_select %p438, %s24, 1
      %s440 = smul.addr %s439, 4
      %s441 = scalar_lea.vmem %s1, %s440
      %p442 = scmp.lt.s32.totalorder %s24, 1
      %s443 = scalar_select %p442, %s24, 1
      %s444 = smul.addr %s443, 8
      %s445 = scalar_lea.vmem %s6, %s444
      %p446 = scmp.lt.s32.totalorder %s24, 1
      %s447 = scalar_select %p446, %s24, 1
      %s448 = smul.addr %s447, 8
      %s449 = scalar_lea.vmem %s11, %s448
      %p450 = scmp.lt.s32.totalorder %s24, 1
      %s451 = scalar_select %p450, %s24, 1
      %s452 = smul.addr %s451, 4
      %s453 = scalar_lea.vmem %s12, %s452
      %v455 = vld [vmem:[%s437] sm:$0xff]
      %v456 = vld [vmem:[%s441] sm:$0xf]
      %v457 = vld [vmem:[%s445] sm:$0xff]
      %v458 = vpack.c.bf16 %v455, %v455
      %v459 = vld [vmem:[%s2] sm:$0xf]
      %v460 = vld [vmem:[%s2 + $0x4] sm:$0xf]
      %v461 = vld [vmem:[%s2 + $0x8] sm:$0xf]
      %v462 = vld [vmem:[%s2 + $0xc] sm:$0xf]
      %v463 = vld [vmem:[%s3] sm:$0x1]
      %v465 = vperm.slane %v463, 0
      %v471 = vunpack.c.l.b16 %v459
      %v472 = vunpack.c.l.b16 %v460
      %v473 = vunpack.c.l.b16 %v461
      %v474 = vunpack.c.l.b16 %v462
      %v475 = vpack.c.b16 %v472, %v471
      %v476 = vpack.c.b16 %v474, %v473
      %vm479 = vcmask 261120
      %v481 = vsel %vm479, %v458, 0
      %483 = vmatpush.bf16.msra.mxu0 0
      %484 = vmatpush.bf16.msra.mxu0 0
      %485 = vmatpush.bf16.msra.mxu0 0
      %486 = vmatpush.bf16.msra.mxu0 0
      %487 = vmatpush.bf16.msra.mxu0 0
      %488 = vmatpush.bf16.msra.mxu0 0
      %489 = vmatpush.bf16.msra.mxu0 %v476
      %490 = vmatpush.bf16.msra.mxu0 %v475
      %491 = vmatmul.bf16.gmra.mxu0 %v481
      %v492 = vpop.f32.mrf.mxu0
      %v493 = vadd.f32 %v465, %v492
      %v494 = vpop.f32.mrf.mxu0
      %495 = vdwg.mxu0
      %v496 = vpack.c.bf16 %v456, %v456
      %v497 = vld [vmem:[%s4] sm:$0xf]
      %v498 = vld [vmem:[%s4 + $0x4] sm:$0xf]
      %v499 = vld [vmem:[%s4 + $0x8] sm:$0xf]
      %v500 = vld [vmem:[%s4 + $0xc] sm:$0xf]
      %v501 = vld [vmem:[%s5] sm:$0x1]
      %v503 = vperm.slane %v501, 0
      %v509 = vunpack.c.l.b16 %v497
      %v510 = vunpack.c.l.b16 %v498
      %v511 = vunpack.c.l.b16 %v499
      %v512 = vunpack.c.l.b16 %v500
      %v513 = vpack.c.b16 %v510, %v509
      %v514 = vpack.c.b16 %v512, %v511
      %v518 = vsel %vm479, %v496, 0
      %520 = vmatpush.bf16.msra.mxu0 0
      %521 = vmatpush.bf16.msra.mxu0 0
      %522 = vmatpush.bf16.msra.mxu0 0
      %523 = vmatpush.bf16.msra.mxu0 0
      %524 = vmatpush.bf16.msra.mxu0 0
      %525 = vmatpush.bf16.msra.mxu0 0
      %526 = vmatpush.bf16.msra.mxu0 %v514
      %527 = vmatpush.bf16.msra.mxu0 %v513
      %528 = vmatmul.bf16.gmra.mxu0 %v518
      %v529 = vpop.f32.mrf.mxu0
      %v530 = vadd.f32 %v503, %v529
      %v531 = vpop.f32.mrf.mxu0
      %532 = vdwg.mxu0
      %v533 = vperm.slane %v457, 0
      %v534 = vlaneseq
      %v535 = vshrl.u32 %v534, 7
      %537 = vset.pattern.permute.xlu0 %v535
      %538 = vperm.xlu0 %537, %v533
      %v539 = vpop.permute.xlu0 %538
      %v540 = vperm.slane %v457, 1
      %v541 = vlaneseq
      %v542 = vshrl.u32 %v541, 7
      %544 = vset.pattern.permute.xlu0 %v542
      %545 = vperm.xlu0 %544, %v540
      %v546 = vpop.permute.xlu0 %545
      %v547 = vperm.slane %v457, 2
      %v548 = vlaneseq
      %v549 = vshrl.u32 %v548, 7
      %551 = vset.pattern.permute.xlu0 %v549
      %552 = vperm.xlu0 %551, %v547
      %v553 = vpop.permute.xlu0 %552
      %v554 = vperm.slane %v457, 3
      %v555 = vlaneseq
      %v556 = vshrl.u32 %v555, 7
      %558 = vset.pattern.permute.xlu0 %v556
      %559 = vperm.xlu0 %558, %v554
      %v560 = vpop.permute.xlu0 %559
      %v561 = vperm.slane %v457, 4
      %v562 = vlaneseq
      %v563 = vshrl.u32 %v562, 7
      %565 = vset.pattern.permute.xlu0 %v563
      %566 = vperm.xlu0 %565, %v561
      %v567 = vpop.permute.xlu0 %566
      %v568 = vperm.slane %v457, 5
      %v569 = vlaneseq
      %v570 = vshrl.u32 %v569, 7
      %572 = vset.pattern.permute.xlu0 %v570
      %573 = vperm.xlu0 %572, %v568
      %v574 = vpop.permute.xlu0 %573
      %v575 = vperm.slane %v457, 6
      %v576 = vlaneseq
      %v577 = vshrl.u32 %v576, 7
      %579 = vset.pattern.permute.xlu0 %v577
      %580 = vperm.xlu0 %579, %v575
      %v581 = vpop.permute.xlu0 %580
      %v582 = vperm.slane %v457, 7
      %v583 = vlaneseq
      %v584 = vshrl.u32 %v583, 7
      %586 = vset.pattern.permute.xlu0 %v584
      %587 = vperm.xlu0 %586, %v582
      %v588 = vpop.permute.xlu0 %587
      %v590 = vrot.slane %v493, 1
      %v591 = vrot.slane %v493, 2
      %v592 = vrot.slane %v493, 3
      %v593 = vrot.slane %v493, 4
      %v594 = vrot.slane %v493, 5
      %v595 = vrot.slane %v493, 6
      %v596 = vrot.slane %v493, 7
      %v597 = vperm.slane %v493, 0
      %v598 = vperm.slane %v590, 0
      %v599 = vperm.slane %v591, 0
      %v600 = vperm.slane %v592, 0
      %v601 = vperm.slane %v593, 0
      %v602 = vperm.slane %v594, 0
      %v603 = vperm.slane %v595, 0
      %v604 = vperm.slane %v596, 0
      %v613 = vadd.f32 %v597, %v530
      %v614 = vadd.f32 %v598, %v530
      %v615 = vadd.f32 %v599, %v530
      %v616 = vadd.f32 %v600, %v530
      %v617 = vadd.f32 %v601, %v530
      %v618 = vadd.f32 %v602, %v530
      %v619 = vadd.f32 %v603, %v530
      %v620 = vadd.f32 %v604, %v530
      %v621 = vxor.u32 %v613, 2147483648
      %v622 = vxor.u32 %v614, 2147483648
      %v623 = vxor.u32 %v615, 2147483648
      %v624 = vxor.u32 %v616, 2147483648
      %v625 = vxor.u32 %v617, 2147483648
      %v626 = vxor.u32 %v618, 2147483648
      %v627 = vxor.u32 %v619, 2147483648
      %v628 = vxor.u32 %v620, 2147483648
      %v629 = vmul.f32 %v621, 1.442695
      %v630 = vpow.pop %v629
      %v631 = vmul.f32 %v622, 1.442695
      %v632 = vpow.pop %v631
      %v633 = vmul.f32 %v623, 1.442695
      %v634 = vpow.pop %v633
      %v635 = vmul.f32 %v624, 1.442695
      %v636 = vpow.pop %v635
      %v637 = vmul.f32 %v625, 1.442695
      %v638 = vpow.pop %v637
      %v639 = vmul.f32 %v626, 1.442695
      %v640 = vpow.pop %v639
      %v641 = vmul.f32 %v627, 1.442695
      %v642 = vpow.pop %v641
      %v643 = vmul.f32 %v628, 1.442695
      %v644 = vpow.pop %v643
      %v645 = vadd.f32 %v630, 1.0
      %v646 = vadd.f32 %v632, 1.0
      %v647 = vadd.f32 %v634, 1.0
      %v648 = vadd.f32 %v636, 1.0
      %v649 = vadd.f32 %v638, 1.0
      %v650 = vadd.f32 %v640, 1.0
      %v651 = vadd.f32 %v642, 1.0
      %v652 = vadd.f32 %v644, 1.0
      %v653 = vrcp.pop %v645
      %v654 = vmul.f32 %v645, %v653
      %v655 = vsub.f32 1.0, %v654
      %v656 = vmul.f32 %v653, %v655
      %v657 = vadd.f32 %v653, %v656
      %vm658 = vweird.f32 %v645
      %vm659 = vweird.f32 %v653
      %vm660 = vmor %vm658, %vm659
      %v661 = vsel %vm660, %v653, %v657
      %v662 = vand.u32 2147483647, %v645
      %vm663 = vcmp.eq.f32.partialorder %v662, 8.507059e+37
      %v664 = vand.u32 %v645, 2147483648
      %v665 = vor.u32 1.1754944e-38, %v664
      %v666 = vsel %vm663, %v665, %v661
      %v667 = vmul.f32 1.0, %v666
      %v668 = vrcp.pop %v646
      %v669 = vmul.f32 %v646, %v668
      %v670 = vsub.f32 1.0, %v669
      %v671 = vmul.f32 %v668, %v670
      %v672 = vadd.f32 %v668, %v671
      %vm673 = vweird.f32 %v646
      %vm674 = vweird.f32 %v668
      %vm675 = vmor %vm673, %vm674
      %v676 = vsel %vm675, %v668, %v672
      %v677 = vand.u32 2147483647, %v646
      %vm678 = vcmp.eq.f32.partialorder %v677, 8.507059e+37
      %v679 = vand.u32 %v646, 2147483648
      %v680 = vor.u32 1.1754944e-38, %v679
      %v681 = vsel %vm678, %v680, %v676
      %v682 = vmul.f32 1.0, %v681
      %v683 = vrcp.pop %v647
      %v684 = vmul.f32 %v647, %v683
      %v685 = vsub.f32 1.0, %v684
      %v686 = vmul.f32 %v683, %v685
      %v687 = vadd.f32 %v683, %v686
      %vm688 = vweird.f32 %v647
      %vm689 = vweird.f32 %v683
      %vm690 = vmor %vm688, %vm689
      %v691 = vsel %vm690, %v683, %v687
      %v692 = vand.u32 2147483647, %v647
      %vm693 = vcmp.eq.f32.partialorder %v692, 8.507059e+37
      %v694 = vand.u32 %v647, 2147483648
      %v695 = vor.u32 1.1754944e-38, %v694
      %v696 = vsel %vm693, %v695, %v691
      %v697 = vmul.f32 1.0, %v696
      %v698 = vrcp.pop %v648
      %v699 = vmul.f32 %v648, %v698
      %v700 = vsub.f32 1.0, %v699
      %v701 = vmul.f32 %v698, %v700
      %v702 = vadd.f32 %v698, %v701
      %vm703 = vweird.f32 %v648
      %vm704 = vweird.f32 %v698
      %vm705 = vmor %vm703, %vm704
      %v706 = vsel %vm705, %v698, %v702
      %v707 = vand.u32 2147483647, %v648
      %vm708 = vcmp.eq.f32.partialorder %v707, 8.507059e+37
      %v709 = vand.u32 %v648, 2147483648
      %v710 = vor.u32 1.1754944e-38, %v709
      %v711 = vsel %vm708, %v710, %v706
      %v712 = vmul.f32 1.0, %v711
      %v713 = vrcp.pop %v649
      %v714 = vmul.f32 %v649, %v713
      %v715 = vsub.f32 1.0, %v714
      %v716 = vmul.f32 %v713, %v715
      %v717 = vadd.f32 %v713, %v716
      %vm718 = vweird.f32 %v649
      %vm719 = vweird.f32 %v713
      %vm720 = vmor %vm718, %vm719
      %v721 = vsel %vm720, %v713, %v717
      %v722 = vand.u32 2147483647, %v649
      %vm723 = vcmp.eq.f32.partialorder %v722, 8.507059e+37
      %v724 = vand.u32 %v649, 2147483648
      %v725 = vor.u32 1.1754944e-38, %v724
      %v726 = vsel %vm723, %v725, %v721
      %v727 = vmul.f32 1.0, %v726
      %v728 = vrcp.pop %v650
      %v729 = vmul.f32 %v650, %v728
      %v730 = vsub.f32 1.0, %v729
      %v731 = vmul.f32 %v728, %v730
      %v732 = vadd.f32 %v728, %v731
      %vm733 = vweird.f32 %v650
      %vm734 = vweird.f32 %v728
      %vm735 = vmor %vm733, %vm734
      %v736 = vsel %vm735, %v728, %v732
      %v737 = vand.u32 2147483647, %v650
      %vm738 = vcmp.eq.f32.partialorder %v737, 8.507059e+37
      %v739 = vand.u32 %v650, 2147483648
      %v740 = vor.u32 1.1754944e-38, %v739
      %v741 = vsel %vm738, %v740, %v736
      %v742 = vmul.f32 1.0, %v741
      %v743 = vrcp.pop %v651
      %v744 = vmul.f32 %v651, %v743
      %v745 = vsub.f32 1.0, %v744
      %v746 = vmul.f32 %v743, %v745
      %v747 = vadd.f32 %v743, %v746
      %vm748 = vweird.f32 %v651
      %vm749 = vweird.f32 %v743
      %vm750 = vmor %vm748, %vm749
      %v751 = vsel %vm750, %v743, %v747
      %v752 = vand.u32 2147483647, %v651
      %vm753 = vcmp.eq.f32.partialorder %v752, 8.507059e+37
      %v754 = vand.u32 %v651, 2147483648
      %v755 = vor.u32 1.1754944e-38, %v754
      %v756 = vsel %vm753, %v755, %v751
      %v757 = vmul.f32 1.0, %v756
      %v758 = vrcp.pop %v652
      %v759 = vmul.f32 %v652, %v758
      %v760 = vsub.f32 1.0, %v759
      %v761 = vmul.f32 %v758, %v760
      %v762 = vadd.f32 %v758, %v761
      %vm763 = vweird.f32 %v652
      %vm764 = vweird.f32 %v758
      %vm765 = vmor %vm763, %vm764
      %v766 = vsel %vm765, %v758, %v762
      %v767 = vand.u32 2147483647, %v652
      %vm768 = vcmp.eq.f32.partialorder %v767, 8.507059e+37
      %v769 = vand.u32 %v652, 2147483648
      %v770 = vor.u32 1.1754944e-38, %v769
      %v771 = vsel %vm768, %v770, %v766
      %v772 = vmul.f32 1.0, %v771
      %v773 = vmul.f32 %v667, %v539
      %v774 = vmul.f32 %v682, %v546
      %v775 = vmul.f32 %v697, %v553
      %v776 = vmul.f32 %v712, %v560
      %v777 = vmul.f32 %v727, %v567
      %v778 = vmul.f32 %v742, %v574
      %v779 = vmul.f32 %v757, %v581
      %v780 = vmul.f32 %v772, %v588
      %v781 = vmul.f32 %v773, %v456
      %v782 = vmul.f32 %v774, %v456
      %v783 = vmul.f32 %v775, %v456
      %v784 = vmul.f32 %v776, %v456
      %v785 = vmul.f32 %v777, %v456
      %v786 = vmul.f32 %v778, %v456
      %v787 = vmul.f32 %v779, %v456
      %v788 = vmul.f32 %v780, %v456
      %vm789 = vcmask 257024
      %v790 = vsel %vm789, %v781, 0.0
      %v791 = vrot.slane %v790, 4
      %v792 = vadd.f32 %v790, %v791
      %v793 = vrot.slane %v792, 2
      %v794 = vadd.f32 %v792, %v793
      %v795 = vrot.slane %v794, 1
      %v796 = vadd.f32 %v794, %v795
      %v797 = vsel %vm789, %v782, 0.0
      %v798 = vrot.slane %v797, 4
      %v799 = vadd.f32 %v797, %v798
      %v800 = vrot.slane %v799, 2
      %v801 = vadd.f32 %v799, %v800
      %v802 = vrot.slane %v801, 1
      %v803 = vadd.f32 %v801, %v802
      %v804 = vsel %vm789, %v783, 0.0
      %v805 = vrot.slane %v804, 4
      %v806 = vadd.f32 %v804, %v805
      %v807 = vrot.slane %v806, 2
      %v808 = vadd.f32 %v806, %v807
      %v809 = vrot.slane %v808, 1
      %v810 = vadd.f32 %v808, %v809
      %v811 = vsel %vm789, %v784, 0.0
      %v812 = vrot.slane %v811, 4
      %v813 = vadd.f32 %v811, %v812
      %v814 = vrot.slane %v813, 2
      %v815 = vadd.f32 %v813, %v814
      %v816 = vrot.slane %v815, 1
      %v817 = vadd.f32 %v815, %v816
      %v818 = vsel %vm789, %v785, 0.0
      %v819 = vrot.slane %v818, 4
      %v820 = vadd.f32 %v818, %v819
      %v821 = vrot.slane %v820, 2
      %v822 = vadd.f32 %v820, %v821
      %v823 = vrot.slane %v822, 1
      %v824 = vadd.f32 %v822, %v823
      %v825 = vsel %vm789, %v786, 0.0
      %v826 = vrot.slane %v825, 4
      %v827 = vadd.f32 %v825, %v826
      %v828 = vrot.slane %v827, 2
      %v829 = vadd.f32 %v827, %v828
      %v830 = vrot.slane %v829, 1
      %v831 = vadd.f32 %v829, %v830
      %v832 = vsel %vm789, %v787, 0.0
      %v833 = vrot.slane %v832, 4
      %v834 = vadd.f32 %v832, %v833
      %v835 = vrot.slane %v834, 2
      %v836 = vadd.f32 %v834, %v835
      %v837 = vrot.slane %v836, 1
      %v838 = vadd.f32 %v836, %v837
      %v839 = vsel %vm789, %v788, 0.0
      %v840 = vrot.slane %v839, 4
      %v841 = vadd.f32 %v839, %v840
      %v842 = vrot.slane %v841, 2
      %v843 = vadd.f32 %v841, %v842
      %v844 = vrot.slane %v843, 1
      %v845 = vadd.f32 %v843, %v844
      %v847 = vrot.slane %v455, 1
      %v848 = vrot.slane %v455, 2
      %v849 = vrot.slane %v455, 3
      %v850 = vrot.slane %v455, 4
      %v851 = vrot.slane %v455, 5
      %v852 = vrot.slane %v455, 6
      %v853 = vrot.slane %v455, 7
      %v854 = vperm.slane %v455, 0
      %v855 = vperm.slane %v847, 0
      %v856 = vperm.slane %v848, 0
      %v857 = vperm.slane %v849, 0
      %v858 = vperm.slane %v850, 0
      %v859 = vperm.slane %v851, 0
      %v860 = vperm.slane %v852, 0
      %v861 = vperm.slane %v853, 0
      %862 = vrot.lane.b32.xlu0 %v854, 32
      %v863 = vpop.permute.xlu0 %862
      %864 = vrot.lane.b32.xlu0 %v855, 32
      %v865 = vpop.permute.xlu0 %864
      %866 = vrot.lane.b32.xlu0 %v856, 32
      %v867 = vpop.permute.xlu0 %866
      %868 = vrot.lane.b32.xlu0 %v857, 32
      %v869 = vpop.permute.xlu0 %868
      %870 = vrot.lane.b32.xlu0 %v858, 32
      %v871 = vpop.permute.xlu0 %870
      %872 = vrot.lane.b32.xlu0 %v859, 32
      %v873 = vpop.permute.xlu0 %872
      %874 = vrot.lane.b32.xlu0 %v860, 32
      %v875 = vpop.permute.xlu0 %874
      %876 = vrot.lane.b32.xlu0 %v861, 32
      %v877 = vpop.permute.xlu0 %876
      %v886 = vmul.f32 %v773, %v863
      %v887 = vmul.f32 %v774, %v865
      %v888 = vmul.f32 %v775, %v867
      %v889 = vmul.f32 %v776, %v869
      %v890 = vmul.f32 %v777, %v871
      %v891 = vmul.f32 %v778, %v873
      %v892 = vmul.f32 %v779, %v875
      %v893 = vmul.f32 %v780, %v877
      %vm894 = vcmask 519424
      %v895 = vsel %vm894, %v886, 0.0
      %v896 = vsel %vm894, %v887, 0.0
      %v897 = vadd.f32 %v895, %v896
      %v898 = vsel %vm894, %v888, 0.0
      %v899 = vadd.f32 %v897, %v898
      %v900 = vsel %vm894, %v889, 0.0
      %v901 = vadd.f32 %v899, %v900
      %v902 = vsel %vm894, %v890, 0.0
      %v903 = vadd.f32 %v901, %v902
      %v904 = vsel %vm894, %v891, 0.0
      %v905 = vadd.f32 %v903, %v904
      %v906 = vsel %vm894, %v892, 0.0
      %v907 = vadd.f32 %v905, %v906
      %v908 = vsel %vm894, %v893, 0.0
      %v909 = vadd.f32 %v907, %v908
      %vm918 = vcmask 1041409
      %v919 = vsel %vm918, %v803, %v796
      %vm920 = vcmask 1042434
      %v921 = vsel %vm920, %v810, %v919
      %vm922 = vcmask 1043459
      %v923 = vsel %vm922, %v817, %v921
      %vm924 = vcmask 1044484
      %v925 = vsel %vm924, %v824, %v923
      %vm926 = vcmask 1045509
      %v927 = vsel %vm926, %v831, %v925
      %vm928 = vcmask 1046534
      %v929 = vsel %vm928, %v838, %v927
      %vm930 = vcmask 1047559
      %v931 = vsel %vm930, %v845, %v929
      %v933 = vadd.f32 %v455, %v931
      %v934 = vld [vmem:[%s7] sm:$0x1]
      %v935 = vld [vmem:[%s8] sm:$0x1]
      %v936 = vsel %vm479, %v933, 0.0
      %937 = vadd.xlane.f32.xlu0 %v936
      %v938 = vpop.xlane.xlu0 %937
      %v939 = vrcp.pop 32.0
      %v940 = vmul.f32 32.0, %v939
      %v941 = vsub.f32 1.0, %v940
      %v942 = vmul.f32 %v939, %v941
      %v943 = vadd.f32 %v939, %v942
      %vm944 = vweird.f32 %v939
      %v945 = vsel %vm944, %v939, %v943
      %v946 = vmul.f32 %v938, %v945
      %v947 = vsub.f32 %v933, %v946
      %v948 = vmul.f32 %v947, %v947
      %v949 = vsel %vm479, %v948, 0.0
      %950 = vadd.xlane.f32.xlu0 %v949
      %v951 = vpop.xlane.xlu0 %950
      %v952 = vrcp.pop 31.0
      %v953 = vmul.f32 31.0, %v952
      %v954 = vsub.f32 1.0, %v953
      %v955 = vmul.f32 %v952, %v954
      %v956 = vadd.f32 %v952, %v955
      %vm957 = vweird.f32 %v952
      %v958 = vsel %vm957, %v952, %v956
      %v959 = vmul.f32 %v951, %v958
      %v961 = vperm.slane %v934, 0
      %v963 = vmul.f32 %v961, %v947
      %v964 = vrsqrt.pop %v959
      %v965 = vmul.f32 %v964, %v959
      %v966 = vmul.f32 %v965, %v964
      %v967 = vmul.f32 0.5, %v966
      %v968 = vsub.f32 1.5, %v967
      %v969 = vmul.f32 %v964, %v968
      %v970 = vmul.f32 %v959, %v969
      %vm971 = vcmp.eq.f32.partialorder %v959, inf
      %v972 = vsel %vm971, %v959, %v970
      %vm973 = vcmp.eq.f32.partialorder %v959, 0.0
      %v974 = vand.u32 %v959, 2147483648
      %v975 = vsel %vm973, %v974, %v972
      %v976 = vadd.f32 %v975, 1e-06
      %v977 = vrcp.pop %v976
      %v978 = vmul.f32 %v976, %v977
      %v979 = vsub.f32 1.0, %v978
      %v980 = vmul.f32 %v977, %v979
      %v981 = vadd.f32 %v977, %v980
      %vm982 = vweird.f32 %v976
      %vm983 = vweird.f32 %v977
      %vm984 = vmor %vm982, %vm983
      %v985 = vsel %vm984, %v977, %v981
      %v986 = vand.u32 2147483647, %v976
      %vm987 = vcmp.eq.f32.partialorder %v986, 8.507059e+37
      %v988 = vand.u32 %v976, 2147483648
      %v989 = vor.u32 1.1754944e-38, %v988
      %v990 = vsel %vm987, %v989, %v985
      %v991 = vmul.f32 %v963, %v990
      %v993 = vperm.slane %v935, 0
      %v995 = vadd.f32 %v991, %v993
      %996 = vst.msk [vmem:[%s449] sm:$0xff] %vm479, %v995
      %998 = vrot.lane.b32.xlu0 %v909, 96
      %v999 = vpop.permute.xlu0 %998
      %v1001 = vadd.f32 %v456, %v999
      %v1002 = vld [vmem:[%s9] sm:$0x1]
      %v1003 = vld [vmem:[%s10] sm:$0x1]
      %v1004 = vsel %vm789, %v1001, 0.0
      %1005 = vadd.xlane.f32.xlu0 %v1004
      %v1006 = vpop.xlane.xlu0 %1005
      %v1007 = vmul.f32 %v1006, %v945
      %v1008 = vsub.f32 %v1001, %v1007
      %v1009 = vmul.f32 %v1008, %v1008
      %v1010 = vsel %vm789, %v1009, 0.0
      %1011 = vadd.xlane.f32.xlu0 %v1010
      %v1012 = vpop.xlane.xlu0 %1011
      %v1013 = vmul.f32 %v1012, %v958
      %v1015 = vperm.slane %v1002, 0
      %v1017 = vmul.f32 %v1015, %v1008
      %v1018 = vrsqrt.pop %v1013
      %v1019 = vmul.f32 %v1018, %v1013
      %v1020 = vmul.f32 %v1019, %v1018
      %v1021 = vmul.f32 0.5, %v1020
      %v1022 = vsub.f32 1.5, %v1021
      %v1023 = vmul.f32 %v1018, %v1022
      %v1024 = vmul.f32 %v1013, %v1023
      %vm1025 = vcmp.eq.f32.partialorder %v1013, inf
      %v1026 = vsel %vm1025, %v1013, %v1024
      %vm1027 = vcmp.eq.f32.partialorder %v1013, 0.0
      %v1028 = vand.u32 %v1013, 2147483648
      %v1029 = vsel %vm1027, %v1028, %v1026
      %v1030 = vadd.f32 %v1029, 1e-06
      %v1031 = vrcp.pop %v1030
      %v1032 = vmul.f32 %v1030, %v1031
      %v1033 = vsub.f32 1.0, %v1032
      %v1034 = vmul.f32 %v1031, %v1033
      %v1035 = vadd.f32 %v1031, %v1034
      %vm1036 = vweird.f32 %v1030
      %vm1037 = vweird.f32 %v1031
      %vm1038 = vmor %vm1036, %vm1037
      %v1039 = vsel %vm1038, %v1031, %v1035
      %v1040 = vand.u32 2147483647, %v1030
      %vm1041 = vcmp.eq.f32.partialorder %v1040, 8.507059e+37
      %v1042 = vand.u32 %v1030, 2147483648
      %v1043 = vor.u32 1.1754944e-38, %v1042
      %v1044 = vsel %vm1041, %v1043, %v1039
      %v1045 = vmul.f32 %v1017, %v1044
      %v1047 = vperm.slane %v1003, 0
      %v1049 = vadd.f32 %v1045, %v1047
      %1050 = vst.msk [vmem:[%s453] sm:$0xf] %vm789, %v1049
      %p1051 = scmp.lt.s32.totalorder %s24, 1
      %s1052 = scalar_select %p1051, %s24, 1
      %s1053 = smul.addr %s1052, 8
      %s1054 = scalar_lea.vmem %s11, %s1053
      %p1055 = scmp.lt.s32.totalorder %s24, 1
      %s1056 = scalar_select %p1055, %s24, 1
      %s1057 = smul.addr %s1056, 4
      %s1058 = scalar_lea.vmem %s12, %s1057
      // Predicated region
      $region65: #{gat_encoder_forward.14} parent=63 // pred_check
        %p1059 = pneg %p288
      $region66: #{gat_encoder_forward.14} parent=63 // pred_check_branch
        %1061 = sbr.rel (%p1059) target = $region68
      $region67: #{gat_encoder_forward.14} parent=63 // pred_region
        _
      $region68: #{gat_encoder_forward.14} parent=63 // pred_fallthru
        _
      // Predicated region
      $region69: #{gat_encoder_forward.14} parent=63 // pred_check
        %p1062 = pneg %p314
      $region70: #{gat_encoder_forward.14} parent=63 // pred_check_branch
        %1064 = sbr.rel (%p1062) target = $region72
      $region71: #{gat_encoder_forward.14} parent=63 // pred_region
        _
      $region72: #{gat_encoder_forward.14} parent=63 // pred_fallthru
        _
    $region64: #{gat_encoder_forward.14} parent=5 // pred_fallthru
      _
    %p1065 = scmp.le.s32.totalorder 2, %s19
    // Predicated region
    $region73: #{gat_encoder_forward.14} parent=5 // pred_check
      %p1066 = pneg %p1065
    $region74: #{gat_encoder_forward.14} parent=5 // pred_check_branch
      %1068 = sbr.rel (%p1066) target = $region76
    $region75: #{gat_encoder_forward.14} parent=5 // pred_region
      %s1069 = ssub.s32 %s19, 2
      // Predicated region
      $region77: #{gat_encoder_forward.14} parent=75 // pred_check
        %p1070 = pneg %p294
      $region78: #{gat_encoder_forward.14} parent=75 // pred_check_branch
        %1072 = sbr.rel (%p1070) target = $region80
      $region79: #{gat_encoder_forward.14} parent=75 // pred_region
        %p1073 = scmp.lt.s32.totalorder %s25, 1
        %s1074 = scalar_select %p1073, %s25, 1
        %s1075 = smul.addr %s1074, 8
        %s1076 = scalar_lea.vmem %s11, %s1075
      $region80: #{gat_encoder_forward.14} parent=75 // pred_fallthru
        _
      // Predicated region
      $region81: #{gat_encoder_forward.14} parent=75 // pred_check
        %p1077 = pneg %p320
      $region82: #{gat_encoder_forward.14} parent=75 // pred_check_branch
        %1079 = sbr.rel (%p1077) target = $region84
      $region83: #{gat_encoder_forward.14} parent=75 // pred_region
        %p1080 = scmp.lt.s32.totalorder %s25, 1
        %s1081 = scalar_select %p1080, %s25, 1
        %s1082 = smul.addr %s1081, 4
        %s1083 = scalar_lea.vmem %s12, %s1082
      $region84: #{gat_encoder_forward.14} parent=75 // pred_fallthru
        _
    $region76: #{gat_encoder_forward.14} parent=5 // pred_fallthru
      _
  $region6: #{gat_encoder_forward.14} parent=0 // loop_footer
    %s23 = sadd.s32 1, %s19
  $region7: #{gat_encoder_forward.14} parent=0 // loop_footer_branch
    %18 = sbr.rel target = $region3
  $region8: #{gat_encoder_forward.14} parent=0 // loop_exit
    _

// kernel: gat_encoder_forward.16
$region0: #{gat_encoder_forward.16}
  #allocation0 [shape = 'u32[]', space=smem, size = 0x4, offset = 0x4, fixed_abs, tag = 'smem constant byte address 0x4 - core index']
  #allocation1 [shape = 'u32[72,128]{1,0:T(1,128)}', space=vmem, size = 0x9000, scoped, tag = 'internal scratch']
  %s0 = inlined_call_operand.vmem [shape: f32[8,32], index: 0, kind: input, shape index: {}]
  %s1 = inlined_call_operand.vmem [shape: bf16[32,64], index: 1, kind: input, shape index: {}]
  %s2 = inlined_call_operand.hbm [shape: f32[1,64], index: 2, kind: input, shape index: {}]
  %s3 = inlined_call_operand.vmem [shape: bf16[64,32], index: 3, kind: input, shape index: {}]
  %s4 = inlined_call_operand.hbm [shape: f32[1,32], index: 4, kind: input, shape index: {}]
  %s5 = inlined_call_operand.hbm [shape: f32[1,32], index: 5, kind: input, shape index: {}]
  %s6 = inlined_call_operand.hbm [shape: f32[1,32], index: 6, kind: input, shape index: {}]
  %s7 = inlined_call_operand.vmem [shape: f32[8,32], index: 7, kind: output, shape index: {}]
  %s8 = sld [smem:[#allocation0]]
  $region54: #{gat_encoder_forward.16} parent=0
    _
  %s10 = ssub.s32 1, %s8
  %s11 = scalar_select 0, %s10, %s8
  $region1: #{gat_encoder_forward.16} parent=0
    #allocation2 [shape = 'u8[512]{0}', space=vmem, size = 0x400, scoped, tag = 'input window, operand 2, single buffered']
    #allocation3 [shape = 's32[1]{0}', space=sflag, size = 0x4, scoped, tag = 'scoped memory for gat_encoder_forward.16']
    #allocation4 [shape = 'u8[512]{0}', space=vmem, size = 0x400, scoped, tag = 'input window, operand 4, single buffered']
    #allocation5 [shape = 's32[1]{0}', space=sflag, size = 0x4, scoped, tag = 'scoped memory for gat_encoder_forward.16']
    #allocation6 [shape = 'u8[512]{0}', space=vmem, size = 0x400, scoped, tag = 'input window, operand 5, single buffered']
    #allocation7 [shape = 'u8[512]{0}', space=vmem, size = 0x400, scoped, tag = 'input window, operand 6, single buffered']
    #allocation8 [shape = 's32[1]{0}', space=sflag, size = 0x4, scoped, tag = 'scoped memory for gat_encoder_forward.16']
    %12 = vsyncpa [#allocation3], 0
    %13 = vsyncpa [#allocation5], 0
    %14 = vsyncpa [#allocation8], 0
    // Predicated region
    $region2: #{gat_encoder_forward.16} parent=1 // pred_check
      _
    $region3: #{gat_encoder_forward.16} parent=1 // pred_check_branch
      %16 = sbr.rel (0) target = $region5
    $region4: #{gat_encoder_forward.16} parent=1 // pred_region
      _
    $region5: #{gat_encoder_forward.16} parent=1 // pred_fallthru
      _
    // Predicated region
    $region6: #{gat_encoder_forward.16} parent=1 // pred_check
      _
    $region7: #{gat_encoder_forward.16} parent=1 // pred_check_branch
      %18 = sbr.rel (0) target = $region9
    $region8: #{gat_encoder_forward.16} parent=1 // pred_region
      _
    $region9: #{gat_encoder_forward.16} parent=1 // pred_fallthru
      _
    // Predicated region
    $region10: #{gat_encoder_forward.16} parent=1 // pred_check
      _
    $region11: #{gat_encoder_forward.16} parent=1 // pred_check_branch
      %20 = sbr.rel (0) target = $region13
    $region12: #{gat_encoder_forward.16} parent=1 // pred_region
      %22 = vsyncadd [#allocation3], 0
      %s24 = sshll.u32 %s2, 4
      %s25 = int_to_ptr.hbm [resolvable:$true] %s24
      %s26 = sshll.u32 [#allocation2], 4
      %s27 = int_to_ptr.vmem [resolvable:$true] %s26
      %29 = dma.hbm_to_vmem [thread:$0]  %s25, 16, %s27, [#allocation3]
    $region13: #{gat_encoder_forward.16} parent=1 // pred_fallthru
      _
    // Predicated region
    $region14: #{gat_encoder_forward.16} parent=1 // pred_check
      _
    $region15: #{gat_encoder_forward.16} parent=1 // pred_check_branch
      %31 = sbr.rel (0) target = $region17
    $region16: #{gat_encoder_forward.16} parent=1 // pred_region
      _
    $region17: #{gat_encoder_forward.16} parent=1 // pred_fallthru
      _
    // Predicated region
    $region18: #{gat_encoder_forward.16} parent=1 // pred_check
      _
    $region19: #{gat_encoder_forward.16} parent=1 // pred_check_branch
      %33 = sbr.rel (0) target = $region21
    $region20: #{gat_encoder_forward.16} parent=1 // pred_region
      %35 = vsyncadd [#allocation5], 0
      %s37 = sshll.u32 %s4, 4
      %s38 = int_to_ptr.hbm [resolvable:$true] %s37
      %s39 = sshll.u32 [#allocation4], 4
      %s40 = int_to_ptr.vmem [resolvable:$true] %s39
      %42 = dma.hbm_to_vmem [thread:$0]  %s38, 16, %s40, [#allocation5]
    $region21: #{gat_encoder_forward.16} parent=1 // pred_fallthru
      _
    // Predicated region
    $region22: #{gat_encoder_forward.16} parent=1 // pred_check
      _
    $region23: #{gat_encoder_forward.16} parent=1 // pred_check_branch
      %44 = sbr.rel (0) target = $region25
    $region24: #{gat_encoder_forward.16} parent=1 // pred_region
      %46 = vsyncadd [#allocation5], 0
      %s48 = sshll.u32 %s5, 4
      %s49 = int_to_ptr.hbm [resolvable:$true] %s48
      %s50 = sshll.u32 [#allocation6], 4
      %s51 = int_to_ptr.vmem [resolvable:$true] %s50
      %53 = dma.hbm_to_vmem [thread:$0]  %s49, 16, %s51, [#allocation5]
    $region25: #{gat_encoder_forward.16} parent=1 // pred_fallthru
      _
    // Predicated region
    $region26: #{gat_encoder_forward.16} parent=1 // pred_check
      _
    $region27: #{gat_encoder_forward.16} parent=1 // pred_check_branch
      %55 = sbr.rel (0) target = $region29
    $region28: #{gat_encoder_forward.16} parent=1 // pred_region
      %57 = vsyncadd [#allocation8], 0
      %s59 = sshll.u32 %s6, 4
      %s60 = int_to_ptr.hbm [resolvable:$true] %s59
      %s61 = sshll.u32 [#allocation7], 4
      %s62 = int_to_ptr.vmem [resolvable:$true] %s61
      %64 = dma.hbm_to_vmem [thread:$0]  %s60, 16, %s62, [#allocation8]
    $region29: #{gat_encoder_forward.16} parent=1 // pred_fallthru
      _
    // Predicated region
    $region30: #{gat_encoder_forward.16} parent=1 // pred_check
      _
    $region31: #{gat_encoder_forward.16} parent=1 // pred_check_branch
      %66 = sbr.rel (0) target = $region33
    $region32: #{gat_encoder_forward.16} parent=1 // pred_region
      %68 = dma.done [#allocation3], 16
    $region33: #{gat_encoder_forward.16} parent=1 // pred_fallthru
      _
    // Predicated region
    $region34: #{gat_encoder_forward.16} parent=1 // pred_check
      _
    $region35: #{gat_encoder_forward.16} parent=1 // pred_check_branch
      %70 = sbr.rel (0) target = $region37
    $region36: #{gat_encoder_forward.16} parent=1 // pred_region
      %72 = dma.done [#allocation5], 16
    $region37: #{gat_encoder_forward.16} parent=1 // pred_fallthru
      _
    // Predicated region
    $region38: #{gat_encoder_forward.16} parent=1 // pred_check
      _
    $region39: #{gat_encoder_forward.16} parent=1 // pred_check_branch
      %74 = sbr.rel (0) target = $region41
    $region40: #{gat_encoder_forward.16} parent=1 // pred_region
      %76 = dma.done [#allocation5], 16
    $region41: #{gat_encoder_forward.16} parent=1 // pred_fallthru
      _
    // Predicated region
    $region42: #{gat_encoder_forward.16} parent=1 // pred_check
      _
    $region43: #{gat_encoder_forward.16} parent=1 // pred_check_branch
      %78 = sbr.rel (0) target = $region45
    $region44: #{gat_encoder_forward.16} parent=1 // pred_region
      %80 = dma.done [#allocation8], 16
    $region45: #{gat_encoder_forward.16} parent=1 // pred_fallthru
      _
    %v82 = vld [vmem:[%s0] sm:$0xff]
    %v83 = vpack.c.bf16 %v82, %v82
    %v84 = vld [vmem:[%s1] sm:$0xf]
    %v85 = vld [vmem:[%s1 + $0x4] sm:$0xf]
    %v86 = vld [vmem:[%s1 + $0x8] sm:$0xf]
    %v87 = vld [vmem:[%s1 + $0xc] sm:$0xf]
    %v88 = vld [vmem:[#allocation2] sm:$0x1]
    %v90 = vperm.slane %v88, 0
    %v96 = vunpack.c.l.b16 %v84
    %v97 = vunpack.c.l.b16 %v85
    %v98 = vunpack.c.l.b16 %v86
    %v99 = vunpack.c.l.b16 %v87
    %v100 = vpack.c.b16 %v97, %v96
    %v101 = vpack.c.b16 %v99, %v98
    %vm104 = vcmask 261120
    %v106 = vsel %vm104, %v83, 0
    %108 = vmatpush.bf16.msra.mxu0 0
    %109 = vmatpush.bf16.msra.mxu0 0
    %110 = vmatpush.bf16.msra.mxu0 0
    %111 = vmatpush.bf16.msra.mxu0 0
    %112 = vmatpush.bf16.msra.mxu0 0
    %113 = vmatpush.bf16.msra.mxu0 0
    %114 = vmatpush.bf16.msra.mxu0 %v101
    %115 = vmatpush.bf16.msra.mxu0 %v100
    %116 = vmatmul.bf16.gmra.mxu0 %v106
    %v117 = vpop.f32.mrf.mxu0
    %v118 = vadd.f32 %v90, %v117
    %v119 = vpop.f32.mrf.mxu0
    %120 = vdwg.mxu0
    %v121 = vmax.f32 %v118, 0.0
    %v122 = vpack.c.bf16 %v121, %v121
    %v123 = vld [vmem:[%s3] sm:$0xf]
    %v124 = vld [vmem:[%s3 + $0x4] sm:$0xf]
    %v125 = vld [vmem:[%s3 + $0x8] sm:$0xf]
    %v126 = vld [vmem:[%s3 + $0xc] sm:$0xf]
    %v127 = vld [vmem:[%s3 + $0x10] sm:$0xf]
    %v128 = vld [vmem:[%s3 + $0x14] sm:$0xf]
    %v129 = vld [vmem:[%s3 + $0x18] sm:$0xf]
    %v130 = vld [vmem:[%s3 + $0x1c] sm:$0xf]
    %v131 = vld [vmem:[#allocation4] sm:$0x1]
    %v133 = vperm.slane %v131, 0
    %v143 = vunpack.c.l.b16 %v123
    %v144 = vunpack.c.l.b16 %v124
    %v145 = vunpack.c.l.b16 %v125
    %v146 = vunpack.c.l.b16 %v126
    %v147 = vunpack.c.l.b16 %v127
    %v148 = vunpack.c.l.b16 %v128
    %v149 = vunpack.c.l.b16 %v129
    %v150 = vunpack.c.l.b16 %v130
    %v151 = vpack.c.b16 %v144, %v143
    %v152 = vpack.c.b16 %v146, %v145
    %v153 = vpack.c.b16 %v148, %v147
    %v154 = vpack.c.b16 %v150, %v149
    %vm159 = vcmask 523264
    %v161 = vsel %vm159, %v122, 0
    %163 = vmatpush.bf16.msra.mxu0 0
    %164 = vmatpush.bf16.msra.mxu0 0
    %165 = vmatpush.bf16.msra.mxu0 0
    %166 = vmatpush.bf16.msra.mxu0 0
    %167 = vmatpush.bf16.msra.mxu0 %v154
    %168 = vmatpush.bf16.msra.mxu0 %v153
    %169 = vmatpush.bf16.msra.mxu0 %v152
    %170 = vmatpush.bf16.msra.mxu0 %v151
    %171 = vmatmul.bf16.gmra.mxu0 %v161
    %v172 = vpop.f32.mrf.mxu0
    %v173 = vadd.f32 %v133, %v172
    %v174 = vpop.f32.mrf.mxu0
    %175 = vdwg.mxu0
    %v176 = vadd.f32 %v82, %v173
    %v177 = vld [vmem:[#allocation6] sm:$0x1]
    %v178 = vld [vmem:[#allocation7] sm:$0x1]
    %v179 = vsel %vm104, %v176, 0.0
    %180 = vadd.xlane.f32.xlu0 %v179
    %v181 = vpop.xlane.xlu0 %180
    %v182 = vrcp.pop 32.0
    %v183 = vmul.f32 32.0, %v182
    %v184 = vsub.f32 1.0, %v183
    %v185 = vmul.f32 %v182, %v184
    %v186 = vadd.f32 %v182, %v185
    %vm187 = vweird.f32 %v182
    %v188 = vsel %vm187, %v182, %v186
    %v189 = vmul.f32 %v181, %v188
    %v190 = vsub.f32 %v176, %v189
    %v191 = vmul.f32 %v190, %v190
    %v192 = vsel %vm104, %v191, 0.0
    %193 = vadd.xlane.f32.xlu0 %v192
    %v194 = vpop.xlane.xlu0 %193
    %v195 = vrcp.pop 31.0
    %v196 = vmul.f32 31.0, %v195
    %v197 = vsub.f32 1.0, %v196
    %v198 = vmul.f32 %v195, %v197
    %v199 = vadd.f32 %v195, %v198
    %vm200 = vweird.f32 %v195
    %v201 = vsel %vm200, %v195, %v199
    %v202 = vmul.f32 %v194, %v201
    %v204 = vperm.slane %v177, 0
    %v206 = vmul.f32 %v204, %v190
    %v207 = vrsqrt.pop %v202
    %v208 = vmul.f32 %v207, %v202
    %v209 = vmul.f32 %v208, %v207
    %v210 = vmul.f32 0.5, %v209
    %v211 = vsub.f32 1.5, %v210
    %v212 = vmul.f32 %v207, %v211
    %v213 = vmul.f32 %v202, %v212
    %vm214 = vcmp.eq.f32.partialorder %v202, inf
    %v215 = vsel %vm214, %v202, %v213
    %vm216 = vcmp.eq.f32.partialorder %v202, 0.0
    %v217 = vand.u32 %v202, 2147483648
    %v218 = vsel %vm216, %v217, %v215
    %v219 = vadd.f32 %v218, 1e-06
    %v220 = vrcp.pop %v219
    %v221 = vmul.f32 %v219, %v220
    %v222 = vsub.f32 1.0, %v221
    %v223 = vmul.f32 %v220, %v222
    %v224 = vadd.f32 %v220, %v223
    %vm225 = vweird.f32 %v219
    %vm226 = vweird.f32 %v220
    %vm227 = vmor %vm225, %vm226
    %v228 = vsel %vm227, %v220, %v224
    %v229 = vand.u32 2147483647, %v219
    %vm230 = vcmp.eq.f32.partialorder %v229, 8.507059e+37
    %v231 = vand.u32 %v219, 2147483648
    %v232 = vor.u32 1.1754944e-38, %v231
    %v233 = vsel %vm230, %v232, %v228
    %v234 = vmul.f32 %v206, %v233
    %v236 = vperm.slane %v178, 0
    %v238 = vadd.f32 %v234, %v236
    %239 = vst.msk [vmem:[%s7] sm:$0xff] %vm104, %v238
    // Predicated region
    $region46: #{gat_encoder_forward.16} parent=1 // pred_check
      _
    $region47: #{gat_encoder_forward.16} parent=1 // pred_check_branch
      %241 = sbr.rel (0) target = $region49
    $region48: #{gat_encoder_forward.16} parent=1 // pred_region
      _
    $region49: #{gat_encoder_forward.16} parent=1 // pred_fallthru
      _
    // Predicated region
    $region50: #{gat_encoder_forward.16} parent=1 // pred_check
      _
    $region51: #{gat_encoder_forward.16} parent=1 // pred_check_branch
      %243 = sbr.rel (0) target = $region53
    $region52: #{gat_encoder_forward.16} parent=1 // pred_region
      _
    $region53: #{gat_encoder_forward.16} parent=1 // pred_fallthru
      _
    %244 = vsyncpa [#allocation3], 1
    %245 = vsyncpa [#allocation5], 1
    %246 = vsyncpa [#allocation8], 1

// kernel: gat_encoder_forward.15
$region0: #{gat_encoder_forward.15}
  #allocation0 [shape = 'u32[]', space=smem, size = 0x4, offset = 0x4, fixed_abs, tag = 'smem constant byte address 0x4 - core index']
  #allocation1 [shape = 'u32[72,128]{1,0:T(1,128)}', space=vmem, size = 0x9000, scoped, tag = 'internal scratch']
  %s0 = inlined_call_operand.vmem [shape: f32[16,32], index: 0, kind: input, shape index: {}]
  %s1 = inlined_call_operand.vmem [shape: bf16[32,64], index: 1, kind: input, shape index: {}]
  %s2 = inlined_call_operand.vmem [shape: f32[1,64], index: 2, kind: input, shape index: {}]
  %s3 = inlined_call_operand.vmem [shape: bf16[64,32], index: 3, kind: input, shape index: {}]
  %s4 = inlined_call_operand.vmem [shape: f32[1,32], index: 4, kind: input, shape index: {}]
  %s5 = inlined_call_operand.vmem [shape: f32[1,32], index: 5, kind: input, shape index: {}]
  %s6 = inlined_call_operand.vmem [shape: f32[1,32], index: 6, kind: input, shape index: {}]
  %s7 = inlined_call_operand.vmem [shape: f32[16,32], index: 7, kind: output, shape index: {}]
  %s8 = sld [smem:[#allocation0]]
  $region61: #{gat_encoder_forward.15} parent=0
    _
  %s10 = ssub.s32 1, %s8
  %s11 = scalar_select 0, %s10, %s8
  loop: start=0, step=1, limit=4
  $region2: #{gat_encoder_forward.15} parent=0 // loop_pre_header
    _
  $region3: #{gat_encoder_forward.15} parent=0 // loop_header
    %s13 = sphi 0, %s17
    %p14 = scmp.ge.s32.totalorder %s13, 4
    %s23 = sphi 0, %s25
    %s26 = sphi 0, %s23
    %s27 = sphi 0, %s26
    %s43 = sphi 0, %s27
    %s47 = sphi 0, %s47
    %s49 = sphi 0, %s47
    %s50 = sphi 0, %s49
    %s64 = sphi 0, %s50
    %s68 = sphi 0, %s68
    %s70 = sphi 0, %s68
    %s71 = sphi 0, %s70
    %s85 = sphi 0, %s71
    %s89 = sphi 0, %s89
    %s91 = sphi 0, %s89
    %s92 = sphi 0, %s91
    %s106 = sphi 0, %s92
    %s110 = sphi 0, %s110
    %s112 = sphi 0, %s110
    %s113 = sphi 0, %s112
    %s127 = sphi 0, %s113
    %s131 = sphi 0, %s131
    %s133 = sphi 0, %s131
    %s134 = sphi 0, %s133
    %s148 = sphi 0, %s134
    %s152 = sphi 0, %s152
    %s154 = sphi 0, %s152
    %s155 = sphi 0, %s154
    %s169 = sphi 0, %s155
    %s175 = sphi 0, %s177
    %s178 = sphi 0, %s175
    %s179 = sphi 0, %s178
    %s195 = sphi 0, %s179
  $region4: #{gat_encoder_forward.15} parent=0 // loop_header_branch
    %16 = sbr.rel (%p14) target = $region8
  $region5: #{gat_encoder_forward.15} parent=0 // loop_body
    %s18 = ssub.s32 %s13, 1
    %s19 = ssub.s32 %s13, 2
    %s20 = sadd.s32 %s13, 1
    %s21 = ssub.s32 %s13, %s20
    %p22 = scmp.eq.s32.totalorder %s21, 0
    %s24 = sadd.s32 %s23, 1
    %s25 = scalar_select %p22, %s23, %s24
    %p28 = pneg %p22
    %p29 = scmp.eq.s32.totalorder %s13, 1
    %p30 = por %p28, %p29
    %p31 = scmp.ne.s32.totalorder %s23, %s26
    %p32 = scmp.eq.s32.totalorder %s13, 0
    %p33 = por %p31, %p32
    %p34 = scmp.ne.s32.totalorder %s23, %s26
    %p35 = scmp.eq.s32.totalorder %s18, 1
    %p36 = por %p34, %p35
    %p37 = scmp.ne.s32.totalorder %s26, %s27
    %p38 = scmp.eq.s32.totalorder %s18, 0
    %p39 = por %p37, %p38
    %p40 = scmp.ne.s32.totalorder %s26, %s27
    %p41 = scmp.eq.s32.totalorder %s19, 1
    %p42 = por %p40, %p41
    %p44 = scmp.ne.s32.totalorder %s27, %s43
    %p45 = scmp.eq.s32.totalorder %s19, 0
    %p46 = por %p44, %p45
    %s48 = sadd.s32 %s47, 1
    %p51 = scmp.eq.s32.totalorder %s13, 1
    %p52 = scmp.ne.s32.totalorder %s47, %s49
    %p53 = scmp.eq.s32.totalorder %s13, 0
    %p54 = por %p52, %p53
    %p55 = scmp.ne.s32.totalorder %s47, %s49
    %p56 = scmp.eq.s32.totalorder %s18, 1
    %p57 = por %p55, %p56
    %p58 = scmp.ne.s32.totalorder %s49, %s50
    %p59 = scmp.eq.s32.totalorder %s18, 0
    %p60 = por %p58, %p59
    %p61 = scmp.ne.s32.totalorder %s49, %s50
    %p62 = scmp.eq.s32.totalorder %s19, 1
    %p63 = por %p61, %p62
    %p65 = scmp.ne.s32.totalorder %s50, %s64
    %p66 = scmp.eq.s32.totalorder %s19, 0
    %p67 = por %p65, %p66
    %s69 = sadd.s32 %s68, 1
    %p72 = scmp.eq.s32.totalorder %s13, 1
    %p73 = scmp.ne.s32.totalorder %s68, %s70
    %p74 = scmp.eq.s32.totalorder %s13, 0
    %p75 = por %p73, %p74
    %p76 = scmp.ne.s32.totalorder %s68, %s70
    %p77 = scmp.eq.s32.totalorder %s18, 1
    %p78 = por %p76, %p77
    %p79 = scmp.ne.s32.totalorder %s70, %s71
    %p80 = scmp.eq.s32.totalorder %s18, 0
    %p81 = por %p79, %p80
    %p82 = scmp.ne.s32.totalorder %s70, %s71
    %p83 = scmp.eq.s32.totalorder %s19, 1
    %p84 = por %p82, %p83
    %p86 = scmp.ne.s32.totalorder %s71, %s85
    %p87 = scmp.eq.s32.totalorder %s19, 0
    %p88 = por %p86, %p87
    %s90 = sadd.s32 %s89, 1
    %p93 = scmp.eq.s32.totalorder %s13, 1
    %p94 = scmp.ne.s32.totalorder %s89, %s91
    %p95 = scmp.eq.s32.totalorder %s13, 0
    %p96 = por %p94, %p95
    %p97 = scmp.ne.s32.totalorder %s89, %s91
    %p98 = scmp.eq.s32.totalorder %s18, 1
    %p99 = por %p97, %p98
    %p100 = scmp.ne.s32.totalorder %s91, %s92
    %p101 = scmp.eq.s32.totalorder %s18, 0
    %p102 = por %p100, %p101
    %p103 = scmp.ne.s32.totalorder %s91, %s92
    %p104 = scmp.eq.s32.totalorder %s19, 1
    %p105 = por %p103, %p104
    %p107 = scmp.ne.s32.totalorder %s92, %s106
    %p108 = scmp.eq.s32.totalorder %s19, 0
    %p109 = por %p107, %p108
    %s111 = sadd.s32 %s110, 1
    %p114 = scmp.eq.s32.totalorder %s13, 1
    %p115 = scmp.ne.s32.totalorder %s110, %s112
    %p116 = scmp.eq.s32.totalorder %s13, 0
    %p117 = por %p115, %p116
    %p118 = scmp.ne.s32.totalorder %s110, %s112
    %p119 = scmp.eq.s32.totalorder %s18, 1
    %p120 = por %p118, %p119
    %p121 = scmp.ne.s32.totalorder %s112, %s113
    %p122 = scmp.eq.s32.totalorder %s18, 0
    %p123 = por %p121, %p122
    %p124 = scmp.ne.s32.totalorder %s112, %s113
    %p125 = scmp.eq.s32.totalorder %s19, 1
    %p126 = por %p124, %p125
    %p128 = scmp.ne.s32.totalorder %s113, %s127
    %p129 = scmp.eq.s32.totalorder %s19, 0
    %p130 = por %p128, %p129
    %s132 = sadd.s32 %s131, 1
    %p135 = scmp.eq.s32.totalorder %s13, 1
    %p136 = scmp.ne.s32.totalorder %s131, %s133
    %p137 = scmp.eq.s32.totalorder %s13, 0
    %p138 = por %p136, %p137
    %p139 = scmp.ne.s32.totalorder %s131, %s133
    %p140 = scmp.eq.s32.totalorder %s18, 1
    %p141 = por %p139, %p140
    %p142 = scmp.ne.s32.totalorder %s133, %s134
    %p143 = scmp.eq.s32.totalorder %s18, 0
    %p144 = por %p142, %p143
    %p145 = scmp.ne.s32.totalorder %s133, %s134
    %p146 = scmp.eq.s32.totalorder %s19, 1
    %p147 = por %p145, %p146
    %p149 = scmp.ne.s32.totalorder %s134, %s148
    %p150 = scmp.eq.s32.totalorder %s19, 0
    %p151 = por %p149, %p150
    %s153 = sadd.s32 %s152, 1
    %p156 = scmp.eq.s32.totalorder %s13, 1
    %p157 = scmp.ne.s32.totalorder %s152, %s154
    %p158 = scmp.eq.s32.totalorder %s13, 0
    %p159 = por %p157, %p158
    %p160 = scmp.ne.s32.totalorder %s152, %s154
    %p161 = scmp.eq.s32.totalorder %s18, 1
    %p162 = por %p160, %p161
    %p163 = scmp.ne.s32.totalorder %s154, %s155
    %p164 = scmp.eq.s32.totalorder %s18, 0
    %p165 = por %p163, %p164
    %p166 = scmp.ne.s32.totalorder %s154, %s155
    %p167 = scmp.eq.s32.totalorder %s19, 1
    %p168 = por %p166, %p167
    %p170 = scmp.ne.s32.totalorder %s155, %s169
    %p171 = scmp.eq.s32.totalorder %s19, 0
    %p172 = por %p170, %p171
    %s173 = ssub.s32 %s13, %s20
    %p174 = scmp.eq.s32.totalorder %s173, 0
    %s176 = sadd.s32 %s175, 1
    %s177 = scalar_select %p174, %s175, %s176
    %p180 = pneg %p174
    %p181 = scmp.eq.s32.totalorder %s13, 1
    %p182 = por %p180, %p181
    %p183 = scmp.ne.s32.totalorder %s175, %s178
    %p184 = scmp.eq.s32.totalorder %s13, 0
    %p185 = por %p183, %p184
    %p186 = scmp.ne.s32.totalorder %s175, %s178
    %p187 = scmp.eq.s32.totalorder %s18, 1
    %p188 = por %p186, %p187
    %p189 = scmp.ne.s32.totalorder %s178, %s179
    %p190 = scmp.eq.s32.totalorder %s18, 0
    %p191 = por %p189, %p190
    %p192 = scmp.ne.s32.totalorder %s178, %s179
    %p193 = scmp.eq.s32.totalorder %s19, 1
    %p194 = por %p192, %p193
    %p196 = scmp.ne.s32.totalorder %s179, %s195
    %p197 = scmp.eq.s32.totalorder %s19, 0
    %p198 = por %p196, %p197
    %p199 = scmp.le.s32.totalorder 1, %s13
    %p200 = scmp.lt.s32.totalorder %s13, 3
    %p201 = pnand %p199, %p200
    %p202 = pneg %p201
    // Predicated region
    $region9: #{gat_encoder_forward.15} parent=5 // pred_check
      _
    $region10: #{gat_encoder_forward.15} parent=5 // pred_check_branch
      %204 = sbr.rel (%p201) target = $region12
    $region11: #{gat_encoder_forward.15} parent=5 // pred_region
      %s205 = ssub.s32 %s13, 1
      // Predicated region
      $region13: #{gat_encoder_forward.15} parent=11 // pred_check
        %p206 = pneg %p60
      $region14: #{gat_encoder_forward.15} parent=11 // pred_check_branch
        %208 = sbr.rel (%p206) target = $region16
      $region15: #{gat_encoder_forward.15} parent=11 // pred_region
        _
      $region16: #{gat_encoder_forward.15} parent=11 // pred_fallthru
        _
      // Predicated region
      $region17: #{gat_encoder_forward.15} parent=11 // pred_check
        %p209 = pneg %p81
      $region18: #{gat_encoder_forward.15} parent=11 // pred_check_branch
        %211 = sbr.rel (%p209) target = $region20
      $region19: #{gat_encoder_forward.15} parent=11 // pred_region
        _
      $region20: #{gat_encoder_forward.15} parent=11 // pred_fallthru
        _
      // Predicated region
      $region21: #{gat_encoder_forward.15} parent=11 // pred_check
        %p212 = pneg %p102
      $region22: #{gat_encoder_forward.15} parent=11 // pred_check_branch
        %214 = sbr.rel (%p212) target = $region24
      $region23: #{gat_encoder_forward.15} parent=11 // pred_region
        _
      $region24: #{gat_encoder_forward.15} parent=11 // pred_fallthru
        _
      // Predicated region
      $region25: #{gat_encoder_forward.15} parent=11 // pred_check
        %p215 = pneg %p123
      $region26: #{gat_encoder_forward.15} parent=11 // pred_check_branch
        %217 = sbr.rel (%p215) target = $region28
      $region27: #{gat_encoder_forward.15} parent=11 // pred_region
        _
      $region28: #{gat_encoder_forward.15} parent=11 // pred_fallthru
        _
      // Predicated region
      $region29: #{gat_encoder_forward.15} parent=11 // pred_check
        %p218 = pneg %p144
      $region30: #{gat_encoder_forward.15} parent=11 // pred_check_branch
        %220 = sbr.rel (%p218) target = $region32
      $region31: #{gat_encoder_forward.15} parent=11 // pred_region
        _
      $region32: #{gat_encoder_forward.15} parent=11 // pred_fallthru
        _
      // Predicated region
      $region33: #{gat_encoder_forward.15} parent=11 // pred_check
        %p221 = pneg %p165
      $region34: #{gat_encoder_forward.15} parent=11 // pred_check_branch
        %223 = sbr.rel (%p221) target = $region36
      $region35: #{gat_encoder_forward.15} parent=11 // pred_region
        _
      $region36: #{gat_encoder_forward.15} parent=11 // pred_fallthru
        _
    $region12: #{gat_encoder_forward.15} parent=5 // pred_fallthru
      _
    %p224 = scmp.lt.s32.totalorder %s13, 2
    // Predicated region
    $region37: #{gat_encoder_forward.15} parent=5 // pred_check
      %p225 = pneg %p224
    $region38: #{gat_encoder_forward.15} parent=5 // pred_check_branch
      %227 = sbr.rel (%p225) target = $region40
    $region39: #{gat_encoder_forward.15} parent=5 // pred_region
      // Predicated region
      $region41: #{gat_encoder_forward.15} parent=39 // pred_check
        %p228 = pneg %p33
      $region42: #{gat_encoder_forward.15} parent=39 // pred_check_branch
        %230 = sbr.rel (%p228) target = $region44
      $region43: #{gat_encoder_forward.15} parent=39 // pred_region
        %p231 = scmp.lt.s32.totalorder %s13, 1
        %s232 = scalar_select %p231, %s13, 1
        %s233 = smul.addr %s232, 8
        %s234 = scalar_lea.vmem %s0, %s233
      $region44: #{gat_encoder_forward.15} parent=39 // pred_fallthru
        _
    $region40: #{gat_encoder_forward.15} parent=5 // pred_fallthru
      _
    %p235 = scmp.le.s32.totalorder 1, %s13
    %p236 = scmp.lt.s32.totalorder %s13, 3
    %p237 = pnand %p235, %p236
    %p238 = pneg %p237
    // Predicated region
    $region45: #{gat_encoder_forward.15} parent=5 // pred_check
      _
    $region46: #{gat_encoder_forward.15} parent=5 // pred_check_branch
      %240 = sbr.rel (%p237) target = $region48
    $region47: #{gat_encoder_forward.15} parent=5 // pred_region
      %s241 = ssub.s32 %s13, 1
      %p242 = scmp.lt.s32.totalorder %s18, 1
      %s243 = scalar_select %p242, %s18, 1
      %s244 = smul.addr %s243, 8
      %s245 = scalar_lea.vmem %s0, %s244
      %p246 = pneg %p39
      %p247 = pneg %p36
      %p248 = pneg %p60
      %p249 = pneg %p57
      %p250 = pneg %p81
      %p251 = pneg %p78
      %p252 = pneg %p102
      %p253 = pneg %p99
      %p254 = pneg %p123
      %p255 = pneg %p120
      %p256 = pneg %p144
      %p257 = pneg %p141
      %p258 = pneg %p165
      %p259 = pneg %p162
      %p260 = pneg %p191
      %p261 = pneg %p188
      %p262 = scmp.lt.s32.totalorder %s18, 1
      %s263 = scalar_select %p262, %s18, 1
      %s264 = smul.addr %s263, 8
      %s265 = scalar_lea.vmem %s7, %s264
      %p266 = scmp.lt.s32.totalorder %s18, 1
      %s267 = scalar_select %p266, %s18, 1
      %s268 = smul.addr %s267, 8
      %s269 = scalar_lea.vmem %s0, %s268
      %p270 = scmp.lt.s32.totalorder %s18, 1
      %s271 = scalar_select %p270, %s18, 1
      %s272 = smul.addr %s271, 8
      %s273 = scalar_lea.vmem %s7, %s272
      %v275 = vld [vmem:[%s269] sm:$0xff]
      %v276 = vpack.c.bf16 %v275, %v275
      %v277 = vld [vmem:[%s1] sm:$0xf]
      %v278 = vld [vmem:[%s1 + $0x4] sm:$0xf]
      %v279 = vld [vmem:[%s1 + $0x8] sm:$0xf]
      %v280 = vld [vmem:[%s1 + $0xc] sm:$0xf]
      %v281 = vld [vmem:[%s2] sm:$0x1]
      %v283 = vperm.slane %v281, 0
      %v289 = vunpack.c.l.b16 %v277
      %v290 = vunpack.c.l.b16 %v278
      %v291 = vunpack.c.l.b16 %v279
      %v292 = vunpack.c.l.b16 %v280
      %v293 = vpack.c.b16 %v290, %v289
      %v294 = vpack.c.b16 %v292, %v291
      %vm297 = vcmask 261120
      %v299 = vsel %vm297, %v276, 0
      %301 = vmatpush.bf16.msra.mxu0 0
      %302 = vmatpush.bf16.msra.mxu0 0
      %303 = vmatpush.bf16.msra.mxu0 0
      %304 = vmatpush.bf16.msra.mxu0 0
      %305 = vmatpush.bf16.msra.mxu0 0
      %306 = vmatpush.bf16.msra.mxu0 0
      %307 = vmatpush.bf16.msra.mxu0 %v294
      %308 = vmatpush.bf16.msra.mxu0 %v293
      %309 = vmatmul.bf16.gmra.mxu0 %v299
      %v310 = vpop.f32.mrf.mxu0
      %v311 = vadd.f32 %v283, %v310
      %v312 = vpop.f32.mrf.mxu0
      %313 = vdwg.mxu0
      %v314 = vmax.f32 %v311, 0.0
      %v315 = vpack.c.bf16 %v314, %v314
      %v316 = vld [vmem:[%s3] sm:$0xf]
      %v317 = vld [vmem:[%s3 + $0x4] sm:$0xf]
      %v318 = vld [vmem:[%s3 + $0x8] sm:$0xf]
      %v319 = vld [vmem:[%s3 + $0xc] sm:$0xf]
      %v320 = vld [vmem:[%s3 + $0x10] sm:$0xf]
      %v321 = vld [vmem:[%s3 + $0x14] sm:$0xf]
      %v322 = vld [vmem:[%s3 + $0x18] sm:$0xf]
      %v323 = vld [vmem:[%s3 + $0x1c] sm:$0xf]
      %v324 = vld [vmem:[%s4] sm:$0x1]
      %v326 = vperm.slane %v324, 0
      %v336 = vunpack.c.l.b16 %v316
      %v337 = vunpack.c.l.b16 %v317
      %v338 = vunpack.c.l.b16 %v318
      %v339 = vunpack.c.l.b16 %v319
      %v340 = vunpack.c.l.b16 %v320
      %v341 = vunpack.c.l.b16 %v321
      %v342 = vunpack.c.l.b16 %v322
      %v343 = vunpack.c.l.b16 %v323
      %v344 = vpack.c.b16 %v337, %v336
      %v345 = vpack.c.b16 %v339, %v338
      %v346 = vpack.c.b16 %v341, %v340
      %v347 = vpack.c.b16 %v343, %v342
      %vm352 = vcmask 523264
      %v354 = vsel %vm352, %v315, 0
      %356 = vmatpush.bf16.msra.mxu0 0
      %357 = vmatpush.bf16.msra.mxu0 0
      %358 = vmatpush.bf16.msra.mxu0 0
      %359 = vmatpush.bf16.msra.mxu0 0
      %360 = vmatpush.bf16.msra.mxu0 %v347
      %361 = vmatpush.bf16.msra.mxu0 %v346
      %362 = vmatpush.bf16.msra.mxu0 %v345
      %363 = vmatpush.bf16.msra.mxu0 %v344
      %364 = vmatmul.bf16.gmra.mxu0 %v354
      %v365 = vpop.f32.mrf.mxu0
      %v366 = vadd.f32 %v326, %v365
      %v367 = vpop.f32.mrf.mxu0
      %368 = vdwg.mxu0
      %v369 = vadd.f32 %v275, %v366
      %v370 = vld [vmem:[%s5] sm:$0x1]
      %v371 = vld [vmem:[%s6] sm:$0x1]
      %v372 = vsel %vm297, %v369, 0.0
      %373 = vadd.xlane.f32.xlu0 %v372
      %v374 = vpop.xlane.xlu0 %373
      %v375 = vrcp.pop 32.0
      %v376 = vmul.f32 32.0, %v375
      %v377 = vsub.f32 1.0, %v376
      %v378 = vmul.f32 %v375, %v377
      %v379 = vadd.f32 %v375, %v378
      %vm380 = vweird.f32 %v375
      %v381 = vsel %vm380, %v375, %v379
      %v382 = vmul.f32 %v374, %v381
      %v383 = vsub.f32 %v369, %v382
      %v384 = vmul.f32 %v383, %v383
      %v385 = vsel %vm297, %v384, 0.0
      %386 = vadd.xlane.f32.xlu0 %v385
      %v387 = vpop.xlane.xlu0 %386
      %v388 = vrcp.pop 31.0
      %v389 = vmul.f32 31.0, %v388
      %v390 = vsub.f32 1.0, %v389
      %v391 = vmul.f32 %v388, %v390
      %v392 = vadd.f32 %v388, %v391
      %vm393 = vweird.f32 %v388
      %v394 = vsel %vm393, %v388, %v392
      %v395 = vmul.f32 %v387, %v394
      %v397 = vperm.slane %v370, 0
      %v399 = vmul.f32 %v397, %v383
      %v400 = vrsqrt.pop %v395
      %v401 = vmul.f32 %v400, %v395
      %v402 = vmul.f32 %v401, %v400
      %v403 = vmul.f32 0.5, %v402
      %v404 = vsub.f32 1.5, %v403
      %v405 = vmul.f32 %v400, %v404
      %v406 = vmul.f32 %v395, %v405
      %vm407 = vcmp.eq.f32.partialorder %v395, inf
      %v408 = vsel %vm407, %v395, %v406
      %vm409 = vcmp.eq.f32.partialorder %v395, 0.0
      %v410 = vand.u32 %v395, 2147483648
      %v411 = vsel %vm409, %v410, %v408
      %v412 = vadd.f32 %v411, 1e-06
      %v413 = vrcp.pop %v412
      %v414 = vmul.f32 %v412, %v413
      %v415 = vsub.f32 1.0, %v414
      %v416 = vmul.f32 %v413, %v415
      %v417 = vadd.f32 %v413, %v416
      %vm418 = vweird.f32 %v412
      %vm419 = vweird.f32 %v413
      %vm420 = vmor %vm418, %vm419
      %v421 = vsel %vm420, %v413, %v417
      %v422 = vand.u32 2147483647, %v412
      %vm423 = vcmp.eq.f32.partialorder %v422, 8.507059e+37
      %v424 = vand.u32 %v412, 2147483648
      %v425 = vor.u32 1.1754944e-38, %v424
      %v426 = vsel %vm423, %v425, %v421
      %v427 = vmul.f32 %v399, %v426
      %v429 = vperm.slane %v371, 0
      %v431 = vadd.f32 %v427, %v429
      %432 = vst.msk [vmem:[%s273] sm:$0xff] %vm297, %v431
      %p433 = scmp.lt.s32.totalorder %s18, 1
      %s434 = scalar_select %p433, %s18, 1
      %s435 = smul.addr %s434, 8
      %s436 = scalar_lea.vmem %s7, %s435
      // Predicated region
      $region49: #{gat_encoder_forward.15} parent=47 // pred_check
        %p437 = pneg %p188
      $region50: #{gat_encoder_forward.15} parent=47 // pred_check_branch
        %439 = sbr.rel (%p437) target = $region52
      $region51: #{gat_encoder_forward.15} parent=47 // pred_region
        _
      $region52: #{gat_encoder_forward.15} parent=47 // pred_fallthru
        _
    $region48: #{gat_encoder_forward.15} parent=5 // pred_fallthru
      _
    %p440 = scmp.le.s32.totalorder 2, %s13
    // Predicated region
    $region53: #{gat_encoder_forward.15} parent=5 // pred_check
      %p441 = pneg %p440
    $region54: #{gat_encoder_forward.15} parent=5 // pred_check_branch
      %443 = sbr.rel (%p441) target = $region56
    $region55: #{gat_encoder_forward.15} parent=5 // pred_region
      %s444 = ssub.s32 %s13, 2
      // Predicated region
      $region57: #{gat_encoder_forward.15} parent=55 // pred_check
        %p445 = pneg %p194
      $region58: #{gat_encoder_forward.15} parent=55 // pred_check_branch
        %447 = sbr.rel (%p445) target = $region60
      $region59: #{gat_encoder_forward.15} parent=55 // pred_region
        %p448 = scmp.lt.s32.totalorder %s19, 1
        %s449 = scalar_select %p448, %s19, 1
        %s450 = smul.addr %s449, 8
        %s451 = scalar_lea.vmem %s7, %s450
      $region60: #{gat_encoder_forward.15} parent=55 // pred_fallthru
        _
    $region56: #{gat_encoder_forward.15} parent=5 // pred_fallthru
      _
  $region6: #{gat_encoder_forward.15} parent=0 // loop_footer
    %s17 = sadd.s32 1, %s13
  $region7: #{gat_encoder_forward.15} parent=0 // loop_footer_branch
    %12 = sbr.rel target = $region3
  $region8: #{gat_encoder_forward.15} parent=0 // loop_exit
    _

// kernel: gat_encoder_forward.18
$region0: #{gat_encoder_forward.18}
  #allocation0 [shape = 'u32[]', space=smem, size = 0x4, offset = 0x4, fixed_abs, tag = 'smem constant byte address 0x4 - core index']
  #allocation1 [shape = 'u32[72,128]{1,0:T(1,128)}', space=vmem, size = 0x9000, scoped, tag = 'internal scratch']
  %s0 = inlined_call_operand.vmem [shape: f32[2,4,32], index: 0, kind: input, shape index: {}]
  %s1 = inlined_call_operand.vmem [shape: bf16[32,64], index: 1, kind: input, shape index: {}]
  %s2 = inlined_call_operand.vmem [shape: f32[1,64], index: 2, kind: input, shape index: {}]
  %s3 = inlined_call_operand.vmem [shape: f32[2,1,4], index: 3, kind: input, shape index: {}]
  %s4 = inlined_call_operand.hbm [shape: f32[1,32], index: 4, kind: input, shape index: {}]
  %s5 = inlined_call_operand.hbm [shape: f32[1,32], index: 5, kind: input, shape index: {}]
  %s6 = inlined_call_operand.vmem [shape: f32[2,4,32], index: 6, kind: output, shape index: {}]
  %s7 = sld [smem:[#allocation0]]
  $region65: #{gat_encoder_forward.18} parent=0
    _
  %s9 = ssub.s32 1, %s7
  %s10 = scalar_select 0, %s9, %s7
  $region1: #{gat_encoder_forward.18} parent=0
    #allocation2 [shape = 'u8[512]{0}', space=vmem, size = 0x400, scoped, tag = 'input window, operand 4, single buffered']
    #allocation3 [shape = 's32[2]{0}', space=sflag, size = 0x8, scoped, tag = 'scoped memory for gat_encoder_forward.18']
    #allocation4 [shape = 'u8[512]{0}', space=vmem, size = 0x400, scoped, tag = 'input window, operand 5, single buffered']
    #allocation5 [shape = 's32[1]{0}', space=sflag, size = 0x4, scoped, tag = 'scoped memory for gat_encoder_forward.18']
    %11 = vsyncpa [#allocation3], 0
    %12 = vsyncpa [#allocation5], 0
    loop: start=0, step=1, limit=4
    $region2: #{gat_encoder_forward.18} parent=1 // loop_pre_header
      _
    $region3: #{gat_encoder_forward.18} parent=1 // loop_header
      %s14 = sphi 0, %s18
      %p15 = scmp.ge.s32.totalorder %s14, 4
      %s24 = sphi 0, %s26
      %s27 = sphi 0, %s24
      %s28 = sphi 0, %s27
      %s44 = sphi 0, %s28
      %s48 = sphi 0, %s48
      %s50 = sphi 0, %s48
      %s51 = sphi 0, %s50
      %s65 = sphi 0, %s51
      %s69 = sphi 0, %s69
      %s71 = sphi 0, %s69
      %s72 = sphi 0, %s71
      %s86 = sphi 0, %s72
      %s92 = sphi 0, %s94
      %s95 = sphi 0, %s92
      %s96 = sphi 0, %s95
      %s112 = sphi 0, %s96
      %s116 = sphi 0, %s116
      %s118 = sphi 0, %s116
      %s119 = sphi 0, %s118
      %s133 = sphi 0, %s119
      %s137 = sphi 0, %s137
      %s139 = sphi 0, %s137
      %s140 = sphi 0, %s139
      %s154 = sphi 0, %s140
      %s160 = sphi 0, %s162
      %s163 = sphi 0, %s160
      %s164 = sphi 0, %s163
      %s180 = sphi 0, %s164
    $region4: #{gat_encoder_forward.18} parent=1 // loop_header_branch
      %17 = sbr.rel (%p15) target = $region8
    $region5: #{gat_encoder_forward.18} parent=1 // loop_body
      %s19 = ssub.s32 %s14, 1
      %s20 = ssub.s32 %s14, 2
      %s21 = sadd.s32 %s14, 1
      %s22 = ssub.s32 %s14, %s21
      %p23 = scmp.eq.s32.totalorder %s22, 0
      %s25 = sadd.s32 %s24, 1
      %s26 = scalar_select %p23, %s24, %s25
      %p29 = pneg %p23
      %p30 = scmp.eq.s32.totalorder %s14, 1
      %p31 = por %p29, %p30
      %p32 = scmp.ne.s32.totalorder %s24, %s27
      %p33 = scmp.eq.s32.totalorder %s14, 0
      %p34 = por %p32, %p33
      %p35 = scmp.ne.s32.totalorder %s24, %s27
      %p36 = scmp.eq.s32.totalorder %s19, 1
      %p37 = por %p35, %p36
      %p38 = scmp.ne.s32.totalorder %s27, %s28
      %p39 = scmp.eq.s32.totalorder %s19, 0
      %p40 = por %p38, %p39
      %p41 = scmp.ne.s32.totalorder %s27, %s28
      %p42 = scmp.eq.s32.totalorder %s20, 1
      %p43 = por %p41, %p42
      %p45 = scmp.ne.s32.totalorder %s28, %s44
      %p46 = scmp.eq.s32.totalorder %s20, 0
      %p47 = por %p45, %p46
      %s49 = sadd.s32 %s48, 1
      %p52 = scmp.eq.s32.totalorder %s14, 1
      %p53 = scmp.ne.s32.totalorder %s48, %s50
      %p54 = scmp.eq.s32.totalorder %s14, 0
      %p55 = por %p53, %p54
      %p56 = scmp.ne.s32.totalorder %s48, %s50
      %p57 = scmp.eq.s32.totalorder %s19, 1
      %p58 = por %p56, %p57
      %p59 = scmp.ne.s32.totalorder %s50, %s51
      %p60 = scmp.eq.s32.totalorder %s19, 0
      %p61 = por %p59, %p60
      %p62 = scmp.ne.s32.totalorder %s50, %s51
      %p63 = scmp.eq.s32.totalorder %s20, 1
      %p64 = por %p62, %p63
      %p66 = scmp.ne.s32.totalorder %s51, %s65
      %p67 = scmp.eq.s32.totalorder %s20, 0
      %p68 = por %p66, %p67
      %s70 = sadd.s32 %s69, 1
      %p73 = scmp.eq.s32.totalorder %s14, 1
      %p74 = scmp.ne.s32.totalorder %s69, %s71
      %p75 = scmp.eq.s32.totalorder %s14, 0
      %p76 = por %p74, %p75
      %p77 = scmp.ne.s32.totalorder %s69, %s71
      %p78 = scmp.eq.s32.totalorder %s19, 1
      %p79 = por %p77, %p78
      %p80 = scmp.ne.s32.totalorder %s71, %s72
      %p81 = scmp.eq.s32.totalorder %s19, 0
      %p82 = por %p80, %p81
      %p83 = scmp.ne.s32.totalorder %s71, %s72
      %p84 = scmp.eq.s32.totalorder %s20, 1
      %p85 = por %p83, %p84
      %p87 = scmp.ne.s32.totalorder %s72, %s86
      %p88 = scmp.eq.s32.totalorder %s20, 0
      %p89 = por %p87, %p88
      %s90 = ssub.s32 %s14, %s21
      %p91 = scmp.eq.s32.totalorder %s90, 0
      %s93 = sadd.s32 %s92, 1
      %s94 = scalar_select %p91, %s92, %s93
      %p97 = pneg %p91
      %p98 = scmp.eq.s32.totalorder %s14, 1
      %p99 = por %p97, %p98
      %p100 = scmp.ne.s32.totalorder %s92, %s95
      %p101 = scmp.eq.s32.totalorder %s14, 0
      %p102 = por %p100, %p101
      %p103 = scmp.ne.s32.totalorder %s92, %s95
      %p104 = scmp.eq.s32.totalorder %s19, 1
      %p105 = por %p103, %p104
      %p106 = scmp.ne.s32.totalorder %s95, %s96
      %p107 = scmp.eq.s32.totalorder %s19, 0
      %p108 = por %p106, %p107
      %p109 = scmp.ne.s32.totalorder %s95, %s96
      %p110 = scmp.eq.s32.totalorder %s20, 1
      %p111 = por %p109, %p110
      %p113 = scmp.ne.s32.totalorder %s96, %s112
      %p114 = scmp.eq.s32.totalorder %s20, 0
      %p115 = por %p113, %p114
      %s117 = sadd.s32 %s116, 1
      %p120 = scmp.eq.s32.totalorder %s14, 1
      %p121 = scmp.ne.s32.totalorder %s116, %s118
      %p122 = scmp.eq.s32.totalorder %s14, 0
      %p123 = por %p121, %p122
      %p124 = scmp.ne.s32.totalorder %s116, %s118
      %p125 = scmp.eq.s32.totalorder %s19, 1
      %p126 = por %p124, %p125
      %p127 = scmp.ne.s32.totalorder %s118, %s119
      %p128 = scmp.eq.s32.totalorder %s19, 0
      %p129 = por %p127, %p128
      %p130 = scmp.ne.s32.totalorder %s118, %s119
      %p131 = scmp.eq.s32.totalorder %s20, 1
      %p132 = por %p130, %p131
      %p134 = scmp.ne.s32.totalorder %s119, %s133
      %p135 = scmp.eq.s32.totalorder %s20, 0
      %p136 = por %p134, %p135
      %s138 = sadd.s32 %s137, 1
      %p141 = scmp.eq.s32.totalorder %s14, 1
      %p142 = scmp.ne.s32.totalorder %s137, %s139
      %p143 = scmp.eq.s32.totalorder %s14, 0
      %p144 = por %p142, %p143
      %p145 = scmp.ne.s32.totalorder %s137, %s139
      %p146 = scmp.eq.s32.totalorder %s19, 1
      %p147 = por %p145, %p146
      %p148 = scmp.ne.s32.totalorder %s139, %s140
      %p149 = scmp.eq.s32.totalorder %s19, 0
      %p150 = por %p148, %p149
      %p151 = scmp.ne.s32.totalorder %s139, %s140
      %p152 = scmp.eq.s32.totalorder %s20, 1
      %p153 = por %p151, %p152
      %p155 = scmp.ne.s32.totalorder %s140, %s154
      %p156 = scmp.eq.s32.totalorder %s20, 0
      %p157 = por %p155, %p156
      %s158 = ssub.s32 %s14, %s21
      %p159 = scmp.eq.s32.totalorder %s158, 0
      %s161 = sadd.s32 %s160, 1
      %s162 = scalar_select %p159, %s160, %s161
      %p165 = pneg %p159
      %p166 = scmp.eq.s32.totalorder %s14, 1
      %p167 = por %p165, %p166
      %p168 = scmp.ne.s32.totalorder %s160, %s163
      %p169 = scmp.eq.s32.totalorder %s14, 0
      %p170 = por %p168, %p169
      %p171 = scmp.ne.s32.totalorder %s160, %s163
      %p172 = scmp.eq.s32.totalorder %s19, 1
      %p173 = por %p171, %p172
      %p174 = scmp.ne.s32.totalorder %s163, %s164
      %p175 = scmp.eq.s32.totalorder %s19, 0
      %p176 = por %p174, %p175
      %p177 = scmp.ne.s32.totalorder %s163, %s164
      %p178 = scmp.eq.s32.totalorder %s20, 1
      %p179 = por %p177, %p178
      %p181 = scmp.ne.s32.totalorder %s164, %s180
      %p182 = scmp.eq.s32.totalorder %s20, 0
      %p183 = por %p181, %p182
      %p184 = scmp.le.s32.totalorder 1, %s14
      %p185 = scmp.lt.s32.totalorder %s14, 3
      %p186 = pnand %p184, %p185
      %p187 = pneg %p186
      // Predicated region
      $region9: #{gat_encoder_forward.18} parent=5 // pred_check
        _
      $region10: #{gat_encoder_forward.18} parent=5 // pred_check_branch
        %189 = sbr.rel (%p186) target = $region12
      $region11: #{gat_encoder_forward.18} parent=5 // pred_region
        %s190 = ssub.s32 %s14, 1
        // Predicated region
        $region13: #{gat_encoder_forward.18} parent=11 // pred_check
          %p191 = pneg %p61
        $region14: #{gat_encoder_forward.18} parent=11 // pred_check_branch
          %193 = sbr.rel (%p191) target = $region16
        $region15: #{gat_encoder_forward.18} parent=11 // pred_region
          _
        $region16: #{gat_encoder_forward.18} parent=11 // pred_fallthru
          _
        // Predicated region
        $region17: #{gat_encoder_forward.18} parent=11 // pred_check
          %p194 = pneg %p82
        $region18: #{gat_encoder_forward.18} parent=11 // pred_check_branch
          %196 = sbr.rel (%p194) target = $region20
        $region19: #{gat_encoder_forward.18} parent=11 // pred_region
          _
        $region20: #{gat_encoder_forward.18} parent=11 // pred_fallthru
          _
        // Predicated region
        $region21: #{gat_encoder_forward.18} parent=11 // pred_check
          %p197 = pneg %p129
        $region22: #{gat_encoder_forward.18} parent=11 // pred_check_branch
          %199 = sbr.rel (%p197) target = $region24
        $region23: #{gat_encoder_forward.18} parent=11 // pred_region
          %201 = vsyncadd [#allocation3], 0
          %s203 = sshll.u32 %s4, 4
          %s204 = int_to_ptr.hbm [resolvable:$true] %s203
          %s205 = sshll.u32 [#allocation2], 4
          %s206 = int_to_ptr.vmem [resolvable:$true] %s205
          %208 = dma.hbm_to_vmem [thread:$0]  %s204, 16, %s206, [#allocation3]
        $region24: #{gat_encoder_forward.18} parent=11 // pred_fallthru
          _
        // Predicated region
        $region25: #{gat_encoder_forward.18} parent=11 // pred_check
          %p209 = pneg %p150
        $region26: #{gat_encoder_forward.18} parent=11 // pred_check_branch
          %211 = sbr.rel (%p209) target = $region28
        $region27: #{gat_encoder_forward.18} parent=11 // pred_region
          %213 = vsyncadd [#allocation5], 0
          %s215 = sshll.u32 %s5, 4
          %s216 = int_to_ptr.hbm [resolvable:$true] %s215
          %s217 = sshll.u32 [#allocation4], 4
          %s218 = int_to_ptr.vmem [resolvable:$true] %s217
          %220 = dma.hbm_to_vmem [thread:$0]  %s216, 16, %s218, [#allocation5]
        $region28: #{gat_encoder_forward.18} parent=11 // pred_fallthru
          _
      $region12: #{gat_encoder_forward.18} parent=5 // pred_fallthru
        _
      %p221 = scmp.lt.s32.totalorder %s14, 2
      // Predicated region
      $region29: #{gat_encoder_forward.18} parent=5 // pred_check
        %p222 = pneg %p221
      $region30: #{gat_encoder_forward.18} parent=5 // pred_check_branch
        %224 = sbr.rel (%p222) target = $region32
      $region31: #{gat_encoder_forward.18} parent=5 // pred_region
        // Predicated region
        $region33: #{gat_encoder_forward.18} parent=31 // pred_check
          %p225 = pneg %p34
        $region34: #{gat_encoder_forward.18} parent=31 // pred_check_branch
          %227 = sbr.rel (%p225) target = $region36
        $region35: #{gat_encoder_forward.18} parent=31 // pred_region
          %p228 = scmp.lt.s32.totalorder %s14, 1
          %s229 = scalar_select %p228, %s14, 1
          %s230 = smul.addr %s229, 4
          %s231 = scalar_lea.vmem %s0, %s230
        $region36: #{gat_encoder_forward.18} parent=31 // pred_fallthru
          _
        // Predicated region
        $region37: #{gat_encoder_forward.18} parent=31 // pred_check
          %p232 = pneg %p102
        $region38: #{gat_encoder_forward.18} parent=31 // pred_check_branch
          %234 = sbr.rel (%p232) target = $region40
        $region39: #{gat_encoder_forward.18} parent=31 // pred_region
          %p235 = scmp.lt.s32.totalorder %s14, 1
          %s236 = scalar_select %p235, %s14, 1
          %s237 = scalar_lea.vmem %s3, %s236
        $region40: #{gat_encoder_forward.18} parent=31 // pred_fallthru
          _
      $region32: #{gat_encoder_forward.18} parent=5 // pred_fallthru
        _
      %p238 = scmp.le.s32.totalorder 1, %s14
      %p239 = scmp.lt.s32.totalorder %s14, 3
      %p240 = pnand %p238, %p239
      %p241 = pneg %p240
      // Predicated region
      $region41: #{gat_encoder_forward.18} parent=5 // pred_check
        _
      $region42: #{gat_encoder_forward.18} parent=5 // pred_check_branch
        %243 = sbr.rel (%p240) target = $region44
      $region43: #{gat_encoder_forward.18} parent=5 // pred_region
        %s244 = ssub.s32 %s14, 1
        // Predicated region
        $region45: #{gat_encoder_forward.18} parent=43 // pred_check
          %p245 = pneg %p129
        $region46: #{gat_encoder_forward.18} parent=43 // pred_check_branch
          %247 = sbr.rel (%p245) target = $region48
        $region47: #{gat_encoder_forward.18} parent=43 // pred_region
          %249 = dma.done [#allocation3], 16
        $region48: #{gat_encoder_forward.18} parent=43 // pred_fallthru
          _
        // Predicated region
        $region49: #{gat_encoder_forward.18} parent=43 // pred_check
          %p250 = pneg %p150
        $region50: #{gat_encoder_forward.18} parent=43 // pred_check_branch
          %252 = sbr.rel (%p250) target = $region52
        $region51: #{gat_encoder_forward.18} parent=43 // pred_region
          %254 = dma.done [#allocation5], 16
        $region52: #{gat_encoder_forward.18} parent=43 // pred_fallthru
          _
        %p255 = scmp.lt.s32.totalorder %s19, 1
        %s256 = scalar_select %p255, %s19, 1
        %s257 = smul.addr %s256, 4
        %s258 = scalar_lea.vmem %s0, %s257
        %p259 = pneg %p40
        %p260 = pneg %p37
        %p261 = pneg %p61
        %p262 = pneg %p58
        %p263 = pneg %p82
        %p264 = pneg %p79
        %p265 = scmp.lt.s32.totalorder %s19, 1
        %s266 = scalar_select %p265, %s19, 1
        %s267 = scalar_lea.vmem %s3, %s266
        %p268 = pneg %p108
        %p269 = pneg %p105
        %p270 = pneg %p129
        %p271 = pneg %p126
        %p272 = pneg %p150
        %p273 = pneg %p147
        %p274 = pneg %p176
        %p275 = pneg %p173
        %p276 = scmp.lt.s32.totalorder %s19, 1
        %s277 = scalar_select %p276, %s19, 1
        %s278 = smul.addr %s277, 4
        %s279 = scalar_lea.vmem %s6, %s278
        %p280 = scmp.lt.s32.totalorder %s19, 1
        %s281 = scalar_select %p280, %s19, 1
        %s282 = smul.addr %s281, 4
        %s283 = scalar_lea.vmem %s0, %s282
        %p284 = scmp.lt.s32.totalorder %s19, 1
        %s285 = scalar_select %p284, %s19, 1
        %s286 = scalar_lea.vmem %s3, %s285
        %p287 = scmp.lt.s32.totalorder %s19, 1
        %s288 = scalar_select %p287, %s19, 1
        %s289 = smul.addr %s288, 4
        %s290 = scalar_lea.vmem %s6, %s289
        %v292 = vld [vmem:[%s283] sm:$0xf]
        %v293 = vpack.c.bf16 %v292, %v292
        %v294 = vld [vmem:[%s1] sm:$0xf]
        %v295 = vld [vmem:[%s1 + $0x4] sm:$0xf]
        %v296 = vld [vmem:[%s1 + $0x8] sm:$0xf]
        %v297 = vld [vmem:[%s1 + $0xc] sm:$0xf]
        %v298 = vld [vmem:[%s2] sm:$0x1]
        %v300 = vperm.slane %v298, 0
        %v306 = vunpack.c.l.b16 %v294
        %v307 = vunpack.c.l.b16 %v295
        %v308 = vunpack.c.l.b16 %v296
        %v309 = vunpack.c.l.b16 %v297
        %v310 = vpack.c.b16 %v307, %v306
        %v311 = vpack.c.b16 %v309, %v308
        %vm314 = vcmask 261120
        %v316 = vsel %vm314, %v293, 0
        %318 = vmatpush.bf16.msra.mxu0 0
        %319 = vmatpush.bf16.msra.mxu0 0
        %320 = vmatpush.bf16.msra.mxu0 0
        %321 = vmatpush.bf16.msra.mxu0 0
        %322 = vmatpush.bf16.msra.mxu0 0
        %323 = vmatpush.bf16.msra.mxu0 0
        %324 = vmatpush.bf16.msra.mxu0 %v311
        %325 = vmatpush.bf16.msra.mxu0 %v310
        %326 = vmatmul.bf16.gmra.mxu0 %v316
        %v327 = vpop.f32.mrf.mxu0
        %v328 = vadd.f32 %v300, %v327
        %v329 = vpop.f32.mrf.mxu0
        %330 = vdwg.mxu0
        %v331 = vld [vmem:[%s286] sm:$0x1]
        %v332 = vpack.c.bf16 %v328, %v328
        %334 = vrot.lane.b32.xlu0 %v332, 96
        %v335 = vpop.permute.xlu0 %334
        %vm336 = vcmask 64512
        %v338 = vsel %vm336, %v332, 0
        %v341 = vsel %vm336, %v335, 0
        %343 = vmatpush.bf16.xpose.msra.mxu0 0
        %344 = vmatpush.bf16.xpose.msra.mxu0 0
        %345 = vmatpush.bf16.xpose.msra.mxu0 0
        %346 = vmatpush.bf16.xpose.msra.mxu0 0
        %347 = vmatpush.bf16.xpose.msra.mxu0 0
        %348 = vmatpush.bf16.xpose.msra.mxu0 0
        %349 = vmatpush.bf16.xpose.msra.mxu0 0
        %350 = vmatpush.bf16.xpose.msra.mxu0 %v341
        %351 = vmatmul.bf16.gmra.mxu0 %v338
        %v352 = vpop.f32.mrf.mxu0
        %v353 = vadd.f32 0.0, %v352
        %v354 = vpop.f32.mrf.mxu0
        %355 = vdwg.mxu0
        %v356 = vmul.f32 %v353, 0.35355338
        %vm357 = vcmp.eq.f32.partialorder %v331, 0.0
        %v358 = vsel %vm357, 1, 0
        %v359 = vperm.slane %v358, 0
        %vm360 = vcmp.eq.s32.totalorder %v359, 1
        %v361 = vsel %vm360, -1e+09, %v356
        %vm362 = vcmask 27648
        %v363 = vsel %vm362, %v361, -inf
        %364 = vmax.xlane.f32.xlu0 %v363
        %v365 = vpop.xlane.xlu0 %364
        %v366 = vsub.f32 %v361, %v365
        %v367 = vmul.f32 %v366, 1.442695
        %v368 = vpow.pop %v367
        %v369 = vsel %vm362, %v368, 0.0
        %370 = vadd.xlane.f32.xlu0 %v369
        %v371 = vpop.xlane.xlu0 %370
        %v372 = vrcp.pop %v371
        %v373 = vmul.f32 %v368, %v372
        %v374 = vpack.c.bf16 %v373, %v373
        %vm375 = vcmask 31744
        %v377 = vsel %vm375, %v374, 0
        %vm379 = vcmask 1041408
        %v380 = vsel %vm379, %v293, 0
        %382 = vmatpush.bf16.msra.mxu0 0
        %383 = vmatpush.bf16.msra.mxu0 0
        %384 = vmatpush.bf16.msra.mxu0 0
        %385 = vmatpush.bf16.msra.mxu0 0
        %386 = vmatpush.bf16.msra.mxu0 0
        %387 = vmatpush.bf16.msra.mxu0 0
        %388 = vmatpush.bf16.msra.mxu0 0
        %389 = vmatpush.bf16.msra.mxu0 %v380
        %390 = vmatmul.bf16.gmra.mxu0 %v377
        %v391 = vpop.f32.mrf.mxu0
        %v392 = vadd.f32 0.0, %v391
        %v393 = vpop.f32.mrf.mxu0
        %394 = vdwg.mxu0
        %395 = vrot.lane.b32.xlu0 %v332, 120
        %v396 = vpop.permute.xlu0 %395
        %397 = vrot.lane.b32.xlu0 %v332, 88
        %v398 = vpop.permute.xlu0 %397
        %v400 = vsel %vm336, %v396, 0
        %v403 = vsel %vm336, %v398, 0
        %405 = vmatpush.bf16.xpose.msra.mxu0 0
        %406 = vmatpush.bf16.xpose.msra.mxu0 0
        %407 = vmatpush.bf16.xpose.msra.mxu0 0
        %408 = vmatpush.bf16.xpose.msra.mxu0 0
        %409 = vmatpush.bf16.xpose.msra.mxu0 0
        %410 = vmatpush.bf16.xpose.msra.mxu0 0
        %411 = vmatpush.bf16.xpose.msra.mxu0 0
        %412 = vmatpush.bf16.xpose.msra.mxu0 %v403
        %413 = vmatmul.bf16.gmra.mxu0 %v400
        %v414 = vpop.f32.mrf.mxu0
        %v415 = vadd.f32 0.0, %v414
        %v416 = vpop.f32.mrf.mxu0
        %417 = vdwg.mxu0
        %v418 = vmul.f32 %v415, 0.35355338
        %v419 = vsel %vm360, -1e+09, %v418
        %v420 = vsel %vm362, %v419, -inf
        %421 = vmax.xlane.f32.xlu0 %v420
        %v422 = vpop.xlane.xlu0 %421
        %v423 = vsub.f32 %v419, %v422
        %v424 = vmul.f32 %v423, 1.442695
        %v425 = vpow.pop %v424
        %v426 = vsel %vm362, %v425, 0.0
        %427 = vadd.xlane.f32.xlu0 %v426
        %v428 = vpop.xlane.xlu0 %427
        %v429 = vrcp.pop %v428
        %v430 = vmul.f32 %v425, %v429
        %v431 = vpack.c.bf16 %v430, %v430
        %433 = vrot.lane.b32.xlu0 %v293, 120
        %v434 = vpop.permute.xlu0 %433
        %v436 = vsel %vm375, %v431, 0
        %v439 = vsel %vm379, %v434, 0
        %441 = vmatpush.bf16.msra.mxu0 0
        %442 = vmatpush.bf16.msra.mxu0 0
        %443 = vmatpush.bf16.msra.mxu0 0
        %444 = vmatpush.bf16.msra.mxu0 0
        %445 = vmatpush.bf16.msra.mxu0 0
        %446 = vmatpush.bf16.msra.mxu0 0
        %447 = vmatpush.bf16.msra.mxu0 0
        %448 = vmatpush.bf16.msra.mxu0 %v439
        %449 = vmatmul.bf16.gmra.mxu0 %v436
        %v450 = vpop.f32.mrf.mxu0
        %v451 = vadd.f32 0.0, %v450
        %v452 = vpop.f32.mrf.mxu0
        %453 = vdwg.mxu0
        %454 = vrot.lane.b32.xlu0 %v332, 112
        %v455 = vpop.permute.xlu0 %454
        %456 = vrot.lane.b32.xlu0 %v332, 80
        %v457 = vpop.permute.xlu0 %456
        %v459 = vsel %vm336, %v455, 0
        %v462 = vsel %vm336, %v457, 0
        %464 = vmatpush.bf16.xpose.msra.mxu0 0
        %465 = vmatpush.bf16.xpose.msra.mxu0 0
        %466 = vmatpush.bf16.xpose.msra.mxu0 0
        %467 = vmatpush.bf16.xpose.msra.mxu0 0
        %468 = vmatpush.bf16.xpose.msra.mxu0 0
        %469 = vmatpush.bf16.xpose.msra.mxu0 0
        %470 = vmatpush.bf16.xpose.msra.mxu0 0
        %471 = vmatpush.bf16.xpose.msra.mxu0 %v462
        %472 = vmatmul.bf16.gmra.mxu0 %v459
        %v473 = vpop.f32.mrf.mxu0
        %v474 = vadd.f32 0.0, %v473
        %v475 = vpop.f32.mrf.mxu0
        %476 = vdwg.mxu0
        %v477 = vmul.f32 %v474, 0.35355338
        %v478 = vsel %vm360, -1e+09, %v477
        %v479 = vsel %vm362, %v478, -inf
        %480 = vmax.xlane.f32.xlu0 %v479
        %v481 = vpop.xlane.xlu0 %480
        %v482 = vsub.f32 %v478, %v481
        %v483 = vmul.f32 %v482, 1.442695
        %v484 = vpow.pop %v483
        %v485 = vsel %vm362, %v484, 0.0
        %486 = vadd.xlane.f32.xlu0 %v485
        %v487 = vpop.xlane.xlu0 %486
        %v488 = vrcp.pop %v487
        %v489 = vmul.f32 %v484, %v488
        %v490 = vpack.c.bf16 %v489, %v489
        %491 = vrot.lane.b32.xlu0 %v293, 112
        %v492 = vpop.permute.xlu0 %491
        %v494 = vsel %vm375, %v490, 0
        %v497 = vsel %vm379, %v492, 0
        %499 = vmatpush.bf16.msra.mxu0 0
        %500 = vmatpush.bf16.msra.mxu0 0
        %501 = vmatpush.bf16.msra.mxu0 0
        %502 = vmatpush.bf16.msra.mxu0 0
        %503 = vmatpush.bf16.msra.mxu0 0
        %504 = vmatpush.bf16.msra.mxu0 0
        %505 = vmatpush.bf16.msra.mxu0 0
        %506 = vmatpush.bf16.msra.mxu0 %v497
        %507 = vmatmul.bf16.gmra.mxu0 %v494
        %v508 = vpop.f32.mrf.mxu0
        %v509 = vadd.f32 0.0, %v508
        %v510 = vpop.f32.mrf.mxu0
        %511 = vdwg.mxu0
        %512 = vrot.lane.b32.xlu0 %v332, 104
        %v513 = vpop.permute.xlu0 %512
        %514 = vrot.lane.b32.xlu0 %v332, 72
        %v515 = vpop.permute.xlu0 %514
        %v517 = vsel %vm336, %v513, 0
        %v520 = vsel %vm336, %v515, 0
        %522 = vmatpush.bf16.xpose.msra.mxu0 0
        %523 = vmatpush.bf16.xpose.msra.mxu0 0
        %524 = vmatpush.bf16.xpose.msra.mxu0 0
        %525 = vmatpush.bf16.xpose.msra.mxu0 0
        %526 = vmatpush.bf16.xpose.msra.mxu0 0
        %527 = vmatpush.bf16.xpose.msra.mxu0 0
        %528 = vmatpush.bf16.xpose.msra.mxu0 0
        %529 = vmatpush.bf16.xpose.msra.mxu0 %v520
        %530 = vmatmul.bf16.gmra.mxu0 %v517
        %v531 = vpop.f32.mrf.mxu0
        %v532 = vadd.f32 0.0, %v531
        %v533 = vpop.f32.mrf.mxu0
        %534 = vdwg.mxu0
        %v535 = vmul.f32 %v532, 0.35355338
        %v536 = vsel %vm360, -1e+09, %v535
        %v537 = vsel %vm362, %v536, -inf
        %538 = vmax.xlane.f32.xlu0 %v537
        %v539 = vpop.xlane.xlu0 %538
        %v540 = vsub.f32 %v536, %v539
        %v541 = vmul.f32 %v540, 1.442695
        %v542 = vpow.pop %v541
        %v543 = vsel %vm362, %v542, 0.0
        %544 = vadd.xlane.f32.xlu0 %v543
        %v545 = vpop.xlane.xlu0 %544
        %v546 = vrcp.pop %v545
        %v547 = vmul.f32 %v542, %v546
        %v548 = vpack.c.bf16 %v547, %v547
        %549 = vrot.lane.b32.xlu0 %v293, 104
        %v550 = vpop.permute.xlu0 %549
        %v552 = vsel %vm375, %v548, 0
        %v555 = vsel %vm379, %v550, 0
        %557 = vmatpush.bf16.msra.mxu0 0
        %558 = vmatpush.bf16.msra.mxu0 0
        %559 = vmatpush.bf16.msra.mxu0 0
        %560 = vmatpush.bf16.msra.mxu0 0
        %561 = vmatpush.bf16.msra.mxu0 0
        %562 = vmatpush.bf16.msra.mxu0 0
        %563 = vmatpush.bf16.msra.mxu0 0
        %564 = vmatpush.bf16.msra.mxu0 %v555
        %565 = vmatmul.bf16.gmra.mxu0 %v552
        %v566 = vpop.f32.mrf.mxu0
        %v567 = vadd.f32 0.0, %v566
        %v568 = vpop.f32.mrf.mxu0
        %569 = vdwg.mxu0
        %571 = vrot.lane.b32.xlu0 %v451, 8
        %v572 = vpop.permute.xlu0 %571
        %575 = vrot.lane.b32.xlu0 %v509, 16
        %v576 = vpop.permute.xlu0 %575
        %579 = vrot.lane.b32.xlu0 %v567, 24
        %v580 = vpop.permute.xlu0 %579
        %v582 = vsel %vm336, %v392, %v572
        %vm583 = vcmask 130048
        %v584 = vsel %vm583, %v582, %v576
        %vm585 = vcmask 195584
        %v586 = vsel %vm585, %v584, %v580
        %v587 = vadd.f32 %v292, %v586
        %v588 = vld [vmem:[#allocation2] sm:$0x1]
        %v589 = vld [vmem:[#allocation4] sm:$0x1]
        %vm590 = vcmask 257024
        %v591 = vsel %vm590, %v587, 0.0
        %592 = vadd.xlane.f32.xlu0 %v591
        %v593 = vpop.xlane.xlu0 %592
        %v594 = vrcp.pop 32.0
        %v595 = vmul.f32 32.0, %v594
        %v596 = vsub.f32 1.0, %v595
        %v597 = vmul.f32 %v594, %v596
        %v598 = vadd.f32 %v594, %v597
        %vm599 = vweird.f32 %v594
        %v600 = vsel %vm599, %v594, %v598
        %v601 = vmul.f32 %v593, %v600
        %v602 = vsub.f32 %v587, %v601
        %v603 = vmul.f32 %v602, %v602
        %v604 = vsel %vm590, %v603, 0.0
        %605 = vadd.xlane.f32.xlu0 %v604
        %v606 = vpop.xlane.xlu0 %605
        %v607 = vrcp.pop 31.0
        %v608 = vmul.f32 31.0, %v607
        %v609 = vsub.f32 1.0, %v608
        %v610 = vmul.f32 %v607, %v609
        %v611 = vadd.f32 %v607, %v610
        %vm612 = vweird.f32 %v607
        %v613 = vsel %vm612, %v607, %v611
        %v614 = vmul.f32 %v606, %v613
        %v616 = vperm.slane %v588, 0
        %v618 = vmul.f32 %v616, %v602
        %v619 = vrsqrt.pop %v614
        %v620 = vmul.f32 %v619, %v614
        %v621 = vmul.f32 %v620, %v619
        %v622 = vmul.f32 0.5, %v621
        %v623 = vsub.f32 1.5, %v622
        %v624 = vmul.f32 %v619, %v623
        %v625 = vmul.f32 %v614, %v624
        %vm626 = vcmp.eq.f32.partialorder %v614, inf
        %v627 = vsel %vm626, %v614, %v625
        %vm628 = vcmp.eq.f32.partialorder %v614, 0.0
        %v629 = vand.u32 %v614, 2147483648
        %v630 = vsel %vm628, %v629, %v627
        %v631 = vadd.f32 %v630, 1e-06
        %v632 = vrcp.pop %v631
        %v633 = vmul.f32 %v631, %v632
        %v634 = vsub.f32 1.0, %v633
        %v635 = vmul.f32 %v632, %v634
        %v636 = vadd.f32 %v632, %v635
        %vm637 = vweird.f32 %v631
        %vm638 = vweird.f32 %v632
        %vm639 = vmor %vm637, %vm638
        %v640 = vsel %vm639, %v632, %v636
        %v641 = vand.u32 2147483647, %v631
        %vm642 = vcmp.eq.f32.partialorder %v641, 8.507059e+37
        %v643 = vand.u32 %v631, 2147483648
        %v644 = vor.u32 1.1754944e-38, %v643
        %v645 = vsel %vm642, %v644, %v640
        %v646 = vmul.f32 %v618, %v645
        %v648 = vperm.slane %v589, 0
        %v650 = vadd.f32 %v646, %v648
        %651 = vst.msk [vmem:[%s290] sm:$0xf] %vm590, %v650
        %p652 = scmp.lt.s32.totalorder %s19, 1
        %s653 = scalar_select %p652, %s19, 1
        %s654 = smul.addr %s653, 4
        %s655 = scalar_lea.vmem %s6, %s654
        // Predicated region
        $region53: #{gat_encoder_forward.18} parent=43 // pred_check
          %p656 = pneg %p173
        $region54: #{gat_encoder_forward.18} parent=43 // pred_check_branch
          %658 = sbr.rel (%p656) target = $region56
        $region55: #{gat_encoder_forward.18} parent=43 // pred_region
          _
        $region56: #{gat_encoder_forward.18} parent=43 // pred_fallthru
          _
      $region44: #{gat_encoder_forward.18} parent=5 // pred_fallthru
        _
      %p659 = scmp.le.s32.totalorder 2, %s14
      // Predicated region
      $region57: #{gat_encoder_forward.18} parent=5 // pred_check
        %p660 = pneg %p659
      $region58: #{gat_encoder_forward.18} parent=5 // pred_check_branch
        %662 = sbr.rel (%p660) target = $region60
      $region59: #{gat_encoder_forward.18} parent=5 // pred_region
        %s663 = ssub.s32 %s14, 2
        // Predicated region
        $region61: #{gat_encoder_forward.18} parent=59 // pred_check
          %p664 = pneg %p179
        $region62: #{gat_encoder_forward.18} parent=59 // pred_check_branch
          %666 = sbr.rel (%p664) target = $region64
        $region63: #{gat_encoder_forward.18} parent=59 // pred_region
          %p667 = scmp.lt.s32.totalorder %s20, 1
          %s668 = scalar_select %p667, %s20, 1
          %s669 = smul.addr %s668, 4
          %s670 = scalar_lea.vmem %s6, %s669
        $region64: #{gat_encoder_forward.18} parent=59 // pred_fallthru
          _
      $region60: #{gat_encoder_forward.18} parent=5 // pred_fallthru
        _
    $region6: #{gat_encoder_forward.18} parent=1 // loop_footer
      %s18 = sadd.s32 1, %s14
    $region7: #{gat_encoder_forward.18} parent=1 // loop_footer_branch
      %13 = sbr.rel target = $region3
    $region8: #{gat_encoder_forward.18} parent=1 // loop_exit
      _
    %671 = vsyncpa [#allocation3], 1
    %s672 = scalar_lea.sflag [#allocation3], 1
    %673 = vsyncpa %s672, 1
    %674 = vsyncpa [#allocation5], 1

// kernel: gat_encoder_forward.20
$region0: #{gat_encoder_forward.20}
  #allocation0 [shape = 'u32[]', space=smem, size = 0x4, offset = 0x4, fixed_abs, tag = 'smem constant byte address 0x4 - core index']
  #allocation1 [shape = 'u32[72,128]{1,0:T(1,128)}', space=vmem, size = 0x9000, scoped, tag = 'internal scratch']
  %s0 = inlined_call_operand.vmem [shape: f32[16,32], index: 0, kind: input, shape index: {}]
  %s1 = inlined_call_operand.vmem [shape: bf16[32,64], index: 1, kind: input, shape index: {}]
  %s2 = inlined_call_operand.vmem [shape: f32[1,64], index: 2, kind: input, shape index: {}]
  %s3 = inlined_call_operand.vmem [shape: bf16[64,32], index: 3, kind: input, shape index: {}]
  %s4 = inlined_call_operand.vmem [shape: f32[1,32], index: 4, kind: input, shape index: {}]
  %s5 = inlined_call_operand.vmem [shape: f32[1,32], index: 5, kind: input, shape index: {}]
  %s6 = inlined_call_operand.vmem [shape: f32[1,32], index: 6, kind: input, shape index: {}]
  %s7 = inlined_call_operand.hbm [shape: f32[16,32], index: 7, kind: output, shape index: {}]
  %s8 = sld [smem:[#allocation0]]
  $region61: #{gat_encoder_forward.20} parent=0
    _
  %s10 = ssub.s32 1, %s8
  %s11 = scalar_select 0, %s10, %s8
  $region1: #{gat_encoder_forward.20} parent=0
    #allocation2 [shape = 'u8[8192]{0}', space=vmem, size = 0x2000, scoped, tag = 'output window, operand 0']
    #allocation3 [shape = 's32[2]{0}', space=sflag, size = 0x8, scoped, tag = 'scoped memory for gat_encoder_forward.20']
    %12 = vsyncpa [#allocation3], 0
    %s13 = scalar_lea.sflag [#allocation3], 1
    %14 = vsyncpa %s13, 0
    loop: start=0, step=1, limit=4
    $region2: #{gat_encoder_forward.20} parent=1 // loop_pre_header
      _
    $region3: #{gat_encoder_forward.20} parent=1 // loop_header
      %s16 = sphi 0, %s20
      %p17 = scmp.ge.s32.totalorder %s16, 4
      %s26 = sphi 0, %s28
      %s29 = sphi 0, %s26
      %s30 = sphi 0, %s29
      %s46 = sphi 0, %s30
      %s50 = sphi 0, %s50
      %s52 = sphi 0, %s50
      %s53 = sphi 0, %s52
      %s67 = sphi 0, %s53
      %s71 = sphi 0, %s71
      %s73 = sphi 0, %s71
      %s74 = sphi 0, %s73
      %s88 = sphi 0, %s74
      %s92 = sphi 0, %s92
      %s94 = sphi 0, %s92
      %s95 = sphi 0, %s94
      %s109 = sphi 0, %s95
      %s113 = sphi 0, %s113
      %s115 = sphi 0, %s113
      %s116 = sphi 0, %s115
      %s130 = sphi 0, %s116
      %s134 = sphi 0, %s134
      %s136 = sphi 0, %s134
      %s137 = sphi 0, %s136
      %s151 = sphi 0, %s137
      %s155 = sphi 0, %s155
      %s157 = sphi 0, %s155
      %s158 = sphi 0, %s157
      %s172 = sphi 0, %s158
      %s178 = sphi 0, %s180
      %s181 = sphi 0, %s178
      %s182 = sphi 0, %s181
      %s198 = sphi 0, %s182
    $region4: #{gat_encoder_forward.20} parent=1 // loop_header_branch
      %19 = sbr.rel (%p17) target = $region8
    $region5: #{gat_encoder_forward.20} parent=1 // loop_body
      %s21 = ssub.s32 %s16, 1
      %s22 = ssub.s32 %s16, 2
      %s23 = sadd.s32 %s16, 1
      %s24 = ssub.s32 %s16, %s23
      %p25 = scmp.eq.s32.totalorder %s24, 0
      %s27 = sadd.s32 %s26, 1
      %s28 = scalar_select %p25, %s26, %s27
      %p31 = pneg %p25
      %p32 = scmp.eq.s32.totalorder %s16, 1
      %p33 = por %p31, %p32
      %p34 = scmp.ne.s32.totalorder %s26, %s29
      %p35 = scmp.eq.s32.totalorder %s16, 0
      %p36 = por %p34, %p35
      %p37 = scmp.ne.s32.totalorder %s26, %s29
      %p38 = scmp.eq.s32.totalorder %s21, 1
      %p39 = por %p37, %p38
      %p40 = scmp.ne.s32.totalorder %s29, %s30
      %p41 = scmp.eq.s32.totalorder %s21, 0
      %p42 = por %p40, %p41
      %p43 = scmp.ne.s32.totalorder %s29, %s30
      %p44 = scmp.eq.s32.totalorder %s22, 1
      %p45 = por %p43, %p44
      %p47 = scmp.ne.s32.totalorder %s30, %s46
      %p48 = scmp.eq.s32.totalorder %s22, 0
      %p49 = por %p47, %p48
      %s51 = sadd.s32 %s50, 1
      %p54 = scmp.eq.s32.totalorder %s16, 1
      %p55 = scmp.ne.s32.totalorder %s50, %s52
      %p56 = scmp.eq.s32.totalorder %s16, 0
      %p57 = por %p55, %p56
      %p58 = scmp.ne.s32.totalorder %s50, %s52
      %p59 = scmp.eq.s32.totalorder %s21, 1
      %p60 = por %p58, %p59
      %p61 = scmp.ne.s32.totalorder %s52, %s53
      %p62 = scmp.eq.s32.totalorder %s21, 0
      %p63 = por %p61, %p62
      %p64 = scmp.ne.s32.totalorder %s52, %s53
      %p65 = scmp.eq.s32.totalorder %s22, 1
      %p66 = por %p64, %p65
      %p68 = scmp.ne.s32.totalorder %s53, %s67
      %p69 = scmp.eq.s32.totalorder %s22, 0
      %p70 = por %p68, %p69
      %s72 = sadd.s32 %s71, 1
      %p75 = scmp.eq.s32.totalorder %s16, 1
      %p76 = scmp.ne.s32.totalorder %s71, %s73
      %p77 = scmp.eq.s32.totalorder %s16, 0
      %p78 = por %p76, %p77
      %p79 = scmp.ne.s32.totalorder %s71, %s73
      %p80 = scmp.eq.s32.totalorder %s21, 1
      %p81 = por %p79, %p80
      %p82 = scmp.ne.s32.totalorder %s73, %s74
      %p83 = scmp.eq.s32.totalorder %s21, 0
      %p84 = por %p82, %p83
      %p85 = scmp.ne.s32.totalorder %s73, %s74
      %p86 = scmp.eq.s32.totalorder %s22, 1
      %p87 = por %p85, %p86
      %p89 = scmp.ne.s32.totalorder %s74, %s88
      %p90 = scmp.eq.s32.totalorder %s22, 0
      %p91 = por %p89, %p90
      %s93 = sadd.s32 %s92, 1
      %p96 = scmp.eq.s32.totalorder %s16, 1
      %p97 = scmp.ne.s32.totalorder %s92, %s94
      %p98 = scmp.eq.s32.totalorder %s16, 0
      %p99 = por %p97, %p98
      %p100 = scmp.ne.s32.totalorder %s92, %s94
      %p101 = scmp.eq.s32.totalorder %s21, 1
      %p102 = por %p100, %p101
      %p103 = scmp.ne.s32.totalorder %s94, %s95
      %p104 = scmp.eq.s32.totalorder %s21, 0
      %p105 = por %p103, %p104
      %p106 = scmp.ne.s32.totalorder %s94, %s95
      %p107 = scmp.eq.s32.totalorder %s22, 1
      %p108 = por %p106, %p107
      %p110 = scmp.ne.s32.totalorder %s95, %s109
      %p111 = scmp.eq.s32.totalorder %s22, 0
      %p112 = por %p110, %p111
      %s114 = sadd.s32 %s113, 1
      %p117 = scmp.eq.s32.totalorder %s16, 1
      %p118 = scmp.ne.s32.totalorder %s113, %s115
      %p119 = scmp.eq.s32.totalorder %s16, 0
      %p120 = por %p118, %p119
      %p121 = scmp.ne.s32.totalorder %s113, %s115
      %p122 = scmp.eq.s32.totalorder %s21, 1
      %p123 = por %p121, %p122
      %p124 = scmp.ne.s32.totalorder %s115, %s116
      %p125 = scmp.eq.s32.totalorder %s21, 0
      %p126 = por %p124, %p125
      %p127 = scmp.ne.s32.totalorder %s115, %s116
      %p128 = scmp.eq.s32.totalorder %s22, 1
      %p129 = por %p127, %p128
      %p131 = scmp.ne.s32.totalorder %s116, %s130
      %p132 = scmp.eq.s32.totalorder %s22, 0
      %p133 = por %p131, %p132
      %s135 = sadd.s32 %s134, 1
      %p138 = scmp.eq.s32.totalorder %s16, 1
      %p139 = scmp.ne.s32.totalorder %s134, %s136
      %p140 = scmp.eq.s32.totalorder %s16, 0
      %p141 = por %p139, %p140
      %p142 = scmp.ne.s32.totalorder %s134, %s136
      %p143 = scmp.eq.s32.totalorder %s21, 1
      %p144 = por %p142, %p143
      %p145 = scmp.ne.s32.totalorder %s136, %s137
      %p146 = scmp.eq.s32.totalorder %s21, 0
      %p147 = por %p145, %p146
      %p148 = scmp.ne.s32.totalorder %s136, %s137
      %p149 = scmp.eq.s32.totalorder %s22, 1
      %p150 = por %p148, %p149
      %p152 = scmp.ne.s32.totalorder %s137, %s151
      %p153 = scmp.eq.s32.totalorder %s22, 0
      %p154 = por %p152, %p153
      %s156 = sadd.s32 %s155, 1
      %p159 = scmp.eq.s32.totalorder %s16, 1
      %p160 = scmp.ne.s32.totalorder %s155, %s157
      %p161 = scmp.eq.s32.totalorder %s16, 0
      %p162 = por %p160, %p161
      %p163 = scmp.ne.s32.totalorder %s155, %s157
      %p164 = scmp.eq.s32.totalorder %s21, 1
      %p165 = por %p163, %p164
      %p166 = scmp.ne.s32.totalorder %s157, %s158
      %p167 = scmp.eq.s32.totalorder %s21, 0
      %p168 = por %p166, %p167
      %p169 = scmp.ne.s32.totalorder %s157, %s158
      %p170 = scmp.eq.s32.totalorder %s22, 1
      %p171 = por %p169, %p170
      %p173 = scmp.ne.s32.totalorder %s158, %s172
      %p174 = scmp.eq.s32.totalorder %s22, 0
      %p175 = por %p173, %p174
      %s176 = ssub.s32 %s16, %s23
      %p177 = scmp.eq.s32.totalorder %s176, 0
      %s179 = sadd.s32 %s178, 1
      %s180 = scalar_select %p177, %s178, %s179
      %p183 = pneg %p177
      %p184 = scmp.eq.s32.totalorder %s16, 1
      %p185 = por %p183, %p184
      %p186 = scmp.ne.s32.totalorder %s178, %s181
      %p187 = scmp.eq.s32.totalorder %s16, 0
      %p188 = por %p186, %p187
      %p189 = scmp.ne.s32.totalorder %s178, %s181
      %p190 = scmp.eq.s32.totalorder %s21, 1
      %p191 = por %p189, %p190
      %p192 = scmp.ne.s32.totalorder %s181, %s182
      %p193 = scmp.eq.s32.totalorder %s21, 0
      %p194 = por %p192, %p193
      %p195 = scmp.ne.s32.totalorder %s181, %s182
      %p196 = scmp.eq.s32.totalorder %s22, 1
      %p197 = por %p195, %p196
      %p199 = scmp.ne.s32.totalorder %s182, %s198
      %p200 = scmp.eq.s32.totalorder %s22, 0
      %p201 = por %p199, %p200
      %p202 = scmp.le.s32.totalorder 1, %s16
      %p203 = scmp.lt.s32.totalorder %s16, 3
      %p204 = pnand %p202, %p203
      %p205 = pneg %p204
      // Predicated region
      $region9: #{gat_encoder_forward.20} parent=5 // pred_check
        _
      $region10: #{gat_encoder_forward.20} parent=5 // pred_check_branch
        %207 = sbr.rel (%p204) target = $region12
      $region11: #{gat_encoder_forward.20} parent=5 // pred_region
        %s208 = ssub.s32 %s16, 1
        // Predicated region
        $region13: #{gat_encoder_forward.20} parent=11 // pred_check
          %p209 = pneg %p63
        $region14: #{gat_encoder_forward.20} parent=11 // pred_check_branch
          %211 = sbr.rel (%p209) target = $region16
        $region15: #{gat_encoder_forward.20} parent=11 // pred_region
          _
        $region16: #{gat_encoder_forward.20} parent=11 // pred_fallthru
          _
        // Predicated region
        $region17: #{gat_encoder_forward.20} parent=11 // pred_check
          %p212 = pneg %p84
        $region18: #{gat_encoder_forward.20} parent=11 // pred_check_branch
          %214 = sbr.rel (%p212) target = $region20
        $region19: #{gat_encoder_forward.20} parent=11 // pred_region
          _
        $region20: #{gat_encoder_forward.20} parent=11 // pred_fallthru
          _
        // Predicated region
        $region21: #{gat_encoder_forward.20} parent=11 // pred_check
          %p215 = pneg %p105
        $region22: #{gat_encoder_forward.20} parent=11 // pred_check_branch
          %217 = sbr.rel (%p215) target = $region24
        $region23: #{gat_encoder_forward.20} parent=11 // pred_region
          _
        $region24: #{gat_encoder_forward.20} parent=11 // pred_fallthru
          _
        // Predicated region
        $region25: #{gat_encoder_forward.20} parent=11 // pred_check
          %p218 = pneg %p126
        $region26: #{gat_encoder_forward.20} parent=11 // pred_check_branch
          %220 = sbr.rel (%p218) target = $region28
        $region27: #{gat_encoder_forward.20} parent=11 // pred_region
          _
        $region28: #{gat_encoder_forward.20} parent=11 // pred_fallthru
          _
        // Predicated region
        $region29: #{gat_encoder_forward.20} parent=11 // pred_check
          %p221 = pneg %p147
        $region30: #{gat_encoder_forward.20} parent=11 // pred_check_branch
          %223 = sbr.rel (%p221) target = $region32
        $region31: #{gat_encoder_forward.20} parent=11 // pred_region
          _
        $region32: #{gat_encoder_forward.20} parent=11 // pred_fallthru
          _
        // Predicated region
        $region33: #{gat_encoder_forward.20} parent=11 // pred_check
          %p224 = pneg %p168
        $region34: #{gat_encoder_forward.20} parent=11 // pred_check_branch
          %226 = sbr.rel (%p224) target = $region36
        $region35: #{gat_encoder_forward.20} parent=11 // pred_region
          _
        $region36: #{gat_encoder_forward.20} parent=11 // pred_fallthru
          _
      $region12: #{gat_encoder_forward.20} parent=5 // pred_fallthru
        _
      %p227 = scmp.lt.s32.totalorder %s16, 2
      // Predicated region
      $region37: #{gat_encoder_forward.20} parent=5 // pred_check
        %p228 = pneg %p227
      $region38: #{gat_encoder_forward.20} parent=5 // pred_check_branch
        %230 = sbr.rel (%p228) target = $region40
      $region39: #{gat_encoder_forward.20} parent=5 // pred_region
        // Predicated region
        $region41: #{gat_encoder_forward.20} parent=39 // pred_check
          %p231 = pneg %p36
        $region42: #{gat_encoder_forward.20} parent=39 // pred_check_branch
          %233 = sbr.rel (%p231) target = $region44
        $region43: #{gat_encoder_forward.20} parent=39 // pred_region
          %p234 = scmp.lt.s32.totalorder %s16, 1
          %s235 = scalar_select %p234, %s16, 1
          %s236 = smul.addr %s235, 8
          %s237 = scalar_lea.vmem %s0, %s236
        $region44: #{gat_encoder_forward.20} parent=39 // pred_fallthru
          _
      $region40: #{gat_encoder_forward.20} parent=5 // pred_fallthru
        _
      %p238 = scmp.le.s32.totalorder 1, %s16
      %p239 = scmp.lt.s32.totalorder %s16, 3
      %p240 = pnand %p238, %p239
      %p241 = pneg %p240
      // Predicated region
      $region45: #{gat_encoder_forward.20} parent=5 // pred_check
        _
      $region46: #{gat_encoder_forward.20} parent=5 // pred_check_branch
        %243 = sbr.rel (%p240) target = $region48
      $region47: #{gat_encoder_forward.20} parent=5 // pred_region
        %s244 = ssub.s32 %s16, 1
        %p245 = scmp.lt.s32.totalorder %s21, 1
        %s246 = scalar_select %p245, %s21, 1
        %s247 = smul.addr %s246, 8
        %s248 = scalar_lea.vmem %s0, %s247
        %p249 = pneg %p42
        %p250 = pneg %p39
        %p251 = pneg %p63
        %p252 = pneg %p60
        %p253 = pneg %p84
        %p254 = pneg %p81
        %p255 = pneg %p105
        %p256 = pneg %p102
        %p257 = pneg %p126
        %p258 = pneg %p123
        %p259 = pneg %p147
        %p260 = pneg %p144
        %p261 = pneg %p168
        %p262 = pneg %p165
        %p263 = pneg %p194
        %p264 = pneg %p191
        %s265 = sand.u32 %s181, 1
        %s266 = scalar_lea.sflag [#allocation3], %s265
        %s267 = sand.u32 %s181, 1
        %s268 = smul.addr %s267, 8
        %s269 = scalar_lea.vmem [#allocation2], %s268
        %p270 = scmp.lt.s32.totalorder %s21, 1
        %s271 = scalar_select %p270, %s21, 1
        %s272 = smul.addr %s271, 8
        %s273 = scalar_lea.vmem %s0, %s272
        %v275 = vld [vmem:[%s273] sm:$0xff]
        %v276 = vpack.c.bf16 %v275, %v275
        %v277 = vld [vmem:[%s1] sm:$0xf]
        %v278 = vld [vmem:[%s1 + $0x4] sm:$0xf]
        %v279 = vld [vmem:[%s1 + $0x8] sm:$0xf]
        %v280 = vld [vmem:[%s1 + $0xc] sm:$0xf]
        %v281 = vld [vmem:[%s2] sm:$0x1]
        %v283 = vperm.slane %v281, 0
        %v289 = vunpack.c.l.b16 %v277
        %v290 = vunpack.c.l.b16 %v278
        %v291 = vunpack.c.l.b16 %v279
        %v292 = vunpack.c.l.b16 %v280
        %v293 = vpack.c.b16 %v290, %v289
        %v294 = vpack.c.b16 %v292, %v291
        %vm297 = vcmask 261120
        %v299 = vsel %vm297, %v276, 0
        %301 = vmatpush.bf16.msra.mxu0 0
        %302 = vmatpush.bf16.msra.mxu0 0
        %303 = vmatpush.bf16.msra.mxu0 0
        %304 = vmatpush.bf16.msra.mxu0 0
        %305 = vmatpush.bf16.msra.mxu0 0
        %306 = vmatpush.bf16.msra.mxu0 0
        %307 = vmatpush.bf16.msra.mxu0 %v294
        %308 = vmatpush.bf16.msra.mxu0 %v293
        %309 = vmatmul.bf16.gmra.mxu0 %v299
        %v310 = vpop.f32.mrf.mxu0
        %v311 = vadd.f32 %v283, %v310
        %v312 = vpop.f32.mrf.mxu0
        %313 = vdwg.mxu0
        %v314 = vmax.f32 %v311, 0.0
        %v315 = vpack.c.bf16 %v314, %v314
        %v316 = vld [vmem:[%s3] sm:$0xf]
        %v317 = vld [vmem:[%s3 + $0x4] sm:$0xf]
        %v318 = vld [vmem:[%s3 + $0x8] sm:$0xf]
        %v319 = vld [vmem:[%s3 + $0xc] sm:$0xf]
        %v320 = vld [vmem:[%s3 + $0x10] sm:$0xf]
        %v321 = vld [vmem:[%s3 + $0x14] sm:$0xf]
        %v322 = vld [vmem:[%s3 + $0x18] sm:$0xf]
        %v323 = vld [vmem:[%s3 + $0x1c] sm:$0xf]
        %v324 = vld [vmem:[%s4] sm:$0x1]
        %v326 = vperm.slane %v324, 0
        %v336 = vunpack.c.l.b16 %v316
        %v337 = vunpack.c.l.b16 %v317
        %v338 = vunpack.c.l.b16 %v318
        %v339 = vunpack.c.l.b16 %v319
        %v340 = vunpack.c.l.b16 %v320
        %v341 = vunpack.c.l.b16 %v321
        %v342 = vunpack.c.l.b16 %v322
        %v343 = vunpack.c.l.b16 %v323
        %v344 = vpack.c.b16 %v337, %v336
        %v345 = vpack.c.b16 %v339, %v338
        %v346 = vpack.c.b16 %v341, %v340
        %v347 = vpack.c.b16 %v343, %v342
        %vm352 = vcmask 523264
        %v354 = vsel %vm352, %v315, 0
        %356 = vmatpush.bf16.msra.mxu0 0
        %357 = vmatpush.bf16.msra.mxu0 0
        %358 = vmatpush.bf16.msra.mxu0 0
        %359 = vmatpush.bf16.msra.mxu0 0
        %360 = vmatpush.bf16.msra.mxu0 %v347
        %361 = vmatpush.bf16.msra.mxu0 %v346
        %362 = vmatpush.bf16.msra.mxu0 %v345
        %363 = vmatpush.bf16.msra.mxu0 %v344
        %364 = vmatmul.bf16.gmra.mxu0 %v354
        %v365 = vpop.f32.mrf.mxu0
        %v366 = vadd.f32 %v326, %v365
        %v367 = vpop.f32.mrf.mxu0
        %368 = vdwg.mxu0
        %v369 = vadd.f32 %v275, %v366
        %v370 = vld [vmem:[%s5] sm:$0x1]
        %v371 = vld [vmem:[%s6] sm:$0x1]
        %v372 = vsel %vm297, %v369, 0.0
        %373 = vadd.xlane.f32.xlu0 %v372
        %v374 = vpop.xlane.xlu0 %373
        %v375 = vrcp.pop 32.0
        %v376 = vmul.f32 32.0, %v375
        %v377 = vsub.f32 1.0, %v376
        %v378 = vmul.f32 %v375, %v377
        %v379 = vadd.f32 %v375, %v378
        %vm380 = vweird.f32 %v375
        %v381 = vsel %vm380, %v375, %v379
        %v382 = vmul.f32 %v374, %v381
        %v383 = vsub.f32 %v369, %v382
        %v384 = vmul.f32 %v383, %v383
        %v385 = vsel %vm297, %v384, 0.0
        %386 = vadd.xlane.f32.xlu0 %v385
        %v387 = vpop.xlane.xlu0 %386
        %v388 = vrcp.pop 31.0
        %v389 = vmul.f32 31.0, %v388
        %v390 = vsub.f32 1.0, %v389
        %v391 = vmul.f32 %v388, %v390
        %v392 = vadd.f32 %v388, %v391
        %vm393 = vweird.f32 %v388
        %v394 = vsel %vm393, %v388, %v392
        %v395 = vmul.f32 %v387, %v394
        %v397 = vperm.slane %v370, 0
        %v399 = vmul.f32 %v397, %v383
        %v400 = vrsqrt.pop %v395
        %v401 = vmul.f32 %v400, %v395
        %v402 = vmul.f32 %v401, %v400
        %v403 = vmul.f32 0.5, %v402
        %v404 = vsub.f32 1.5, %v403
        %v405 = vmul.f32 %v400, %v404
        %v406 = vmul.f32 %v395, %v405
        %vm407 = vcmp.eq.f32.partialorder %v395, inf
        %v408 = vsel %vm407, %v395, %v406
        %vm409 = vcmp.eq.f32.partialorder %v395, 0.0
        %v410 = vand.u32 %v395, 2147483648
        %v411 = vsel %vm409, %v410, %v408
        %v412 = vadd.f32 %v411, 1e-06
        %v413 = vrcp.pop %v412
        %v414 = vmul.f32 %v412, %v413
        %v415 = vsub.f32 1.0, %v414
        %v416 = vmul.f32 %v413, %v415
        %v417 = vadd.f32 %v413, %v416
        %vm418 = vweird.f32 %v412
        %vm419 = vweird.f32 %v413
        %vm420 = vmor %vm418, %vm419
        %v421 = vsel %vm420, %v413, %v417
        %v422 = vand.u32 2147483647, %v412
        %vm423 = vcmp.eq.f32.partialorder %v422, 8.507059e+37
        %v424 = vand.u32 %v412, 2147483648
        %v425 = vor.u32 1.1754944e-38, %v424
        %v426 = vsel %vm423, %v425, %v421
        %v427 = vmul.f32 %v399, %v426
        %v429 = vperm.slane %v371, 0
        %v431 = vadd.f32 %v427, %v429
        %432 = vst.msk [vmem:[%s269] sm:$0xff] %vm297, %v431
        %s433 = sand.u32 %s181, 1
        %s434 = scalar_lea.sflag [#allocation3], %s433
        %s435 = sand.u32 %s181, 1
        %s436 = smul.addr %s435, 8
        %s437 = scalar_lea.vmem [#allocation2], %s436
        // Predicated region
        $region49: #{gat_encoder_forward.20} parent=47 // pred_check
          %p438 = pneg %p191
        $region50: #{gat_encoder_forward.20} parent=47 // pred_check_branch
          %440 = sbr.rel (%p438) target = $region52
        $region51: #{gat_encoder_forward.20} parent=47 // pred_region
          %442 = vsyncadd %s434, 0
          %s443 = smul.addr %s21, 8
          %s444 = scalar_lea.hbm %s7, %s443
          %s446 = sshll.u32 %s437, 4
          %s447 = int_to_ptr.vmem [resolvable:$true] %s446
          %s448 = sshll.u32 %s444, 4
          %s449 = int_to_ptr.hbm [resolvable:$true] %s448
          %451 = dma.vmem_to_hbm [thread:$0]  %s447, 128, %s449, %s434
        $region52: #{gat_encoder_forward.20} parent=47 // pred_fallthru
          _
      $region48: #{gat_encoder_forward.20} parent=5 // pred_fallthru
        _
      %p452 = scmp.le.s32.totalorder 2, %s16
      // Predicated region
      $region53: #{gat_encoder_forward.20} parent=5 // pred_check
        %p453 = pneg %p452
      $region54: #{gat_encoder_forward.20} parent=5 // pred_check_branch
        %455 = sbr.rel (%p453) target = $region56
      $region55: #{gat_encoder_forward.20} parent=5 // pred_region
        %s456 = ssub.s32 %s16, 2
        // Predicated region
        $region57: #{gat_encoder_forward.20} parent=55 // pred_check
          %p457 = pneg %p197
        $region58: #{gat_encoder_forward.20} parent=55 // pred_check_branch
          %459 = sbr.rel (%p457) target = $region60
        $region59: #{gat_encoder_forward.20} parent=55 // pred_region
          %s460 = sand.u32 %s182, 1
          %s461 = scalar_lea.sflag [#allocation3], %s460
          %s462 = sand.u32 %s182, 1
          %s463 = smul.addr %s462, 8
          %s464 = scalar_lea.vmem [#allocation2], %s463
          %466 = dma.done %s461, 128
        $region60: #{gat_encoder_forward.20} parent=55 // pred_fallthru
          _
      $region56: #{gat_encoder_forward.20} parent=5 // pred_fallthru
        _
    $region6: #{gat_encoder_forward.20} parent=1 // loop_footer
      %s20 = sadd.s32 1, %s16
    $region7: #{gat_encoder_forward.20} parent=1 // loop_footer_branch
      %15 = sbr.rel target = $region3
    $region8: #{gat_encoder_forward.20} parent=1 // loop_exit
      _
    %467 = vsyncpa [#allocation3], 1
    %s468 = scalar_lea.sflag [#allocation3], 1
    %469 = vsyncpa %s468, 1

// kernel: gat_encoder_forward.21
$region0: #{gat_encoder_forward.21}
  #allocation0 [shape = 'u32[]', space=smem, size = 0x4, offset = 0x4, fixed_abs, tag = 'smem constant byte address 0x4 - core index']
  #allocation1 [shape = 'u32[72,128]{1,0:T(1,128)}', space=vmem, size = 0x9000, scoped, tag = 'internal scratch']
  %s0 = inlined_call_operand.vmem [shape: f32[8,32], index: 0, kind: input, shape index: {}]
  %s1 = inlined_call_operand.vmem [shape: bf16[32,64], index: 1, kind: input, shape index: {}]
  %s2 = inlined_call_operand.vmem [shape: f32[1,64], index: 2, kind: input, shape index: {}]
  %s3 = inlined_call_operand.vmem [shape: bf16[64,32], index: 3, kind: input, shape index: {}]
  %s4 = inlined_call_operand.vmem [shape: f32[1,32], index: 4, kind: input, shape index: {}]
  %s5 = inlined_call_operand.vmem [shape: f32[1,32], index: 5, kind: input, shape index: {}]
  %s6 = inlined_call_operand.vmem [shape: f32[1,32], index: 6, kind: input, shape index: {}]
  %s7 = inlined_call_operand.hbm [shape: f32[8,32], index: 7, kind: output, shape index: {}]
  %s8 = sld [smem:[#allocation0]]
  $region38: #{gat_encoder_forward.21} parent=0
    _
  %s10 = ssub.s32 1, %s8
  %s11 = scalar_select 0, %s10, %s8
  $region1: #{gat_encoder_forward.21} parent=0
    #allocation2 [shape = 'u8[4096]{0}', space=vmem, size = 0x1000, scoped, tag = 'output window, operand 0, single buffered']
    #allocation3 [shape = 's32[1]{0}', space=sflag, size = 0x4, scoped, tag = 'scoped memory for gat_encoder_forward.21']
    %12 = vsyncpa [#allocation3], 0
    // Predicated region
    $region2: #{gat_encoder_forward.21} parent=1 // pred_check
      _
    $region3: #{gat_encoder_forward.21} parent=1 // pred_check_branch
      %14 = sbr.rel (0) target = $region5
    $region4: #{gat_encoder_forward.21} parent=1 // pred_region
      _
    $region5: #{gat_encoder_forward.21} parent=1 // pred_fallthru
      _
    // Predicated region
    $region6: #{gat_encoder_forward.21} parent=1 // pred_check
      _
    $region7: #{gat_encoder_forward.21} parent=1 // pred_check_branch
      %16 = sbr.rel (0) target = $region9
    $region8: #{gat_encoder_forward.21} parent=1 // pred_region
      _
    $region9: #{gat_encoder_forward.21} parent=1 // pred_fallthru
      _
    // Predicated region
    $region10: #{gat_encoder_forward.21} parent=1 // pred_check
      _
    $region11: #{gat_encoder_forward.21} parent=1 // pred_check_branch
      %18 = sbr.rel (0) target = $region13
    $region12: #{gat_encoder_forward.21} parent=1 // pred_region
      _
    $region13: #{gat_encoder_forward.21} parent=1 // pred_fallthru
      _
    // Predicated region
    $region14: #{gat_encoder_forward.21} parent=1 // pred_check
      _
    $region15: #{gat_encoder_forward.21} parent=1 // pred_check_branch
      %20 = sbr.rel (0) target = $region17
    $region16: #{gat_encoder_forward.21} parent=1 // pred_region
      _
    $region17: #{gat_encoder_forward.21} parent=1 // pred_fallthru
      _
    // Predicated region
    $region18: #{gat_encoder_forward.21} parent=1 // pred_check
      _
    $region19: #{gat_encoder_forward.21} parent=1 // pred_check_branch
      %22 = sbr.rel (0) target = $region21
    $region20: #{gat_encoder_forward.21} parent=1 // pred_region
      _
    $region21: #{gat_encoder_forward.21} parent=1 // pred_fallthru
      _
    // Predicated region
    $region22: #{gat_encoder_forward.21} parent=1 // pred_check
      _
    $region23: #{gat_encoder_forward.21} parent=1 // pred_check_branch
      %24 = sbr.rel (0) target = $region25
    $region24: #{gat_encoder_forward.21} parent=1 // pred_region
      _
    $region25: #{gat_encoder_forward.21} parent=1 // pred_fallthru
      _
    // Predicated region
    $region26: #{gat_encoder_forward.21} parent=1 // pred_check
      _
    $region27: #{gat_encoder_forward.21} parent=1 // pred_check_branch
      %26 = sbr.rel (0) target = $region29
    $region28: #{gat_encoder_forward.21} parent=1 // pred_region
      _
    $region29: #{gat_encoder_forward.21} parent=1 // pred_fallthru
      _
    %v28 = vld [vmem:[%s0] sm:$0xff]
    %v29 = vpack.c.bf16 %v28, %v28
    %v30 = vld [vmem:[%s1] sm:$0xf]
    %v31 = vld [vmem:[%s1 + $0x4] sm:$0xf]
    %v32 = vld [vmem:[%s1 + $0x8] sm:$0xf]
    %v33 = vld [vmem:[%s1 + $0xc] sm:$0xf]
    %v34 = vld [vmem:[%s2] sm:$0x1]
    %v36 = vperm.slane %v34, 0
    %v42 = vunpack.c.l.b16 %v30
    %v43 = vunpack.c.l.b16 %v31
    %v44 = vunpack.c.l.b16 %v32
    %v45 = vunpack.c.l.b16 %v33
    %v46 = vpack.c.b16 %v43, %v42
    %v47 = vpack.c.b16 %v45, %v44
    %vm50 = vcmask 261120
    %v52 = vsel %vm50, %v29, 0
    %54 = vmatpush.bf16.msra.mxu0 0
    %55 = vmatpush.bf16.msra.mxu0 0
    %56 = vmatpush.bf16.msra.mxu0 0
    %57 = vmatpush.bf16.msra.mxu0 0
    %58 = vmatpush.bf16.msra.mxu0 0
    %59 = vmatpush.bf16.msra.mxu0 0
    %60 = vmatpush.bf16.msra.mxu0 %v47
    %61 = vmatpush.bf16.msra.mxu0 %v46
    %62 = vmatmul.bf16.gmra.mxu0 %v52
    %v63 = vpop.f32.mrf.mxu0
    %v64 = vadd.f32 %v36, %v63
    %v65 = vpop.f32.mrf.mxu0
    %66 = vdwg.mxu0
    %v67 = vmax.f32 %v64, 0.0
    %v68 = vpack.c.bf16 %v67, %v67
    %v69 = vld [vmem:[%s3] sm:$0xf]
    %v70 = vld [vmem:[%s3 + $0x4] sm:$0xf]
    %v71 = vld [vmem:[%s3 + $0x8] sm:$0xf]
    %v72 = vld [vmem:[%s3 + $0xc] sm:$0xf]
    %v73 = vld [vmem:[%s3 + $0x10] sm:$0xf]
    %v74 = vld [vmem:[%s3 + $0x14] sm:$0xf]
    %v75 = vld [vmem:[%s3 + $0x18] sm:$0xf]
    %v76 = vld [vmem:[%s3 + $0x1c] sm:$0xf]
    %v77 = vld [vmem:[%s4] sm:$0x1]
    %v79 = vperm.slane %v77, 0
    %v89 = vunpack.c.l.b16 %v69
    %v90 = vunpack.c.l.b16 %v70
    %v91 = vunpack.c.l.b16 %v71
    %v92 = vunpack.c.l.b16 %v72
    %v93 = vunpack.c.l.b16 %v73
    %v94 = vunpack.c.l.b16 %v74
    %v95 = vunpack.c.l.b16 %v75
    %v96 = vunpack.c.l.b16 %v76
    %v97 = vpack.c.b16 %v90, %v89
    %v98 = vpack.c.b16 %v92, %v91
    %v99 = vpack.c.b16 %v94, %v93
    %v100 = vpack.c.b16 %v96, %v95
    %vm105 = vcmask 523264
    %v107 = vsel %vm105, %v68, 0
    %109 = vmatpush.bf16.msra.mxu0 0
    %110 = vmatpush.bf16.msra.mxu0 0
    %111 = vmatpush.bf16.msra.mxu0 0
    %112 = vmatpush.bf16.msra.mxu0 0
    %113 = vmatpush.bf16.msra.mxu0 %v100
    %114 = vmatpush.bf16.msra.mxu0 %v99
    %115 = vmatpush.bf16.msra.mxu0 %v98
    %116 = vmatpush.bf16.msra.mxu0 %v97
    %117 = vmatmul.bf16.gmra.mxu0 %v107
    %v118 = vpop.f32.mrf.mxu0
    %v119 = vadd.f32 %v79, %v118
    %v120 = vpop.f32.mrf.mxu0
    %121 = vdwg.mxu0
    %v122 = vadd.f32 %v28, %v119
    %v123 = vld [vmem:[%s5] sm:$0x1]
    %v124 = vld [vmem:[%s6] sm:$0x1]
    %v125 = vsel %vm50, %v122, 0.0
    %126 = vadd.xlane.f32.xlu0 %v125
    %v127 = vpop.xlane.xlu0 %126
    %v128 = vrcp.pop 32.0
    %v129 = vmul.f32 32.0, %v128
    %v130 = vsub.f32 1.0, %v129
    %v131 = vmul.f32 %v128, %v130
    %v132 = vadd.f32 %v128, %v131
    %vm133 = vweird.f32 %v128
    %v134 = vsel %vm133, %v128, %v132
    %v135 = vmul.f32 %v127, %v134
    %v136 = vsub.f32 %v122, %v135
    %v137 = vmul.f32 %v136, %v136
    %v138 = vsel %vm50, %v137, 0.0
    %139 = vadd.xlane.f32.xlu0 %v138
    %v140 = vpop.xlane.xlu0 %139
    %v141 = vrcp.pop 31.0
    %v142 = vmul.f32 31.0, %v141
    %v143 = vsub.f32 1.0, %v142
    %v144 = vmul.f32 %v141, %v143
    %v145 = vadd.f32 %v141, %v144
    %vm146 = vweird.f32 %v141
    %v147 = vsel %vm146, %v141, %v145
    %v148 = vmul.f32 %v140, %v147
    %v150 = vperm.slane %v123, 0
    %v152 = vmul.f32 %v150, %v136
    %v153 = vrsqrt.pop %v148
    %v154 = vmul.f32 %v153, %v148
    %v155 = vmul.f32 %v154, %v153
    %v156 = vmul.f32 0.5, %v155
    %v157 = vsub.f32 1.5, %v156
    %v158 = vmul.f32 %v153, %v157
    %v159 = vmul.f32 %v148, %v158
    %vm160 = vcmp.eq.f32.partialorder %v148, inf
    %v161 = vsel %vm160, %v148, %v159
    %vm162 = vcmp.eq.f32.partialorder %v148, 0.0
    %v163 = vand.u32 %v148, 2147483648
    %v164 = vsel %vm162, %v163, %v161
    %v165 = vadd.f32 %v164, 1e-06
    %v166 = vrcp.pop %v165
    %v167 = vmul.f32 %v165, %v166
    %v168 = vsub.f32 1.0, %v167
    %v169 = vmul.f32 %v166, %v168
    %v170 = vadd.f32 %v166, %v169
    %vm171 = vweird.f32 %v165
    %vm172 = vweird.f32 %v166
    %vm173 = vmor %vm171, %vm172
    %v174 = vsel %vm173, %v166, %v170
    %v175 = vand.u32 2147483647, %v165
    %vm176 = vcmp.eq.f32.partialorder %v175, 8.507059e+37
    %v177 = vand.u32 %v165, 2147483648
    %v178 = vor.u32 1.1754944e-38, %v177
    %v179 = vsel %vm176, %v178, %v174
    %v180 = vmul.f32 %v152, %v179
    %v182 = vperm.slane %v124, 0
    %v184 = vadd.f32 %v180, %v182
    %185 = vst.msk [vmem:[#allocation2] sm:$0xff] %vm50, %v184
    // Predicated region
    $region30: #{gat_encoder_forward.21} parent=1 // pred_check
      _
    $region31: #{gat_encoder_forward.21} parent=1 // pred_check_branch
      %187 = sbr.rel (0) target = $region33
    $region32: #{gat_encoder_forward.21} parent=1 // pred_region
      %189 = vsyncadd [#allocation3], 0
      %s191 = sshll.u32 [#allocation2], 4
      %s192 = int_to_ptr.vmem [resolvable:$true] %s191
      %s193 = sshll.u32 %s7, 4
      %s194 = int_to_ptr.hbm [resolvable:$true] %s193
      %196 = dma.vmem_to_hbm [thread:$0]  %s192, 128, %s194, [#allocation3]
    $region33: #{gat_encoder_forward.21} parent=1 // pred_fallthru
      _
    // Predicated region
    $region34: #{gat_encoder_forward.21} parent=1 // pred_check
      _
    $region35: #{gat_encoder_forward.21} parent=1 // pred_check_branch
      %198 = sbr.rel (0) target = $region37
    $region36: #{gat_encoder_forward.21} parent=1 // pred_region
      %200 = dma.done [#allocation3], 128
    $region37: #{gat_encoder_forward.21} parent=1 // pred_fallthru
      _
    %201 = vsyncpa [#allocation3], 1

// kernel: gat_encoder_forward.19
$region0: #{gat_encoder_forward.19}
  #allocation0 [shape = 'u32[]', space=smem, size = 0x4, offset = 0x4, fixed_abs, tag = 'smem constant byte address 0x4 - core index']
  #allocation1 [shape = 'u32[72,128]{1,0:T(1,128)}', space=vmem, size = 0x9000, scoped, tag = 'internal scratch']
  %s0 = inlined_call_operand.vmem [shape: f32[2,8,32], index: 0, kind: input, shape index: {}]
  %s1 = inlined_call_operand.vmem [shape: f32[2,4,32], index: 1, kind: input, shape index: {}]
  %s2 = inlined_call_operand.vmem [shape: bf16[32,64], index: 2, kind: input, shape index: {}]
  %s3 = inlined_call_operand.vmem [shape: f32[1,64], index: 3, kind: input, shape index: {}]
  %s4 = inlined_call_operand.vmem [shape: bf16[32,64], index: 4, kind: input, shape index: {}]
  %s5 = inlined_call_operand.hbm [shape: f32[1,64], index: 5, kind: input, shape index: {}]
  %s6 = inlined_call_operand.vmem [shape: f32[2,8,4], index: 6, kind: input, shape index: {}]
  %s7 = inlined_call_operand.hbm [shape: f32[1,32], index: 7, kind: input, shape index: {}]
  %s8 = inlined_call_operand.hbm [shape: f32[1,32], index: 8, kind: input, shape index: {}]
  %s9 = inlined_call_operand.hbm [shape: f32[1,32], index: 9, kind: input, shape index: {}]
  %s10 = inlined_call_operand.hbm [shape: f32[1,32], index: 10, kind: input, shape index: {}]
  %s11 = inlined_call_operand.vmem [shape: f32[2,8,32], index: 11, kind: output, shape index: {0}]
  %s12 = inlined_call_operand.vmem [shape: f32[2,4,32], index: 12, kind: output, shape index: {1}]
  %13 = xla_tuple %s11, %s12
  %s14 = sld [smem:[#allocation0]]
  $region105: #{gat_encoder_forward.19} parent=0
    _
  %s16 = ssub.s32 1, %s14
  %s17 = scalar_select 0, %s16, %s14
  $region1: #{gat_encoder_forward.19} parent=0
    #allocation2 [shape = 'u8[512]{0}', space=vmem, size = 0x400, scoped, tag = 'input window, operand 5, single buffered']
    #allocation3 [shape = 's32[2]{0}', space=sflag, size = 0x8, scoped, tag = 'scoped memory for gat_encoder_forward.19']
    #allocation4 [shape = 'u8[512]{0}', space=vmem, size = 0x400, scoped, tag = 'input window, operand 7, single buffered']
    #allocation5 [shape = 's32[1]{0}', space=sflag, size = 0x4, scoped, tag = 'scoped memory for gat_encoder_forward.19']
    #allocation6 [shape = 'u8[512]{0}', space=vmem, size = 0x400, scoped, tag = 'input window, operand 8, single buffered']
    #allocation7 [shape = 'u8[512]{0}', space=vmem, size = 0x400, scoped, tag = 'input window, operand 9, single buffered']
    #allocation8 [shape = 's32[1]{0}', space=sflag, size = 0x4, scoped, tag = 'scoped memory for gat_encoder_forward.19']
    #allocation9 [shape = 'u8[512]{0}', space=vmem, size = 0x400, scoped, tag = 'input window, operand 10, single buffered']
    %18 = vsyncpa [#allocation3], 0
    %19 = vsyncpa [#allocation5], 0
    %20 = vsyncpa [#allocation8], 0
    loop: start=0, step=1, limit=4
    $region2: #{gat_encoder_forward.19} parent=1 // loop_pre_header
      _
    $region3: #{gat_encoder_forward.19} parent=1 // loop_header
      %s22 = sphi 0, %s26
      %p23 = scmp.ge.s32.totalorder %s22, 4
      %s32 = sphi 0, %s34
      %s35 = sphi 0, %s32
      %s36 = sphi 0, %s35
      %s52 = sphi 0, %s36
      %s58 = sphi 0, %s60
      %s61 = sphi 0, %s58
      %s62 = sphi 0, %s61
      %s78 = sphi 0, %s62
      %s82 = sphi 0, %s82
      %s84 = sphi 0, %s82
      %s85 = sphi 0, %s84
      %s99 = sphi 0, %s85
      %s103 = sphi 0, %s103
      %s105 = sphi 0, %s103
      %s106 = sphi 0, %s105
      %s120 = sphi 0, %s106
      %s124 = sphi 0, %s124
      %s126 = sphi 0, %s124
      %s127 = sphi 0, %s126
      %s141 = sphi 0, %s127
      %s145 = sphi 0, %s145
      %s147 = sphi 0, %s145
      %s148 = sphi 0, %s147
      %s162 = sphi 0, %s148
      %s168 = sphi 0, %s170
      %s171 = sphi 0, %s168
      %s172 = sphi 0, %s171
      %s188 = sphi 0, %s172
      %s192 = sphi 0, %s192
      %s194 = sphi 0, %s192
      %s195 = sphi 0, %s194
      %s209 = sphi 0, %s195
      %s213 = sphi 0, %s213
      %s215 = sphi 0, %s213
      %s216 = sphi 0, %s215
      %s230 = sphi 0, %s216
      %s234 = sphi 0, %s234
      %s236 = sphi 0, %s234
      %s237 = sphi 0, %s236
      %s251 = sphi 0, %s237
      %s255 = sphi 0, %s255
      %s257 = sphi 0, %s255
      %s258 = sphi 0, %s257
      %s272 = sphi 0, %s258
      %s278 = sphi 0, %s280
      %s281 = sphi 0, %s278
      %s282 = sphi 0, %s281
      %s298 = sphi 0, %s282
      %s304 = sphi 0, %s306
      %s307 = sphi 0, %s304
      %s308 = sphi 0, %s307
      %s324 = sphi 0, %s308
    $region4: #{gat_encoder_forward.19} parent=1 // loop_header_branch
      %25 = sbr.rel (%p23) target = $region8
    $region5: #{gat_encoder_forward.19} parent=1 // loop_body
      %s27 = ssub.s32 %s22, 1
      %s28 = ssub.s32 %s22, 2
      %s29 = sadd.s32 %s22, 1
      %s30 = ssub.s32 %s22, %s29
      %p31 = scmp.eq.s32.totalorder %s30, 0
      %s33 = sadd.s32 %s32, 1
      %s34 = scalar_select %p31, %s32, %s33
      %p37 = pneg %p31
      %p38 = scmp.eq.s32.totalorder %s22, 1
      %p39 = por %p37, %p38
      %p40 = scmp.ne.s32.totalorder %s32, %s35
      %p41 = scmp.eq.s32.totalorder %s22, 0
      %p42 = por %p40, %p41
      %p43 = scmp.ne.s32.totalorder %s32, %s35
      %p44 = scmp.eq.s32.totalorder %s27, 1
      %p45 = por %p43, %p44
      %p46 = scmp.ne.s32.totalorder %s35, %s36
      %p47 = scmp.eq.s32.totalorder %s27, 0
      %p48 = por %p46, %p47
      %p49 = scmp.ne.s32.totalorder %s35, %s36
      %p50 = scmp.eq.s32.totalorder %s28, 1
      %p51 = por %p49, %p50
      %p53 = scmp.ne.s32.totalorder %s36, %s52
      %p54 = scmp.eq.s32.totalorder %s28, 0
      %p55 = por %p53, %p54
      %s56 = ssub.s32 %s22, %s29
      %p57 = scmp.eq.s32.totalorder %s56, 0
      %s59 = sadd.s32 %s58, 1
      %s60 = scalar_select %p57, %s58, %s59
      %p63 = pneg %p57
      %p64 = scmp.eq.s32.totalorder %s22, 1
      %p65 = por %p63, %p64
      %p66 = scmp.ne.s32.totalorder %s58, %s61
      %p67 = scmp.eq.s32.totalorder %s22, 0
      %p68 = por %p66, %p67
      %p69 = scmp.ne.s32.totalorder %s58, %s61
      %p70 = scmp.eq.s32.totalorder %s27, 1
      %p71 = por %p69, %p70
      %p72 = scmp.ne.s32.totalorder %s61, %s62
      %p73 = scmp.eq.s32.totalorder %s27, 0
      %p74 = por %p72, %p73
      %p75 = scmp.ne.s32.totalorder %s61, %s62
      %p76 = scmp.eq.s32.totalorder %s28, 1
      %p77 = por %p75, %p76
      %p79 = scmp.ne.s32.totalorder %s62, %s78
      %p80 = scmp.eq.s32.totalorder %s28, 0
      %p81 = por %p79, %p80
      %s83 = sadd.s32 %s82, 1
      %p86 = scmp.eq.s32.totalorder %s22, 1
      %p87 = scmp.ne.s32.totalorder %s82, %s84
      %p88 = scmp.eq.s32.totalorder %s22, 0
      %p89 = por %p87, %p88
      %p90 = scmp.ne.s32.totalorder %s82, %s84
      %p91 = scmp.eq.s32.totalorder %s27, 1
      %p92 = por %p90, %p91
      %p93 = scmp.ne.s32.totalorder %s84, %s85
      %p94 = scmp.eq.s32.totalorder %s27, 0
      %p95 = por %p93, %p94
      %p96 = scmp.ne.s32.totalorder %s84, %s85
      %p97 = scmp.eq.s32.totalorder %s28, 1
      %p98 = por %p96, %p97
      %p100 = scmp.ne.s32.totalorder %s85, %s99
      %p101 = scmp.eq.s32.totalorder %s28, 0
      %p102 = por %p100, %p101
      %s104 = sadd.s32 %s103, 1
      %p107 = scmp.eq.s32.totalorder %s22, 1
      %p108 = scmp.ne.s32.totalorder %s103, %s105
      %p109 = scmp.eq.s32.totalorder %s22, 0
      %p110 = por %p108, %p109
      %p111 = scmp.ne.s32.totalorder %s103, %s105
      %p112 = scmp.eq.s32.totalorder %s27, 1
      %p113 = por %p111, %p112
      %p114 = scmp.ne.s32.totalorder %s105, %s106
      %p115 = scmp.eq.s32.totalorder %s27, 0
      %p116 = por %p114, %p115
      %p117 = scmp.ne.s32.totalorder %s105, %s106
      %p118 = scmp.eq.s32.totalorder %s28, 1
      %p119 = por %p117, %p118
      %p121 = scmp.ne.s32.totalorder %s106, %s120
      %p122 = scmp.eq.s32.totalorder %s28, 0
      %p123 = por %p121, %p122
      %s125 = sadd.s32 %s124, 1
      %p128 = scmp.eq.s32.totalorder %s22, 1
      %p129 = scmp.ne.s32.totalorder %s124, %s126
      %p130 = scmp.eq.s32.totalorder %s22, 0
      %p131 = por %p129, %p130
      %p132 = scmp.ne.s32.totalorder %s124, %s126
      %p133 = scmp.eq.s32.totalorder %s27, 1
      %p134 = por %p132, %p133
      %p135 = scmp.ne.s32.totalorder %s126, %s127
      %p136 = scmp.eq.s32.totalorder %s27, 0
      %p137 = por %p135, %p136
      %p138 = scmp.ne.s32.totalorder %s126, %s127
      %p139 = scmp.eq.s32.totalorder %s28, 1
      %p140 = por %p138, %p139
      %p142 = scmp.ne.s32.totalorder %s127, %s141
      %p143 = scmp.eq.s32.totalorder %s28, 0
      %p144 = por %p142, %p143
      %s146 = sadd.s32 %s145, 1
      %p149 = scmp.eq.s32.totalorder %s22, 1
      %p150 = scmp.ne.s32.totalorder %s145, %s147
      %p151 = scmp.eq.s32.totalorder %s22, 0
      %p152 = por %p150, %p151
      %p153 = scmp.ne.s32.totalorder %s145, %s147
      %p154 = scmp.eq.s32.totalorder %s27, 1
      %p155 = por %p153, %p154
      %p156 = scmp.ne.s32.totalorder %s147, %s148
      %p157 = scmp.eq.s32.totalorder %s27, 0
      %p158 = por %p156, %p157
      %p159 = scmp.ne.s32.totalorder %s147, %s148
      %p160 = scmp.eq.s32.totalorder %s28, 1
      %p161 = por %p159, %p160
      %p163 = scmp.ne.s32.totalorder %s148, %s162
      %p164 = scmp.eq.s32.totalorder %s28, 0
      %p165 = por %p163, %p164
      %s166 = ssub.s32 %s22, %s29
      %p167 = scmp.eq.s32.totalorder %s166, 0
      %s169 = sadd.s32 %s168, 1
      %s170 = scalar_select %p167, %s168, %s169
      %p173 = pneg %p167
      %p174 = scmp.eq.s32.totalorder %s22, 1
      %p175 = por %p173, %p174
      %p176 = scmp.ne.s32.totalorder %s168, %s171
      %p177 = scmp.eq.s32.totalorder %s22, 0
      %p178 = por %p176, %p177
      %p179 = scmp.ne.s32.totalorder %s168, %s171
      %p180 = scmp.eq.s32.totalorder %s27, 1
      %p181 = por %p179, %p180
      %p182 = scmp.ne.s32.totalorder %s171, %s172
      %p183 = scmp.eq.s32.totalorder %s27, 0
      %p184 = por %p182, %p183
      %p185 = scmp.ne.s32.totalorder %s171, %s172
      %p186 = scmp.eq.s32.totalorder %s28, 1
      %p187 = por %p185, %p186
      %p189 = scmp.ne.s32.totalorder %s172, %s188
      %p190 = scmp.eq.s32.totalorder %s28, 0
      %p191 = por %p189, %p190
      %s193 = sadd.s32 %s192, 1
      %p196 = scmp.eq.s32.totalorder %s22, 1
      %p197 = scmp.ne.s32.totalorder %s192, %s194
      %p198 = scmp.eq.s32.totalorder %s22, 0
      %p199 = por %p197, %p198
      %p200 = scmp.ne.s32.totalorder %s192, %s194
      %p201 = scmp.eq.s32.totalorder %s27, 1
      %p202 = por %p200, %p201
      %p203 = scmp.ne.s32.totalorder %s194, %s195
      %p204 = scmp.eq.s32.totalorder %s27, 0
      %p205 = por %p203, %p204
      %p206 = scmp.ne.s32.totalorder %s194, %s195
      %p207 = scmp.eq.s32.totalorder %s28, 1
      %p208 = por %p206, %p207
      %p210 = scmp.ne.s32.totalorder %s195, %s209
      %p211 = scmp.eq.s32.totalorder %s28, 0
      %p212 = por %p210, %p211
      %s214 = sadd.s32 %s213, 1
      %p217 = scmp.eq.s32.totalorder %s22, 1
      %p218 = scmp.ne.s32.totalorder %s213, %s215
      %p219 = scmp.eq.s32.totalorder %s22, 0
      %p220 = por %p218, %p219
      %p221 = scmp.ne.s32.totalorder %s213, %s215
      %p222 = scmp.eq.s32.totalorder %s27, 1
      %p223 = por %p221, %p222
      %p224 = scmp.ne.s32.totalorder %s215, %s216
      %p225 = scmp.eq.s32.totalorder %s27, 0
      %p226 = por %p224, %p225
      %p227 = scmp.ne.s32.totalorder %s215, %s216
      %p228 = scmp.eq.s32.totalorder %s28, 1
      %p229 = por %p227, %p228
      %p231 = scmp.ne.s32.totalorder %s216, %s230
      %p232 = scmp.eq.s32.totalorder %s28, 0
      %p233 = por %p231, %p232
      %s235 = sadd.s32 %s234, 1
      %p238 = scmp.eq.s32.totalorder %s22, 1
      %p239 = scmp.ne.s32.totalorder %s234, %s236
      %p240 = scmp.eq.s32.totalorder %s22, 0
      %p241 = por %p239, %p240
      %p242 = scmp.ne.s32.totalorder %s234, %s236
      %p243 = scmp.eq.s32.totalorder %s27, 1
      %p244 = por %p242, %p243
      %p245 = scmp.ne.s32.totalorder %s236, %s237
      %p246 = scmp.eq.s32.totalorder %s27, 0
      %p247 = por %p245, %p246
      %p248 = scmp.ne.s32.totalorder %s236, %s237
      %p249 = scmp.eq.s32.totalorder %s28, 1
      %p250 = por %p248, %p249
      %p252 = scmp.ne.s32.totalorder %s237, %s251
      %p253 = scmp.eq.s32.totalorder %s28, 0
      %p254 = por %p252, %p253
      %s256 = sadd.s32 %s255, 1
      %p259 = scmp.eq.s32.totalorder %s22, 1
      %p260 = scmp.ne.s32.totalorder %s255, %s257
      %p261 = scmp.eq.s32.totalorder %s22, 0
      %p262 = por %p260, %p261
      %p263 = scmp.ne.s32.totalorder %s255, %s257
      %p264 = scmp.eq.s32.totalorder %s27, 1
      %p265 = por %p263, %p264
      %p266 = scmp.ne.s32.totalorder %s257, %s258
      %p267 = scmp.eq.s32.totalorder %s27, 0
      %p268 = por %p266, %p267
      %p269 = scmp.ne.s32.totalorder %s257, %s258
      %p270 = scmp.eq.s32.totalorder %s28, 1
      %p271 = por %p269, %p270
      %p273 = scmp.ne.s32.totalorder %s258, %s272
      %p274 = scmp.eq.s32.totalorder %s28, 0
      %p275 = por %p273, %p274
      %s276 = ssub.s32 %s22, %s29
      %p277 = scmp.eq.s32.totalorder %s276, 0
      %s279 = sadd.s32 %s278, 1
      %s280 = scalar_select %p277, %s278, %s279
      %p283 = pneg %p277
      %p284 = scmp.eq.s32.totalorder %s22, 1
      %p285 = por %p283, %p284
      %p286 = scmp.ne.s32.totalorder %s278, %s281
      %p287 = scmp.eq.s32.totalorder %s22, 0
      %p288 = por %p286, %p287
      %p289 = scmp.ne.s32.totalorder %s278, %s281
      %p290 = scmp.eq.s32.totalorder %s27, 1
      %p291 = por %p289, %p290
      %p292 = scmp.ne.s32.totalorder %s281, %s282
      %p293 = scmp.eq.s32.totalorder %s27, 0
      %p294 = por %p292, %p293
      %p295 = scmp.ne.s32.totalorder %s281, %s282
      %p296 = scmp.eq.s32.totalorder %s28, 1
      %p297 = por %p295, %p296
      %p299 = scmp.ne.s32.totalorder %s282, %s298
      %p300 = scmp.eq.s32.totalorder %s28, 0
      %p301 = por %p299, %p300
      %s302 = ssub.s32 %s22, %s29
      %p303 = scmp.eq.s32.totalorder %s302, 0
      %s305 = sadd.s32 %s304, 1
      %s306 = scalar_select %p303, %s304, %s305
      %p309 = pneg %p303
      %p310 = scmp.eq.s32.totalorder %s22, 1
      %p311 = por %p309, %p310
      %p312 = scmp.ne.s32.totalorder %s304, %s307
      %p313 = scmp.eq.s32.totalorder %s22, 0
      %p314 = por %p312, %p313
      %p315 = scmp.ne.s32.totalorder %s304, %s307
      %p316 = scmp.eq.s32.totalorder %s27, 1
      %p317 = por %p315, %p316
      %p318 = scmp.ne.s32.totalorder %s307, %s308
      %p319 = scmp.eq.s32.totalorder %s27, 0
      %p320 = por %p318, %p319
      %p321 = scmp.ne.s32.totalorder %s307, %s308
      %p322 = scmp.eq.s32.totalorder %s28, 1
      %p323 = por %p321, %p322
      %p325 = scmp.ne.s32.totalorder %s308, %s324
      %p326 = scmp.eq.s32.totalorder %s28, 0
      %p327 = por %p325, %p326
      %p328 = scmp.le.s32.totalorder 1, %s22
      %p329 = scmp.lt.s32.totalorder %s22, 3
      %p330 = pnand %p328, %p329
      %p331 = pneg %p330
      // Predicated region
      $region9: #{gat_encoder_forward.19} parent=5 // pred_check
        _
      $region10: #{gat_encoder_forward.19} parent=5 // pred_check_branch
        %333 = sbr.rel (%p330) target = $region12
      $region11: #{gat_encoder_forward.19} parent=5 // pred_region
        %s334 = ssub.s32 %s22, 1
        // Predicated region
        $region13: #{gat_encoder_forward.19} parent=11 // pred_check
          %p335 = pneg %p95
        $region14: #{gat_encoder_forward.19} parent=11 // pred_check_branch
          %337 = sbr.rel (%p335) target = $region16
        $region15: #{gat_encoder_forward.19} parent=11 // pred_region
          _
        $region16: #{gat_encoder_forward.19} parent=11 // pred_fallthru
          _
        // Predicated region
        $region17: #{gat_encoder_forward.19} parent=11 // pred_check
          %p338 = pneg %p116
        $region18: #{gat_encoder_forward.19} parent=11 // pred_check_branch
          %340 = sbr.rel (%p338) target = $region20
        $region19: #{gat_encoder_forward.19} parent=11 // pred_region
          _
        $region20: #{gat_encoder_forward.19} parent=11 // pred_fallthru
          _
        // Predicated region
        $region21: #{gat_encoder_forward.19} parent=11 // pred_check
          %p341 = pneg %p137
        $region22: #{gat_encoder_forward.19} parent=11 // pred_check_branch
          %343 = sbr.rel (%p341) target = $region24
        $region23: #{gat_encoder_forward.19} parent=11 // pred_region
          _
        $region24: #{gat_encoder_forward.19} parent=11 // pred_fallthru
          _
        // Predicated region
        $region25: #{gat_encoder_forward.19} parent=11 // pred_check
          %p344 = pneg %p158
        $region26: #{gat_encoder_forward.19} parent=11 // pred_check_branch
          %346 = sbr.rel (%p344) target = $region28
        $region27: #{gat_encoder_forward.19} parent=11 // pred_region
          %348 = vsyncadd [#allocation3], 0
          %s350 = sshll.u32 %s5, 4
          %s351 = int_to_ptr.hbm [resolvable:$true] %s350
          %s352 = sshll.u32 [#allocation2], 4
          %s353 = int_to_ptr.vmem [resolvable:$true] %s352
          %355 = dma.hbm_to_vmem [thread:$0]  %s351, 16, %s353, [#allocation3]
        $region28: #{gat_encoder_forward.19} parent=11 // pred_fallthru
          _
        // Predicated region
        $region29: #{gat_encoder_forward.19} parent=11 // pred_check
          %p356 = pneg %p205
        $region30: #{gat_encoder_forward.19} parent=11 // pred_check_branch
          %358 = sbr.rel (%p356) target = $region32
        $region31: #{gat_encoder_forward.19} parent=11 // pred_region
          %360 = vsyncadd [#allocation5], 0
          %s362 = sshll.u32 %s7, 4
          %s363 = int_to_ptr.hbm [resolvable:$true] %s362
          %s364 = sshll.u32 [#allocation4], 4
          %s365 = int_to_ptr.vmem [resolvable:$true] %s364
          %367 = dma.hbm_to_vmem [thread:$0]  %s363, 16, %s365, [#allocation5]
        $region32: #{gat_encoder_forward.19} parent=11 // pred_fallthru
          _
        // Predicated region
        $region33: #{gat_encoder_forward.19} parent=11 // pred_check
          %p368 = pneg %p226
        $region34: #{gat_encoder_forward.19} parent=11 // pred_check_branch
          %370 = sbr.rel (%p368) target = $region36
        $region35: #{gat_encoder_forward.19} parent=11 // pred_region
          %372 = vsyncadd [#allocation5], 0
          %s374 = sshll.u32 %s8, 4
          %s375 = int_to_ptr.hbm [resolvable:$true] %s374
          %s376 = sshll.u32 [#allocation6], 4
          %s377 = int_to_ptr.vmem [resolvable:$true] %s376
          %379 = dma.hbm_to_vmem [thread:$0]  %s375, 16, %s377, [#allocation5]
        $region36: #{gat_encoder_forward.19} parent=11 // pred_fallthru
          _
        // Predicated region
        $region37: #{gat_encoder_forward.19} parent=11 // pred_check
          %p380 = pneg %p247
        $region38: #{gat_encoder_forward.19} parent=11 // pred_check_branch
          %382 = sbr.rel (%p380) target = $region40
        $region39: #{gat_encoder_forward.19} parent=11 // pred_region
          %384 = vsyncadd [#allocation8], 0
          %s386 = sshll.u32 %s9, 4
          %s387 = int_to_ptr.hbm [resolvable:$true] %s386
          %s388 = sshll.u32 [#allocation7], 4
          %s389 = int_to_ptr.vmem [resolvable:$true] %s388
          %391 = dma.hbm_to_vmem [thread:$0]  %s387, 16, %s389, [#allocation8]
        $region40: #{gat_encoder_forward.19} parent=11 // pred_fallthru
          _
        // Predicated region
        $region41: #{gat_encoder_forward.19} parent=11 // pred_check
          %p392 = pneg %p268
        $region42: #{gat_encoder_forward.19} parent=11 // pred_check_branch
          %394 = sbr.rel (%p392) target = $region44
        $region43: #{gat_encoder_forward.19} parent=11 // pred_region
          %396 = vsyncadd [#allocation8], 0
          %s398 = sshll.u32 %s10, 4
          %s399 = int_to_ptr.hbm [resolvable:$true] %s398
          %s400 = sshll.u32 [#allocation9], 4
          %s401 = int_to_ptr.vmem [resolvable:$true] %s400
          %403 = dma.hbm_to_vmem [thread:$0]  %s399, 16, %s401, [#allocation8]
        $region44: #{gat_encoder_forward.19} parent=11 // pred_fallthru
          _
      $region12: #{gat_encoder_forward.19} parent=5 // pred_fallthru
        _
      %p404 = scmp.lt.s32.totalorder %s22, 2
      // Predicated region
      $region45: #{gat_encoder_forward.19} parent=5 // pred_check
        %p405 = pneg %p404
      $region46: #{gat_encoder_forward.19} parent=5 // pred_check_branch
        %407 = sbr.rel (%p405) target = $region48
      $region47: #{gat_encoder_forward.19} parent=5 // pred_region
        // Predicated region
        $region49: #{gat_encoder_forward.19} parent=47 // pred_check
          %p408 = pneg %p42
        $region50: #{gat_encoder_forward.19} parent=47 // pred_check_branch
          %410 = sbr.rel (%p408) target = $region52
        $region51: #{gat_encoder_forward.19} parent=47 // pred_region
          %p411 = scmp.lt.s32.totalorder %s22, 1
          %s412 = scalar_select %p411, %s22, 1
          %s413 = smul.addr %s412, 8
          %s414 = scalar_lea.vmem %s0, %s413
        $region52: #{gat_encoder_forward.19} parent=47 // pred_fallthru
          _
        // Predicated region
        $region53: #{gat_encoder_forward.19} parent=47 // pred_check
          %p415 = pneg %p68
        $region54: #{gat_encoder_forward.19} parent=47 // pred_check_branch
          %417 = sbr.rel (%p415) target = $region56
        $region55: #{gat_encoder_forward.19} parent=47 // pred_region
          %p418 = scmp.lt.s32.totalorder %s22, 1
          %s419 = scalar_select %p418, %s22, 1
          %s420 = smul.addr %s419, 4
          %s421 = scalar_lea.vmem %s1, %s420
        $region56: #{gat_encoder_forward.19} parent=47 // pred_fallthru
          _
        // Predicated region
        $region57: #{gat_encoder_forward.19} parent=47 // pred_check
          %p422 = pneg %p178
        $region58: #{gat_encoder_forward.19} parent=47 // pred_check_branch
          %424 = sbr.rel (%p422) target = $region60
        $region59: #{gat_encoder_forward.19} parent=47 // pred_region
          %p425 = scmp.lt.s32.totalorder %s22, 1
          %s426 = scalar_select %p425, %s22, 1
          %s427 = smul.addr %s426, 8
          %s428 = scalar_lea.vmem %s6, %s427
        $region60: #{gat_encoder_forward.19} parent=47 // pred_fallthru
          _
      $region48: #{gat_encoder_forward.19} parent=5 // pred_fallthru
        _
      %p429 = scmp.le.s32.totalorder 1, %s22
      %p430 = scmp.lt.s32.totalorder %s22, 3
      %p431 = pnand %p429, %p430
      %p432 = pneg %p431
      // Predicated region
      $region61: #{gat_encoder_forward.19} parent=5 // pred_check
        _
      $region62: #{gat_encoder_forward.19} parent=5 // pred_check_branch
        %434 = sbr.rel (%p431) target = $region64
      $region63: #{gat_encoder_forward.19} parent=5 // pred_region
        %s435 = ssub.s32 %s22, 1
        // Predicated region
        $region65: #{gat_encoder_forward.19} parent=63 // pred_check
          %p436 = pneg %p158
        $region66: #{gat_encoder_forward.19} parent=63 // pred_check_branch
          %438 = sbr.rel (%p436) target = $region68
        $region67: #{gat_encoder_forward.19} parent=63 // pred_region
          %440 = dma.done [#allocation3], 16
        $region68: #{gat_encoder_forward.19} parent=63 // pred_fallthru
          _
        // Predicated region
        $region69: #{gat_encoder_forward.19} parent=63 // pred_check
          %p441 = pneg %p205
        $region70: #{gat_encoder_forward.19} parent=63 // pred_check_branch
          %443 = sbr.rel (%p441) target = $region72
        $region71: #{gat_encoder_forward.19} parent=63 // pred_region
          %445 = dma.done [#allocation5], 16
        $region72: #{gat_encoder_forward.19} parent=63 // pred_fallthru
          _
        // Predicated region
        $region73: #{gat_encoder_forward.19} parent=63 // pred_check
          %p446 = pneg %p226
        $region74: #{gat_encoder_forward.19} parent=63 // pred_check_branch
          %448 = sbr.rel (%p446) target = $region76
        $region75: #{gat_encoder_forward.19} parent=63 // pred_region
          %450 = dma.done [#allocation5], 16
        $region76: #{gat_encoder_forward.19} parent=63 // pred_fallthru
          _
        // Predicated region
        $region77: #{gat_encoder_forward.19} parent=63 // pred_check
          %p451 = pneg %p247
        $region78: #{gat_encoder_forward.19} parent=63 // pred_check_branch
          %453 = sbr.rel (%p451) target = $region80
        $region79: #{gat_encoder_forward.19} parent=63 // pred_region
          %455 = dma.done [#allocation8], 16
        $region80: #{gat_encoder_forward.19} parent=63 // pred_fallthru
          _
        // Predicated region
        $region81: #{gat_encoder_forward.19} parent=63 // pred_check
          %p456 = pneg %p268
        $region82: #{gat_encoder_forward.19} parent=63 // pred_check_branch
          %458 = sbr.rel (%p456) target = $region84
        $region83: #{gat_encoder_forward.19} parent=63 // pred_region
          %460 = dma.done [#allocation8], 16
        $region84: #{gat_encoder_forward.19} parent=63 // pred_fallthru
          _
        %p461 = scmp.lt.s32.totalorder %s27, 1
        %s462 = scalar_select %p461, %s27, 1
        %s463 = smul.addr %s462, 8
        %s464 = scalar_lea.vmem %s0, %s463
        %p465 = pneg %p48
        %p466 = pneg %p45
        %p467 = scmp.lt.s32.totalorder %s27, 1
        %s468 = scalar_select %p467, %s27, 1
        %s469 = smul.addr %s468, 4
        %s470 = scalar_lea.vmem %s1, %s469
        %p471 = pneg %p74
        %p472 = pneg %p71
        %p473 = pneg %p95
        %p474 = pneg %p92
        %p475 = pneg %p116
        %p476 = pneg %p113
        %p477 = pneg %p137
        %p478 = pneg %p134
        %p479 = pneg %p158
        %p480 = pneg %p155
        %p481 = scmp.lt.s32.totalorder %s27, 1
        %s482 = scalar_select %p481, %s27, 1
        %s483 = smul.addr %s482, 8
        %s484 = scalar_lea.vmem %s6, %s483
        %p485 = pneg %p184
        %p486 = pneg %p181
        %p487 = pneg %p205
        %p488 = pneg %p202
        %p489 = pneg %p226
        %p490 = pneg %p223
        %p491 = pneg %p247
        %p492 = pneg %p244
        %p493 = pneg %p268
        %p494 = pneg %p265
        %p495 = pneg %p294
        %p496 = pneg %p291
        %p497 = scmp.lt.s32.totalorder %s27, 1
        %s498 = scalar_select %p497, %s27, 1
        %s499 = smul.addr %s498, 8
        %s500 = scalar_lea.vmem %s11, %s499
        %p501 = pneg %p320
        %p502 = pneg %p317
        %p503 = scmp.lt.s32.totalorder %s27, 1
        %s504 = scalar_select %p503, %s27, 1
        %s505 = smul.addr %s504, 4
        %s506 = scalar_lea.vmem %s12, %s505
        %p507 = scmp.lt.s32.totalorder %s27, 1
        %s508 = scalar_select %p507, %s27, 1
        %s509 = smul.addr %s508, 8
        %s510 = scalar_lea.vmem %s0, %s509
        %p511 = scmp.lt.s32.totalorder %s27, 1
        %s512 = scalar_select %p511, %s27, 1
        %s513 = smul.addr %s512, 4
        %s514 = scalar_lea.vmem %s1, %s513
        %p515 = scmp.lt.s32.totalorder %s27, 1
        %s516 = scalar_select %p515, %s27, 1
        %s517 = smul.addr %s516, 8
        %s518 = scalar_lea.vmem %s6, %s517
        %p519 = scmp.lt.s32.totalorder %s27, 1
        %s520 = scalar_select %p519, %s27, 1
        %s521 = smul.addr %s520, 8
        %s522 = scalar_lea.vmem %s11, %s521
        %p523 = scmp.lt.s32.totalorder %s27, 1
        %s524 = scalar_select %p523, %s27, 1
        %s525 = smul.addr %s524, 4
        %s526 = scalar_lea.vmem %s12, %s525
        %v528 = vld [vmem:[%s510] sm:$0xff]
        %v529 = vld [vmem:[%s514] sm:$0xf]
        %v530 = vld [vmem:[%s518] sm:$0xff]
        %v531 = vpack.c.bf16 %v528, %v528
        %v532 = vld [vmem:[%s2] sm:$0xf]
        %v533 = vld [vmem:[%s2 + $0x4] sm:$0xf]
        %v534 = vld [vmem:[%s2 + $0x8] sm:$0xf]
        %v535 = vld [vmem:[%s2 + $0xc] sm:$0xf]
        %v536 = vld [vmem:[%s3] sm:$0x1]
        %v538 = vperm.slane %v536, 0
        %v544 = vunpack.c.l.b16 %v532
        %v545 = vunpack.c.l.b16 %v533
        %v546 = vunpack.c.l.b16 %v534
        %v547 = vunpack.c.l.b16 %v535
        %v548 = vpack.c.b16 %v545, %v544
        %v549 = vpack.c.b16 %v547, %v546
        %vm552 = vcmask 261120
        %v554 = vsel %vm552, %v531, 0
        %556 = vmatpush.bf16.msra.mxu0 0
        %557 = vmatpush.bf16.msra.mxu0 0
        %558 = vmatpush.bf16.msra.mxu0 0
        %559 = vmatpush.bf16.msra.mxu0 0
        %560 = vmatpush.bf16.msra.mxu0 0
        %561 = vmatpush.bf16.msra.mxu0 0
        %562 = vmatpush.bf16.msra.mxu0 %v549
        %563 = vmatpush.bf16.msra.mxu0 %v548
        %564 = vmatmul.bf16.gmra.mxu0 %v554
        %v565 = vpop.f32.mrf.mxu0
        %v566 = vadd.f32 %v538, %v565
        %v567 = vpop.f32.mrf.mxu0
        %568 = vdwg.mxu0
        %v569 = vpack.c.bf16 %v529, %v529
        %v570 = vld [vmem:[%s4] sm:$0xf]
        %v571 = vld [vmem:[%s4 + $0x4] sm:$0xf]
        %v572 = vld [vmem:[%s4 + $0x8] sm:$0xf]
        %v573 = vld [vmem:[%s4 + $0xc] sm:$0xf]
        %v574 = vld [vmem:[#allocation2] sm:$0x1]
        %v576 = vperm.slane %v574, 0
        %v582 = vunpack.c.l.b16 %v570
        %v583 = vunpack.c.l.b16 %v571
        %v584 = vunpack.c.l.b16 %v572
        %v585 = vunpack.c.l.b16 %v573
        %v586 = vpack.c.b16 %v583, %v582
        %v587 = vpack.c.b16 %v585, %v584
        %v591 = vsel %vm552, %v569, 0
        %593 = vmatpush.bf16.msra.mxu0 0
        %594 = vmatpush.bf16.msra.mxu0 0
        %595 = vmatpush.bf16.msra.mxu0 0
        %596 = vmatpush.bf16.msra.mxu0 0
        %597 = vmatpush.bf16.msra.mxu0 0
        %598 = vmatpush.bf16.msra.mxu0 0
        %599 = vmatpush.bf16.msra.mxu0 %v587
        %600 = vmatpush.bf16.msra.mxu0 %v586
        %601 = vmatmul.bf16.gmra.mxu0 %v591
        %v602 = vpop.f32.mrf.mxu0
        %v603 = vadd.f32 %v576, %v602
        %v604 = vpop.f32.mrf.mxu0
        %605 = vdwg.mxu0
        %v606 = vperm.slane %v530, 0
        %v607 = vlaneseq
        %v608 = vshrl.u32 %v607, 7
        %610 = vset.pattern.permute.xlu0 %v608
        %611 = vperm.xlu0 %610, %v606
        %v612 = vpop.permute.xlu0 %611
        %v613 = vperm.slane %v530, 1
        %v614 = vlaneseq
        %v615 = vshrl.u32 %v614, 7
        %617 = vset.pattern.permute.xlu0 %v615
        %618 = vperm.xlu0 %617, %v613
        %v619 = vpop.permute.xlu0 %618
        %v620 = vperm.slane %v530, 2
        %v621 = vlaneseq
        %v622 = vshrl.u32 %v621, 7
        %624 = vset.pattern.permute.xlu0 %v622
        %625 = vperm.xlu0 %624, %v620
        %v626 = vpop.permute.xlu0 %625
        %v627 = vperm.slane %v530, 3
        %v628 = vlaneseq
        %v629 = vshrl.u32 %v628, 7
        %631 = vset.pattern.permute.xlu0 %v629
        %632 = vperm.xlu0 %631, %v627
        %v633 = vpop.permute.xlu0 %632
        %v634 = vperm.slane %v530, 4
        %v635 = vlaneseq
        %v636 = vshrl.u32 %v635, 7
        %638 = vset.pattern.permute.xlu0 %v636
        %639 = vperm.xlu0 %638, %v634
        %v640 = vpop.permute.xlu0 %639
        %v641 = vperm.slane %v530, 5
        %v642 = vlaneseq
        %v643 = vshrl.u32 %v642, 7
        %645 = vset.pattern.permute.xlu0 %v643
        %646 = vperm.xlu0 %645, %v641
        %v647 = vpop.permute.xlu0 %646
        %v648 = vperm.slane %v530, 6
        %v649 = vlaneseq
        %v650 = vshrl.u32 %v649, 7
        %652 = vset.pattern.permute.xlu0 %v650
        %653 = vperm.xlu0 %652, %v648
        %v654 = vpop.permute.xlu0 %653
        %v655 = vperm.slane %v530, 7
        %v656 = vlaneseq
        %v657 = vshrl.u32 %v656, 7
        %659 = vset.pattern.permute.xlu0 %v657
        %660 = vperm.xlu0 %659, %v655
        %v661 = vpop.permute.xlu0 %660
        %v663 = vrot.slane %v566, 1
        %v664 = vrot.slane %v566, 2
        %v665 = vrot.slane %v566, 3
        %v666 = vrot.slane %v566, 4
        %v667 = vrot.slane %v566, 5
        %v668 = vrot.slane %v566, 6
        %v669 = vrot.slane %v566, 7
        %v670 = vperm.slane %v566, 0
        %v671 = vperm.slane %v663, 0
        %v672 = vperm.slane %v664, 0
        %v673 = vperm.slane %v665, 0
        %v674 = vperm.slane %v666, 0
        %v675 = vperm.slane %v667, 0
        %v676 = vperm.slane %v668, 0
        %v677 = vperm.slane %v669, 0
        %v686 = vadd.f32 %v670, %v603
        %v687 = vadd.f32 %v671, %v603
        %v688 = vadd.f32 %v672, %v603
        %v689 = vadd.f32 %v673, %v603
        %v690 = vadd.f32 %v674, %v603
        %v691 = vadd.f32 %v675, %v603
        %v692 = vadd.f32 %v676, %v603
        %v693 = vadd.f32 %v677, %v603
        %v694 = vxor.u32 %v686, 2147483648
        %v695 = vxor.u32 %v687, 2147483648
        %v696 = vxor.u32 %v688, 2147483648
        %v697 = vxor.u32 %v689, 2147483648
        %v698 = vxor.u32 %v690, 2147483648
        %v699 = vxor.u32 %v691, 2147483648
        %v700 = vxor.u32 %v692, 2147483648
        %v701 = vxor.u32 %v693, 2147483648
        %v702 = vmul.f32 %v694, 1.442695
        %v703 = vpow.pop %v702
        %v704 = vmul.f32 %v695, 1.442695
        %v705 = vpow.pop %v704
        %v706 = vmul.f32 %v696, 1.442695
        %v707 = vpow.pop %v706
        %v708 = vmul.f32 %v697, 1.442695
        %v709 = vpow.pop %v708
        %v710 = vmul.f32 %v698, 1.442695
        %v711 = vpow.pop %v710
        %v712 = vmul.f32 %v699, 1.442695
        %v713 = vpow.pop %v712
        %v714 = vmul.f32 %v700, 1.442695
        %v715 = vpow.pop %v714
        %v716 = vmul.f32 %v701, 1.442695
        %v717 = vpow.pop %v716
        %v718 = vadd.f32 %v703, 1.0
        %v719 = vadd.f32 %v705, 1.0
        %v720 = vadd.f32 %v707, 1.0
        %v721 = vadd.f32 %v709, 1.0
        %v722 = vadd.f32 %v711, 1.0
        %v723 = vadd.f32 %v713, 1.0
        %v724 = vadd.f32 %v715, 1.0
        %v725 = vadd.f32 %v717, 1.0
        %v726 = vrcp.pop %v718
        %v727 = vmul.f32 %v718, %v726
        %v728 = vsub.f32 1.0, %v727
        %v729 = vmul.f32 %v726, %v728
        %v730 = vadd.f32 %v726, %v729
        %vm731 = vweird.f32 %v718
        %vm732 = vweird.f32 %v726
        %vm733 = vmor %vm731, %vm732
        %v734 = vsel %vm733, %v726, %v730
        %v735 = vand.u32 2147483647, %v718
        %vm736 = vcmp.eq.f32.partialorder %v735, 8.507059e+37
        %v737 = vand.u32 %v718, 2147483648
        %v738 = vor.u32 1.1754944e-38, %v737
        %v739 = vsel %vm736, %v738, %v734
        %v740 = vmul.f32 1.0, %v739
        %v741 = vrcp.pop %v719
        %v742 = vmul.f32 %v719, %v741
        %v743 = vsub.f32 1.0, %v742
        %v744 = vmul.f32 %v741, %v743
        %v745 = vadd.f32 %v741, %v744
        %vm746 = vweird.f32 %v719
        %vm747 = vweird.f32 %v741
        %vm748 = vmor %vm746, %vm747
        %v749 = vsel %vm748, %v741, %v745
        %v750 = vand.u32 2147483647, %v719
        %vm751 = vcmp.eq.f32.partialorder %v750, 8.507059e+37
        %v752 = vand.u32 %v719, 2147483648
        %v753 = vor.u32 1.1754944e-38, %v752
        %v754 = vsel %vm751, %v753, %v749
        %v755 = vmul.f32 1.0, %v754
        %v756 = vrcp.pop %v720
        %v757 = vmul.f32 %v720, %v756
        %v758 = vsub.f32 1.0, %v757
        %v759 = vmul.f32 %v756, %v758
        %v760 = vadd.f32 %v756, %v759
        %vm761 = vweird.f32 %v720
        %vm762 = vweird.f32 %v756
        %vm763 = vmor %vm761, %vm762
        %v764 = vsel %vm763, %v756, %v760
        %v765 = vand.u32 2147483647, %v720
        %vm766 = vcmp.eq.f32.partialorder %v765, 8.507059e+37
        %v767 = vand.u32 %v720, 2147483648
        %v768 = vor.u32 1.1754944e-38, %v767
        %v769 = vsel %vm766, %v768, %v764
        %v770 = vmul.f32 1.0, %v769
        %v771 = vrcp.pop %v721
        %v772 = vmul.f32 %v721, %v771
        %v773 = vsub.f32 1.0, %v772
        %v774 = vmul.f32 %v771, %v773
        %v775 = vadd.f32 %v771, %v774
        %vm776 = vweird.f32 %v721
        %vm777 = vweird.f32 %v771
        %vm778 = vmor %vm776, %vm777
        %v779 = vsel %vm778, %v771, %v775
        %v780 = vand.u32 2147483647, %v721
        %vm781 = vcmp.eq.f32.partialorder %v780, 8.507059e+37
        %v782 = vand.u32 %v721, 2147483648
        %v783 = vor.u32 1.1754944e-38, %v782
        %v784 = vsel %vm781, %v783, %v779
        %v785 = vmul.f32 1.0, %v784
        %v786 = vrcp.pop %v722
        %v787 = vmul.f32 %v722, %v786
        %v788 = vsub.f32 1.0, %v787
        %v789 = vmul.f32 %v786, %v788
        %v790 = vadd.f32 %v786, %v789
        %vm791 = vweird.f32 %v722
        %vm792 = vweird.f32 %v786
        %vm793 = vmor %vm791, %vm792
        %v794 = vsel %vm793, %v786, %v790
        %v795 = vand.u32 2147483647, %v722
        %vm796 = vcmp.eq.f32.partialorder %v795, 8.507059e+37
        %v797 = vand.u32 %v722, 2147483648
        %v798 = vor.u32 1.1754944e-38, %v797
        %v799 = vsel %vm796, %v798, %v794
        %v800 = vmul.f32 1.0, %v799
        %v801 = vrcp.pop %v723
        %v802 = vmul.f32 %v723, %v801
        %v803 = vsub.f32 1.0, %v802
        %v804 = vmul.f32 %v801, %v803
        %v805 = vadd.f32 %v801, %v804
        %vm806 = vweird.f32 %v723
        %vm807 = vweird.f32 %v801
        %vm808 = vmor %vm806, %vm807
        %v809 = vsel %vm808, %v801, %v805
        %v810 = vand.u32 2147483647, %v723
        %vm811 = vcmp.eq.f32.partialorder %v810, 8.507059e+37
        %v812 = vand.u32 %v723, 2147483648
        %v813 = vor.u32 1.1754944e-38, %v812
        %v814 = vsel %vm811, %v813, %v809
        %v815 = vmul.f32 1.0, %v814
        %v816 = vrcp.pop %v724
        %v817 = vmul.f32 %v724, %v816
        %v818 = vsub.f32 1.0, %v817
        %v819 = vmul.f32 %v816, %v818
        %v820 = vadd.f32 %v816, %v819
        %vm821 = vweird.f32 %v724
        %vm822 = vweird.f32 %v816
        %vm823 = vmor %vm821, %vm822
        %v824 = vsel %vm823, %v816, %v820
        %v825 = vand.u32 2147483647, %v724
        %vm826 = vcmp.eq.f32.partialorder %v825, 8.507059e+37
        %v827 = vand.u32 %v724, 2147483648
        %v828 = vor.u32 1.1754944e-38, %v827
        %v829 = vsel %vm826, %v828, %v824
        %v830 = vmul.f32 1.0, %v829
        %v831 = vrcp.pop %v725
        %v832 = vmul.f32 %v725, %v831
        %v833 = vsub.f32 1.0, %v832
        %v834 = vmul.f32 %v831, %v833
        %v835 = vadd.f32 %v831, %v834
        %vm836 = vweird.f32 %v725
        %vm837 = vweird.f32 %v831
        %vm838 = vmor %vm836, %vm837
        %v839 = vsel %vm838, %v831, %v835
        %v840 = vand.u32 2147483647, %v725
        %vm841 = vcmp.eq.f32.partialorder %v840, 8.507059e+37
        %v842 = vand.u32 %v725, 2147483648
        %v843 = vor.u32 1.1754944e-38, %v842
        %v844 = vsel %vm841, %v843, %v839
        %v845 = vmul.f32 1.0, %v844
        %v846 = vmul.f32 %v740, %v612
        %v847 = vmul.f32 %v755, %v619
        %v848 = vmul.f32 %v770, %v626
        %v849 = vmul.f32 %v785, %v633
        %v850 = vmul.f32 %v800, %v640
        %v851 = vmul.f32 %v815, %v647
        %v852 = vmul.f32 %v830, %v654
        %v853 = vmul.f32 %v845, %v661
        %v854 = vmul.f32 %v846, %v529
        %v855 = vmul.f32 %v847, %v529
        %v856 = vmul.f32 %v848, %v529
        %v857 = vmul.f32 %v849, %v529
        %v858 = vmul.f32 %v850, %v529
        %v859 = vmul.f32 %v851, %v529
        %v860 = vmul.f32 %v852, %v529
        %v861 = vmul.f32 %v853, %v529
        %vm862 = vcmask 257024
        %v863 = vsel %vm862, %v854, 0.0
        %v864 = vrot.slane %v863, 4
        %v865 = vadd.f32 %v863, %v864
        %v866 = vrot.slane %v865, 2
        %v867 = vadd.f32 %v865, %v866
        %v868 = vrot.slane %v867, 1
        %v869 = vadd.f32 %v867, %v868
        %v870 = vsel %vm862, %v855, 0.0
        %v871 = vrot.slane %v870, 4
        %v872 = vadd.f32 %v870, %v871
        %v873 = vrot.slane %v872, 2
        %v874 = vadd.f32 %v872, %v873
        %v875 = vrot.slane %v874, 1
        %v876 = vadd.f32 %v874, %v875
        %v877 = vsel %vm862, %v856, 0.0
        %v878 = vrot.slane %v877, 4
        %v879 = vadd.f32 %v877, %v878
        %v880 = vrot.slane %v879, 2
        %v881 = vadd.f32 %v879, %v880
        %v882 = vrot.slane %v881, 1
        %v883 = vadd.f32 %v881, %v882
        %v884 = vsel %vm862, %v857, 0.0
        %v885 = vrot.slane %v884, 4
        %v886 = vadd.f32 %v884, %v885
        %v887 = vrot.slane %v886, 2
        %v888 = vadd.f32 %v886, %v887
        %v889 = vrot.slane %v888, 1
        %v890 = vadd.f32 %v888, %v889
        %v891 = vsel %vm862, %v858, 0.0
        %v892 = vrot.slane %v891, 4
        %v893 = vadd.f32 %v891, %v892
        %v894 = vrot.slane %v893, 2
        %v895 = vadd.f32 %v893, %v894
        %v896 = vrot.slane %v895, 1
        %v897 = vadd.f32 %v895, %v896
        %v898 = vsel %vm862, %v859, 0.0
        %v899 = vrot.slane %v898, 4
        %v900 = vadd.f32 %v898, %v899
        %v901 = vrot.slane %v900, 2
        %v902 = vadd.f32 %v900, %v901
        %v903 = vrot.slane %v902, 1
        %v904 = vadd.f32 %v902, %v903
        %v905 = vsel %vm862, %v860, 0.0
        %v906 = vrot.slane %v905, 4
        %v907 = vadd.f32 %v905, %v906
        %v908 = vrot.slane %v907, 2
        %v909 = vadd.f32 %v907, %v908
        %v910 = vrot.slane %v909, 1
        %v911 = vadd.f32 %v909, %v910
        %v912 = vsel %vm862, %v861, 0.0
        %v913 = vrot.slane %v912, 4
        %v914 = vadd.f32 %v912, %v913
        %v915 = vrot.slane %v914, 2
        %v916 = vadd.f32 %v914, %v915
        %v917 = vrot.slane %v916, 1
        %v918 = vadd.f32 %v916, %v917
        %v920 = vrot.slane %v528, 1
        %v921 = vrot.slane %v528, 2
        %v922 = vrot.slane %v528, 3
        %v923 = vrot.slane %v528, 4
        %v924 = vrot.slane %v528, 5
        %v925 = vrot.slane %v528, 6
        %v926 = vrot.slane %v528, 7
        %v927 = vperm.slane %v528, 0
        %v928 = vperm.slane %v920, 0
        %v929 = vperm.slane %v921, 0
        %v930 = vperm.slane %v922, 0
        %v931 = vperm.slane %v923, 0
        %v932 = vperm.slane %v924, 0
        %v933 = vperm.slane %v925, 0
        %v934 = vperm.slane %v926, 0
        %935 = vrot.lane.b32.xlu0 %v927, 32
        %v936 = vpop.permute.xlu0 %935
        %937 = vrot.lane.b32.xlu0 %v928, 32
        %v938 = vpop.permute.xlu0 %937
        %939 = vrot.lane.b32.xlu0 %v929, 32
        %v940 = vpop.permute.xlu0 %939
        %941 = vrot.lane.b32.xlu0 %v930, 32
        %v942 = vpop.permute.xlu0 %941
        %943 = vrot.lane.b32.xlu0 %v931, 32
        %v944 = vpop.permute.xlu0 %943
        %945 = vrot.lane.b32.xlu0 %v932, 32
        %v946 = vpop.permute.xlu0 %945
        %947 = vrot.lane.b32.xlu0 %v933, 32
        %v948 = vpop.permute.xlu0 %947
        %949 = vrot.lane.b32.xlu0 %v934, 32
        %v950 = vpop.permute.xlu0 %949
        %v959 = vmul.f32 %v846, %v936
        %v960 = vmul.f32 %v847, %v938
        %v961 = vmul.f32 %v848, %v940
        %v962 = vmul.f32 %v849, %v942
        %v963 = vmul.f32 %v850, %v944
        %v964 = vmul.f32 %v851, %v946
        %v965 = vmul.f32 %v852, %v948
        %v966 = vmul.f32 %v853, %v950
        %vm967 = vcmask 519424
        %v968 = vsel %vm967, %v959, 0.0
        %v969 = vsel %vm967, %v960, 0.0
        %v970 = vadd.f32 %v968, %v969
        %v971 = vsel %vm967, %v961, 0.0
        %v972 = vadd.f32 %v970, %v971
        %v973 = vsel %vm967, %v962, 0.0
        %v974 = vadd.f32 %v972, %v973
        %v975 = vsel %vm967, %v963, 0.0
        %v976 = vadd.f32 %v974, %v975
        %v977 = vsel %vm967, %v964, 0.0
        %v978 = vadd.f32 %v976, %v977
        %v979 = vsel %vm967, %v965, 0.0
        %v980 = vadd.f32 %v978, %v979
        %v981 = vsel %vm967, %v966, 0.0
        %v982 = vadd.f32 %v980, %v981
        %vm991 = vcmask 1041409
        %v992 = vsel %vm991, %v876, %v869
        %vm993 = vcmask 1042434
        %v994 = vsel %vm993, %v883, %v992
        %vm995 = vcmask 1043459
        %v996 = vsel %vm995, %v890, %v994
        %vm997 = vcmask 1044484
        %v998 = vsel %vm997, %v897, %v996
        %vm999 = vcmask 1045509
        %v1000 = vsel %vm999, %v904, %v998
        %vm1001 = vcmask 1046534
        %v1002 = vsel %vm1001, %v911, %v1000
        %vm1003 = vcmask 1047559
        %v1004 = vsel %vm1003, %v918, %v1002
        %v1006 = vadd.f32 %v528, %v1004
        %v1007 = vld [vmem:[#allocation4] sm:$0x1]
        %v1008 = vld [vmem:[#allocation6] sm:$0x1]
        %v1009 = vsel %vm552, %v1006, 0.0
        %1010 = vadd.xlane.f32.xlu0 %v1009
        %v1011 = vpop.xlane.xlu0 %1010
        %v1012 = vrcp.pop 32.0
        %v1013 = vmul.f32 32.0, %v1012
        %v1014 = vsub.f32 1.0, %v1013
        %v1015 = vmul.f32 %v1012, %v1014
        %v1016 = vadd.f32 %v1012, %v1015
        %vm1017 = vweird.f32 %v1012
        %v1018 = vsel %vm1017, %v1012, %v1016
        %v1019 = vmul.f32 %v1011, %v1018
        %v1020 = vsub.f32 %v1006, %v1019
        %v1021 = vmul.f32 %v1020, %v1020
        %v1022 = vsel %vm552, %v1021, 0.0
        %1023 = vadd.xlane.f32.xlu0 %v1022
        %v1024 = vpop.xlane.xlu0 %1023
        %v1025 = vrcp.pop 31.0
        %v1026 = vmul.f32 31.0, %v1025
        %v1027 = vsub.f32 1.0, %v1026
        %v1028 = vmul.f32 %v1025, %v1027
        %v1029 = vadd.f32 %v1025, %v1028
        %vm1030 = vweird.f32 %v1025
        %v1031 = vsel %vm1030, %v1025, %v1029
        %v1032 = vmul.f32 %v1024, %v1031
        %v1034 = vperm.slane %v1007, 0
        %v1036 = vmul.f32 %v1034, %v1020
        %v1037 = vrsqrt.pop %v1032
        %v1038 = vmul.f32 %v1037, %v1032
        %v1039 = vmul.f32 %v1038, %v1037
        %v1040 = vmul.f32 0.5, %v1039
        %v1041 = vsub.f32 1.5, %v1040
        %v1042 = vmul.f32 %v1037, %v1041
        %v1043 = vmul.f32 %v1032, %v1042
        %vm1044 = vcmp.eq.f32.partialorder %v1032, inf
        %v1045 = vsel %vm1044, %v1032, %v1043
        %vm1046 = vcmp.eq.f32.partialorder %v1032, 0.0
        %v1047 = vand.u32 %v1032, 2147483648
        %v1048 = vsel %vm1046, %v1047, %v1045
        %v1049 = vadd.f32 %v1048, 1e-06
        %v1050 = vrcp.pop %v1049
        %v1051 = vmul.f32 %v1049, %v1050
        %v1052 = vsub.f32 1.0, %v1051
        %v1053 = vmul.f32 %v1050, %v1052
        %v1054 = vadd.f32 %v1050, %v1053
        %vm1055 = vweird.f32 %v1049
        %vm1056 = vweird.f32 %v1050
        %vm1057 = vmor %vm1055, %vm1056
        %v1058 = vsel %vm1057, %v1050, %v1054
        %v1059 = vand.u32 2147483647, %v1049
        %vm1060 = vcmp.eq.f32.partialorder %v1059, 8.507059e+37
        %v1061 = vand.u32 %v1049, 2147483648
        %v1062 = vor.u32 1.1754944e-38, %v1061
        %v1063 = vsel %vm1060, %v1062, %v1058
        %v1064 = vmul.f32 %v1036, %v1063
        %v1066 = vperm.slane %v1008, 0
        %v1068 = vadd.f32 %v1064, %v1066
        %1069 = vst.msk [vmem:[%s522] sm:$0xff] %vm552, %v1068
        %1071 = vrot.lane.b32.xlu0 %v982, 96
        %v1072 = vpop.permute.xlu0 %1071
        %v1074 = vadd.f32 %v529, %v1072
        %v1075 = vld [vmem:[#allocation7] sm:$0x1]
        %v1076 = vld [vmem:[#allocation9] sm:$0x1]
        %v1077 = vsel %vm862, %v1074, 0.0
        %1078 = vadd.xlane.f32.xlu0 %v1077
        %v1079 = vpop.xlane.xlu0 %1078
        %v1080 = vmul.f32 %v1079, %v1018
        %v1081 = vsub.f32 %v1074, %v1080
        %v1082 = vmul.f32 %v1081, %v1081
        %v1083 = vsel %vm862, %v1082, 0.0
        %1084 = vadd.xlane.f32.xlu0 %v1083
        %v1085 = vpop.xlane.xlu0 %1084
        %v1086 = vmul.f32 %v1085, %v1031
        %v1088 = vperm.slane %v1075, 0
        %v1090 = vmul.f32 %v1088, %v1081
        %v1091 = vrsqrt.pop %v1086
        %v1092 = vmul.f32 %v1091, %v1086
        %v1093 = vmul.f32 %v1092, %v1091
        %v1094 = vmul.f32 0.5, %v1093
        %v1095 = vsub.f32 1.5, %v1094
        %v1096 = vmul.f32 %v1091, %v1095
        %v1097 = vmul.f32 %v1086, %v1096
        %vm1098 = vcmp.eq.f32.partialorder %v1086, inf
        %v1099 = vsel %vm1098, %v1086, %v1097
        %vm1100 = vcmp.eq.f32.partialorder %v1086, 0.0
        %v1101 = vand.u32 %v1086, 2147483648
        %v1102 = vsel %vm1100, %v1101, %v1099
        %v1103 = vadd.f32 %v1102, 1e-06
        %v1104 = vrcp.pop %v1103
        %v1105 = vmul.f32 %v1103, %v1104
        %v1106 = vsub.f32 1.0, %v1105
        %v1107 = vmul.f32 %v1104, %v1106
        %v1108 = vadd.f32 %v1104, %v1107
        %vm1109 = vweird.f32 %v1103
        %vm1110 = vweird.f32 %v1104
        %vm1111 = vmor %vm1109, %vm1110
        %v1112 = vsel %vm1111, %v1104, %v1108
        %v1113 = vand.u32 2147483647, %v1103
        %vm1114 = vcmp.eq.f32.partialorder %v1113, 8.507059e+37
        %v1115 = vand.u32 %v1103, 2147483648
        %v1116 = vor.u32 1.1754944e-38, %v1115
        %v1117 = vsel %vm1114, %v1116, %v1112
        %v1118 = vmul.f32 %v1090, %v1117
        %v1120 = vperm.slane %v1076, 0
        %v1122 = vadd.f32 %v1118, %v1120
        %1123 = vst.msk [vmem:[%s526] sm:$0xf] %vm862, %v1122
        %p1124 = scmp.lt.s32.totalorder %s27, 1
        %s1125 = scalar_select %p1124, %s27, 1
        %s1126 = smul.addr %s1125, 8
        %s1127 = scalar_lea.vmem %s11, %s1126
        %p1128 = scmp.lt.s32.totalorder %s27, 1
        %s1129 = scalar_select %p1128, %s27, 1
        %s1130 = smul.addr %s1129, 4
        %s1131 = scalar_lea.vmem %s12, %s1130
        // Predicated region
        $region85: #{gat_encoder_forward.19} parent=63 // pred_check
          %p1132 = pneg %p291
        $region86: #{gat_encoder_forward.19} parent=63 // pred_check_branch
          %1134 = sbr.rel (%p1132) target = $region88
        $region87: #{gat_encoder_forward.19} parent=63 // pred_region
          _
        $region88: #{gat_encoder_forward.19} parent=63 // pred_fallthru
          _
        // Predicated region
        $region89: #{gat_encoder_forward.19} parent=63 // pred_check
          %p1135 = pneg %p317
        $region90: #{gat_encoder_forward.19} parent=63 // pred_check_branch
          %1137 = sbr.rel (%p1135) target = $region92
        $region91: #{gat_encoder_forward.19} parent=63 // pred_region
          _
        $region92: #{gat_encoder_forward.19} parent=63 // pred_fallthru
          _
      $region64: #{gat_encoder_forward.19} parent=5 // pred_fallthru
        _
      %p1138 = scmp.le.s32.totalorder 2, %s22
      // Predicated region
      $region93: #{gat_encoder_forward.19} parent=5 // pred_check
        %p1139 = pneg %p1138
      $region94: #{gat_encoder_forward.19} parent=5 // pred_check_branch
        %1141 = sbr.rel (%p1139) target = $region96
      $region95: #{gat_encoder_forward.19} parent=5 // pred_region
        %s1142 = ssub.s32 %s22, 2
        // Predicated region
        $region97: #{gat_encoder_forward.19} parent=95 // pred_check
          %p1143 = pneg %p297
        $region98: #{gat_encoder_forward.19} parent=95 // pred_check_branch
          %1145 = sbr.rel (%p1143) target = $region100
        $region99: #{gat_encoder_forward.19} parent=95 // pred_region
          %p1146 = scmp.lt.s32.totalorder %s28, 1
          %s1147 = scalar_select %p1146, %s28, 1
          %s1148 = smul.addr %s1147, 8
          %s1149 = scalar_lea.vmem %s11, %s1148
        $region100: #{gat_encoder_forward.19} parent=95 // pred_fallthru
          _
        // Predicated region
        $region101: #{gat_encoder_forward.19} parent=95 // pred_check
          %p1150 = pneg %p323
        $region102: #{gat_encoder_forward.19} parent=95 // pred_check_branch
          %1152 = sbr.rel (%p1150) target = $region104
        $region103: #{gat_encoder_forward.19} parent=95 // pred_region
          %p1153 = scmp.lt.s32.totalorder %s28, 1
          %s1154 = scalar_select %p1153, %s28, 1
          %s1155 = smul.addr %s1154, 4
          %s1156 = scalar_lea.vmem %s12, %s1155
        $region104: #{gat_encoder_forward.19} parent=95 // pred_fallthru
          _
      $region96: #{gat_encoder_forward.19} parent=5 // pred_fallthru
        _
    $region6: #{gat_encoder_forward.19} parent=1 // loop_footer
      %s26 = sadd.s32 1, %s22
    $region7: #{gat_encoder_forward.19} parent=1 // loop_footer_branch
      %21 = sbr.rel target = $region3
    $region8: #{gat_encoder_forward.19} parent=1 // loop_exit
      _
    %1157 = vsyncpa [#allocation3], 1
    %s1158 = scalar_lea.sflag [#allocation3], 1
    %1159 = vsyncpa %s1158, 1
    %1160 = vsyncpa [#allocation5], 1
    %1161 = vsyncpa [#allocation8], 1

</llo_original>
